<compile_context>
chip_gen: v5e
topology: v5e:2x2
jax: 0.10.0
libtpu: 0.0.40
codegen_flags: <defaults>
</compile_context>

<pallas_src>
import functools

import jax
import jax.numpy as jnp
from jax.experimental import pallas as pl
from jax.experimental.pallas import tpu as pltpu


# -----------------------------------------------------------------------------
# Fused Pallas kernel: 10-layer LSTM (wavefront order) + fc1(ReLU) + fc2
# -----------------------------------------------------------------------------
def lstm_mlp_kernel(x_ref, w_ref, b_ref, w1_ref, b1_ref, w2_ref, b2_ref,
                    out_ref, *, batch):
    """x_ref:  (T*B, H)   time-major stacked input (row t*B + b = x[b, t, :])
       w_ref:  (L, 2H, 4H) fused [W_ih; W_hh] per layer, gate order (i,f,g,o),
                           g-gate columns pre-scaled by 2 (tanh-as-sigmoid fold)
       b_ref:  (L, 1, 4H)  combined bias b_ih + b_hh (g columns pre-scaled by 2)
       w1_ref: (T*H, T*H), b1_ref: (1, T*H), w2_ref: (T*H, F2), b2_ref: (1, F2)
       out_ref:(B, F2)
    """
    B = batch
    H = x_ref.shape[-1]
    T = x_ref.shape[0] // B
    L = w_ref.shape[0]

    # --- layer-0 input projection, batched over all timesteps (one matmul) ---
    w0 = w_ref[0]                                    # (2H, 4H)
    wih0, whh0 = w0[:H, :], w0[H:, :]
    xp0 = jnp.dot(x_ref[...], wih0,
                  preferred_element_type=jnp.float32) + b_ref[0]   # (T*B, 4H)

    def activate(gates):
        # g columns of W/b were pre-scaled by 2 => a single lane-dense sigmoid
        # over the whole (B, 4H) pre-activation yields every gate;
        # tanh(pre_g) == 2 * sigmoid(2 * pre_g) - 1 is a free VPU fixup.
        act = jax.nn.sigmoid(gates)
        i_g = act[:, 0 * H:1 * H]
        f_g = act[:, 1 * H:2 * H]
        g_g = 2.0 * act[:, 2 * H:3 * H] - 1.0
        o_g = act[:, 3 * H:4 * H]
        return i_g, f_g, g_g, o_g

    zero = jnp.zeros((B, H), jnp.float32)
    h = [zero] * L
    c = [zero] * L
    ys = [None] * T

    # --- wavefront over the unrolled (layer, time) cell grid ---
    for s in range(L + T - 1):
        l_lo = max(0, s - T + 1)
        l_hi = min(L - 1, s)
        # Decreasing l: cell (l, t) reads h[l-1] (== h_{l-1}[t]) before cell
        # (l-1, t+1), which sits on the same diagonal, rebinds it.
        for l in range(l_hi, l_lo - 1, -1):
            t = s - l
            if l == 0:
                gates = xp0[t * B:(t + 1) * B, :] + jnp.dot(
                    h[0], whh0, preferred_element_type=jnp.float32)
            else:
                z = jnp.concatenate([h[l - 1], h[l]], axis=1)        # (B, 2H)
                gates = jnp.dot(z, w_ref[l],
                                preferred_element_type=jnp.float32) + b_ref[l]
            i_g, f_g, g_g, o_g = activate(gates)
            c[l] = f_g * c[l] + i_g * g_g
            h[l] = o_g * jnp.tanh(c[l])
            if l == L - 1:
                ys[t] = h[l]
    # TODO(synk): nn.LSTM inter-layer dropout (p=0.1) is train-mode only; the
    # eval/inference forward implemented here is identity, so nothing applied.

    # torch: lstm_out (B, T, H).flatten(start_dim=1) == per-row concat over t.
    flat = jnp.concatenate(ys, axis=1)                               # (B, T*H)
    hid = jnp.dot(flat, w1_ref[...], preferred_element_type=jnp.float32) + b1_ref[...]
    hid = jnp.maximum(hid, 0.0)                                      # ReLU
    # TODO(synk): F2 = n_nodes^2 = 64 (< 128 lanes) => masked vst on the final
    # store; could pad to 128 in-kernel and slice in the wrapper (lowest prio).
    out_ref[...] = (
        jnp.dot(hid, w2_ref[...], preferred_element_type=jnp.float32) + b2_ref[...]
    )


# -----------------------------------------------------------------------------
# Wrapper
# -----------------------------------------------------------------------------
def forward(x_bth, params):
    """x_bth: (B, T, H) batch-first; T = n_nodes, H = timestep_bin_length."""
    B, T, H = x_bth.shape
    F2 = params["w2"].shape[1]
    # Stack time-major: row t*B + b holds x[b, t, :] (single lane/sublane slab).
    x_stacked = jnp.transpose(x_bth, (1, 0, 2)).reshape(T * B, H).astype(jnp.float32)

    def vmem_spec():
        return pl.BlockSpec(memory_space=pltpu.MemorySpace.VMEM)

    return pl.pallas_call(
        functools.partial(lstm_mlp_kernel, batch=B),
        out_shape=jax.ShapeDtypeStruct((B, F2), jnp.float32),
        in_specs=[vmem_spec() for _ in range(7)],
        out_specs=vmem_spec(),
    )(
        x_stacked,
        params["w"], params["b"],
        params["w1"], params["b1"], params["w2"], params["b2"],
    )


# -----------------------------------------------------------------------------
# Parameter construction (deterministic, PyTorch-like uniform init)
# -----------------------------------------------------------------------------
def init_params(key, timestep_bin_length, n_nodes, num_layers):
    H = timestep_bin_length
    F1 = timestep_bin_length * n_nodes
    F2 = n_nodes * n_nodes
    bound = 1.0 / float(H) ** 0.5

    keys = jax.random.split(key, 4 * num_layers + 4)
    # g-gate (3rd block of the 4H output columns) pre-scaled by 2: lets the
    # kernel compute all gates with ONE sigmoid (tanh(x) = 2*sigmoid(2x) - 1).
    g_scale = jnp.concatenate(
        [jnp.ones((2 * H,)), 2.0 * jnp.ones((H,)), jnp.ones((H,))]
    ).astype(jnp.float32)

    ws, bs = [], []
    for l in range(num_layers):
        k0, k1, k2, k3 = keys[4 * l: 4 * l + 4]
        # Gate order (i, f, g, o) along the output dim; stored (in, out).
        wih = jax.random.uniform(k0, (H, 4 * H), jnp.float32, -bound, bound)
        whh = jax.random.uniform(k1, (H, 4 * H), jnp.float32, -bound, bound)
        b_ih = jax.random.uniform(k2, (1, 4 * H), jnp.float32, -bound, bound)
        b_hh = jax.random.uniform(k3, (1, 4 * H), jnp.float32, -bound, bound)
        ws.append(jnp.concatenate([wih, whh], axis=0) * g_scale)   # (2H, 4H)
        bs.append((b_ih + b_hh) * g_scale)                         # (1, 4H)

    params = {"w": jnp.stack(ws), "b": jnp.stack(bs)}              # (L,2H,4H),(L,1,4H)

    kf1w, kf1b, kf2w, kf2b = keys[4 * num_layers:]
    bf = 1.0 / float(F1) ** 0.5
    params["w1"] = jax.random.uniform(kf1w, (F1, F1), jnp.float32, -bf, bf)
    params["b1"] = jax.random.uniform(kf1b, (1, F1), jnp.float32, -bf, bf)
    params["w2"] = jax.random.uniform(kf2w, (F1, F2), jnp.float32, -bf, bf)
    params["b2"] = jax.random.uniform(kf2b, (1, F2), jnp.float32, -bf, bf)
    return params


# -----------------------------------------------------------------------------
# Pure-JAX layer-major reference (standard sigmoid/tanh LSTM cell)
# -----------------------------------------------------------------------------
def forward_reference(x_bth, params):
    hp = jax.lax.Precision.HIGHEST
    x = x_bth.astype(jnp.float32)
    B, T, H = x.shape
    L = params["w"].shape[0]
    unscale = jnp.concatenate(
        [jnp.ones((2 * H,)), 0.5 * jnp.ones((H,)), jnp.ones((H,))]
    ).astype(jnp.float32)
    for l in range(L):
        w = params["w"][l] * unscale
        b = params["b"][l][0] * unscale
        wih, whh = w[:H], w[H:]
        h = jnp.zeros((B, H), jnp.float32)
        c = jnp.zeros((B, H), jnp.float32)
        ys = []
        for t in range(T):
            g = (jnp.dot(x[:, t, :], wih, precision=hp)
                 + jnp.dot(h, whh, precision=hp) + b)
            i_g = jax.nn.sigmoid(g[:, :H])
            f_g = jax.nn.sigmoid(g[:, H:2 * H])
            g_g = jnp.tanh(g[:, 2 * H:3 * H])
            o_g = jax.nn.sigmoid(g[:, 3 * H:])
            c = f_g * c + i_g * g_g
            h = o_g * jnp.tanh(c)
            ys.append(h)
        x = jnp.stack(ys, axis=1)
    flat = x.reshape(B, T * H)
    hid = jax.nn.relu(jnp.dot(flat, params["w1"], precision=hp) + params["b1"][0])
    return jnp.dot(hid, params["w2"], precision=hp) + params["b2"][0]


if __name__ == "__main__":
    # Shapes consistent with the module:
    #   timestep_bin_length (H) = 32, n_nodes (seq len T) = 8, batch B = 2, num_layers = 10
    B, T, H = 2, 8, 32
    NUM_LAYERS = 10

    key = jax.random.PRNGKey(0)
    k_x, k_p = jax.random.split(key)
    x = jax.random.normal(k_x, (B, T, H), dtype=jnp.float32)
    params = init_params(k_p, timestep_bin_length=H, n_nodes=T, num_layers=NUM_LAYERS)

    out = jax.jit(forward)(x, params)
    jax.block_until_ready(out)
    assert out.shape == (B, T * T), out.shape          # (batch, n_nodes * n_nodes)

    # Sanity check vs. the pure-JAX reference (tolerance covers MXU precision).
    ref = forward_reference(x, params)
    err = float(jnp.max(jnp.abs(out - ref)))
    assert err < 2e-2, f"max abs err vs reference = {err}"

    print("KERNEL_OK")
</pallas_src>

<mosaic_0001>
module attributes {stable_mosaic.version = 11 : i64} {
  func.func @lstm_mlp_kernel(%arg0: memref<16x32xf32, #tpu.memory_space<vmem>>, %arg1: memref<10x64x128xf32, #tpu.memory_space<vmem>>, %arg2: memref<10x1x128xf32, #tpu.memory_space<vmem>>, %arg3: memref<256x256xf32, #tpu.memory_space<vmem>>, %arg4: memref<1x256xf32, #tpu.memory_space<vmem>>, %arg5: memref<256x64xf32, #tpu.memory_space<vmem>>, %arg6: memref<1x64xf32, #tpu.memory_space<vmem>>, %arg7: memref<2x64xf32, #tpu.memory_space<vmem>>) attributes {dimension_semantics = [], scalar_prefetch = 0 : i64, scratch_operands = 0 : i64, tpu.core_type = #tpu.core_type<tc>} {
    %c0 = arith.constant 0 : index
    %c0_0 = arith.constant 0 : index
    %c0_1 = arith.constant 0 : index
    %0 = vector.load %arg1[%c0, %c0_0, %c0_1] : memref<10x64x128xf32, #tpu.memory_space<vmem>>, vector<1x64x128xf32>
    %1 = vector.shape_cast %0 : vector<1x64x128xf32> to vector<64x128xf32>
    %2 = vector.extract_strided_slice %1 {offsets = [0, 0], sizes = [32, 128], strides = [1, 1]} : vector<64x128xf32> to vector<32x128xf32>
    %3 = vector.extract_strided_slice %1 {offsets = [32, 0], sizes = [32, 128], strides = [1, 1]} : vector<64x128xf32> to vector<32x128xf32>
    %c0_2 = arith.constant 0 : index
    %c0_3 = arith.constant 0 : index
    %4 = vector.load %arg0[%c0_2, %c0_3] : memref<16x32xf32, #tpu.memory_space<vmem>>, vector<16x32xf32>
    %cst = arith.constant dense<0.000000e+00> : vector<16x128xf32>
    %5 = tpu.matmul %4, %2, %cst {dimension_numbers = #tpu.dot_dimension_numbers<[1], [0], [0], [1], [0, 0, 1, 1], [], []>} : vector<16x32xf32>, vector<32x128xf32>, vector<16x128xf32> -> vector<16x128xf32>
    %c0_4 = arith.constant 0 : index
    %c0_5 = arith.constant 0 : index
    %c0_6 = arith.constant 0 : index
    %6 = vector.load %arg2[%c0_4, %c0_5, %c0_6] : memref<10x1x128xf32, #tpu.memory_space<vmem>>, vector<1x1x128xf32>
    %7 = vector.shape_cast %6 : vector<1x1x128xf32> to vector<1x128xf32>
    %8 = vector.broadcast %7 : vector<1x128xf32> to vector<16x128xf32>
    %9 = arith.addf %5, %8 : vector<16x128xf32>
    %cst_7 = arith.constant 0.000000e+00 : f32
    %10 = vector.broadcast %cst_7 : f32 to vector<2x32xf32>
    %11 = vector.extract_strided_slice %9 {offsets = [0, 0], sizes = [2, 128], strides = [1, 1]} : vector<16x128xf32> to vector<2x128xf32>
    %cst_8 = arith.constant dense<0.000000e+00> : vector<2x128xf32>
    %12 = tpu.matmul %10, %3, %cst_8 {dimension_numbers = #tpu.dot_dimension_numbers<[1], [0], [0], [1], [0, 0, 1, 1], [], []>} : vector<2x32xf32>, vector<32x128xf32>, vector<2x128xf32> -> vector<2x128xf32>
    %13 = arith.addf %11, %12 : vector<2x128xf32>
    %14 = arith.negf %13 : vector<2x128xf32>
    %15 = math.exp %14 : vector<2x128xf32>
    %cst_9 = arith.constant 1.000000e+00 : f32
    %16 = vector.broadcast %cst_9 : f32 to vector<2x128xf32>
    %17 = arith.addf %16, %15 : vector<2x128xf32>
    %18 = arith.divf %16, %17 : vector<2x128xf32>
    %19 = vector.extract_strided_slice %18 {offsets = [0, 0], sizes = [2, 32], strides = [1, 1]} : vector<2x128xf32> to vector<2x32xf32>
    %20 = vector.extract_strided_slice %18 {offsets = [0, 32], sizes = [2, 32], strides = [1, 1]} : vector<2x128xf32> to vector<2x32xf32>
    %21 = vector.extract_strided_slice %18 {offsets = [0, 64], sizes = [2, 32], strides = [1, 1]} : vector<2x128xf32> to vector<2x32xf32>
    %cst_10 = arith.constant 2.000000e+00 : f32
    %22 = vector.broadcast %cst_10 : f32 to vector<2x32xf32>
    %23 = arith.mulf %22, %21 : vector<2x32xf32>
    %cst_11 = arith.constant 1.000000e+00 : f32
    %24 = vector.broadcast %cst_11 : f32 to vector<2x32xf32>
    %25 = arith.subf %23, %24 : vector<2x32xf32>
    %26 = vector.extract_strided_slice %18 {offsets = [0, 96], sizes = [2, 32], strides = [1, 1]} : vector<2x128xf32> to vector<2x32xf32>
    %27 = arith.mulf %20, %10 : vector<2x32xf32>
    %28 = arith.mulf %19, %25 : vector<2x32xf32>
    %29 = arith.addf %27, %28 : vector<2x32xf32>
    %30 = math.tanh %29 : vector<2x32xf32>
    %31 = arith.mulf %26, %30 : vector<2x32xf32>
    %32 = tpu.concatenate %31, %10 in 1 : vector<2x32xf32>, vector<2x32xf32> -> vector<2x64xf32>
    %c1 = arith.constant 1 : index
    %c0_12 = arith.constant 0 : index
    %c0_13 = arith.constant 0 : index
    %33 = vector.load %arg1[%c1, %c0_12, %c0_13] : memref<10x64x128xf32, #tpu.memory_space<vmem>>, vector<1x64x128xf32>
    %34 = vector.shape_cast %33 : vector<1x64x128xf32> to vector<64x128xf32>
    %cst_14 = arith.constant dense<0.000000e+00> : vector<2x128xf32>
    %35 = tpu.matmul %32, %34, %cst_14 {dimension_numbers = #tpu.dot_dimension_numbers<[1], [0], [0], [1], [0, 0, 1, 1], [], []>} : vector<2x64xf32>, vector<64x128xf32>, vector<2x128xf32> -> vector<2x128xf32>
    %c1_15 = arith.constant 1 : index
    %c0_16 = arith.constant 0 : index
    %c0_17 = arith.constant 0 : index
    %36 = vector.load %arg2[%c1_15, %c0_16, %c0_17] : memref<10x1x128xf32, #tpu.memory_space<vmem>>, vector<1x1x128xf32>
    %37 = vector.shape_cast %36 : vector<1x1x128xf32> to vector<1x128xf32>
    %38 = vector.broadcast %37 : vector<1x128xf32> to vector<2x128xf32>
    %39 = arith.addf %35, %38 : vector<2x128xf32>
    %40 = arith.negf %39 : vector<2x128xf32>
    %41 = math.exp %40 : vector<2x128xf32>
    %cst_18 = arith.constant 1.000000e+00 : f32
    %42 = vector.broadcast %cst_18 : f32 to vector<2x128xf32>
    %43 = arith.addf %42, %41 : vector<2x128xf32>
    %44 = arith.divf %42, %43 : vector<2x128xf32>
    %45 = vector.extract_strided_slice %44 {offsets = [0, 0], sizes = [2, 32], strides = [1, 1]} : vector<2x128xf32> to vector<2x32xf32>
    %46 = vector.extract_strided_slice %44 {offsets = [0, 32], sizes = [2, 32], strides = [1, 1]} : vector<2x128xf32> to vector<2x32xf32>
    %47 = vector.extract_strided_slice %44 {offsets = [0, 64], sizes = [2, 32], strides = [1, 1]} : vector<2x128xf32> to vector<2x32xf32>
    %cst_19 = arith.constant 2.000000e+00 : f32
    %48 = vector.broadcast %cst_19 : f32 to vector<2x32xf32>
    %49 = arith.mulf %48, %47 : vector<2x32xf32>
    %cst_20 = arith.constant 1.000000e+00 : f32
    %50 = vector.broadcast %cst_20 : f32 to vector<2x32xf32>
    %51 = arith.subf %49, %50 : vector<2x32xf32>
    %52 = vector.extract_strided_slice %44 {offsets = [0, 96], sizes = [2, 32], strides = [1, 1]} : vector<2x128xf32> to vector<2x32xf32>
    %53 = arith.mulf %46, %10 : vector<2x32xf32>
    %54 = arith.mulf %45, %51 : vector<2x32xf32>
    %55 = arith.addf %53, %54 : vector<2x32xf32>
    %56 = math.tanh %55 : vector<2x32xf32>
    %57 = arith.mulf %52, %56 : vector<2x32xf32>
    %58 = vector.extract_strided_slice %9 {offsets = [2, 0], sizes = [2, 128], strides = [1, 1]} : vector<16x128xf32> to vector<2x128xf32>
    %cst_21 = arith.constant dense<0.000000e+00> : vector<2x128xf32>
    %59 = tpu.matmul %31, %3, %cst_21 {dimension_numbers = #tpu.dot_dimension_numbers<[1], [0], [0], [1], [0, 0, 1, 1], [], []>} : vector<2x32xf32>, vector<32x128xf32>, vector<2x128xf32> -> vector<2x128xf32>
    %60 = arith.addf %58, %59 : vector<2x128xf32>
    %61 = arith.negf %60 : vector<2x128xf32>
    %62 = math.exp %61 : vector<2x128xf32>
    %cst_22 = arith.constant 1.000000e+00 : f32
    %63 = vector.broadcast %cst_22 : f32 to vector<2x128xf32>
    %64 = arith.addf %63, %62 : vector<2x128xf32>
    %65 = arith.divf %63, %64 : vector<2x128xf32>
    %66 = vector.extract_strided_slice %65 {offsets = [0, 0], sizes = [2, 32], strides = [1, 1]} : vector<2x128xf32> to vector<2x32xf32>
    %67 = vector.extract_strided_slice %65 {offsets = [0, 32], sizes = [2, 32], strides = [1, 1]} : vector<2x128xf32> to vector<2x32xf32>
    %68 = vector.extract_strided_slice %65 {offsets = [0, 64], sizes = [2, 32], strides = [1, 1]} : vector<2x128xf32> to vector<2x32xf32>
    %cst_23 = arith.constant 2.000000e+00 : f32
    %69 = vector.broadcast %cst_23 : f32 to vector<2x32xf32>
    %70 = arith.mulf %69, %68 : vector<2x32xf32>
    %cst_24 = arith.constant 1.000000e+00 : f32
    %71 = vector.broadcast %cst_24 : f32 to vector<2x32xf32>
    %72 = arith.subf %70, %71 : vector<2x32xf32>
    %73 = vector.extract_strided_slice %65 {offsets = [0, 96], sizes = [2, 32], strides = [1, 1]} : vector<2x128xf32> to vector<2x32xf32>
    %74 = arith.mulf %67, %29 : vector<2x32xf32>
    %75 = arith.mulf %66, %72 : vector<2x32xf32>
    %76 = arith.addf %74, %75 : vector<2x32xf32>
    %77 = math.tanh %76 : vector<2x32xf32>
    %78 = arith.mulf %73, %77 : vector<2x32xf32>
    %79 = tpu.concatenate %57, %10 in 1 : vector<2x32xf32>, vector<2x32xf32> -> vector<2x64xf32>
    %c2 = arith.constant 2 : index
    %c0_25 = arith.constant 0 : index
    %c0_26 = arith.constant 0 : index
    %80 = vector.load %arg1[%c2, %c0_25, %c0_26] : memref<10x64x128xf32, #tpu.memory_space<vmem>>, vector<1x64x128xf32>
    %81 = vector.shape_cast %80 : vector<1x64x128xf32> to vector<64x128xf32>
    %cst_27 = arith.constant dense<0.000000e+00> : vector<2x128xf32>
    %82 = tpu.matmul %79, %81, %cst_27 {dimension_numbers = #tpu.dot_dimension_numbers<[1], [0], [0], [1], [0, 0, 1, 1], [], []>} : vector<2x64xf32>, vector<64x128xf32>, vector<2x128xf32> -> vector<2x128xf32>
    %c2_28 = arith.constant 2 : index
    %c0_29 = arith.constant 0 : index
    %c0_30 = arith.constant 0 : index
    %83 = vector.load %arg2[%c2_28, %c0_29, %c0_30] : memref<10x1x128xf32, #tpu.memory_space<vmem>>, vector<1x1x128xf32>
    %84 = vector.shape_cast %83 : vector<1x1x128xf32> to vector<1x128xf32>
    %85 = vector.broadcast %84 : vector<1x128xf32> to vector<2x128xf32>
    %86 = arith.addf %82, %85 : vector<2x128xf32>
    %87 = arith.negf %86 : vector<2x128xf32>
    %88 = math.exp %87 : vector<2x128xf32>
    %cst_31 = arith.constant 1.000000e+00 : f32
    %89 = vector.broadcast %cst_31 : f32 to vector<2x128xf32>
    %90 = arith.addf %89, %88 : vector<2x128xf32>
    %91 = arith.divf %89, %90 : vector<2x128xf32>
    %92 = vector.extract_strided_slice %91 {offsets = [0, 0], sizes = [2, 32], strides = [1, 1]} : vector<2x128xf32> to vector<2x32xf32>
    %93 = vector.extract_strided_slice %91 {offsets = [0, 32], sizes = [2, 32], strides = [1, 1]} : vector<2x128xf32> to vector<2x32xf32>
    %94 = vector.extract_strided_slice %91 {offsets = [0, 64], sizes = [2, 32], strides = [1, 1]} : vector<2x128xf32> to vector<2x32xf32>
    %cst_32 = arith.constant 2.000000e+00 : f32
    %95 = vector.broadcast %cst_32 : f32 to vector<2x32xf32>
    %96 = arith.mulf %95, %94 : vector<2x32xf32>
    %cst_33 = arith.constant 1.000000e+00 : f32
    %97 = vector.broadcast %cst_33 : f32 to vector<2x32xf32>
    %98 = arith.subf %96, %97 : vector<2x32xf32>
    %99 = vector.extract_strided_slice %91 {offsets = [0, 96], sizes = [2, 32], strides = [1, 1]} : vector<2x128xf32> to vector<2x32xf32>
    %100 = arith.mulf %93, %10 : vector<2x32xf32>
    %101 = arith.mulf %92, %98 : vector<2x32xf32>
    %102 = arith.addf %100, %101 : vector<2x32xf32>
    %103 = math.tanh %102 : vector<2x32xf32>
    %104 = arith.mulf %99, %103 : vector<2x32xf32>
    %105 = tpu.concatenate %78, %57 in 1 : vector<2x32xf32>, vector<2x32xf32> -> vector<2x64xf32>
    %c1_34 = arith.constant 1 : index
    %c0_35 = arith.constant 0 : index
    %c0_36 = arith.constant 0 : index
    %106 = vector.load %arg1[%c1_34, %c0_35, %c0_36] : memref<10x64x128xf32, #tpu.memory_space<vmem>>, vector<1x64x128xf32>
    %107 = vector.shape_cast %106 : vector<1x64x128xf32> to vector<64x128xf32>
    %cst_37 = arith.constant dense<0.000000e+00> : vector<2x128xf32>
    %108 = tpu.matmul %105, %107, %cst_37 {dimension_numbers = #tpu.dot_dimension_numbers<[1], [0], [0], [1], [0, 0, 1, 1], [], []>} : vector<2x64xf32>, vector<64x128xf32>, vector<2x128xf32> -> vector<2x128xf32>
    %c1_38 = arith.constant 1 : index
    %c0_39 = arith.constant 0 : index
    %c0_40 = arith.constant 0 : index
    %109 = vector.load %arg2[%c1_38, %c0_39, %c0_40] : memref<10x1x128xf32, #tpu.memory_space<vmem>>, vector<1x1x128xf32>
    %110 = vector.shape_cast %109 : vector<1x1x128xf32> to vector<1x128xf32>
    %111 = vector.broadcast %110 : vector<1x128xf32> to vector<2x128xf32>
    %112 = arith.addf %108, %111 : vector<2x128xf32>
    %113 = arith.negf %112 : vector<2x128xf32>
    %114 = math.exp %113 : vector<2x128xf32>
    %cst_41 = arith.constant 1.000000e+00 : f32
    %115 = vector.broadcast %cst_41 : f32 to vector<2x128xf32>
    %116 = arith.addf %115, %114 : vector<2x128xf32>
    %117 = arith.divf %115, %116 : vector<2x128xf32>
    %118 = vector.extract_strided_slice %117 {offsets = [0, 0], sizes = [2, 32], strides = [1, 1]} : vector<2x128xf32> to vector<2x32xf32>
    %119 = vector.extract_strided_slice %117 {offsets = [0, 32], sizes = [2, 32], strides = [1, 1]} : vector<2x128xf32> to vector<2x32xf32>
    %120 = vector.extract_strided_slice %117 {offsets = [0, 64], sizes = [2, 32], strides = [1, 1]} : vector<2x128xf32> to vector<2x32xf32>
    %cst_42 = arith.constant 2.000000e+00 : f32
    %121 = vector.broadcast %cst_42 : f32 to vector<2x32xf32>
    %122 = arith.mulf %121, %120 : vector<2x32xf32>
    %cst_43 = arith.constant 1.000000e+00 : f32
    %123 = vector.broadcast %cst_43 : f32 to vector<2x32xf32>
    %124 = arith.subf %122, %123 : vector<2x32xf32>
    %125 = vector.extract_strided_slice %117 {offsets = [0, 96], sizes = [2, 32], strides = [1, 1]} : vector<2x128xf32> to vector<2x32xf32>
    %126 = arith.mulf %119, %55 : vector<2x32xf32>
    %127 = arith.mulf %118, %124 : vector<2x32xf32>
    %128 = arith.addf %126, %127 : vector<2x32xf32>
    %129 = math.tanh %128 : vector<2x32xf32>
    %130 = arith.mulf %125, %129 : vector<2x32xf32>
    %131 = vector.extract_strided_slice %9 {offsets = [4, 0], sizes = [2, 128], strides = [1, 1]} : vector<16x128xf32> to vector<2x128xf32>
    %cst_44 = arith.constant dense<0.000000e+00> : vector<2x128xf32>
    %132 = tpu.matmul %78, %3, %cst_44 {dimension_numbers = #tpu.dot_dimension_numbers<[1], [0], [0], [1], [0, 0, 1, 1], [], []>} : vector<2x32xf32>, vector<32x128xf32>, vector<2x128xf32> -> vector<2x128xf32>
    %133 = arith.addf %131, %132 : vector<2x128xf32>
    %134 = arith.negf %133 : vector<2x128xf32>
    %135 = math.exp %134 : vector<2x128xf32>
    %cst_45 = arith.constant 1.000000e+00 : f32
    %136 = vector.broadcast %cst_45 : f32 to vector<2x128xf32>
    %137 = arith.addf %136, %135 : vector<2x128xf32>
    %138 = arith.divf %136, %137 : vector<2x128xf32>
    %139 = vector.extract_strided_slice %138 {offsets = [0, 0], sizes = [2, 32], strides = [1, 1]} : vector<2x128xf32> to vector<2x32xf32>
    %140 = vector.extract_strided_slice %138 {offsets = [0, 32], sizes = [2, 32], strides = [1, 1]} : vector<2x128xf32> to vector<2x32xf32>
    %141 = vector.extract_strided_slice %138 {offsets = [0, 64], sizes = [2, 32], strides = [1, 1]} : vector<2x128xf32> to vector<2x32xf32>
    %cst_46 = arith.constant 2.000000e+00 : f32
    %142 = vector.broadcast %cst_46 : f32 to vector<2x32xf32>
    %143 = arith.mulf %142, %141 : vector<2x32xf32>
    %cst_47 = arith.constant 1.000000e+00 : f32
    %144 = vector.broadcast %cst_47 : f32 to vector<2x32xf32>
    %145 = arith.subf %143, %144 : vector<2x32xf32>
    %146 = vector.extract_strided_slice %138 {offsets = [0, 96], sizes = [2, 32], strides = [1, 1]} : vector<2x128xf32> to vector<2x32xf32>
    %147 = arith.mulf %140, %76 : vector<2x32xf32>
    %148 = arith.mulf %139, %145 : vector<2x32xf32>
    %149 = arith.addf %147, %148 : vector<2x32xf32>
    %150 = math.tanh %149 : vector<2x32xf32>
    %151 = arith.mulf %146, %150 : vector<2x32xf32>
    %152 = tpu.concatenate %104, %10 in 1 : vector<2x32xf32>, vector<2x32xf32> -> vector<2x64xf32>
    %c3 = arith.constant 3 : index
    %c0_48 = arith.constant 0 : index
    %c0_49 = arith.constant 0 : index
    %153 = vector.load %arg1[%c3, %c0_48, %c0_49] : memref<10x64x128xf32, #tpu.memory_space<vmem>>, vector<1x64x128xf32>
    %154 = vector.shape_cast %153 : vector<1x64x128xf32> to vector<64x128xf32>
    %cst_50 = arith.constant dense<0.000000e+00> : vector<2x128xf32>
    %155 = tpu.matmul %152, %154, %cst_50 {dimension_numbers = #tpu.dot_dimension_numbers<[1], [0], [0], [1], [0, 0, 1, 1], [], []>} : vector<2x64xf32>, vector<64x128xf32>, vector<2x128xf32> -> vector<2x128xf32>
    %c3_51 = arith.constant 3 : index
    %c0_52 = arith.constant 0 : index
    %c0_53 = arith.constant 0 : index
    %156 = vector.load %arg2[%c3_51, %c0_52, %c0_53] : memref<10x1x128xf32, #tpu.memory_space<vmem>>, vector<1x1x128xf32>
    %157 = vector.shape_cast %156 : vector<1x1x128xf32> to vector<1x128xf32>
    %158 = vector.broadcast %157 : vector<1x128xf32> to vector<2x128xf32>
    %159 = arith.addf %155, %158 : vector<2x128xf32>
    %160 = arith.negf %159 : vector<2x128xf32>
    %161 = math.exp %160 : vector<2x128xf32>
    %cst_54 = arith.constant 1.000000e+00 : f32
    %162 = vector.broadcast %cst_54 : f32 to vector<2x128xf32>
    %163 = arith.addf %162, %161 : vector<2x128xf32>
    %164 = arith.divf %162, %163 : vector<2x128xf32>
    %165 = vector.extract_strided_slice %164 {offsets = [0, 0], sizes = [2, 32], strides = [1, 1]} : vector<2x128xf32> to vector<2x32xf32>
    %166 = vector.extract_strided_slice %164 {offsets = [0, 32], sizes = [2, 32], strides = [1, 1]} : vector<2x128xf32> to vector<2x32xf32>
    %167 = vector.extract_strided_slice %164 {offsets = [0, 64], sizes = [2, 32], strides = [1, 1]} : vector<2x128xf32> to vector<2x32xf32>
    %cst_55 = arith.constant 2.000000e+00 : f32
    %168 = vector.broadcast %cst_55 : f32 to vector<2x32xf32>
    %169 = arith.mulf %168, %167 : vector<2x32xf32>
    %cst_56 = arith.constant 1.000000e+00 : f32
    %170 = vector.broadcast %cst_56 : f32 to vector<2x32xf32>
    %171 = arith.subf %169, %170 : vector<2x32xf32>
    %172 = vector.extract_strided_slice %164 {offsets = [0, 96], sizes = [2, 32], strides = [1, 1]} : vector<2x128xf32> to vector<2x32xf32>
    %173 = arith.mulf %166, %10 : vector<2x32xf32>
    %174 = arith.mulf %165, %171 : vector<2x32xf32>
    %175 = arith.addf %173, %174 : vector<2x32xf32>
    %176 = math.tanh %175 : vector<2x32xf32>
    %177 = arith.mulf %172, %176 : vector<2x32xf32>
    %178 = tpu.concatenate %130, %104 in 1 : vector<2x32xf32>, vector<2x32xf32> -> vector<2x64xf32>
    %c2_57 = arith.constant 2 : index
    %c0_58 = arith.constant 0 : index
    %c0_59 = arith.constant 0 : index
    %179 = vector.load %arg1[%c2_57, %c0_58, %c0_59] : memref<10x64x128xf32, #tpu.memory_space<vmem>>, vector<1x64x128xf32>
    %180 = vector.shape_cast %179 : vector<1x64x128xf32> to vector<64x128xf32>
    %cst_60 = arith.constant dense<0.000000e+00> : vector<2x128xf32>
    %181 = tpu.matmul %178, %180, %cst_60 {dimension_numbers = #tpu.dot_dimension_numbers<[1], [0], [0], [1], [0, 0, 1, 1], [], []>} : vector<2x64xf32>, vector<64x128xf32>, vector<2x128xf32> -> vector<2x128xf32>
    %c2_61 = arith.constant 2 : index
    %c0_62 = arith.constant 0 : index
    %c0_63 = arith.constant 0 : index
    %182 = vector.load %arg2[%c2_61, %c0_62, %c0_63] : memref<10x1x128xf32, #tpu.memory_space<vmem>>, vector<1x1x128xf32>
    %183 = vector.shape_cast %182 : vector<1x1x128xf32> to vector<1x128xf32>
    %184 = vector.broadcast %183 : vector<1x128xf32> to vector<2x128xf32>
    %185 = arith.addf %181, %184 : vector<2x128xf32>
    %186 = arith.negf %185 : vector<2x128xf32>
    %187 = math.exp %186 : vector<2x128xf32>
    %cst_64 = arith.constant 1.000000e+00 : f32
    %188 = vector.broadcast %cst_64 : f32 to vector<2x128xf32>
    %189 = arith.addf %188, %187 : vector<2x128xf32>
    %190 = arith.divf %188, %189 : vector<2x128xf32>
    %191 = vector.extract_strided_slice %190 {offsets = [0, 0], sizes = [2, 32], strides = [1, 1]} : vector<2x128xf32> to vector<2x32xf32>
    %192 = vector.extract_strided_slice %190 {offsets = [0, 32], sizes = [2, 32], strides = [1, 1]} : vector<2x128xf32> to vector<2x32xf32>
    %193 = vector.extract_strided_slice %190 {offsets = [0, 64], sizes = [2, 32], strides = [1, 1]} : vector<2x128xf32> to vector<2x32xf32>
    %cst_65 = arith.constant 2.000000e+00 : f32
    %194 = vector.broadcast %cst_65 : f32 to vector<2x32xf32>
    %195 = arith.mulf %194, %193 : vector<2x32xf32>
    %cst_66 = arith.constant 1.000000e+00 : f32
    %196 = vector.broadcast %cst_66 : f32 to vector<2x32xf32>
    %197 = arith.subf %195, %196 : vector<2x32xf32>
    %198 = vector.extract_strided_slice %190 {offsets = [0, 96], sizes = [2, 32], strides = [1, 1]} : vector<2x128xf32> to vector<2x32xf32>
    %199 = arith.mulf %192, %102 : vector<2x32xf32>
    %200 = arith.mulf %191, %197 : vector<2x32xf32>
    %201 = arith.addf %199, %200 : vector<2x32xf32>
    %202 = math.tanh %201 : vector<2x32xf32>
    %203 = arith.mulf %198, %202 : vector<2x32xf32>
    %204 = tpu.concatenate %151, %130 in 1 : vector<2x32xf32>, vector<2x32xf32> -> vector<2x64xf32>
    %c1_67 = arith.constant 1 : index
    %c0_68 = arith.constant 0 : index
    %c0_69 = arith.constant 0 : index
    %205 = vector.load %arg1[%c1_67, %c0_68, %c0_69] : memref<10x64x128xf32, #tpu.memory_space<vmem>>, vector<1x64x128xf32>
    %206 = vector.shape_cast %205 : vector<1x64x128xf32> to vector<64x128xf32>
    %cst_70 = arith.constant dense<0.000000e+00> : vector<2x128xf32>
    %207 = tpu.matmul %204, %206, %cst_70 {dimension_numbers = #tpu.dot_dimension_numbers<[1], [0], [0], [1], [0, 0, 1, 1], [], []>} : vector<2x64xf32>, vector<64x128xf32>, vector<2x128xf32> -> vector<2x128xf32>
    %c1_71 = arith.constant 1 : index
    %c0_72 = arith.constant 0 : index
    %c0_73 = arith.constant 0 : index
    %208 = vector.load %arg2[%c1_71, %c0_72, %c0_73] : memref<10x1x128xf32, #tpu.memory_space<vmem>>, vector<1x1x128xf32>
    %209 = vector.shape_cast %208 : vector<1x1x128xf32> to vector<1x128xf32>
    %210 = vector.broadcast %209 : vector<1x128xf32> to vector<2x128xf32>
    %211 = arith.addf %207, %210 : vector<2x128xf32>
    %212 = arith.negf %211 : vector<2x128xf32>
    %213 = math.exp %212 : vector<2x128xf32>
    %cst_74 = arith.constant 1.000000e+00 : f32
    %214 = vector.broadcast %cst_74 : f32 to vector<2x128xf32>
    %215 = arith.addf %214, %213 : vector<2x128xf32>
    %216 = arith.divf %214, %215 : vector<2x128xf32>
    %217 = vector.extract_strided_slice %216 {offsets = [0, 0], sizes = [2, 32], strides = [1, 1]} : vector<2x128xf32> to vector<2x32xf32>
    %218 = vector.extract_strided_slice %216 {offsets = [0, 32], sizes = [2, 32], strides = [1, 1]} : vector<2x128xf32> to vector<2x32xf32>
    %219 = vector.extract_strided_slice %216 {offsets = [0, 64], sizes = [2, 32], strides = [1, 1]} : vector<2x128xf32> to vector<2x32xf32>
    %cst_75 = arith.constant 2.000000e+00 : f32
    %220 = vector.broadcast %cst_75 : f32 to vector<2x32xf32>
    %221 = arith.mulf %220, %219 : vector<2x32xf32>
    %cst_76 = arith.constant 1.000000e+00 : f32
    %222 = vector.broadcast %cst_76 : f32 to vector<2x32xf32>
    %223 = arith.subf %221, %222 : vector<2x32xf32>
    %224 = vector.extract_strided_slice %216 {offsets = [0, 96], sizes = [2, 32], strides = [1, 1]} : vector<2x128xf32> to vector<2x32xf32>
    %225 = arith.mulf %218, %128 : vector<2x32xf32>
    %226 = arith.mulf %217, %223 : vector<2x32xf32>
    %227 = arith.addf %225, %226 : vector<2x32xf32>
    %228 = math.tanh %227 : vector<2x32xf32>
    %229 = arith.mulf %224, %228 : vector<2x32xf32>
    %230 = vector.extract_strided_slice %9 {offsets = [6, 0], sizes = [2, 128], strides = [1, 1]} : vector<16x128xf32> to vector<2x128xf32>
    %cst_77 = arith.constant dense<0.000000e+00> : vector<2x128xf32>
    %231 = tpu.matmul %151, %3, %cst_77 {dimension_numbers = #tpu.dot_dimension_numbers<[1], [0], [0], [1], [0, 0, 1, 1], [], []>} : vector<2x32xf32>, vector<32x128xf32>, vector<2x128xf32> -> vector<2x128xf32>
    %232 = arith.addf %230, %231 : vector<2x128xf32>
    %233 = arith.negf %232 : vector<2x128xf32>
    %234 = math.exp %233 : vector<2x128xf32>
    %cst_78 = arith.constant 1.000000e+00 : f32
    %235 = vector.broadcast %cst_78 : f32 to vector<2x128xf32>
    %236 = arith.addf %235, %234 : vector<2x128xf32>
    %237 = arith.divf %235, %236 : vector<2x128xf32>
    %238 = vector.extract_strided_slice %237 {offsets = [0, 0], sizes = [2, 32], strides = [1, 1]} : vector<2x128xf32> to vector<2x32xf32>
    %239 = vector.extract_strided_slice %237 {offsets = [0, 32], sizes = [2, 32], strides = [1, 1]} : vector<2x128xf32> to vector<2x32xf32>
    %240 = vector.extract_strided_slice %237 {offsets = [0, 64], sizes = [2, 32], strides = [1, 1]} : vector<2x128xf32> to vector<2x32xf32>
    %cst_79 = arith.constant 2.000000e+00 : f32
    %241 = vector.broadcast %cst_79 : f32 to vector<2x32xf32>
    %242 = arith.mulf %241, %240 : vector<2x32xf32>
    %cst_80 = arith.constant 1.000000e+00 : f32
    %243 = vector.broadcast %cst_80 : f32 to vector<2x32xf32>
    %244 = arith.subf %242, %243 : vector<2x32xf32>
    %245 = vector.extract_strided_slice %237 {offsets = [0, 96], sizes = [2, 32], strides = [1, 1]} : vector<2x128xf32> to vector<2x32xf32>
    %246 = arith.mulf %239, %149 : vector<2x32xf32>
    %247 = arith.mulf %238, %244 : vector<2x32xf32>
    %248 = arith.addf %246, %247 : vector<2x32xf32>
    %249 = math.tanh %248 : vector<2x32xf32>
    %250 = arith.mulf %245, %249 : vector<2x32xf32>
    %251 = tpu.concatenate %177, %10 in 1 : vector<2x32xf32>, vector<2x32xf32> -> vector<2x64xf32>
    %c4 = arith.constant 4 : index
    %c0_81 = arith.constant 0 : index
    %c0_82 = arith.constant 0 : index
    %252 = vector.load %arg1[%c4, %c0_81, %c0_82] : memref<10x64x128xf32, #tpu.memory_space<vmem>>, vector<1x64x128xf32>
    %253 = vector.shape_cast %252 : vector<1x64x128xf32> to vector<64x128xf32>
    %cst_83 = arith.constant dense<0.000000e+00> : vector<2x128xf32>
    %254 = tpu.matmul %251, %253, %cst_83 {dimension_numbers = #tpu.dot_dimension_numbers<[1], [0], [0], [1], [0, 0, 1, 1], [], []>} : vector<2x64xf32>, vector<64x128xf32>, vector<2x128xf32> -> vector<2x128xf32>
    %c4_84 = arith.constant 4 : index
    %c0_85 = arith.constant 0 : index
    %c0_86 = arith.constant 0 : index
    %255 = vector.load %arg2[%c4_84, %c0_85, %c0_86] : memref<10x1x128xf32, #tpu.memory_space<vmem>>, vector<1x1x128xf32>
    %256 = vector.shape_cast %255 : vector<1x1x128xf32> to vector<1x128xf32>
    %257 = vector.broadcast %256 : vector<1x128xf32> to vector<2x128xf32>
    %258 = arith.addf %254, %257 : vector<2x128xf32>
    %259 = arith.negf %258 : vector<2x128xf32>
    %260 = math.exp %259 : vector<2x128xf32>
    %cst_87 = arith.constant 1.000000e+00 : f32
    %261 = vector.broadcast %cst_87 : f32 to vector<2x128xf32>
    %262 = arith.addf %261, %260 : vector<2x128xf32>
    %263 = arith.divf %261, %262 : vector<2x128xf32>
    %264 = vector.extract_strided_slice %263 {offsets = [0, 0], sizes = [2, 32], strides = [1, 1]} : vector<2x128xf32> to vector<2x32xf32>
    %265 = vector.extract_strided_slice %263 {offsets = [0, 32], sizes = [2, 32], strides = [1, 1]} : vector<2x128xf32> to vector<2x32xf32>
    %266 = vector.extract_strided_slice %263 {offsets = [0, 64], sizes = [2, 32], strides = [1, 1]} : vector<2x128xf32> to vector<2x32xf32>
    %cst_88 = arith.constant 2.000000e+00 : f32
    %267 = vector.broadcast %cst_88 : f32 to vector<2x32xf32>
    %268 = arith.mulf %267, %266 : vector<2x32xf32>
    %cst_89 = arith.constant 1.000000e+00 : f32
    %269 = vector.broadcast %cst_89 : f32 to vector<2x32xf32>
    %270 = arith.subf %268, %269 : vector<2x32xf32>
    %271 = vector.extract_strided_slice %263 {offsets = [0, 96], sizes = [2, 32], strides = [1, 1]} : vector<2x128xf32> to vector<2x32xf32>
    %272 = arith.mulf %265, %10 : vector<2x32xf32>
    %273 = arith.mulf %264, %270 : vector<2x32xf32>
    %274 = arith.addf %272, %273 : vector<2x32xf32>
    %275 = math.tanh %274 : vector<2x32xf32>
    %276 = arith.mulf %271, %275 : vector<2x32xf32>
    %277 = tpu.concatenate %203, %177 in 1 : vector<2x32xf32>, vector<2x32xf32> -> vector<2x64xf32>
    %c3_90 = arith.constant 3 : index
    %c0_91 = arith.constant 0 : index
    %c0_92 = arith.constant 0 : index
    %278 = vector.load %arg1[%c3_90, %c0_91, %c0_92] : memref<10x64x128xf32, #tpu.memory_space<vmem>>, vector<1x64x128xf32>
    %279 = vector.shape_cast %278 : vector<1x64x128xf32> to vector<64x128xf32>
    %cst_93 = arith.constant dense<0.000000e+00> : vector<2x128xf32>
    %280 = tpu.matmul %277, %279, %cst_93 {dimension_numbers = #tpu.dot_dimension_numbers<[1], [0], [0], [1], [0, 0, 1, 1], [], []>} : vector<2x64xf32>, vector<64x128xf32>, vector<2x128xf32> -> vector<2x128xf32>
    %c3_94 = arith.constant 3 : index
    %c0_95 = arith.constant 0 : index
    %c0_96 = arith.constant 0 : index
    %281 = vector.load %arg2[%c3_94, %c0_95, %c0_96] : memref<10x1x128xf32, #tpu.memory_space<vmem>>, vector<1x1x128xf32>
    %282 = vector.shape_cast %281 : vector<1x1x128xf32> to vector<1x128xf32>
    %283 = vector.broadcast %282 : vector<1x128xf32> to vector<2x128xf32>
    %284 = arith.addf %280, %283 : vector<2x128xf32>
    %285 = arith.negf %284 : vector<2x128xf32>
    %286 = math.exp %285 : vector<2x128xf32>
    %cst_97 = arith.constant 1.000000e+00 : f32
    %287 = vector.broadcast %cst_97 : f32 to vector<2x128xf32>
    %288 = arith.addf %287, %286 : vector<2x128xf32>
    %289 = arith.divf %287, %288 : vector<2x128xf32>
    %290 = vector.extract_strided_slice %289 {offsets = [0, 0], sizes = [2, 32], strides = [1, 1]} : vector<2x128xf32> to vector<2x32xf32>
    %291 = vector.extract_strided_slice %289 {offsets = [0, 32], sizes = [2, 32], strides = [1, 1]} : vector<2x128xf32> to vector<2x32xf32>
    %292 = vector.extract_strided_slice %289 {offsets = [0, 64], sizes = [2, 32], strides = [1, 1]} : vector<2x128xf32> to vector<2x32xf32>
    %cst_98 = arith.constant 2.000000e+00 : f32
    %293 = vector.broadcast %cst_98 : f32 to vector<2x32xf32>
    %294 = arith.mulf %293, %292 : vector<2x32xf32>
    %cst_99 = arith.constant 1.000000e+00 : f32
    %295 = vector.broadcast %cst_99 : f32 to vector<2x32xf32>
    %296 = arith.subf %294, %295 : vector<2x32xf32>
    %297 = vector.extract_strided_slice %289 {offsets = [0, 96], sizes = [2, 32], strides = [1, 1]} : vector<2x128xf32> to vector<2x32xf32>
    %298 = arith.mulf %291, %175 : vector<2x32xf32>
    %299 = arith.mulf %290, %296 : vector<2x32xf32>
    %300 = arith.addf %298, %299 : vector<2x32xf32>
    %301 = math.tanh %300 : vector<2x32xf32>
    %302 = arith.mulf %297, %301 : vector<2x32xf32>
    %303 = tpu.concatenate %229, %203 in 1 : vector<2x32xf32>, vector<2x32xf32> -> vector<2x64xf32>
    %c2_100 = arith.constant 2 : index
    %c0_101 = arith.constant 0 : index
    %c0_102 = arith.constant 0 : index
    %304 = vector.load %arg1[%c2_100, %c0_101, %c0_102] : memref<10x64x128xf32, #tpu.memory_space<vmem>>, vector<1x64x128xf32>
    %305 = vector.shape_cast %304 : vector<1x64x128xf32> to vector<64x128xf32>
    %cst_103 = arith.constant dense<0.000000e+00> : vector<2x128xf32>
    %306 = tpu.matmul %303, %305, %cst_103 {dimension_numbers = #tpu.dot_dimension_numbers<[1], [0], [0], [1], [0, 0, 1, 1], [], []>} : vector<2x64xf32>, vector<64x128xf32>, vector<2x128xf32> -> vector<2x128xf32>
    %c2_104 = arith.constant 2 : index
    %c0_105 = arith.constant 0 : index
    %c0_106 = arith.constant 0 : index
    %307 = vector.load %arg2[%c2_104, %c0_105, %c0_106] : memref<10x1x128xf32, #tpu.memory_space<vmem>>, vector<1x1x128xf32>
    %308 = vector.shape_cast %307 : vector<1x1x128xf32> to vector<1x128xf32>
    %309 = vector.broadcast %308 : vector<1x128xf32> to vector<2x128xf32>
    %310 = arith.addf %306, %309 : vector<2x128xf32>
    %311 = arith.negf %310 : vector<2x128xf32>
    %312 = math.exp %311 : vector<2x128xf32>
    %cst_107 = arith.constant 1.000000e+00 : f32
    %313 = vector.broadcast %cst_107 : f32 to vector<2x128xf32>
    %314 = arith.addf %313, %312 : vector<2x128xf32>
    %315 = arith.divf %313, %314 : vector<2x128xf32>
    %316 = vector.extract_strided_slice %315 {offsets = [0, 0], sizes = [2, 32], strides = [1, 1]} : vector<2x128xf32> to vector<2x32xf32>
    %317 = vector.extract_strided_slice %315 {offsets = [0, 32], sizes = [2, 32], strides = [1, 1]} : vector<2x128xf32> to vector<2x32xf32>
    %318 = vector.extract_strided_slice %315 {offsets = [0, 64], sizes = [2, 32], strides = [1, 1]} : vector<2x128xf32> to vector<2x32xf32>
    %cst_108 = arith.constant 2.000000e+00 : f32
    %319 = vector.broadcast %cst_108 : f32 to vector<2x32xf32>
    %320 = arith.mulf %319, %318 : vector<2x32xf32>
    %cst_109 = arith.constant 1.000000e+00 : f32
    %321 = vector.broadcast %cst_109 : f32 to vector<2x32xf32>
    %322 = arith.subf %320, %321 : vector<2x32xf32>
    %323 = vector.extract_strided_slice %315 {offsets = [0, 96], sizes = [2, 32], strides = [1, 1]} : vector<2x128xf32> to vector<2x32xf32>
    %324 = arith.mulf %317, %201 : vector<2x32xf32>
    %325 = arith.mulf %316, %322 : vector<2x32xf32>
    %326 = arith.addf %324, %325 : vector<2x32xf32>
    %327 = math.tanh %326 : vector<2x32xf32>
    %328 = arith.mulf %323, %327 : vector<2x32xf32>
    %329 = tpu.concatenate %250, %229 in 1 : vector<2x32xf32>, vector<2x32xf32> -> vector<2x64xf32>
    %c1_110 = arith.constant 1 : index
    %c0_111 = arith.constant 0 : index
    %c0_112 = arith.constant 0 : index
    %330 = vector.load %arg1[%c1_110, %c0_111, %c0_112] : memref<10x64x128xf32, #tpu.memory_space<vmem>>, vector<1x64x128xf32>
    %331 = vector.shape_cast %330 : vector<1x64x128xf32> to vector<64x128xf32>
    %cst_113 = arith.constant dense<0.000000e+00> : vector<2x128xf32>
    %332 = tpu.matmul %329, %331, %cst_113 {dimension_numbers = #tpu.dot_dimension_numbers<[1], [0], [0], [1], [0, 0, 1, 1], [], []>} : vector<2x64xf32>, vector<64x128xf32>, vector<2x128xf32> -> vector<2x128xf32>
    %c1_114 = arith.constant 1 : index
    %c0_115 = arith.constant 0 : index
    %c0_116 = arith.constant 0 : index
    %333 = vector.load %arg2[%c1_114, %c0_115, %c0_116] : memref<10x1x128xf32, #tpu.memory_space<vmem>>, vector<1x1x128xf32>
    %334 = vector.shape_cast %333 : vector<1x1x128xf32> to vector<1x128xf32>
    %335 = vector.broadcast %334 : vector<1x128xf32> to vector<2x128xf32>
    %336 = arith.addf %332, %335 : vector<2x128xf32>
    %337 = arith.negf %336 : vector<2x128xf32>
    %338 = math.exp %337 : vector<2x128xf32>
    %cst_117 = arith.constant 1.000000e+00 : f32
    %339 = vector.broadcast %cst_117 : f32 to vector<2x128xf32>
    %340 = arith.addf %339, %338 : vector<2x128xf32>
    %341 = arith.divf %339, %340 : vector<2x128xf32>
    %342 = vector.extract_strided_slice %341 {offsets = [0, 0], sizes = [2, 32], strides = [1, 1]} : vector<2x128xf32> to vector<2x32xf32>
    %343 = vector.extract_strided_slice %341 {offsets = [0, 32], sizes = [2, 32], strides = [1, 1]} : vector<2x128xf32> to vector<2x32xf32>
    %344 = vector.extract_strided_slice %341 {offsets = [0, 64], sizes = [2, 32], strides = [1, 1]} : vector<2x128xf32> to vector<2x32xf32>
    %cst_118 = arith.constant 2.000000e+00 : f32
    %345 = vector.broadcast %cst_118 : f32 to vector<2x32xf32>
    %346 = arith.mulf %345, %344 : vector<2x32xf32>
    %cst_119 = arith.constant 1.000000e+00 : f32
    %347 = vector.broadcast %cst_119 : f32 to vector<2x32xf32>
    %348 = arith.subf %346, %347 : vector<2x32xf32>
    %349 = vector.extract_strided_slice %341 {offsets = [0, 96], sizes = [2, 32], strides = [1, 1]} : vector<2x128xf32> to vector<2x32xf32>
    %350 = arith.mulf %343, %227 : vector<2x32xf32>
    %351 = arith.mulf %342, %348 : vector<2x32xf32>
    %352 = arith.addf %350, %351 : vector<2x32xf32>
    %353 = math.tanh %352 : vector<2x32xf32>
    %354 = arith.mulf %349, %353 : vector<2x32xf32>
    %355 = vector.extract_strided_slice %9 {offsets = [8, 0], sizes = [2, 128], strides = [1, 1]} : vector<16x128xf32> to vector<2x128xf32>
    %cst_120 = arith.constant dense<0.000000e+00> : vector<2x128xf32>
    %356 = tpu.matmul %250, %3, %cst_120 {dimension_numbers = #tpu.dot_dimension_numbers<[1], [0], [0], [1], [0, 0, 1, 1], [], []>} : vector<2x32xf32>, vector<32x128xf32>, vector<2x128xf32> -> vector<2x128xf32>
    %357 = arith.addf %355, %356 : vector<2x128xf32>
    %358 = arith.negf %357 : vector<2x128xf32>
    %359 = math.exp %358 : vector<2x128xf32>
    %cst_121 = arith.constant 1.000000e+00 : f32
    %360 = vector.broadcast %cst_121 : f32 to vector<2x128xf32>
    %361 = arith.addf %360, %359 : vector<2x128xf32>
    %362 = arith.divf %360, %361 : vector<2x128xf32>
    %363 = vector.extract_strided_slice %362 {offsets = [0, 0], sizes = [2, 32], strides = [1, 1]} : vector<2x128xf32> to vector<2x32xf32>
    %364 = vector.extract_strided_slice %362 {offsets = [0, 32], sizes = [2, 32], strides = [1, 1]} : vector<2x128xf32> to vector<2x32xf32>
    %365 = vector.extract_strided_slice %362 {offsets = [0, 64], sizes = [2, 32], strides = [1, 1]} : vector<2x128xf32> to vector<2x32xf32>
    %cst_122 = arith.constant 2.000000e+00 : f32
    %366 = vector.broadcast %cst_122 : f32 to vector<2x32xf32>
    %367 = arith.mulf %366, %365 : vector<2x32xf32>
    %cst_123 = arith.constant 1.000000e+00 : f32
    %368 = vector.broadcast %cst_123 : f32 to vector<2x32xf32>
    %369 = arith.subf %367, %368 : vector<2x32xf32>
    %370 = vector.extract_strided_slice %362 {offsets = [0, 96], sizes = [2, 32], strides = [1, 1]} : vector<2x128xf32> to vector<2x32xf32>
    %371 = arith.mulf %364, %248 : vector<2x32xf32>
    %372 = arith.mulf %363, %369 : vector<2x32xf32>
    %373 = arith.addf %371, %372 : vector<2x32xf32>
    %374 = math.tanh %373 : vector<2x32xf32>
    %375 = arith.mulf %370, %374 : vector<2x32xf32>
    %376 = tpu.concatenate %276, %10 in 1 : vector<2x32xf32>, vector<2x32xf32> -> vector<2x64xf32>
    %c5 = arith.constant 5 : index
    %c0_124 = arith.constant 0 : index
    %c0_125 = arith.constant 0 : index
    %377 = vector.load %arg1[%c5, %c0_124, %c0_125] : memref<10x64x128xf32, #tpu.memory_space<vmem>>, vector<1x64x128xf32>
    %378 = vector.shape_cast %377 : vector<1x64x128xf32> to vector<64x128xf32>
    %cst_126 = arith.constant dense<0.000000e+00> : vector<2x128xf32>
    %379 = tpu.matmul %376, %378, %cst_126 {dimension_numbers = #tpu.dot_dimension_numbers<[1], [0], [0], [1], [0, 0, 1, 1], [], []>} : vector<2x64xf32>, vector<64x128xf32>, vector<2x128xf32> -> vector<2x128xf32>
    %c5_127 = arith.constant 5 : index
    %c0_128 = arith.constant 0 : index
    %c0_129 = arith.constant 0 : index
    %380 = vector.load %arg2[%c5_127, %c0_128, %c0_129] : memref<10x1x128xf32, #tpu.memory_space<vmem>>, vector<1x1x128xf32>
    %381 = vector.shape_cast %380 : vector<1x1x128xf32> to vector<1x128xf32>
    %382 = vector.broadcast %381 : vector<1x128xf32> to vector<2x128xf32>
    %383 = arith.addf %379, %382 : vector<2x128xf32>
    %384 = arith.negf %383 : vector<2x128xf32>
    %385 = math.exp %384 : vector<2x128xf32>
    %cst_130 = arith.constant 1.000000e+00 : f32
    %386 = vector.broadcast %cst_130 : f32 to vector<2x128xf32>
    %387 = arith.addf %386, %385 : vector<2x128xf32>
    %388 = arith.divf %386, %387 : vector<2x128xf32>
    %389 = vector.extract_strided_slice %388 {offsets = [0, 0], sizes = [2, 32], strides = [1, 1]} : vector<2x128xf32> to vector<2x32xf32>
    %390 = vector.extract_strided_slice %388 {offsets = [0, 32], sizes = [2, 32], strides = [1, 1]} : vector<2x128xf32> to vector<2x32xf32>
    %391 = vector.extract_strided_slice %388 {offsets = [0, 64], sizes = [2, 32], strides = [1, 1]} : vector<2x128xf32> to vector<2x32xf32>
    %cst_131 = arith.constant 2.000000e+00 : f32
    %392 = vector.broadcast %cst_131 : f32 to vector<2x32xf32>
    %393 = arith.mulf %392, %391 : vector<2x32xf32>
    %cst_132 = arith.constant 1.000000e+00 : f32
    %394 = vector.broadcast %cst_132 : f32 to vector<2x32xf32>
    %395 = arith.subf %393, %394 : vector<2x32xf32>
    %396 = vector.extract_strided_slice %388 {offsets = [0, 96], sizes = [2, 32], strides = [1, 1]} : vector<2x128xf32> to vector<2x32xf32>
    %397 = arith.mulf %390, %10 : vector<2x32xf32>
    %398 = arith.mulf %389, %395 : vector<2x32xf32>
    %399 = arith.addf %397, %398 : vector<2x32xf32>
    %400 = math.tanh %399 : vector<2x32xf32>
    %401 = arith.mulf %396, %400 : vector<2x32xf32>
    %402 = tpu.concatenate %302, %276 in 1 : vector<2x32xf32>, vector<2x32xf32> -> vector<2x64xf32>
    %c4_133 = arith.constant 4 : index
    %c0_134 = arith.constant 0 : index
    %c0_135 = arith.constant 0 : index
    %403 = vector.load %arg1[%c4_133, %c0_134, %c0_135] : memref<10x64x128xf32, #tpu.memory_space<vmem>>, vector<1x64x128xf32>
    %404 = vector.shape_cast %403 : vector<1x64x128xf32> to vector<64x128xf32>
    %cst_136 = arith.constant dense<0.000000e+00> : vector<2x128xf32>
    %405 = tpu.matmul %402, %404, %cst_136 {dimension_numbers = #tpu.dot_dimension_numbers<[1], [0], [0], [1], [0, 0, 1, 1], [], []>} : vector<2x64xf32>, vector<64x128xf32>, vector<2x128xf32> -> vector<2x128xf32>
    %c4_137 = arith.constant 4 : index
    %c0_138 = arith.constant 0 : index
    %c0_139 = arith.constant 0 : index
    %406 = vector.load %arg2[%c4_137, %c0_138, %c0_139] : memref<10x1x128xf32, #tpu.memory_space<vmem>>, vector<1x1x128xf32>
    %407 = vector.shape_cast %406 : vector<1x1x128xf32> to vector<1x128xf32>
    %408 = vector.broadcast %407 : vector<1x128xf32> to vector<2x128xf32>
    %409 = arith.addf %405, %408 : vector<2x128xf32>
    %410 = arith.negf %409 : vector<2x128xf32>
    %411 = math.exp %410 : vector<2x128xf32>
    %cst_140 = arith.constant 1.000000e+00 : f32
    %412 = vector.broadcast %cst_140 : f32 to vector<2x128xf32>
    %413 = arith.addf %412, %411 : vector<2x128xf32>
    %414 = arith.divf %412, %413 : vector<2x128xf32>
    %415 = vector.extract_strided_slice %414 {offsets = [0, 0], sizes = [2, 32], strides = [1, 1]} : vector<2x128xf32> to vector<2x32xf32>
    %416 = vector.extract_strided_slice %414 {offsets = [0, 32], sizes = [2, 32], strides = [1, 1]} : vector<2x128xf32> to vector<2x32xf32>
    %417 = vector.extract_strided_slice %414 {offsets = [0, 64], sizes = [2, 32], strides = [1, 1]} : vector<2x128xf32> to vector<2x32xf32>
    %cst_141 = arith.constant 2.000000e+00 : f32
    %418 = vector.broadcast %cst_141 : f32 to vector<2x32xf32>
    %419 = arith.mulf %418, %417 : vector<2x32xf32>
    %cst_142 = arith.constant 1.000000e+00 : f32
    %420 = vector.broadcast %cst_142 : f32 to vector<2x32xf32>
    %421 = arith.subf %419, %420 : vector<2x32xf32>
    %422 = vector.extract_strided_slice %414 {offsets = [0, 96], sizes = [2, 32], strides = [1, 1]} : vector<2x128xf32> to vector<2x32xf32>
    %423 = arith.mulf %416, %274 : vector<2x32xf32>
    %424 = arith.mulf %415, %421 : vector<2x32xf32>
    %425 = arith.addf %423, %424 : vector<2x32xf32>
    %426 = math.tanh %425 : vector<2x32xf32>
    %427 = arith.mulf %422, %426 : vector<2x32xf32>
    %428 = tpu.concatenate %328, %302 in 1 : vector<2x32xf32>, vector<2x32xf32> -> vector<2x64xf32>
    %c3_143 = arith.constant 3 : index
    %c0_144 = arith.constant 0 : index
    %c0_145 = arith.constant 0 : index
    %429 = vector.load %arg1[%c3_143, %c0_144, %c0_145] : memref<10x64x128xf32, #tpu.memory_space<vmem>>, vector<1x64x128xf32>
    %430 = vector.shape_cast %429 : vector<1x64x128xf32> to vector<64x128xf32>
    %cst_146 = arith.constant dense<0.000000e+00> : vector<2x128xf32>
    %431 = tpu.matmul %428, %430, %cst_146 {dimension_numbers = #tpu.dot_dimension_numbers<[1], [0], [0], [1], [0, 0, 1, 1], [], []>} : vector<2x64xf32>, vector<64x128xf32>, vector<2x128xf32> -> vector<2x128xf32>
    %c3_147 = arith.constant 3 : index
    %c0_148 = arith.constant 0 : index
    %c0_149 = arith.constant 0 : index
    %432 = vector.load %arg2[%c3_147, %c0_148, %c0_149] : memref<10x1x128xf32, #tpu.memory_space<vmem>>, vector<1x1x128xf32>
    %433 = vector.shape_cast %432 : vector<1x1x128xf32> to vector<1x128xf32>
    %434 = vector.broadcast %433 : vector<1x128xf32> to vector<2x128xf32>
    %435 = arith.addf %431, %434 : vector<2x128xf32>
    %436 = arith.negf %435 : vector<2x128xf32>
    %437 = math.exp %436 : vector<2x128xf32>
    %cst_150 = arith.constant 1.000000e+00 : f32
    %438 = vector.broadcast %cst_150 : f32 to vector<2x128xf32>
    %439 = arith.addf %438, %437 : vector<2x128xf32>
    %440 = arith.divf %438, %439 : vector<2x128xf32>
    %441 = vector.extract_strided_slice %440 {offsets = [0, 0], sizes = [2, 32], strides = [1, 1]} : vector<2x128xf32> to vector<2x32xf32>
    %442 = vector.extract_strided_slice %440 {offsets = [0, 32], sizes = [2, 32], strides = [1, 1]} : vector<2x128xf32> to vector<2x32xf32>
    %443 = vector.extract_strided_slice %440 {offsets = [0, 64], sizes = [2, 32], strides = [1, 1]} : vector<2x128xf32> to vector<2x32xf32>
    %cst_151 = arith.constant 2.000000e+00 : f32
    %444 = vector.broadcast %cst_151 : f32 to vector<2x32xf32>
    %445 = arith.mulf %444, %443 : vector<2x32xf32>
    %cst_152 = arith.constant 1.000000e+00 : f32
    %446 = vector.broadcast %cst_152 : f32 to vector<2x32xf32>
    %447 = arith.subf %445, %446 : vector<2x32xf32>
    %448 = vector.extract_strided_slice %440 {offsets = [0, 96], sizes = [2, 32], strides = [1, 1]} : vector<2x128xf32> to vector<2x32xf32>
    %449 = arith.mulf %442, %300 : vector<2x32xf32>
    %450 = arith.mulf %441, %447 : vector<2x32xf32>
    %451 = arith.addf %449, %450 : vector<2x32xf32>
    %452 = math.tanh %451 : vector<2x32xf32>
    %453 = arith.mulf %448, %452 : vector<2x32xf32>
    %454 = tpu.concatenate %354, %328 in 1 : vector<2x32xf32>, vector<2x32xf32> -> vector<2x64xf32>
    %c2_153 = arith.constant 2 : index
    %c0_154 = arith.constant 0 : index
    %c0_155 = arith.constant 0 : index
    %455 = vector.load %arg1[%c2_153, %c0_154, %c0_155] : memref<10x64x128xf32, #tpu.memory_space<vmem>>, vector<1x64x128xf32>
    %456 = vector.shape_cast %455 : vector<1x64x128xf32> to vector<64x128xf32>
    %cst_156 = arith.constant dense<0.000000e+00> : vector<2x128xf32>
    %457 = tpu.matmul %454, %456, %cst_156 {dimension_numbers = #tpu.dot_dimension_numbers<[1], [0], [0], [1], [0, 0, 1, 1], [], []>} : vector<2x64xf32>, vector<64x128xf32>, vector<2x128xf32> -> vector<2x128xf32>
    %c2_157 = arith.constant 2 : index
    %c0_158 = arith.constant 0 : index
    %c0_159 = arith.constant 0 : index
    %458 = vector.load %arg2[%c2_157, %c0_158, %c0_159] : memref<10x1x128xf32, #tpu.memory_space<vmem>>, vector<1x1x128xf32>
    %459 = vector.shape_cast %458 : vector<1x1x128xf32> to vector<1x128xf32>
    %460 = vector.broadcast %459 : vector<1x128xf32> to vector<2x128xf32>
    %461 = arith.addf %457, %460 : vector<2x128xf32>
    %462 = arith.negf %461 : vector<2x128xf32>
    %463 = math.exp %462 : vector<2x128xf32>
    %cst_160 = arith.constant 1.000000e+00 : f32
    %464 = vector.broadcast %cst_160 : f32 to vector<2x128xf32>
    %465 = arith.addf %464, %463 : vector<2x128xf32>
    %466 = arith.divf %464, %465 : vector<2x128xf32>
    %467 = vector.extract_strided_slice %466 {offsets = [0, 0], sizes = [2, 32], strides = [1, 1]} : vector<2x128xf32> to vector<2x32xf32>
    %468 = vector.extract_strided_slice %466 {offsets = [0, 32], sizes = [2, 32], strides = [1, 1]} : vector<2x128xf32> to vector<2x32xf32>
    %469 = vector.extract_strided_slice %466 {offsets = [0, 64], sizes = [2, 32], strides = [1, 1]} : vector<2x128xf32> to vector<2x32xf32>
    %cst_161 = arith.constant 2.000000e+00 : f32
    %470 = vector.broadcast %cst_161 : f32 to vector<2x32xf32>
    %471 = arith.mulf %470, %469 : vector<2x32xf32>
    %cst_162 = arith.constant 1.000000e+00 : f32
    %472 = vector.broadcast %cst_162 : f32 to vector<2x32xf32>
    %473 = arith.subf %471, %472 : vector<2x32xf32>
    %474 = vector.extract_strided_slice %466 {offsets = [0, 96], sizes = [2, 32], strides = [1, 1]} : vector<2x128xf32> to vector<2x32xf32>
    %475 = arith.mulf %468, %326 : vector<2x32xf32>
    %476 = arith.mulf %467, %473 : vector<2x32xf32>
    %477 = arith.addf %475, %476 : vector<2x32xf32>
    %478 = math.tanh %477 : vector<2x32xf32>
    %479 = arith.mulf %474, %478 : vector<2x32xf32>
    %480 = tpu.concatenate %375, %354 in 1 : vector<2x32xf32>, vector<2x32xf32> -> vector<2x64xf32>
    %c1_163 = arith.constant 1 : index
    %c0_164 = arith.constant 0 : index
    %c0_165 = arith.constant 0 : index
    %481 = vector.load %arg1[%c1_163, %c0_164, %c0_165] : memref<10x64x128xf32, #tpu.memory_space<vmem>>, vector<1x64x128xf32>
    %482 = vector.shape_cast %481 : vector<1x64x128xf32> to vector<64x128xf32>
    %cst_166 = arith.constant dense<0.000000e+00> : vector<2x128xf32>
    %483 = tpu.matmul %480, %482, %cst_166 {dimension_numbers = #tpu.dot_dimension_numbers<[1], [0], [0], [1], [0, 0, 1, 1], [], []>} : vector<2x64xf32>, vector<64x128xf32>, vector<2x128xf32> -> vector<2x128xf32>
    %c1_167 = arith.constant 1 : index
    %c0_168 = arith.constant 0 : index
    %c0_169 = arith.constant 0 : index
    %484 = vector.load %arg2[%c1_167, %c0_168, %c0_169] : memref<10x1x128xf32, #tpu.memory_space<vmem>>, vector<1x1x128xf32>
    %485 = vector.shape_cast %484 : vector<1x1x128xf32> to vector<1x128xf32>
    %486 = vector.broadcast %485 : vector<1x128xf32> to vector<2x128xf32>
    %487 = arith.addf %483, %486 : vector<2x128xf32>
    %488 = arith.negf %487 : vector<2x128xf32>
    %489 = math.exp %488 : vector<2x128xf32>
    %cst_170 = arith.constant 1.000000e+00 : f32
    %490 = vector.broadcast %cst_170 : f32 to vector<2x128xf32>
    %491 = arith.addf %490, %489 : vector<2x128xf32>
    %492 = arith.divf %490, %491 : vector<2x128xf32>
    %493 = vector.extract_strided_slice %492 {offsets = [0, 0], sizes = [2, 32], strides = [1, 1]} : vector<2x128xf32> to vector<2x32xf32>
    %494 = vector.extract_strided_slice %492 {offsets = [0, 32], sizes = [2, 32], strides = [1, 1]} : vector<2x128xf32> to vector<2x32xf32>
    %495 = vector.extract_strided_slice %492 {offsets = [0, 64], sizes = [2, 32], strides = [1, 1]} : vector<2x128xf32> to vector<2x32xf32>
    %cst_171 = arith.constant 2.000000e+00 : f32
    %496 = vector.broadcast %cst_171 : f32 to vector<2x32xf32>
    %497 = arith.mulf %496, %495 : vector<2x32xf32>
    %cst_172 = arith.constant 1.000000e+00 : f32
    %498 = vector.broadcast %cst_172 : f32 to vector<2x32xf32>
    %499 = arith.subf %497, %498 : vector<2x32xf32>
    %500 = vector.extract_strided_slice %492 {offsets = [0, 96], sizes = [2, 32], strides = [1, 1]} : vector<2x128xf32> to vector<2x32xf32>
    %501 = arith.mulf %494, %352 : vector<2x32xf32>
    %502 = arith.mulf %493, %499 : vector<2x32xf32>
    %503 = arith.addf %501, %502 : vector<2x32xf32>
    %504 = math.tanh %503 : vector<2x32xf32>
    %505 = arith.mulf %500, %504 : vector<2x32xf32>
    %506 = vector.extract_strided_slice %9 {offsets = [10, 0], sizes = [2, 128], strides = [1, 1]} : vector<16x128xf32> to vector<2x128xf32>
    %cst_173 = arith.constant dense<0.000000e+00> : vector<2x128xf32>
    %507 = tpu.matmul %375, %3, %cst_173 {dimension_numbers = #tpu.dot_dimension_numbers<[1], [0], [0], [1], [0, 0, 1, 1], [], []>} : vector<2x32xf32>, vector<32x128xf32>, vector<2x128xf32> -> vector<2x128xf32>
    %508 = arith.addf %506, %507 : vector<2x128xf32>
    %509 = arith.negf %508 : vector<2x128xf32>
    %510 = math.exp %509 : vector<2x128xf32>
    %cst_174 = arith.constant 1.000000e+00 : f32
    %511 = vector.broadcast %cst_174 : f32 to vector<2x128xf32>
    %512 = arith.addf %511, %510 : vector<2x128xf32>
    %513 = arith.divf %511, %512 : vector<2x128xf32>
    %514 = vector.extract_strided_slice %513 {offsets = [0, 0], sizes = [2, 32], strides = [1, 1]} : vector<2x128xf32> to vector<2x32xf32>
    %515 = vector.extract_strided_slice %513 {offsets = [0, 32], sizes = [2, 32], strides = [1, 1]} : vector<2x128xf32> to vector<2x32xf32>
    %516 = vector.extract_strided_slice %513 {offsets = [0, 64], sizes = [2, 32], strides = [1, 1]} : vector<2x128xf32> to vector<2x32xf32>
    %cst_175 = arith.constant 2.000000e+00 : f32
    %517 = vector.broadcast %cst_175 : f32 to vector<2x32xf32>
    %518 = arith.mulf %517, %516 : vector<2x32xf32>
    %cst_176 = arith.constant 1.000000e+00 : f32
    %519 = vector.broadcast %cst_176 : f32 to vector<2x32xf32>
    %520 = arith.subf %518, %519 : vector<2x32xf32>
    %521 = vector.extract_strided_slice %513 {offsets = [0, 96], sizes = [2, 32], strides = [1, 1]} : vector<2x128xf32> to vector<2x32xf32>
    %522 = arith.mulf %515, %373 : vector<2x32xf32>
    %523 = arith.mulf %514, %520 : vector<2x32xf32>
    %524 = arith.addf %522, %523 : vector<2x32xf32>
    %525 = math.tanh %524 : vector<2x32xf32>
    %526 = arith.mulf %521, %525 : vector<2x32xf32>
    %527 = tpu.concatenate %401, %10 in 1 : vector<2x32xf32>, vector<2x32xf32> -> vector<2x64xf32>
    %c6 = arith.constant 6 : index
    %c0_177 = arith.constant 0 : index
    %c0_178 = arith.constant 0 : index
    %528 = vector.load %arg1[%c6, %c0_177, %c0_178] : memref<10x64x128xf32, #tpu.memory_space<vmem>>, vector<1x64x128xf32>
    %529 = vector.shape_cast %528 : vector<1x64x128xf32> to vector<64x128xf32>
    %cst_179 = arith.constant dense<0.000000e+00> : vector<2x128xf32>
    %530 = tpu.matmul %527, %529, %cst_179 {dimension_numbers = #tpu.dot_dimension_numbers<[1], [0], [0], [1], [0, 0, 1, 1], [], []>} : vector<2x64xf32>, vector<64x128xf32>, vector<2x128xf32> -> vector<2x128xf32>
    %c6_180 = arith.constant 6 : index
    %c0_181 = arith.constant 0 : index
    %c0_182 = arith.constant 0 : index
    %531 = vector.load %arg2[%c6_180, %c0_181, %c0_182] : memref<10x1x128xf32, #tpu.memory_space<vmem>>, vector<1x1x128xf32>
    %532 = vector.shape_cast %531 : vector<1x1x128xf32> to vector<1x128xf32>
    %533 = vector.broadcast %532 : vector<1x128xf32> to vector<2x128xf32>
    %534 = arith.addf %530, %533 : vector<2x128xf32>
    %535 = arith.negf %534 : vector<2x128xf32>
    %536 = math.exp %535 : vector<2x128xf32>
    %cst_183 = arith.constant 1.000000e+00 : f32
    %537 = vector.broadcast %cst_183 : f32 to vector<2x128xf32>
    %538 = arith.addf %537, %536 : vector<2x128xf32>
    %539 = arith.divf %537, %538 : vector<2x128xf32>
    %540 = vector.extract_strided_slice %539 {offsets = [0, 0], sizes = [2, 32], strides = [1, 1]} : vector<2x128xf32> to vector<2x32xf32>
    %541 = vector.extract_strided_slice %539 {offsets = [0, 32], sizes = [2, 32], strides = [1, 1]} : vector<2x128xf32> to vector<2x32xf32>
    %542 = vector.extract_strided_slice %539 {offsets = [0, 64], sizes = [2, 32], strides = [1, 1]} : vector<2x128xf32> to vector<2x32xf32>
    %cst_184 = arith.constant 2.000000e+00 : f32
    %543 = vector.broadcast %cst_184 : f32 to vector<2x32xf32>
    %544 = arith.mulf %543, %542 : vector<2x32xf32>
    %cst_185 = arith.constant 1.000000e+00 : f32
    %545 = vector.broadcast %cst_185 : f32 to vector<2x32xf32>
    %546 = arith.subf %544, %545 : vector<2x32xf32>
    %547 = vector.extract_strided_slice %539 {offsets = [0, 96], sizes = [2, 32], strides = [1, 1]} : vector<2x128xf32> to vector<2x32xf32>
    %548 = arith.mulf %541, %10 : vector<2x32xf32>
    %549 = arith.mulf %540, %546 : vector<2x32xf32>
    %550 = arith.addf %548, %549 : vector<2x32xf32>
    %551 = math.tanh %550 : vector<2x32xf32>
    %552 = arith.mulf %547, %551 : vector<2x32xf32>
    %553 = tpu.concatenate %427, %401 in 1 : vector<2x32xf32>, vector<2x32xf32> -> vector<2x64xf32>
    %c5_186 = arith.constant 5 : index
    %c0_187 = arith.constant 0 : index
    %c0_188 = arith.constant 0 : index
    %554 = vector.load %arg1[%c5_186, %c0_187, %c0_188] : memref<10x64x128xf32, #tpu.memory_space<vmem>>, vector<1x64x128xf32>
    %555 = vector.shape_cast %554 : vector<1x64x128xf32> to vector<64x128xf32>
    %cst_189 = arith.constant dense<0.000000e+00> : vector<2x128xf32>
    %556 = tpu.matmul %553, %555, %cst_189 {dimension_numbers = #tpu.dot_dimension_numbers<[1], [0], [0], [1], [0, 0, 1, 1], [], []>} : vector<2x64xf32>, vector<64x128xf32>, vector<2x128xf32> -> vector<2x128xf32>
    %c5_190 = arith.constant 5 : index
    %c0_191 = arith.constant 0 : index
    %c0_192 = arith.constant 0 : index
    %557 = vector.load %arg2[%c5_190, %c0_191, %c0_192] : memref<10x1x128xf32, #tpu.memory_space<vmem>>, vector<1x1x128xf32>
    %558 = vector.shape_cast %557 : vector<1x1x128xf32> to vector<1x128xf32>
    %559 = vector.broadcast %558 : vector<1x128xf32> to vector<2x128xf32>
    %560 = arith.addf %556, %559 : vector<2x128xf32>
    %561 = arith.negf %560 : vector<2x128xf32>
    %562 = math.exp %561 : vector<2x128xf32>
    %cst_193 = arith.constant 1.000000e+00 : f32
    %563 = vector.broadcast %cst_193 : f32 to vector<2x128xf32>
    %564 = arith.addf %563, %562 : vector<2x128xf32>
    %565 = arith.divf %563, %564 : vector<2x128xf32>
    %566 = vector.extract_strided_slice %565 {offsets = [0, 0], sizes = [2, 32], strides = [1, 1]} : vector<2x128xf32> to vector<2x32xf32>
    %567 = vector.extract_strided_slice %565 {offsets = [0, 32], sizes = [2, 32], strides = [1, 1]} : vector<2x128xf32> to vector<2x32xf32>
    %568 = vector.extract_strided_slice %565 {offsets = [0, 64], sizes = [2, 32], strides = [1, 1]} : vector<2x128xf32> to vector<2x32xf32>
    %cst_194 = arith.constant 2.000000e+00 : f32
    %569 = vector.broadcast %cst_194 : f32 to vector<2x32xf32>
    %570 = arith.mulf %569, %568 : vector<2x32xf32>
    %cst_195 = arith.constant 1.000000e+00 : f32
    %571 = vector.broadcast %cst_195 : f32 to vector<2x32xf32>
    %572 = arith.subf %570, %571 : vector<2x32xf32>
    %573 = vector.extract_strided_slice %565 {offsets = [0, 96], sizes = [2, 32], strides = [1, 1]} : vector<2x128xf32> to vector<2x32xf32>
    %574 = arith.mulf %567, %399 : vector<2x32xf32>
    %575 = arith.mulf %566, %572 : vector<2x32xf32>
    %576 = arith.addf %574, %575 : vector<2x32xf32>
    %577 = math.tanh %576 : vector<2x32xf32>
    %578 = arith.mulf %573, %577 : vector<2x32xf32>
    %579 = tpu.concatenate %453, %427 in 1 : vector<2x32xf32>, vector<2x32xf32> -> vector<2x64xf32>
    %c4_196 = arith.constant 4 : index
    %c0_197 = arith.constant 0 : index
    %c0_198 = arith.constant 0 : index
    %580 = vector.load %arg1[%c4_196, %c0_197, %c0_198] : memref<10x64x128xf32, #tpu.memory_space<vmem>>, vector<1x64x128xf32>
    %581 = vector.shape_cast %580 : vector<1x64x128xf32> to vector<64x128xf32>
    %cst_199 = arith.constant dense<0.000000e+00> : vector<2x128xf32>
    %582 = tpu.matmul %579, %581, %cst_199 {dimension_numbers = #tpu.dot_dimension_numbers<[1], [0], [0], [1], [0, 0, 1, 1], [], []>} : vector<2x64xf32>, vector<64x128xf32>, vector<2x128xf32> -> vector<2x128xf32>
    %c4_200 = arith.constant 4 : index
    %c0_201 = arith.constant 0 : index
    %c0_202 = arith.constant 0 : index
    %583 = vector.load %arg2[%c4_200, %c0_201, %c0_202] : memref<10x1x128xf32, #tpu.memory_space<vmem>>, vector<1x1x128xf32>
    %584 = vector.shape_cast %583 : vector<1x1x128xf32> to vector<1x128xf32>
    %585 = vector.broadcast %584 : vector<1x128xf32> to vector<2x128xf32>
    %586 = arith.addf %582, %585 : vector<2x128xf32>
    %587 = arith.negf %586 : vector<2x128xf32>
    %588 = math.exp %587 : vector<2x128xf32>
    %cst_203 = arith.constant 1.000000e+00 : f32
    %589 = vector.broadcast %cst_203 : f32 to vector<2x128xf32>
    %590 = arith.addf %589, %588 : vector<2x128xf32>
    %591 = arith.divf %589, %590 : vector<2x128xf32>
    %592 = vector.extract_strided_slice %591 {offsets = [0, 0], sizes = [2, 32], strides = [1, 1]} : vector<2x128xf32> to vector<2x32xf32>
    %593 = vector.extract_strided_slice %591 {offsets = [0, 32], sizes = [2, 32], strides = [1, 1]} : vector<2x128xf32> to vector<2x32xf32>
    %594 = vector.extract_strided_slice %591 {offsets = [0, 64], sizes = [2, 32], strides = [1, 1]} : vector<2x128xf32> to vector<2x32xf32>
    %cst_204 = arith.constant 2.000000e+00 : f32
    %595 = vector.broadcast %cst_204 : f32 to vector<2x32xf32>
    %596 = arith.mulf %595, %594 : vector<2x32xf32>
    %cst_205 = arith.constant 1.000000e+00 : f32
    %597 = vector.broadcast %cst_205 : f32 to vector<2x32xf32>
    %598 = arith.subf %596, %597 : vector<2x32xf32>
    %599 = vector.extract_strided_slice %591 {offsets = [0, 96], sizes = [2, 32], strides = [1, 1]} : vector<2x128xf32> to vector<2x32xf32>
    %600 = arith.mulf %593, %425 : vector<2x32xf32>
    %601 = arith.mulf %592, %598 : vector<2x32xf32>
    %602 = arith.addf %600, %601 : vector<2x32xf32>
    %603 = math.tanh %602 : vector<2x32xf32>
    %604 = arith.mulf %599, %603 : vector<2x32xf32>
    %605 = tpu.concatenate %479, %453 in 1 : vector<2x32xf32>, vector<2x32xf32> -> vector<2x64xf32>
    %c3_206 = arith.constant 3 : index
    %c0_207 = arith.constant 0 : index
    %c0_208 = arith.constant 0 : index
    %606 = vector.load %arg1[%c3_206, %c0_207, %c0_208] : memref<10x64x128xf32, #tpu.memory_space<vmem>>, vector<1x64x128xf32>
    %607 = vector.shape_cast %606 : vector<1x64x128xf32> to vector<64x128xf32>
    %cst_209 = arith.constant dense<0.000000e+00> : vector<2x128xf32>
    %608 = tpu.matmul %605, %607, %cst_209 {dimension_numbers = #tpu.dot_dimension_numbers<[1], [0], [0], [1], [0, 0, 1, 1], [], []>} : vector<2x64xf32>, vector<64x128xf32>, vector<2x128xf32> -> vector<2x128xf32>
    %c3_210 = arith.constant 3 : index
    %c0_211 = arith.constant 0 : index
    %c0_212 = arith.constant 0 : index
    %609 = vector.load %arg2[%c3_210, %c0_211, %c0_212] : memref<10x1x128xf32, #tpu.memory_space<vmem>>, vector<1x1x128xf32>
    %610 = vector.shape_cast %609 : vector<1x1x128xf32> to vector<1x128xf32>
    %611 = vector.broadcast %610 : vector<1x128xf32> to vector<2x128xf32>
    %612 = arith.addf %608, %611 : vector<2x128xf32>
    %613 = arith.negf %612 : vector<2x128xf32>
    %614 = math.exp %613 : vector<2x128xf32>
    %cst_213 = arith.constant 1.000000e+00 : f32
    %615 = vector.broadcast %cst_213 : f32 to vector<2x128xf32>
    %616 = arith.addf %615, %614 : vector<2x128xf32>
    %617 = arith.divf %615, %616 : vector<2x128xf32>
    %618 = vector.extract_strided_slice %617 {offsets = [0, 0], sizes = [2, 32], strides = [1, 1]} : vector<2x128xf32> to vector<2x32xf32>
    %619 = vector.extract_strided_slice %617 {offsets = [0, 32], sizes = [2, 32], strides = [1, 1]} : vector<2x128xf32> to vector<2x32xf32>
    %620 = vector.extract_strided_slice %617 {offsets = [0, 64], sizes = [2, 32], strides = [1, 1]} : vector<2x128xf32> to vector<2x32xf32>
    %cst_214 = arith.constant 2.000000e+00 : f32
    %621 = vector.broadcast %cst_214 : f32 to vector<2x32xf32>
    %622 = arith.mulf %621, %620 : vector<2x32xf32>
    %cst_215 = arith.constant 1.000000e+00 : f32
    %623 = vector.broadcast %cst_215 : f32 to vector<2x32xf32>
    %624 = arith.subf %622, %623 : vector<2x32xf32>
    %625 = vector.extract_strided_slice %617 {offsets = [0, 96], sizes = [2, 32], strides = [1, 1]} : vector<2x128xf32> to vector<2x32xf32>
    %626 = arith.mulf %619, %451 : vector<2x32xf32>
    %627 = arith.mulf %618, %624 : vector<2x32xf32>
    %628 = arith.addf %626, %627 : vector<2x32xf32>
    %629 = math.tanh %628 : vector<2x32xf32>
    %630 = arith.mulf %625, %629 : vector<2x32xf32>
    %631 = tpu.concatenate %505, %479 in 1 : vector<2x32xf32>, vector<2x32xf32> -> vector<2x64xf32>
    %c2_216 = arith.constant 2 : index
    %c0_217 = arith.constant 0 : index
    %c0_218 = arith.constant 0 : index
    %632 = vector.load %arg1[%c2_216, %c0_217, %c0_218] : memref<10x64x128xf32, #tpu.memory_space<vmem>>, vector<1x64x128xf32>
    %633 = vector.shape_cast %632 : vector<1x64x128xf32> to vector<64x128xf32>
    %cst_219 = arith.constant dense<0.000000e+00> : vector<2x128xf32>
    %634 = tpu.matmul %631, %633, %cst_219 {dimension_numbers = #tpu.dot_dimension_numbers<[1], [0], [0], [1], [0, 0, 1, 1], [], []>} : vector<2x64xf32>, vector<64x128xf32>, vector<2x128xf32> -> vector<2x128xf32>
    %c2_220 = arith.constant 2 : index
    %c0_221 = arith.constant 0 : index
    %c0_222 = arith.constant 0 : index
    %635 = vector.load %arg2[%c2_220, %c0_221, %c0_222] : memref<10x1x128xf32, #tpu.memory_space<vmem>>, vector<1x1x128xf32>
    %636 = vector.shape_cast %635 : vector<1x1x128xf32> to vector<1x128xf32>
    %637 = vector.broadcast %636 : vector<1x128xf32> to vector<2x128xf32>
    %638 = arith.addf %634, %637 : vector<2x128xf32>
    %639 = arith.negf %638 : vector<2x128xf32>
    %640 = math.exp %639 : vector<2x128xf32>
    %cst_223 = arith.constant 1.000000e+00 : f32
    %641 = vector.broadcast %cst_223 : f32 to vector<2x128xf32>
    %642 = arith.addf %641, %640 : vector<2x128xf32>
    %643 = arith.divf %641, %642 : vector<2x128xf32>
    %644 = vector.extract_strided_slice %643 {offsets = [0, 0], sizes = [2, 32], strides = [1, 1]} : vector<2x128xf32> to vector<2x32xf32>
    %645 = vector.extract_strided_slice %643 {offsets = [0, 32], sizes = [2, 32], strides = [1, 1]} : vector<2x128xf32> to vector<2x32xf32>
    %646 = vector.extract_strided_slice %643 {offsets = [0, 64], sizes = [2, 32], strides = [1, 1]} : vector<2x128xf32> to vector<2x32xf32>
    %cst_224 = arith.constant 2.000000e+00 : f32
    %647 = vector.broadcast %cst_224 : f32 to vector<2x32xf32>
    %648 = arith.mulf %647, %646 : vector<2x32xf32>
    %cst_225 = arith.constant 1.000000e+00 : f32
    %649 = vector.broadcast %cst_225 : f32 to vector<2x32xf32>
    %650 = arith.subf %648, %649 : vector<2x32xf32>
    %651 = vector.extract_strided_slice %643 {offsets = [0, 96], sizes = [2, 32], strides = [1, 1]} : vector<2x128xf32> to vector<2x32xf32>
    %652 = arith.mulf %645, %477 : vector<2x32xf32>
    %653 = arith.mulf %644, %650 : vector<2x32xf32>
    %654 = arith.addf %652, %653 : vector<2x32xf32>
    %655 = math.tanh %654 : vector<2x32xf32>
    %656 = arith.mulf %651, %655 : vector<2x32xf32>
    %657 = tpu.concatenate %526, %505 in 1 : vector<2x32xf32>, vector<2x32xf32> -> vector<2x64xf32>
    %c1_226 = arith.constant 1 : index
    %c0_227 = arith.constant 0 : index
    %c0_228 = arith.constant 0 : index
    %658 = vector.load %arg1[%c1_226, %c0_227, %c0_228] : memref<10x64x128xf32, #tpu.memory_space<vmem>>, vector<1x64x128xf32>
    %659 = vector.shape_cast %658 : vector<1x64x128xf32> to vector<64x128xf32>
    %cst_229 = arith.constant dense<0.000000e+00> : vector<2x128xf32>
    %660 = tpu.matmul %657, %659, %cst_229 {dimension_numbers = #tpu.dot_dimension_numbers<[1], [0], [0], [1], [0, 0, 1, 1], [], []>} : vector<2x64xf32>, vector<64x128xf32>, vector<2x128xf32> -> vector<2x128xf32>
    %c1_230 = arith.constant 1 : index
    %c0_231 = arith.constant 0 : index
    %c0_232 = arith.constant 0 : index
    %661 = vector.load %arg2[%c1_230, %c0_231, %c0_232] : memref<10x1x128xf32, #tpu.memory_space<vmem>>, vector<1x1x128xf32>
    %662 = vector.shape_cast %661 : vector<1x1x128xf32> to vector<1x128xf32>
    %663 = vector.broadcast %662 : vector<1x128xf32> to vector<2x128xf32>
    %664 = arith.addf %660, %663 : vector<2x128xf32>
    %665 = arith.negf %664 : vector<2x128xf32>
    %666 = math.exp %665 : vector<2x128xf32>
    %cst_233 = arith.constant 1.000000e+00 : f32
    %667 = vector.broadcast %cst_233 : f32 to vector<2x128xf32>
    %668 = arith.addf %667, %666 : vector<2x128xf32>
    %669 = arith.divf %667, %668 : vector<2x128xf32>
    %670 = vector.extract_strided_slice %669 {offsets = [0, 0], sizes = [2, 32], strides = [1, 1]} : vector<2x128xf32> to vector<2x32xf32>
    %671 = vector.extract_strided_slice %669 {offsets = [0, 32], sizes = [2, 32], strides = [1, 1]} : vector<2x128xf32> to vector<2x32xf32>
    %672 = vector.extract_strided_slice %669 {offsets = [0, 64], sizes = [2, 32], strides = [1, 1]} : vector<2x128xf32> to vector<2x32xf32>
    %cst_234 = arith.constant 2.000000e+00 : f32
    %673 = vector.broadcast %cst_234 : f32 to vector<2x32xf32>
    %674 = arith.mulf %673, %672 : vector<2x32xf32>
    %cst_235 = arith.constant 1.000000e+00 : f32
    %675 = vector.broadcast %cst_235 : f32 to vector<2x32xf32>
    %676 = arith.subf %674, %675 : vector<2x32xf32>
    %677 = vector.extract_strided_slice %669 {offsets = [0, 96], sizes = [2, 32], strides = [1, 1]} : vector<2x128xf32> to vector<2x32xf32>
    %678 = arith.mulf %671, %503 : vector<2x32xf32>
    %679 = arith.mulf %670, %676 : vector<2x32xf32>
    %680 = arith.addf %678, %679 : vector<2x32xf32>
    %681 = math.tanh %680 : vector<2x32xf32>
    %682 = arith.mulf %677, %681 : vector<2x32xf32>
    %683 = vector.extract_strided_slice %9 {offsets = [12, 0], sizes = [2, 128], strides = [1, 1]} : vector<16x128xf32> to vector<2x128xf32>
    %cst_236 = arith.constant dense<0.000000e+00> : vector<2x128xf32>
    %684 = tpu.matmul %526, %3, %cst_236 {dimension_numbers = #tpu.dot_dimension_numbers<[1], [0], [0], [1], [0, 0, 1, 1], [], []>} : vector<2x32xf32>, vector<32x128xf32>, vector<2x128xf32> -> vector<2x128xf32>
    %685 = arith.addf %683, %684 : vector<2x128xf32>
    %686 = arith.negf %685 : vector<2x128xf32>
    %687 = math.exp %686 : vector<2x128xf32>
    %cst_237 = arith.constant 1.000000e+00 : f32
    %688 = vector.broadcast %cst_237 : f32 to vector<2x128xf32>
    %689 = arith.addf %688, %687 : vector<2x128xf32>
    %690 = arith.divf %688, %689 : vector<2x128xf32>
    %691 = vector.extract_strided_slice %690 {offsets = [0, 0], sizes = [2, 32], strides = [1, 1]} : vector<2x128xf32> to vector<2x32xf32>
    %692 = vector.extract_strided_slice %690 {offsets = [0, 32], sizes = [2, 32], strides = [1, 1]} : vector<2x128xf32> to vector<2x32xf32>
    %693 = vector.extract_strided_slice %690 {offsets = [0, 64], sizes = [2, 32], strides = [1, 1]} : vector<2x128xf32> to vector<2x32xf32>
    %cst_238 = arith.constant 2.000000e+00 : f32
    %694 = vector.broadcast %cst_238 : f32 to vector<2x32xf32>
    %695 = arith.mulf %694, %693 : vector<2x32xf32>
    %cst_239 = arith.constant 1.000000e+00 : f32
    %696 = vector.broadcast %cst_239 : f32 to vector<2x32xf32>
    %697 = arith.subf %695, %696 : vector<2x32xf32>
    %698 = vector.extract_strided_slice %690 {offsets = [0, 96], sizes = [2, 32], strides = [1, 1]} : vector<2x128xf32> to vector<2x32xf32>
    %699 = arith.mulf %692, %524 : vector<2x32xf32>
    %700 = arith.mulf %691, %697 : vector<2x32xf32>
    %701 = arith.addf %699, %700 : vector<2x32xf32>
    %702 = math.tanh %701 : vector<2x32xf32>
    %703 = arith.mulf %698, %702 : vector<2x32xf32>
    %704 = tpu.concatenate %552, %10 in 1 : vector<2x32xf32>, vector<2x32xf32> -> vector<2x64xf32>
    %c7 = arith.constant 7 : index
    %c0_240 = arith.constant 0 : index
    %c0_241 = arith.constant 0 : index
    %705 = vector.load %arg1[%c7, %c0_240, %c0_241] : memref<10x64x128xf32, #tpu.memory_space<vmem>>, vector<1x64x128xf32>
    %706 = vector.shape_cast %705 : vector<1x64x128xf32> to vector<64x128xf32>
    %cst_242 = arith.constant dense<0.000000e+00> : vector<2x128xf32>
    %707 = tpu.matmul %704, %706, %cst_242 {dimension_numbers = #tpu.dot_dimension_numbers<[1], [0], [0], [1], [0, 0, 1, 1], [], []>} : vector<2x64xf32>, vector<64x128xf32>, vector<2x128xf32> -> vector<2x128xf32>
    %c7_243 = arith.constant 7 : index
    %c0_244 = arith.constant 0 : index
    %c0_245 = arith.constant 0 : index
    %708 = vector.load %arg2[%c7_243, %c0_244, %c0_245] : memref<10x1x128xf32, #tpu.memory_space<vmem>>, vector<1x1x128xf32>
    %709 = vector.shape_cast %708 : vector<1x1x128xf32> to vector<1x128xf32>
    %710 = vector.broadcast %709 : vector<1x128xf32> to vector<2x128xf32>
    %711 = arith.addf %707, %710 : vector<2x128xf32>
    %712 = arith.negf %711 : vector<2x128xf32>
    %713 = math.exp %712 : vector<2x128xf32>
    %cst_246 = arith.constant 1.000000e+00 : f32
    %714 = vector.broadcast %cst_246 : f32 to vector<2x128xf32>
    %715 = arith.addf %714, %713 : vector<2x128xf32>
    %716 = arith.divf %714, %715 : vector<2x128xf32>
    %717 = vector.extract_strided_slice %716 {offsets = [0, 0], sizes = [2, 32], strides = [1, 1]} : vector<2x128xf32> to vector<2x32xf32>
    %718 = vector.extract_strided_slice %716 {offsets = [0, 32], sizes = [2, 32], strides = [1, 1]} : vector<2x128xf32> to vector<2x32xf32>
    %719 = vector.extract_strided_slice %716 {offsets = [0, 64], sizes = [2, 32], strides = [1, 1]} : vector<2x128xf32> to vector<2x32xf32>
    %cst_247 = arith.constant 2.000000e+00 : f32
    %720 = vector.broadcast %cst_247 : f32 to vector<2x32xf32>
    %721 = arith.mulf %720, %719 : vector<2x32xf32>
    %cst_248 = arith.constant 1.000000e+00 : f32
    %722 = vector.broadcast %cst_248 : f32 to vector<2x32xf32>
    %723 = arith.subf %721, %722 : vector<2x32xf32>
    %724 = vector.extract_strided_slice %716 {offsets = [0, 96], sizes = [2, 32], strides = [1, 1]} : vector<2x128xf32> to vector<2x32xf32>
    %725 = arith.mulf %718, %10 : vector<2x32xf32>
    %726 = arith.mulf %717, %723 : vector<2x32xf32>
    %727 = arith.addf %725, %726 : vector<2x32xf32>
    %728 = math.tanh %727 : vector<2x32xf32>
    %729 = arith.mulf %724, %728 : vector<2x32xf32>
    %730 = tpu.concatenate %578, %552 in 1 : vector<2x32xf32>, vector<2x32xf32> -> vector<2x64xf32>
    %c6_249 = arith.constant 6 : index
    %c0_250 = arith.constant 0 : index
    %c0_251 = arith.constant 0 : index
    %731 = vector.load %arg1[%c6_249, %c0_250, %c0_251] : memref<10x64x128xf32, #tpu.memory_space<vmem>>, vector<1x64x128xf32>
    %732 = vector.shape_cast %731 : vector<1x64x128xf32> to vector<64x128xf32>
    %cst_252 = arith.constant dense<0.000000e+00> : vector<2x128xf32>
    %733 = tpu.matmul %730, %732, %cst_252 {dimension_numbers = #tpu.dot_dimension_numbers<[1], [0], [0], [1], [0, 0, 1, 1], [], []>} : vector<2x64xf32>, vector<64x128xf32>, vector<2x128xf32> -> vector<2x128xf32>
    %c6_253 = arith.constant 6 : index
    %c0_254 = arith.constant 0 : index
    %c0_255 = arith.constant 0 : index
    %734 = vector.load %arg2[%c6_253, %c0_254, %c0_255] : memref<10x1x128xf32, #tpu.memory_space<vmem>>, vector<1x1x128xf32>
    %735 = vector.shape_cast %734 : vector<1x1x128xf32> to vector<1x128xf32>
    %736 = vector.broadcast %735 : vector<1x128xf32> to vector<2x128xf32>
    %737 = arith.addf %733, %736 : vector<2x128xf32>
    %738 = arith.negf %737 : vector<2x128xf32>
    %739 = math.exp %738 : vector<2x128xf32>
    %cst_256 = arith.constant 1.000000e+00 : f32
    %740 = vector.broadcast %cst_256 : f32 to vector<2x128xf32>
    %741 = arith.addf %740, %739 : vector<2x128xf32>
    %742 = arith.divf %740, %741 : vector<2x128xf32>
    %743 = vector.extract_strided_slice %742 {offsets = [0, 0], sizes = [2, 32], strides = [1, 1]} : vector<2x128xf32> to vector<2x32xf32>
    %744 = vector.extract_strided_slice %742 {offsets = [0, 32], sizes = [2, 32], strides = [1, 1]} : vector<2x128xf32> to vector<2x32xf32>
    %745 = vector.extract_strided_slice %742 {offsets = [0, 64], sizes = [2, 32], strides = [1, 1]} : vector<2x128xf32> to vector<2x32xf32>
    %cst_257 = arith.constant 2.000000e+00 : f32
    %746 = vector.broadcast %cst_257 : f32 to vector<2x32xf32>
    %747 = arith.mulf %746, %745 : vector<2x32xf32>
    %cst_258 = arith.constant 1.000000e+00 : f32
    %748 = vector.broadcast %cst_258 : f32 to vector<2x32xf32>
    %749 = arith.subf %747, %748 : vector<2x32xf32>
    %750 = vector.extract_strided_slice %742 {offsets = [0, 96], sizes = [2, 32], strides = [1, 1]} : vector<2x128xf32> to vector<2x32xf32>
    %751 = arith.mulf %744, %550 : vector<2x32xf32>
    %752 = arith.mulf %743, %749 : vector<2x32xf32>
    %753 = arith.addf %751, %752 : vector<2x32xf32>
    %754 = math.tanh %753 : vector<2x32xf32>
    %755 = arith.mulf %750, %754 : vector<2x32xf32>
    %756 = tpu.concatenate %604, %578 in 1 : vector<2x32xf32>, vector<2x32xf32> -> vector<2x64xf32>
    %c5_259 = arith.constant 5 : index
    %c0_260 = arith.constant 0 : index
    %c0_261 = arith.constant 0 : index
    %757 = vector.load %arg1[%c5_259, %c0_260, %c0_261] : memref<10x64x128xf32, #tpu.memory_space<vmem>>, vector<1x64x128xf32>
    %758 = vector.shape_cast %757 : vector<1x64x128xf32> to vector<64x128xf32>
    %cst_262 = arith.constant dense<0.000000e+00> : vector<2x128xf32>
    %759 = tpu.matmul %756, %758, %cst_262 {dimension_numbers = #tpu.dot_dimension_numbers<[1], [0], [0], [1], [0, 0, 1, 1], [], []>} : vector<2x64xf32>, vector<64x128xf32>, vector<2x128xf32> -> vector<2x128xf32>
    %c5_263 = arith.constant 5 : index
    %c0_264 = arith.constant 0 : index
    %c0_265 = arith.constant 0 : index
    %760 = vector.load %arg2[%c5_263, %c0_264, %c0_265] : memref<10x1x128xf32, #tpu.memory_space<vmem>>, vector<1x1x128xf32>
    %761 = vector.shape_cast %760 : vector<1x1x128xf32> to vector<1x128xf32>
    %762 = vector.broadcast %761 : vector<1x128xf32> to vector<2x128xf32>
    %763 = arith.addf %759, %762 : vector<2x128xf32>
    %764 = arith.negf %763 : vector<2x128xf32>
    %765 = math.exp %764 : vector<2x128xf32>
    %cst_266 = arith.constant 1.000000e+00 : f32
    %766 = vector.broadcast %cst_266 : f32 to vector<2x128xf32>
    %767 = arith.addf %766, %765 : vector<2x128xf32>
    %768 = arith.divf %766, %767 : vector<2x128xf32>
    %769 = vector.extract_strided_slice %768 {offsets = [0, 0], sizes = [2, 32], strides = [1, 1]} : vector<2x128xf32> to vector<2x32xf32>
    %770 = vector.extract_strided_slice %768 {offsets = [0, 32], sizes = [2, 32], strides = [1, 1]} : vector<2x128xf32> to vector<2x32xf32>
    %771 = vector.extract_strided_slice %768 {offsets = [0, 64], sizes = [2, 32], strides = [1, 1]} : vector<2x128xf32> to vector<2x32xf32>
    %cst_267 = arith.constant 2.000000e+00 : f32
    %772 = vector.broadcast %cst_267 : f32 to vector<2x32xf32>
    %773 = arith.mulf %772, %771 : vector<2x32xf32>
    %cst_268 = arith.constant 1.000000e+00 : f32
    %774 = vector.broadcast %cst_268 : f32 to vector<2x32xf32>
    %775 = arith.subf %773, %774 : vector<2x32xf32>
    %776 = vector.extract_strided_slice %768 {offsets = [0, 96], sizes = [2, 32], strides = [1, 1]} : vector<2x128xf32> to vector<2x32xf32>
    %777 = arith.mulf %770, %576 : vector<2x32xf32>
    %778 = arith.mulf %769, %775 : vector<2x32xf32>
    %779 = arith.addf %777, %778 : vector<2x32xf32>
    %780 = math.tanh %779 : vector<2x32xf32>
    %781 = arith.mulf %776, %780 : vector<2x32xf32>
    %782 = tpu.concatenate %630, %604 in 1 : vector<2x32xf32>, vector<2x32xf32> -> vector<2x64xf32>
    %c4_269 = arith.constant 4 : index
    %c0_270 = arith.constant 0 : index
    %c0_271 = arith.constant 0 : index
    %783 = vector.load %arg1[%c4_269, %c0_270, %c0_271] : memref<10x64x128xf32, #tpu.memory_space<vmem>>, vector<1x64x128xf32>
    %784 = vector.shape_cast %783 : vector<1x64x128xf32> to vector<64x128xf32>
    %cst_272 = arith.constant dense<0.000000e+00> : vector<2x128xf32>
    %785 = tpu.matmul %782, %784, %cst_272 {dimension_numbers = #tpu.dot_dimension_numbers<[1], [0], [0], [1], [0, 0, 1, 1], [], []>} : vector<2x64xf32>, vector<64x128xf32>, vector<2x128xf32> -> vector<2x128xf32>
    %c4_273 = arith.constant 4 : index
    %c0_274 = arith.constant 0 : index
    %c0_275 = arith.constant 0 : index
    %786 = vector.load %arg2[%c4_273, %c0_274, %c0_275] : memref<10x1x128xf32, #tpu.memory_space<vmem>>, vector<1x1x128xf32>
    %787 = vector.shape_cast %786 : vector<1x1x128xf32> to vector<1x128xf32>
    %788 = vector.broadcast %787 : vector<1x128xf32> to vector<2x128xf32>
    %789 = arith.addf %785, %788 : vector<2x128xf32>
    %790 = arith.negf %789 : vector<2x128xf32>
    %791 = math.exp %790 : vector<2x128xf32>
    %cst_276 = arith.constant 1.000000e+00 : f32
    %792 = vector.broadcast %cst_276 : f32 to vector<2x128xf32>
    %793 = arith.addf %792, %791 : vector<2x128xf32>
    %794 = arith.divf %792, %793 : vector<2x128xf32>
    %795 = vector.extract_strided_slice %794 {offsets = [0, 0], sizes = [2, 32], strides = [1, 1]} : vector<2x128xf32> to vector<2x32xf32>
    %796 = vector.extract_strided_slice %794 {offsets = [0, 32], sizes = [2, 32], strides = [1, 1]} : vector<2x128xf32> to vector<2x32xf32>
    %797 = vector.extract_strided_slice %794 {offsets = [0, 64], sizes = [2, 32], strides = [1, 1]} : vector<2x128xf32> to vector<2x32xf32>
    %cst_277 = arith.constant 2.000000e+00 : f32
    %798 = vector.broadcast %cst_277 : f32 to vector<2x32xf32>
    %799 = arith.mulf %798, %797 : vector<2x32xf32>
    %cst_278 = arith.constant 1.000000e+00 : f32
    %800 = vector.broadcast %cst_278 : f32 to vector<2x32xf32>
    %801 = arith.subf %799, %800 : vector<2x32xf32>
    %802 = vector.extract_strided_slice %794 {offsets = [0, 96], sizes = [2, 32], strides = [1, 1]} : vector<2x128xf32> to vector<2x32xf32>
    %803 = arith.mulf %796, %602 : vector<2x32xf32>
    %804 = arith.mulf %795, %801 : vector<2x32xf32>
    %805 = arith.addf %803, %804 : vector<2x32xf32>
    %806 = math.tanh %805 : vector<2x32xf32>
    %807 = arith.mulf %802, %806 : vector<2x32xf32>
    %808 = tpu.concatenate %656, %630 in 1 : vector<2x32xf32>, vector<2x32xf32> -> vector<2x64xf32>
    %c3_279 = arith.constant 3 : index
    %c0_280 = arith.constant 0 : index
    %c0_281 = arith.constant 0 : index
    %809 = vector.load %arg1[%c3_279, %c0_280, %c0_281] : memref<10x64x128xf32, #tpu.memory_space<vmem>>, vector<1x64x128xf32>
    %810 = vector.shape_cast %809 : vector<1x64x128xf32> to vector<64x128xf32>
    %cst_282 = arith.constant dense<0.000000e+00> : vector<2x128xf32>
    %811 = tpu.matmul %808, %810, %cst_282 {dimension_numbers = #tpu.dot_dimension_numbers<[1], [0], [0], [1], [0, 0, 1, 1], [], []>} : vector<2x64xf32>, vector<64x128xf32>, vector<2x128xf32> -> vector<2x128xf32>
    %c3_283 = arith.constant 3 : index
    %c0_284 = arith.constant 0 : index
    %c0_285 = arith.constant 0 : index
    %812 = vector.load %arg2[%c3_283, %c0_284, %c0_285] : memref<10x1x128xf32, #tpu.memory_space<vmem>>, vector<1x1x128xf32>
    %813 = vector.shape_cast %812 : vector<1x1x128xf32> to vector<1x128xf32>
    %814 = vector.broadcast %813 : vector<1x128xf32> to vector<2x128xf32>
    %815 = arith.addf %811, %814 : vector<2x128xf32>
    %816 = arith.negf %815 : vector<2x128xf32>
    %817 = math.exp %816 : vector<2x128xf32>
    %cst_286 = arith.constant 1.000000e+00 : f32
    %818 = vector.broadcast %cst_286 : f32 to vector<2x128xf32>
    %819 = arith.addf %818, %817 : vector<2x128xf32>
    %820 = arith.divf %818, %819 : vector<2x128xf32>
    %821 = vector.extract_strided_slice %820 {offsets = [0, 0], sizes = [2, 32], strides = [1, 1]} : vector<2x128xf32> to vector<2x32xf32>
    %822 = vector.extract_strided_slice %820 {offsets = [0, 32], sizes = [2, 32], strides = [1, 1]} : vector<2x128xf32> to vector<2x32xf32>
    %823 = vector.extract_strided_slice %820 {offsets = [0, 64], sizes = [2, 32], strides = [1, 1]} : vector<2x128xf32> to vector<2x32xf32>
    %cst_287 = arith.constant 2.000000e+00 : f32
    %824 = vector.broadcast %cst_287 : f32 to vector<2x32xf32>
    %825 = arith.mulf %824, %823 : vector<2x32xf32>
    %cst_288 = arith.constant 1.000000e+00 : f32
    %826 = vector.broadcast %cst_288 : f32 to vector<2x32xf32>
    %827 = arith.subf %825, %826 : vector<2x32xf32>
    %828 = vector.extract_strided_slice %820 {offsets = [0, 96], sizes = [2, 32], strides = [1, 1]} : vector<2x128xf32> to vector<2x32xf32>
    %829 = arith.mulf %822, %628 : vector<2x32xf32>
    %830 = arith.mulf %821, %827 : vector<2x32xf32>
    %831 = arith.addf %829, %830 : vector<2x32xf32>
    %832 = math.tanh %831 : vector<2x32xf32>
    %833 = arith.mulf %828, %832 : vector<2x32xf32>
    %834 = tpu.concatenate %682, %656 in 1 : vector<2x32xf32>, vector<2x32xf32> -> vector<2x64xf32>
    %c2_289 = arith.constant 2 : index
    %c0_290 = arith.constant 0 : index
    %c0_291 = arith.constant 0 : index
    %835 = vector.load %arg1[%c2_289, %c0_290, %c0_291] : memref<10x64x128xf32, #tpu.memory_space<vmem>>, vector<1x64x128xf32>
    %836 = vector.shape_cast %835 : vector<1x64x128xf32> to vector<64x128xf32>
    %cst_292 = arith.constant dense<0.000000e+00> : vector<2x128xf32>
    %837 = tpu.matmul %834, %836, %cst_292 {dimension_numbers = #tpu.dot_dimension_numbers<[1], [0], [0], [1], [0, 0, 1, 1], [], []>} : vector<2x64xf32>, vector<64x128xf32>, vector<2x128xf32> -> vector<2x128xf32>
    %c2_293 = arith.constant 2 : index
    %c0_294 = arith.constant 0 : index
    %c0_295 = arith.constant 0 : index
    %838 = vector.load %arg2[%c2_293, %c0_294, %c0_295] : memref<10x1x128xf32, #tpu.memory_space<vmem>>, vector<1x1x128xf32>
    %839 = vector.shape_cast %838 : vector<1x1x128xf32> to vector<1x128xf32>
    %840 = vector.broadcast %839 : vector<1x128xf32> to vector<2x128xf32>
    %841 = arith.addf %837, %840 : vector<2x128xf32>
    %842 = arith.negf %841 : vector<2x128xf32>
    %843 = math.exp %842 : vector<2x128xf32>
    %cst_296 = arith.constant 1.000000e+00 : f32
    %844 = vector.broadcast %cst_296 : f32 to vector<2x128xf32>
    %845 = arith.addf %844, %843 : vector<2x128xf32>
    %846 = arith.divf %844, %845 : vector<2x128xf32>
    %847 = vector.extract_strided_slice %846 {offsets = [0, 0], sizes = [2, 32], strides = [1, 1]} : vector<2x128xf32> to vector<2x32xf32>
    %848 = vector.extract_strided_slice %846 {offsets = [0, 32], sizes = [2, 32], strides = [1, 1]} : vector<2x128xf32> to vector<2x32xf32>
    %849 = vector.extract_strided_slice %846 {offsets = [0, 64], sizes = [2, 32], strides = [1, 1]} : vector<2x128xf32> to vector<2x32xf32>
    %cst_297 = arith.constant 2.000000e+00 : f32
    %850 = vector.broadcast %cst_297 : f32 to vector<2x32xf32>
    %851 = arith.mulf %850, %849 : vector<2x32xf32>
    %cst_298 = arith.constant 1.000000e+00 : f32
    %852 = vector.broadcast %cst_298 : f32 to vector<2x32xf32>
    %853 = arith.subf %851, %852 : vector<2x32xf32>
    %854 = vector.extract_strided_slice %846 {offsets = [0, 96], sizes = [2, 32], strides = [1, 1]} : vector<2x128xf32> to vector<2x32xf32>
    %855 = arith.mulf %848, %654 : vector<2x32xf32>
    %856 = arith.mulf %847, %853 : vector<2x32xf32>
    %857 = arith.addf %855, %856 : vector<2x32xf32>
    %858 = math.tanh %857 : vector<2x32xf32>
    %859 = arith.mulf %854, %858 : vector<2x32xf32>
    %860 = tpu.concatenate %703, %682 in 1 : vector<2x32xf32>, vector<2x32xf32> -> vector<2x64xf32>
    %c1_299 = arith.constant 1 : index
    %c0_300 = arith.constant 0 : index
    %c0_301 = arith.constant 0 : index
    %861 = vector.load %arg1[%c1_299, %c0_300, %c0_301] : memref<10x64x128xf32, #tpu.memory_space<vmem>>, vector<1x64x128xf32>
    %862 = vector.shape_cast %861 : vector<1x64x128xf32> to vector<64x128xf32>
    %cst_302 = arith.constant dense<0.000000e+00> : vector<2x128xf32>
    %863 = tpu.matmul %860, %862, %cst_302 {dimension_numbers = #tpu.dot_dimension_numbers<[1], [0], [0], [1], [0, 0, 1, 1], [], []>} : vector<2x64xf32>, vector<64x128xf32>, vector<2x128xf32> -> vector<2x128xf32>
    %c1_303 = arith.constant 1 : index
    %c0_304 = arith.constant 0 : index
    %c0_305 = arith.constant 0 : index
    %864 = vector.load %arg2[%c1_303, %c0_304, %c0_305] : memref<10x1x128xf32, #tpu.memory_space<vmem>>, vector<1x1x128xf32>
    %865 = vector.shape_cast %864 : vector<1x1x128xf32> to vector<1x128xf32>
    %866 = vector.broadcast %865 : vector<1x128xf32> to vector<2x128xf32>
    %867 = arith.addf %863, %866 : vector<2x128xf32>
    %868 = arith.negf %867 : vector<2x128xf32>
    %869 = math.exp %868 : vector<2x128xf32>
    %cst_306 = arith.constant 1.000000e+00 : f32
    %870 = vector.broadcast %cst_306 : f32 to vector<2x128xf32>
    %871 = arith.addf %870, %869 : vector<2x128xf32>
    %872 = arith.divf %870, %871 : vector<2x128xf32>
    %873 = vector.extract_strided_slice %872 {offsets = [0, 0], sizes = [2, 32], strides = [1, 1]} : vector<2x128xf32> to vector<2x32xf32>
    %874 = vector.extract_strided_slice %872 {offsets = [0, 32], sizes = [2, 32], strides = [1, 1]} : vector<2x128xf32> to vector<2x32xf32>
    %875 = vector.extract_strided_slice %872 {offsets = [0, 64], sizes = [2, 32], strides = [1, 1]} : vector<2x128xf32> to vector<2x32xf32>
    %cst_307 = arith.constant 2.000000e+00 : f32
    %876 = vector.broadcast %cst_307 : f32 to vector<2x32xf32>
    %877 = arith.mulf %876, %875 : vector<2x32xf32>
    %cst_308 = arith.constant 1.000000e+00 : f32
    %878 = vector.broadcast %cst_308 : f32 to vector<2x32xf32>
    %879 = arith.subf %877, %878 : vector<2x32xf32>
    %880 = vector.extract_strided_slice %872 {offsets = [0, 96], sizes = [2, 32], strides = [1, 1]} : vector<2x128xf32> to vector<2x32xf32>
    %881 = arith.mulf %874, %680 : vector<2x32xf32>
    %882 = arith.mulf %873, %879 : vector<2x32xf32>
    %883 = arith.addf %881, %882 : vector<2x32xf32>
    %884 = math.tanh %883 : vector<2x32xf32>
    %885 = arith.mulf %880, %884 : vector<2x32xf32>
    %886 = vector.extract_strided_slice %9 {offsets = [14, 0], sizes = [2, 128], strides = [1, 1]} : vector<16x128xf32> to vector<2x128xf32>
    %cst_309 = arith.constant dense<0.000000e+00> : vector<2x128xf32>
    %887 = tpu.matmul %703, %3, %cst_309 {dimension_numbers = #tpu.dot_dimension_numbers<[1], [0], [0], [1], [0, 0, 1, 1], [], []>} : vector<2x32xf32>, vector<32x128xf32>, vector<2x128xf32> -> vector<2x128xf32>
    %888 = arith.addf %886, %887 : vector<2x128xf32>
    %889 = arith.negf %888 : vector<2x128xf32>
    %890 = math.exp %889 : vector<2x128xf32>
    %cst_310 = arith.constant 1.000000e+00 : f32
    %891 = vector.broadcast %cst_310 : f32 to vector<2x128xf32>
    %892 = arith.addf %891, %890 : vector<2x128xf32>
    %893 = arith.divf %891, %892 : vector<2x128xf32>
    %894 = vector.extract_strided_slice %893 {offsets = [0, 0], sizes = [2, 32], strides = [1, 1]} : vector<2x128xf32> to vector<2x32xf32>
    %895 = vector.extract_strided_slice %893 {offsets = [0, 32], sizes = [2, 32], strides = [1, 1]} : vector<2x128xf32> to vector<2x32xf32>
    %896 = vector.extract_strided_slice %893 {offsets = [0, 64], sizes = [2, 32], strides = [1, 1]} : vector<2x128xf32> to vector<2x32xf32>
    %cst_311 = arith.constant 2.000000e+00 : f32
    %897 = vector.broadcast %cst_311 : f32 to vector<2x32xf32>
    %898 = arith.mulf %897, %896 : vector<2x32xf32>
    %cst_312 = arith.constant 1.000000e+00 : f32
    %899 = vector.broadcast %cst_312 : f32 to vector<2x32xf32>
    %900 = arith.subf %898, %899 : vector<2x32xf32>
    %901 = vector.extract_strided_slice %893 {offsets = [0, 96], sizes = [2, 32], strides = [1, 1]} : vector<2x128xf32> to vector<2x32xf32>
    %902 = arith.mulf %895, %701 : vector<2x32xf32>
    %903 = arith.mulf %894, %900 : vector<2x32xf32>
    %904 = arith.addf %902, %903 : vector<2x32xf32>
    %905 = math.tanh %904 : vector<2x32xf32>
    %906 = arith.mulf %901, %905 : vector<2x32xf32>
    %907 = tpu.concatenate %729, %10 in 1 : vector<2x32xf32>, vector<2x32xf32> -> vector<2x64xf32>
    %c8 = arith.constant 8 : index
    %c0_313 = arith.constant 0 : index
    %c0_314 = arith.constant 0 : index
    %908 = vector.load %arg1[%c8, %c0_313, %c0_314] : memref<10x64x128xf32, #tpu.memory_space<vmem>>, vector<1x64x128xf32>
    %909 = vector.shape_cast %908 : vector<1x64x128xf32> to vector<64x128xf32>
    %cst_315 = arith.constant dense<0.000000e+00> : vector<2x128xf32>
    %910 = tpu.matmul %907, %909, %cst_315 {dimension_numbers = #tpu.dot_dimension_numbers<[1], [0], [0], [1], [0, 0, 1, 1], [], []>} : vector<2x64xf32>, vector<64x128xf32>, vector<2x128xf32> -> vector<2x128xf32>
    %c8_316 = arith.constant 8 : index
    %c0_317 = arith.constant 0 : index
    %c0_318 = arith.constant 0 : index
    %911 = vector.load %arg2[%c8_316, %c0_317, %c0_318] : memref<10x1x128xf32, #tpu.memory_space<vmem>>, vector<1x1x128xf32>
    %912 = vector.shape_cast %911 : vector<1x1x128xf32> to vector<1x128xf32>
    %913 = vector.broadcast %912 : vector<1x128xf32> to vector<2x128xf32>
    %914 = arith.addf %910, %913 : vector<2x128xf32>
    %915 = arith.negf %914 : vector<2x128xf32>
    %916 = math.exp %915 : vector<2x128xf32>
    %cst_319 = arith.constant 1.000000e+00 : f32
    %917 = vector.broadcast %cst_319 : f32 to vector<2x128xf32>
    %918 = arith.addf %917, %916 : vector<2x128xf32>
    %919 = arith.divf %917, %918 : vector<2x128xf32>
    %920 = vector.extract_strided_slice %919 {offsets = [0, 0], sizes = [2, 32], strides = [1, 1]} : vector<2x128xf32> to vector<2x32xf32>
    %921 = vector.extract_strided_slice %919 {offsets = [0, 32], sizes = [2, 32], strides = [1, 1]} : vector<2x128xf32> to vector<2x32xf32>
    %922 = vector.extract_strided_slice %919 {offsets = [0, 64], sizes = [2, 32], strides = [1, 1]} : vector<2x128xf32> to vector<2x32xf32>
    %cst_320 = arith.constant 2.000000e+00 : f32
    %923 = vector.broadcast %cst_320 : f32 to vector<2x32xf32>
    %924 = arith.mulf %923, %922 : vector<2x32xf32>
    %cst_321 = arith.constant 1.000000e+00 : f32
    %925 = vector.broadcast %cst_321 : f32 to vector<2x32xf32>
    %926 = arith.subf %924, %925 : vector<2x32xf32>
    %927 = vector.extract_strided_slice %919 {offsets = [0, 96], sizes = [2, 32], strides = [1, 1]} : vector<2x128xf32> to vector<2x32xf32>
    %928 = arith.mulf %921, %10 : vector<2x32xf32>
    %929 = arith.mulf %920, %926 : vector<2x32xf32>
    %930 = arith.addf %928, %929 : vector<2x32xf32>
    %931 = math.tanh %930 : vector<2x32xf32>
    %932 = arith.mulf %927, %931 : vector<2x32xf32>
    %933 = tpu.concatenate %755, %729 in 1 : vector<2x32xf32>, vector<2x32xf32> -> vector<2x64xf32>
    %c7_322 = arith.constant 7 : index
    %c0_323 = arith.constant 0 : index
    %c0_324 = arith.constant 0 : index
    %934 = vector.load %arg1[%c7_322, %c0_323, %c0_324] : memref<10x64x128xf32, #tpu.memory_space<vmem>>, vector<1x64x128xf32>
    %935 = vector.shape_cast %934 : vector<1x64x128xf32> to vector<64x128xf32>
    %cst_325 = arith.constant dense<0.000000e+00> : vector<2x128xf32>
    %936 = tpu.matmul %933, %935, %cst_325 {dimension_numbers = #tpu.dot_dimension_numbers<[1], [0], [0], [1], [0, 0, 1, 1], [], []>} : vector<2x64xf32>, vector<64x128xf32>, vector<2x128xf32> -> vector<2x128xf32>
    %c7_326 = arith.constant 7 : index
    %c0_327 = arith.constant 0 : index
    %c0_328 = arith.constant 0 : index
    %937 = vector.load %arg2[%c7_326, %c0_327, %c0_328] : memref<10x1x128xf32, #tpu.memory_space<vmem>>, vector<1x1x128xf32>
    %938 = vector.shape_cast %937 : vector<1x1x128xf32> to vector<1x128xf32>
    %939 = vector.broadcast %938 : vector<1x128xf32> to vector<2x128xf32>
    %940 = arith.addf %936, %939 : vector<2x128xf32>
    %941 = arith.negf %940 : vector<2x128xf32>
    %942 = math.exp %941 : vector<2x128xf32>
    %cst_329 = arith.constant 1.000000e+00 : f32
    %943 = vector.broadcast %cst_329 : f32 to vector<2x128xf32>
    %944 = arith.addf %943, %942 : vector<2x128xf32>
    %945 = arith.divf %943, %944 : vector<2x128xf32>
    %946 = vector.extract_strided_slice %945 {offsets = [0, 0], sizes = [2, 32], strides = [1, 1]} : vector<2x128xf32> to vector<2x32xf32>
    %947 = vector.extract_strided_slice %945 {offsets = [0, 32], sizes = [2, 32], strides = [1, 1]} : vector<2x128xf32> to vector<2x32xf32>
    %948 = vector.extract_strided_slice %945 {offsets = [0, 64], sizes = [2, 32], strides = [1, 1]} : vector<2x128xf32> to vector<2x32xf32>
    %cst_330 = arith.constant 2.000000e+00 : f32
    %949 = vector.broadcast %cst_330 : f32 to vector<2x32xf32>
    %950 = arith.mulf %949, %948 : vector<2x32xf32>
    %cst_331 = arith.constant 1.000000e+00 : f32
    %951 = vector.broadcast %cst_331 : f32 to vector<2x32xf32>
    %952 = arith.subf %950, %951 : vector<2x32xf32>
    %953 = vector.extract_strided_slice %945 {offsets = [0, 96], sizes = [2, 32], strides = [1, 1]} : vector<2x128xf32> to vector<2x32xf32>
    %954 = arith.mulf %947, %727 : vector<2x32xf32>
    %955 = arith.mulf %946, %952 : vector<2x32xf32>
    %956 = arith.addf %954, %955 : vector<2x32xf32>
    %957 = math.tanh %956 : vector<2x32xf32>
    %958 = arith.mulf %953, %957 : vector<2x32xf32>
    %959 = tpu.concatenate %781, %755 in 1 : vector<2x32xf32>, vector<2x32xf32> -> vector<2x64xf32>
    %c6_332 = arith.constant 6 : index
    %c0_333 = arith.constant 0 : index
    %c0_334 = arith.constant 0 : index
    %960 = vector.load %arg1[%c6_332, %c0_333, %c0_334] : memref<10x64x128xf32, #tpu.memory_space<vmem>>, vector<1x64x128xf32>
    %961 = vector.shape_cast %960 : vector<1x64x128xf32> to vector<64x128xf32>
    %cst_335 = arith.constant dense<0.000000e+00> : vector<2x128xf32>
    %962 = tpu.matmul %959, %961, %cst_335 {dimension_numbers = #tpu.dot_dimension_numbers<[1], [0], [0], [1], [0, 0, 1, 1], [], []>} : vector<2x64xf32>, vector<64x128xf32>, vector<2x128xf32> -> vector<2x128xf32>
    %c6_336 = arith.constant 6 : index
    %c0_337 = arith.constant 0 : index
    %c0_338 = arith.constant 0 : index
    %963 = vector.load %arg2[%c6_336, %c0_337, %c0_338] : memref<10x1x128xf32, #tpu.memory_space<vmem>>, vector<1x1x128xf32>
    %964 = vector.shape_cast %963 : vector<1x1x128xf32> to vector<1x128xf32>
    %965 = vector.broadcast %964 : vector<1x128xf32> to vector<2x128xf32>
    %966 = arith.addf %962, %965 : vector<2x128xf32>
    %967 = arith.negf %966 : vector<2x128xf32>
    %968 = math.exp %967 : vector<2x128xf32>
    %cst_339 = arith.constant 1.000000e+00 : f32
    %969 = vector.broadcast %cst_339 : f32 to vector<2x128xf32>
    %970 = arith.addf %969, %968 : vector<2x128xf32>
    %971 = arith.divf %969, %970 : vector<2x128xf32>
    %972 = vector.extract_strided_slice %971 {offsets = [0, 0], sizes = [2, 32], strides = [1, 1]} : vector<2x128xf32> to vector<2x32xf32>
    %973 = vector.extract_strided_slice %971 {offsets = [0, 32], sizes = [2, 32], strides = [1, 1]} : vector<2x128xf32> to vector<2x32xf32>
    %974 = vector.extract_strided_slice %971 {offsets = [0, 64], sizes = [2, 32], strides = [1, 1]} : vector<2x128xf32> to vector<2x32xf32>
    %cst_340 = arith.constant 2.000000e+00 : f32
    %975 = vector.broadcast %cst_340 : f32 to vector<2x32xf32>
    %976 = arith.mulf %975, %974 : vector<2x32xf32>
    %cst_341 = arith.constant 1.000000e+00 : f32
    %977 = vector.broadcast %cst_341 : f32 to vector<2x32xf32>
    %978 = arith.subf %976, %977 : vector<2x32xf32>
    %979 = vector.extract_strided_slice %971 {offsets = [0, 96], sizes = [2, 32], strides = [1, 1]} : vector<2x128xf32> to vector<2x32xf32>
    %980 = arith.mulf %973, %753 : vector<2x32xf32>
    %981 = arith.mulf %972, %978 : vector<2x32xf32>
    %982 = arith.addf %980, %981 : vector<2x32xf32>
    %983 = math.tanh %982 : vector<2x32xf32>
    %984 = arith.mulf %979, %983 : vector<2x32xf32>
    %985 = tpu.concatenate %807, %781 in 1 : vector<2x32xf32>, vector<2x32xf32> -> vector<2x64xf32>
    %c5_342 = arith.constant 5 : index
    %c0_343 = arith.constant 0 : index
    %c0_344 = arith.constant 0 : index
    %986 = vector.load %arg1[%c5_342, %c0_343, %c0_344] : memref<10x64x128xf32, #tpu.memory_space<vmem>>, vector<1x64x128xf32>
    %987 = vector.shape_cast %986 : vector<1x64x128xf32> to vector<64x128xf32>
    %cst_345 = arith.constant dense<0.000000e+00> : vector<2x128xf32>
    %988 = tpu.matmul %985, %987, %cst_345 {dimension_numbers = #tpu.dot_dimension_numbers<[1], [0], [0], [1], [0, 0, 1, 1], [], []>} : vector<2x64xf32>, vector<64x128xf32>, vector<2x128xf32> -> vector<2x128xf32>
    %c5_346 = arith.constant 5 : index
    %c0_347 = arith.constant 0 : index
    %c0_348 = arith.constant 0 : index
    %989 = vector.load %arg2[%c5_346, %c0_347, %c0_348] : memref<10x1x128xf32, #tpu.memory_space<vmem>>, vector<1x1x128xf32>
    %990 = vector.shape_cast %989 : vector<1x1x128xf32> to vector<1x128xf32>
    %991 = vector.broadcast %990 : vector<1x128xf32> to vector<2x128xf32>
    %992 = arith.addf %988, %991 : vector<2x128xf32>
    %993 = arith.negf %992 : vector<2x128xf32>
    %994 = math.exp %993 : vector<2x128xf32>
    %cst_349 = arith.constant 1.000000e+00 : f32
    %995 = vector.broadcast %cst_349 : f32 to vector<2x128xf32>
    %996 = arith.addf %995, %994 : vector<2x128xf32>
    %997 = arith.divf %995, %996 : vector<2x128xf32>
    %998 = vector.extract_strided_slice %997 {offsets = [0, 0], sizes = [2, 32], strides = [1, 1]} : vector<2x128xf32> to vector<2x32xf32>
    %999 = vector.extract_strided_slice %997 {offsets = [0, 32], sizes = [2, 32], strides = [1, 1]} : vector<2x128xf32> to vector<2x32xf32>
    %1000 = vector.extract_strided_slice %997 {offsets = [0, 64], sizes = [2, 32], strides = [1, 1]} : vector<2x128xf32> to vector<2x32xf32>
    %cst_350 = arith.constant 2.000000e+00 : f32
    %1001 = vector.broadcast %cst_350 : f32 to vector<2x32xf32>
    %1002 = arith.mulf %1001, %1000 : vector<2x32xf32>
    %cst_351 = arith.constant 1.000000e+00 : f32
    %1003 = vector.broadcast %cst_351 : f32 to vector<2x32xf32>
    %1004 = arith.subf %1002, %1003 : vector<2x32xf32>
    %1005 = vector.extract_strided_slice %997 {offsets = [0, 96], sizes = [2, 32], strides = [1, 1]} : vector<2x128xf32> to vector<2x32xf32>
    %1006 = arith.mulf %999, %779 : vector<2x32xf32>
    %1007 = arith.mulf %998, %1004 : vector<2x32xf32>
    %1008 = arith.addf %1006, %1007 : vector<2x32xf32>
    %1009 = math.tanh %1008 : vector<2x32xf32>
    %1010 = arith.mulf %1005, %1009 : vector<2x32xf32>
    %1011 = tpu.concatenate %833, %807 in 1 : vector<2x32xf32>, vector<2x32xf32> -> vector<2x64xf32>
    %c4_352 = arith.constant 4 : index
    %c0_353 = arith.constant 0 : index
    %c0_354 = arith.constant 0 : index
    %1012 = vector.load %arg1[%c4_352, %c0_353, %c0_354] : memref<10x64x128xf32, #tpu.memory_space<vmem>>, vector<1x64x128xf32>
    %1013 = vector.shape_cast %1012 : vector<1x64x128xf32> to vector<64x128xf32>
    %cst_355 = arith.constant dense<0.000000e+00> : vector<2x128xf32>
    %1014 = tpu.matmul %1011, %1013, %cst_355 {dimension_numbers = #tpu.dot_dimension_numbers<[1], [0], [0], [1], [0, 0, 1, 1], [], []>} : vector<2x64xf32>, vector<64x128xf32>, vector<2x128xf32> -> vector<2x128xf32>
    %c4_356 = arith.constant 4 : index
    %c0_357 = arith.constant 0 : index
    %c0_358 = arith.constant 0 : index
    %1015 = vector.load %arg2[%c4_356, %c0_357, %c0_358] : memref<10x1x128xf32, #tpu.memory_space<vmem>>, vector<1x1x128xf32>
    %1016 = vector.shape_cast %1015 : vector<1x1x128xf32> to vector<1x128xf32>
    %1017 = vector.broadcast %1016 : vector<1x128xf32> to vector<2x128xf32>
    %1018 = arith.addf %1014, %1017 : vector<2x128xf32>
    %1019 = arith.negf %1018 : vector<2x128xf32>
    %1020 = math.exp %1019 : vector<2x128xf32>
    %cst_359 = arith.constant 1.000000e+00 : f32
    %1021 = vector.broadcast %cst_359 : f32 to vector<2x128xf32>
    %1022 = arith.addf %1021, %1020 : vector<2x128xf32>
    %1023 = arith.divf %1021, %1022 : vector<2x128xf32>
    %1024 = vector.extract_strided_slice %1023 {offsets = [0, 0], sizes = [2, 32], strides = [1, 1]} : vector<2x128xf32> to vector<2x32xf32>
    %1025 = vector.extract_strided_slice %1023 {offsets = [0, 32], sizes = [2, 32], strides = [1, 1]} : vector<2x128xf32> to vector<2x32xf32>
    %1026 = vector.extract_strided_slice %1023 {offsets = [0, 64], sizes = [2, 32], strides = [1, 1]} : vector<2x128xf32> to vector<2x32xf32>
    %cst_360 = arith.constant 2.000000e+00 : f32
    %1027 = vector.broadcast %cst_360 : f32 to vector<2x32xf32>
    %1028 = arith.mulf %1027, %1026 : vector<2x32xf32>
    %cst_361 = arith.constant 1.000000e+00 : f32
    %1029 = vector.broadcast %cst_361 : f32 to vector<2x32xf32>
    %1030 = arith.subf %1028, %1029 : vector<2x32xf32>
    %1031 = vector.extract_strided_slice %1023 {offsets = [0, 96], sizes = [2, 32], strides = [1, 1]} : vector<2x128xf32> to vector<2x32xf32>
    %1032 = arith.mulf %1025, %805 : vector<2x32xf32>
    %1033 = arith.mulf %1024, %1030 : vector<2x32xf32>
    %1034 = arith.addf %1032, %1033 : vector<2x32xf32>
    %1035 = math.tanh %1034 : vector<2x32xf32>
    %1036 = arith.mulf %1031, %1035 : vector<2x32xf32>
    %1037 = tpu.concatenate %859, %833 in 1 : vector<2x32xf32>, vector<2x32xf32> -> vector<2x64xf32>
    %c3_362 = arith.constant 3 : index
    %c0_363 = arith.constant 0 : index
    %c0_364 = arith.constant 0 : index
    %1038 = vector.load %arg1[%c3_362, %c0_363, %c0_364] : memref<10x64x128xf32, #tpu.memory_space<vmem>>, vector<1x64x128xf32>
    %1039 = vector.shape_cast %1038 : vector<1x64x128xf32> to vector<64x128xf32>
    %cst_365 = arith.constant dense<0.000000e+00> : vector<2x128xf32>
    %1040 = tpu.matmul %1037, %1039, %cst_365 {dimension_numbers = #tpu.dot_dimension_numbers<[1], [0], [0], [1], [0, 0, 1, 1], [], []>} : vector<2x64xf32>, vector<64x128xf32>, vector<2x128xf32> -> vector<2x128xf32>
    %c3_366 = arith.constant 3 : index
    %c0_367 = arith.constant 0 : index
    %c0_368 = arith.constant 0 : index
    %1041 = vector.load %arg2[%c3_366, %c0_367, %c0_368] : memref<10x1x128xf32, #tpu.memory_space<vmem>>, vector<1x1x128xf32>
    %1042 = vector.shape_cast %1041 : vector<1x1x128xf32> to vector<1x128xf32>
    %1043 = vector.broadcast %1042 : vector<1x128xf32> to vector<2x128xf32>
    %1044 = arith.addf %1040, %1043 : vector<2x128xf32>
    %1045 = arith.negf %1044 : vector<2x128xf32>
    %1046 = math.exp %1045 : vector<2x128xf32>
    %cst_369 = arith.constant 1.000000e+00 : f32
    %1047 = vector.broadcast %cst_369 : f32 to vector<2x128xf32>
    %1048 = arith.addf %1047, %1046 : vector<2x128xf32>
    %1049 = arith.divf %1047, %1048 : vector<2x128xf32>
    %1050 = vector.extract_strided_slice %1049 {offsets = [0, 0], sizes = [2, 32], strides = [1, 1]} : vector<2x128xf32> to vector<2x32xf32>
    %1051 = vector.extract_strided_slice %1049 {offsets = [0, 32], sizes = [2, 32], strides = [1, 1]} : vector<2x128xf32> to vector<2x32xf32>
    %1052 = vector.extract_strided_slice %1049 {offsets = [0, 64], sizes = [2, 32], strides = [1, 1]} : vector<2x128xf32> to vector<2x32xf32>
    %cst_370 = arith.constant 2.000000e+00 : f32
    %1053 = vector.broadcast %cst_370 : f32 to vector<2x32xf32>
    %1054 = arith.mulf %1053, %1052 : vector<2x32xf32>
    %cst_371 = arith.constant 1.000000e+00 : f32
    %1055 = vector.broadcast %cst_371 : f32 to vector<2x32xf32>
    %1056 = arith.subf %1054, %1055 : vector<2x32xf32>
    %1057 = vector.extract_strided_slice %1049 {offsets = [0, 96], sizes = [2, 32], strides = [1, 1]} : vector<2x128xf32> to vector<2x32xf32>
    %1058 = arith.mulf %1051, %831 : vector<2x32xf32>
    %1059 = arith.mulf %1050, %1056 : vector<2x32xf32>
    %1060 = arith.addf %1058, %1059 : vector<2x32xf32>
    %1061 = math.tanh %1060 : vector<2x32xf32>
    %1062 = arith.mulf %1057, %1061 : vector<2x32xf32>
    %1063 = tpu.concatenate %885, %859 in 1 : vector<2x32xf32>, vector<2x32xf32> -> vector<2x64xf32>
    %c2_372 = arith.constant 2 : index
    %c0_373 = arith.constant 0 : index
    %c0_374 = arith.constant 0 : index
    %1064 = vector.load %arg1[%c2_372, %c0_373, %c0_374] : memref<10x64x128xf32, #tpu.memory_space<vmem>>, vector<1x64x128xf32>
    %1065 = vector.shape_cast %1064 : vector<1x64x128xf32> to vector<64x128xf32>
    %cst_375 = arith.constant dense<0.000000e+00> : vector<2x128xf32>
    %1066 = tpu.matmul %1063, %1065, %cst_375 {dimension_numbers = #tpu.dot_dimension_numbers<[1], [0], [0], [1], [0, 0, 1, 1], [], []>} : vector<2x64xf32>, vector<64x128xf32>, vector<2x128xf32> -> vector<2x128xf32>
    %c2_376 = arith.constant 2 : index
    %c0_377 = arith.constant 0 : index
    %c0_378 = arith.constant 0 : index
    %1067 = vector.load %arg2[%c2_376, %c0_377, %c0_378] : memref<10x1x128xf32, #tpu.memory_space<vmem>>, vector<1x1x128xf32>
    %1068 = vector.shape_cast %1067 : vector<1x1x128xf32> to vector<1x128xf32>
    %1069 = vector.broadcast %1068 : vector<1x128xf32> to vector<2x128xf32>
    %1070 = arith.addf %1066, %1069 : vector<2x128xf32>
    %1071 = arith.negf %1070 : vector<2x128xf32>
    %1072 = math.exp %1071 : vector<2x128xf32>
    %cst_379 = arith.constant 1.000000e+00 : f32
    %1073 = vector.broadcast %cst_379 : f32 to vector<2x128xf32>
    %1074 = arith.addf %1073, %1072 : vector<2x128xf32>
    %1075 = arith.divf %1073, %1074 : vector<2x128xf32>
    %1076 = vector.extract_strided_slice %1075 {offsets = [0, 0], sizes = [2, 32], strides = [1, 1]} : vector<2x128xf32> to vector<2x32xf32>
    %1077 = vector.extract_strided_slice %1075 {offsets = [0, 32], sizes = [2, 32], strides = [1, 1]} : vector<2x128xf32> to vector<2x32xf32>
    %1078 = vector.extract_strided_slice %1075 {offsets = [0, 64], sizes = [2, 32], strides = [1, 1]} : vector<2x128xf32> to vector<2x32xf32>
    %cst_380 = arith.constant 2.000000e+00 : f32
    %1079 = vector.broadcast %cst_380 : f32 to vector<2x32xf32>
    %1080 = arith.mulf %1079, %1078 : vector<2x32xf32>
    %cst_381 = arith.constant 1.000000e+00 : f32
    %1081 = vector.broadcast %cst_381 : f32 to vector<2x32xf32>
    %1082 = arith.subf %1080, %1081 : vector<2x32xf32>
    %1083 = vector.extract_strided_slice %1075 {offsets = [0, 96], sizes = [2, 32], strides = [1, 1]} : vector<2x128xf32> to vector<2x32xf32>
    %1084 = arith.mulf %1077, %857 : vector<2x32xf32>
    %1085 = arith.mulf %1076, %1082 : vector<2x32xf32>
    %1086 = arith.addf %1084, %1085 : vector<2x32xf32>
    %1087 = math.tanh %1086 : vector<2x32xf32>
    %1088 = arith.mulf %1083, %1087 : vector<2x32xf32>
    %1089 = tpu.concatenate %906, %885 in 1 : vector<2x32xf32>, vector<2x32xf32> -> vector<2x64xf32>
    %c1_382 = arith.constant 1 : index
    %c0_383 = arith.constant 0 : index
    %c0_384 = arith.constant 0 : index
    %1090 = vector.load %arg1[%c1_382, %c0_383, %c0_384] : memref<10x64x128xf32, #tpu.memory_space<vmem>>, vector<1x64x128xf32>
    %1091 = vector.shape_cast %1090 : vector<1x64x128xf32> to vector<64x128xf32>
    %cst_385 = arith.constant dense<0.000000e+00> : vector<2x128xf32>
    %1092 = tpu.matmul %1089, %1091, %cst_385 {dimension_numbers = #tpu.dot_dimension_numbers<[1], [0], [0], [1], [0, 0, 1, 1], [], []>} : vector<2x64xf32>, vector<64x128xf32>, vector<2x128xf32> -> vector<2x128xf32>
    %c1_386 = arith.constant 1 : index
    %c0_387 = arith.constant 0 : index
    %c0_388 = arith.constant 0 : index
    %1093 = vector.load %arg2[%c1_386, %c0_387, %c0_388] : memref<10x1x128xf32, #tpu.memory_space<vmem>>, vector<1x1x128xf32>
    %1094 = vector.shape_cast %1093 : vector<1x1x128xf32> to vector<1x128xf32>
    %1095 = vector.broadcast %1094 : vector<1x128xf32> to vector<2x128xf32>
    %1096 = arith.addf %1092, %1095 : vector<2x128xf32>
    %1097 = arith.negf %1096 : vector<2x128xf32>
    %1098 = math.exp %1097 : vector<2x128xf32>
    %cst_389 = arith.constant 1.000000e+00 : f32
    %1099 = vector.broadcast %cst_389 : f32 to vector<2x128xf32>
    %1100 = arith.addf %1099, %1098 : vector<2x128xf32>
    %1101 = arith.divf %1099, %1100 : vector<2x128xf32>
    %1102 = vector.extract_strided_slice %1101 {offsets = [0, 0], sizes = [2, 32], strides = [1, 1]} : vector<2x128xf32> to vector<2x32xf32>
    %1103 = vector.extract_strided_slice %1101 {offsets = [0, 32], sizes = [2, 32], strides = [1, 1]} : vector<2x128xf32> to vector<2x32xf32>
    %1104 = vector.extract_strided_slice %1101 {offsets = [0, 64], sizes = [2, 32], strides = [1, 1]} : vector<2x128xf32> to vector<2x32xf32>
    %cst_390 = arith.constant 2.000000e+00 : f32
    %1105 = vector.broadcast %cst_390 : f32 to vector<2x32xf32>
    %1106 = arith.mulf %1105, %1104 : vector<2x32xf32>
    %cst_391 = arith.constant 1.000000e+00 : f32
    %1107 = vector.broadcast %cst_391 : f32 to vector<2x32xf32>
    %1108 = arith.subf %1106, %1107 : vector<2x32xf32>
    %1109 = vector.extract_strided_slice %1101 {offsets = [0, 96], sizes = [2, 32], strides = [1, 1]} : vector<2x128xf32> to vector<2x32xf32>
    %1110 = arith.mulf %1103, %883 : vector<2x32xf32>
    %1111 = arith.mulf %1102, %1108 : vector<2x32xf32>
    %1112 = arith.addf %1110, %1111 : vector<2x32xf32>
    %1113 = math.tanh %1112 : vector<2x32xf32>
    %1114 = arith.mulf %1109, %1113 : vector<2x32xf32>
    %1115 = tpu.concatenate %932, %10 in 1 : vector<2x32xf32>, vector<2x32xf32> -> vector<2x64xf32>
    %c9 = arith.constant 9 : index
    %c0_392 = arith.constant 0 : index
    %c0_393 = arith.constant 0 : index
    %1116 = vector.load %arg1[%c9, %c0_392, %c0_393] : memref<10x64x128xf32, #tpu.memory_space<vmem>>, vector<1x64x128xf32>
    %1117 = vector.shape_cast %1116 : vector<1x64x128xf32> to vector<64x128xf32>
    %cst_394 = arith.constant dense<0.000000e+00> : vector<2x128xf32>
    %1118 = tpu.matmul %1115, %1117, %cst_394 {dimension_numbers = #tpu.dot_dimension_numbers<[1], [0], [0], [1], [0, 0, 1, 1], [], []>} : vector<2x64xf32>, vector<64x128xf32>, vector<2x128xf32> -> vector<2x128xf32>
    %c9_395 = arith.constant 9 : index
    %c0_396 = arith.constant 0 : index
    %c0_397 = arith.constant 0 : index
    %1119 = vector.load %arg2[%c9_395, %c0_396, %c0_397] : memref<10x1x128xf32, #tpu.memory_space<vmem>>, vector<1x1x128xf32>
    %1120 = vector.shape_cast %1119 : vector<1x1x128xf32> to vector<1x128xf32>
    %1121 = vector.broadcast %1120 : vector<1x128xf32> to vector<2x128xf32>
    %1122 = arith.addf %1118, %1121 : vector<2x128xf32>
    %1123 = arith.negf %1122 : vector<2x128xf32>
    %1124 = math.exp %1123 : vector<2x128xf32>
    %cst_398 = arith.constant 1.000000e+00 : f32
    %1125 = vector.broadcast %cst_398 : f32 to vector<2x128xf32>
    %1126 = arith.addf %1125, %1124 : vector<2x128xf32>
    %1127 = arith.divf %1125, %1126 : vector<2x128xf32>
    %1128 = vector.extract_strided_slice %1127 {offsets = [0, 0], sizes = [2, 32], strides = [1, 1]} : vector<2x128xf32> to vector<2x32xf32>
    %1129 = vector.extract_strided_slice %1127 {offsets = [0, 32], sizes = [2, 32], strides = [1, 1]} : vector<2x128xf32> to vector<2x32xf32>
    %1130 = vector.extract_strided_slice %1127 {offsets = [0, 64], sizes = [2, 32], strides = [1, 1]} : vector<2x128xf32> to vector<2x32xf32>
    %cst_399 = arith.constant 2.000000e+00 : f32
    %1131 = vector.broadcast %cst_399 : f32 to vector<2x32xf32>
    %1132 = arith.mulf %1131, %1130 : vector<2x32xf32>
    %cst_400 = arith.constant 1.000000e+00 : f32
    %1133 = vector.broadcast %cst_400 : f32 to vector<2x32xf32>
    %1134 = arith.subf %1132, %1133 : vector<2x32xf32>
    %1135 = vector.extract_strided_slice %1127 {offsets = [0, 96], sizes = [2, 32], strides = [1, 1]} : vector<2x128xf32> to vector<2x32xf32>
    %1136 = arith.mulf %1129, %10 : vector<2x32xf32>
    %1137 = arith.mulf %1128, %1134 : vector<2x32xf32>
    %1138 = arith.addf %1136, %1137 : vector<2x32xf32>
    %1139 = math.tanh %1138 : vector<2x32xf32>
    %1140 = arith.mulf %1135, %1139 : vector<2x32xf32>
    %1141 = tpu.concatenate %958, %932 in 1 : vector<2x32xf32>, vector<2x32xf32> -> vector<2x64xf32>
    %c8_401 = arith.constant 8 : index
    %c0_402 = arith.constant 0 : index
    %c0_403 = arith.constant 0 : index
    %1142 = vector.load %arg1[%c8_401, %c0_402, %c0_403] : memref<10x64x128xf32, #tpu.memory_space<vmem>>, vector<1x64x128xf32>
    %1143 = vector.shape_cast %1142 : vector<1x64x128xf32> to vector<64x128xf32>
    %cst_404 = arith.constant dense<0.000000e+00> : vector<2x128xf32>
    %1144 = tpu.matmul %1141, %1143, %cst_404 {dimension_numbers = #tpu.dot_dimension_numbers<[1], [0], [0], [1], [0, 0, 1, 1], [], []>} : vector<2x64xf32>, vector<64x128xf32>, vector<2x128xf32> -> vector<2x128xf32>
    %c8_405 = arith.constant 8 : index
    %c0_406 = arith.constant 0 : index
    %c0_407 = arith.constant 0 : index
    %1145 = vector.load %arg2[%c8_405, %c0_406, %c0_407] : memref<10x1x128xf32, #tpu.memory_space<vmem>>, vector<1x1x128xf32>
    %1146 = vector.shape_cast %1145 : vector<1x1x128xf32> to vector<1x128xf32>
    %1147 = vector.broadcast %1146 : vector<1x128xf32> to vector<2x128xf32>
    %1148 = arith.addf %1144, %1147 : vector<2x128xf32>
    %1149 = arith.negf %1148 : vector<2x128xf32>
    %1150 = math.exp %1149 : vector<2x128xf32>
    %cst_408 = arith.constant 1.000000e+00 : f32
    %1151 = vector.broadcast %cst_408 : f32 to vector<2x128xf32>
    %1152 = arith.addf %1151, %1150 : vector<2x128xf32>
    %1153 = arith.divf %1151, %1152 : vector<2x128xf32>
    %1154 = vector.extract_strided_slice %1153 {offsets = [0, 0], sizes = [2, 32], strides = [1, 1]} : vector<2x128xf32> to vector<2x32xf32>
    %1155 = vector.extract_strided_slice %1153 {offsets = [0, 32], sizes = [2, 32], strides = [1, 1]} : vector<2x128xf32> to vector<2x32xf32>
    %1156 = vector.extract_strided_slice %1153 {offsets = [0, 64], sizes = [2, 32], strides = [1, 1]} : vector<2x128xf32> to vector<2x32xf32>
    %cst_409 = arith.constant 2.000000e+00 : f32
    %1157 = vector.broadcast %cst_409 : f32 to vector<2x32xf32>
    %1158 = arith.mulf %1157, %1156 : vector<2x32xf32>
    %cst_410 = arith.constant 1.000000e+00 : f32
    %1159 = vector.broadcast %cst_410 : f32 to vector<2x32xf32>
    %1160 = arith.subf %1158, %1159 : vector<2x32xf32>
    %1161 = vector.extract_strided_slice %1153 {offsets = [0, 96], sizes = [2, 32], strides = [1, 1]} : vector<2x128xf32> to vector<2x32xf32>
    %1162 = arith.mulf %1155, %930 : vector<2x32xf32>
    %1163 = arith.mulf %1154, %1160 : vector<2x32xf32>
    %1164 = arith.addf %1162, %1163 : vector<2x32xf32>
    %1165 = math.tanh %1164 : vector<2x32xf32>
    %1166 = arith.mulf %1161, %1165 : vector<2x32xf32>
    %1167 = tpu.concatenate %984, %958 in 1 : vector<2x32xf32>, vector<2x32xf32> -> vector<2x64xf32>
    %c7_411 = arith.constant 7 : index
    %c0_412 = arith.constant 0 : index
    %c0_413 = arith.constant 0 : index
    %1168 = vector.load %arg1[%c7_411, %c0_412, %c0_413] : memref<10x64x128xf32, #tpu.memory_space<vmem>>, vector<1x64x128xf32>
    %1169 = vector.shape_cast %1168 : vector<1x64x128xf32> to vector<64x128xf32>
    %cst_414 = arith.constant dense<0.000000e+00> : vector<2x128xf32>
    %1170 = tpu.matmul %1167, %1169, %cst_414 {dimension_numbers = #tpu.dot_dimension_numbers<[1], [0], [0], [1], [0, 0, 1, 1], [], []>} : vector<2x64xf32>, vector<64x128xf32>, vector<2x128xf32> -> vector<2x128xf32>
    %c7_415 = arith.constant 7 : index
    %c0_416 = arith.constant 0 : index
    %c0_417 = arith.constant 0 : index
    %1171 = vector.load %arg2[%c7_415, %c0_416, %c0_417] : memref<10x1x128xf32, #tpu.memory_space<vmem>>, vector<1x1x128xf32>
    %1172 = vector.shape_cast %1171 : vector<1x1x128xf32> to vector<1x128xf32>
    %1173 = vector.broadcast %1172 : vector<1x128xf32> to vector<2x128xf32>
    %1174 = arith.addf %1170, %1173 : vector<2x128xf32>
    %1175 = arith.negf %1174 : vector<2x128xf32>
    %1176 = math.exp %1175 : vector<2x128xf32>
    %cst_418 = arith.constant 1.000000e+00 : f32
    %1177 = vector.broadcast %cst_418 : f32 to vector<2x128xf32>
    %1178 = arith.addf %1177, %1176 : vector<2x128xf32>
    %1179 = arith.divf %1177, %1178 : vector<2x128xf32>
    %1180 = vector.extract_strided_slice %1179 {offsets = [0, 0], sizes = [2, 32], strides = [1, 1]} : vector<2x128xf32> to vector<2x32xf32>
    %1181 = vector.extract_strided_slice %1179 {offsets = [0, 32], sizes = [2, 32], strides = [1, 1]} : vector<2x128xf32> to vector<2x32xf32>
    %1182 = vector.extract_strided_slice %1179 {offsets = [0, 64], sizes = [2, 32], strides = [1, 1]} : vector<2x128xf32> to vector<2x32xf32>
    %cst_419 = arith.constant 2.000000e+00 : f32
    %1183 = vector.broadcast %cst_419 : f32 to vector<2x32xf32>
    %1184 = arith.mulf %1183, %1182 : vector<2x32xf32>
    %cst_420 = arith.constant 1.000000e+00 : f32
    %1185 = vector.broadcast %cst_420 : f32 to vector<2x32xf32>
    %1186 = arith.subf %1184, %1185 : vector<2x32xf32>
    %1187 = vector.extract_strided_slice %1179 {offsets = [0, 96], sizes = [2, 32], strides = [1, 1]} : vector<2x128xf32> to vector<2x32xf32>
    %1188 = arith.mulf %1181, %956 : vector<2x32xf32>
    %1189 = arith.mulf %1180, %1186 : vector<2x32xf32>
    %1190 = arith.addf %1188, %1189 : vector<2x32xf32>
    %1191 = math.tanh %1190 : vector<2x32xf32>
    %1192 = arith.mulf %1187, %1191 : vector<2x32xf32>
    %1193 = tpu.concatenate %1010, %984 in 1 : vector<2x32xf32>, vector<2x32xf32> -> vector<2x64xf32>
    %c6_421 = arith.constant 6 : index
    %c0_422 = arith.constant 0 : index
    %c0_423 = arith.constant 0 : index
    %1194 = vector.load %arg1[%c6_421, %c0_422, %c0_423] : memref<10x64x128xf32, #tpu.memory_space<vmem>>, vector<1x64x128xf32>
    %1195 = vector.shape_cast %1194 : vector<1x64x128xf32> to vector<64x128xf32>
    %cst_424 = arith.constant dense<0.000000e+00> : vector<2x128xf32>
    %1196 = tpu.matmul %1193, %1195, %cst_424 {dimension_numbers = #tpu.dot_dimension_numbers<[1], [0], [0], [1], [0, 0, 1, 1], [], []>} : vector<2x64xf32>, vector<64x128xf32>, vector<2x128xf32> -> vector<2x128xf32>
    %c6_425 = arith.constant 6 : index
    %c0_426 = arith.constant 0 : index
    %c0_427 = arith.constant 0 : index
    %1197 = vector.load %arg2[%c6_425, %c0_426, %c0_427] : memref<10x1x128xf32, #tpu.memory_space<vmem>>, vector<1x1x128xf32>
    %1198 = vector.shape_cast %1197 : vector<1x1x128xf32> to vector<1x128xf32>
    %1199 = vector.broadcast %1198 : vector<1x128xf32> to vector<2x128xf32>
    %1200 = arith.addf %1196, %1199 : vector<2x128xf32>
    %1201 = arith.negf %1200 : vector<2x128xf32>
    %1202 = math.exp %1201 : vector<2x128xf32>
    %cst_428 = arith.constant 1.000000e+00 : f32
    %1203 = vector.broadcast %cst_428 : f32 to vector<2x128xf32>
    %1204 = arith.addf %1203, %1202 : vector<2x128xf32>
    %1205 = arith.divf %1203, %1204 : vector<2x128xf32>
    %1206 = vector.extract_strided_slice %1205 {offsets = [0, 0], sizes = [2, 32], strides = [1, 1]} : vector<2x128xf32> to vector<2x32xf32>
    %1207 = vector.extract_strided_slice %1205 {offsets = [0, 32], sizes = [2, 32], strides = [1, 1]} : vector<2x128xf32> to vector<2x32xf32>
    %1208 = vector.extract_strided_slice %1205 {offsets = [0, 64], sizes = [2, 32], strides = [1, 1]} : vector<2x128xf32> to vector<2x32xf32>
    %cst_429 = arith.constant 2.000000e+00 : f32
    %1209 = vector.broadcast %cst_429 : f32 to vector<2x32xf32>
    %1210 = arith.mulf %1209, %1208 : vector<2x32xf32>
    %cst_430 = arith.constant 1.000000e+00 : f32
    %1211 = vector.broadcast %cst_430 : f32 to vector<2x32xf32>
    %1212 = arith.subf %1210, %1211 : vector<2x32xf32>
    %1213 = vector.extract_strided_slice %1205 {offsets = [0, 96], sizes = [2, 32], strides = [1, 1]} : vector<2x128xf32> to vector<2x32xf32>
    %1214 = arith.mulf %1207, %982 : vector<2x32xf32>
    %1215 = arith.mulf %1206, %1212 : vector<2x32xf32>
    %1216 = arith.addf %1214, %1215 : vector<2x32xf32>
    %1217 = math.tanh %1216 : vector<2x32xf32>
    %1218 = arith.mulf %1213, %1217 : vector<2x32xf32>
    %1219 = tpu.concatenate %1036, %1010 in 1 : vector<2x32xf32>, vector<2x32xf32> -> vector<2x64xf32>
    %c5_431 = arith.constant 5 : index
    %c0_432 = arith.constant 0 : index
    %c0_433 = arith.constant 0 : index
    %1220 = vector.load %arg1[%c5_431, %c0_432, %c0_433] : memref<10x64x128xf32, #tpu.memory_space<vmem>>, vector<1x64x128xf32>
    %1221 = vector.shape_cast %1220 : vector<1x64x128xf32> to vector<64x128xf32>
    %cst_434 = arith.constant dense<0.000000e+00> : vector<2x128xf32>
    %1222 = tpu.matmul %1219, %1221, %cst_434 {dimension_numbers = #tpu.dot_dimension_numbers<[1], [0], [0], [1], [0, 0, 1, 1], [], []>} : vector<2x64xf32>, vector<64x128xf32>, vector<2x128xf32> -> vector<2x128xf32>
    %c5_435 = arith.constant 5 : index
    %c0_436 = arith.constant 0 : index
    %c0_437 = arith.constant 0 : index
    %1223 = vector.load %arg2[%c5_435, %c0_436, %c0_437] : memref<10x1x128xf32, #tpu.memory_space<vmem>>, vector<1x1x128xf32>
    %1224 = vector.shape_cast %1223 : vector<1x1x128xf32> to vector<1x128xf32>
    %1225 = vector.broadcast %1224 : vector<1x128xf32> to vector<2x128xf32>
    %1226 = arith.addf %1222, %1225 : vector<2x128xf32>
    %1227 = arith.negf %1226 : vector<2x128xf32>
    %1228 = math.exp %1227 : vector<2x128xf32>
    %cst_438 = arith.constant 1.000000e+00 : f32
    %1229 = vector.broadcast %cst_438 : f32 to vector<2x128xf32>
    %1230 = arith.addf %1229, %1228 : vector<2x128xf32>
    %1231 = arith.divf %1229, %1230 : vector<2x128xf32>
    %1232 = vector.extract_strided_slice %1231 {offsets = [0, 0], sizes = [2, 32], strides = [1, 1]} : vector<2x128xf32> to vector<2x32xf32>
    %1233 = vector.extract_strided_slice %1231 {offsets = [0, 32], sizes = [2, 32], strides = [1, 1]} : vector<2x128xf32> to vector<2x32xf32>
    %1234 = vector.extract_strided_slice %1231 {offsets = [0, 64], sizes = [2, 32], strides = [1, 1]} : vector<2x128xf32> to vector<2x32xf32>
    %cst_439 = arith.constant 2.000000e+00 : f32
    %1235 = vector.broadcast %cst_439 : f32 to vector<2x32xf32>
    %1236 = arith.mulf %1235, %1234 : vector<2x32xf32>
    %cst_440 = arith.constant 1.000000e+00 : f32
    %1237 = vector.broadcast %cst_440 : f32 to vector<2x32xf32>
    %1238 = arith.subf %1236, %1237 : vector<2x32xf32>
    %1239 = vector.extract_strided_slice %1231 {offsets = [0, 96], sizes = [2, 32], strides = [1, 1]} : vector<2x128xf32> to vector<2x32xf32>
    %1240 = arith.mulf %1233, %1008 : vector<2x32xf32>
    %1241 = arith.mulf %1232, %1238 : vector<2x32xf32>
    %1242 = arith.addf %1240, %1241 : vector<2x32xf32>
    %1243 = math.tanh %1242 : vector<2x32xf32>
    %1244 = arith.mulf %1239, %1243 : vector<2x32xf32>
    %1245 = tpu.concatenate %1062, %1036 in 1 : vector<2x32xf32>, vector<2x32xf32> -> vector<2x64xf32>
    %c4_441 = arith.constant 4 : index
    %c0_442 = arith.constant 0 : index
    %c0_443 = arith.constant 0 : index
    %1246 = vector.load %arg1[%c4_441, %c0_442, %c0_443] : memref<10x64x128xf32, #tpu.memory_space<vmem>>, vector<1x64x128xf32>
    %1247 = vector.shape_cast %1246 : vector<1x64x128xf32> to vector<64x128xf32>
    %cst_444 = arith.constant dense<0.000000e+00> : vector<2x128xf32>
    %1248 = tpu.matmul %1245, %1247, %cst_444 {dimension_numbers = #tpu.dot_dimension_numbers<[1], [0], [0], [1], [0, 0, 1, 1], [], []>} : vector<2x64xf32>, vector<64x128xf32>, vector<2x128xf32> -> vector<2x128xf32>
    %c4_445 = arith.constant 4 : index
    %c0_446 = arith.constant 0 : index
    %c0_447 = arith.constant 0 : index
    %1249 = vector.load %arg2[%c4_445, %c0_446, %c0_447] : memref<10x1x128xf32, #tpu.memory_space<vmem>>, vector<1x1x128xf32>
    %1250 = vector.shape_cast %1249 : vector<1x1x128xf32> to vector<1x128xf32>
    %1251 = vector.broadcast %1250 : vector<1x128xf32> to vector<2x128xf32>
    %1252 = arith.addf %1248, %1251 : vector<2x128xf32>
    %1253 = arith.negf %1252 : vector<2x128xf32>
    %1254 = math.exp %1253 : vector<2x128xf32>
    %cst_448 = arith.constant 1.000000e+00 : f32
    %1255 = vector.broadcast %cst_448 : f32 to vector<2x128xf32>
    %1256 = arith.addf %1255, %1254 : vector<2x128xf32>
    %1257 = arith.divf %1255, %1256 : vector<2x128xf32>
    %1258 = vector.extract_strided_slice %1257 {offsets = [0, 0], sizes = [2, 32], strides = [1, 1]} : vector<2x128xf32> to vector<2x32xf32>
    %1259 = vector.extract_strided_slice %1257 {offsets = [0, 32], sizes = [2, 32], strides = [1, 1]} : vector<2x128xf32> to vector<2x32xf32>
    %1260 = vector.extract_strided_slice %1257 {offsets = [0, 64], sizes = [2, 32], strides = [1, 1]} : vector<2x128xf32> to vector<2x32xf32>
    %cst_449 = arith.constant 2.000000e+00 : f32
    %1261 = vector.broadcast %cst_449 : f32 to vector<2x32xf32>
    %1262 = arith.mulf %1261, %1260 : vector<2x32xf32>
    %cst_450 = arith.constant 1.000000e+00 : f32
    %1263 = vector.broadcast %cst_450 : f32 to vector<2x32xf32>
    %1264 = arith.subf %1262, %1263 : vector<2x32xf32>
    %1265 = vector.extract_strided_slice %1257 {offsets = [0, 96], sizes = [2, 32], strides = [1, 1]} : vector<2x128xf32> to vector<2x32xf32>
    %1266 = arith.mulf %1259, %1034 : vector<2x32xf32>
    %1267 = arith.mulf %1258, %1264 : vector<2x32xf32>
    %1268 = arith.addf %1266, %1267 : vector<2x32xf32>
    %1269 = math.tanh %1268 : vector<2x32xf32>
    %1270 = arith.mulf %1265, %1269 : vector<2x32xf32>
    %1271 = tpu.concatenate %1088, %1062 in 1 : vector<2x32xf32>, vector<2x32xf32> -> vector<2x64xf32>
    %c3_451 = arith.constant 3 : index
    %c0_452 = arith.constant 0 : index
    %c0_453 = arith.constant 0 : index
    %1272 = vector.load %arg1[%c3_451, %c0_452, %c0_453] : memref<10x64x128xf32, #tpu.memory_space<vmem>>, vector<1x64x128xf32>
    %1273 = vector.shape_cast %1272 : vector<1x64x128xf32> to vector<64x128xf32>
    %cst_454 = arith.constant dense<0.000000e+00> : vector<2x128xf32>
    %1274 = tpu.matmul %1271, %1273, %cst_454 {dimension_numbers = #tpu.dot_dimension_numbers<[1], [0], [0], [1], [0, 0, 1, 1], [], []>} : vector<2x64xf32>, vector<64x128xf32>, vector<2x128xf32> -> vector<2x128xf32>
    %c3_455 = arith.constant 3 : index
    %c0_456 = arith.constant 0 : index
    %c0_457 = arith.constant 0 : index
    %1275 = vector.load %arg2[%c3_455, %c0_456, %c0_457] : memref<10x1x128xf32, #tpu.memory_space<vmem>>, vector<1x1x128xf32>
    %1276 = vector.shape_cast %1275 : vector<1x1x128xf32> to vector<1x128xf32>
    %1277 = vector.broadcast %1276 : vector<1x128xf32> to vector<2x128xf32>
    %1278 = arith.addf %1274, %1277 : vector<2x128xf32>
    %1279 = arith.negf %1278 : vector<2x128xf32>
    %1280 = math.exp %1279 : vector<2x128xf32>
    %cst_458 = arith.constant 1.000000e+00 : f32
    %1281 = vector.broadcast %cst_458 : f32 to vector<2x128xf32>
    %1282 = arith.addf %1281, %1280 : vector<2x128xf32>
    %1283 = arith.divf %1281, %1282 : vector<2x128xf32>
    %1284 = vector.extract_strided_slice %1283 {offsets = [0, 0], sizes = [2, 32], strides = [1, 1]} : vector<2x128xf32> to vector<2x32xf32>
    %1285 = vector.extract_strided_slice %1283 {offsets = [0, 32], sizes = [2, 32], strides = [1, 1]} : vector<2x128xf32> to vector<2x32xf32>
    %1286 = vector.extract_strided_slice %1283 {offsets = [0, 64], sizes = [2, 32], strides = [1, 1]} : vector<2x128xf32> to vector<2x32xf32>
    %cst_459 = arith.constant 2.000000e+00 : f32
    %1287 = vector.broadcast %cst_459 : f32 to vector<2x32xf32>
    %1288 = arith.mulf %1287, %1286 : vector<2x32xf32>
    %cst_460 = arith.constant 1.000000e+00 : f32
    %1289 = vector.broadcast %cst_460 : f32 to vector<2x32xf32>
    %1290 = arith.subf %1288, %1289 : vector<2x32xf32>
    %1291 = vector.extract_strided_slice %1283 {offsets = [0, 96], sizes = [2, 32], strides = [1, 1]} : vector<2x128xf32> to vector<2x32xf32>
    %1292 = arith.mulf %1285, %1060 : vector<2x32xf32>
    %1293 = arith.mulf %1284, %1290 : vector<2x32xf32>
    %1294 = arith.addf %1292, %1293 : vector<2x32xf32>
    %1295 = math.tanh %1294 : vector<2x32xf32>
    %1296 = arith.mulf %1291, %1295 : vector<2x32xf32>
    %1297 = tpu.concatenate %1114, %1088 in 1 : vector<2x32xf32>, vector<2x32xf32> -> vector<2x64xf32>
    %c2_461 = arith.constant 2 : index
    %c0_462 = arith.constant 0 : index
    %c0_463 = arith.constant 0 : index
    %1298 = vector.load %arg1[%c2_461, %c0_462, %c0_463] : memref<10x64x128xf32, #tpu.memory_space<vmem>>, vector<1x64x128xf32>
    %1299 = vector.shape_cast %1298 : vector<1x64x128xf32> to vector<64x128xf32>
    %cst_464 = arith.constant dense<0.000000e+00> : vector<2x128xf32>
    %1300 = tpu.matmul %1297, %1299, %cst_464 {dimension_numbers = #tpu.dot_dimension_numbers<[1], [0], [0], [1], [0, 0, 1, 1], [], []>} : vector<2x64xf32>, vector<64x128xf32>, vector<2x128xf32> -> vector<2x128xf32>
    %c2_465 = arith.constant 2 : index
    %c0_466 = arith.constant 0 : index
    %c0_467 = arith.constant 0 : index
    %1301 = vector.load %arg2[%c2_465, %c0_466, %c0_467] : memref<10x1x128xf32, #tpu.memory_space<vmem>>, vector<1x1x128xf32>
    %1302 = vector.shape_cast %1301 : vector<1x1x128xf32> to vector<1x128xf32>
    %1303 = vector.broadcast %1302 : vector<1x128xf32> to vector<2x128xf32>
    %1304 = arith.addf %1300, %1303 : vector<2x128xf32>
    %1305 = arith.negf %1304 : vector<2x128xf32>
    %1306 = math.exp %1305 : vector<2x128xf32>
    %cst_468 = arith.constant 1.000000e+00 : f32
    %1307 = vector.broadcast %cst_468 : f32 to vector<2x128xf32>
    %1308 = arith.addf %1307, %1306 : vector<2x128xf32>
    %1309 = arith.divf %1307, %1308 : vector<2x128xf32>
    %1310 = vector.extract_strided_slice %1309 {offsets = [0, 0], sizes = [2, 32], strides = [1, 1]} : vector<2x128xf32> to vector<2x32xf32>
    %1311 = vector.extract_strided_slice %1309 {offsets = [0, 32], sizes = [2, 32], strides = [1, 1]} : vector<2x128xf32> to vector<2x32xf32>
    %1312 = vector.extract_strided_slice %1309 {offsets = [0, 64], sizes = [2, 32], strides = [1, 1]} : vector<2x128xf32> to vector<2x32xf32>
    %cst_469 = arith.constant 2.000000e+00 : f32
    %1313 = vector.broadcast %cst_469 : f32 to vector<2x32xf32>
    %1314 = arith.mulf %1313, %1312 : vector<2x32xf32>
    %cst_470 = arith.constant 1.000000e+00 : f32
    %1315 = vector.broadcast %cst_470 : f32 to vector<2x32xf32>
    %1316 = arith.subf %1314, %1315 : vector<2x32xf32>
    %1317 = vector.extract_strided_slice %1309 {offsets = [0, 96], sizes = [2, 32], strides = [1, 1]} : vector<2x128xf32> to vector<2x32xf32>
    %1318 = arith.mulf %1311, %1086 : vector<2x32xf32>
    %1319 = arith.mulf %1310, %1316 : vector<2x32xf32>
    %1320 = arith.addf %1318, %1319 : vector<2x32xf32>
    %1321 = math.tanh %1320 : vector<2x32xf32>
    %1322 = arith.mulf %1317, %1321 : vector<2x32xf32>
    %1323 = tpu.concatenate %1166, %1140 in 1 : vector<2x32xf32>, vector<2x32xf32> -> vector<2x64xf32>
    %c9_471 = arith.constant 9 : index
    %c0_472 = arith.constant 0 : index
    %c0_473 = arith.constant 0 : index
    %1324 = vector.load %arg1[%c9_471, %c0_472, %c0_473] : memref<10x64x128xf32, #tpu.memory_space<vmem>>, vector<1x64x128xf32>
    %1325 = vector.shape_cast %1324 : vector<1x64x128xf32> to vector<64x128xf32>
    %cst_474 = arith.constant dense<0.000000e+00> : vector<2x128xf32>
    %1326 = tpu.matmul %1323, %1325, %cst_474 {dimension_numbers = #tpu.dot_dimension_numbers<[1], [0], [0], [1], [0, 0, 1, 1], [], []>} : vector<2x64xf32>, vector<64x128xf32>, vector<2x128xf32> -> vector<2x128xf32>
    %c9_475 = arith.constant 9 : index
    %c0_476 = arith.constant 0 : index
    %c0_477 = arith.constant 0 : index
    %1327 = vector.load %arg2[%c9_475, %c0_476, %c0_477] : memref<10x1x128xf32, #tpu.memory_space<vmem>>, vector<1x1x128xf32>
    %1328 = vector.shape_cast %1327 : vector<1x1x128xf32> to vector<1x128xf32>
    %1329 = vector.broadcast %1328 : vector<1x128xf32> to vector<2x128xf32>
    %1330 = arith.addf %1326, %1329 : vector<2x128xf32>
    %1331 = arith.negf %1330 : vector<2x128xf32>
    %1332 = math.exp %1331 : vector<2x128xf32>
    %cst_478 = arith.constant 1.000000e+00 : f32
    %1333 = vector.broadcast %cst_478 : f32 to vector<2x128xf32>
    %1334 = arith.addf %1333, %1332 : vector<2x128xf32>
    %1335 = arith.divf %1333, %1334 : vector<2x128xf32>
    %1336 = vector.extract_strided_slice %1335 {offsets = [0, 0], sizes = [2, 32], strides = [1, 1]} : vector<2x128xf32> to vector<2x32xf32>
    %1337 = vector.extract_strided_slice %1335 {offsets = [0, 32], sizes = [2, 32], strides = [1, 1]} : vector<2x128xf32> to vector<2x32xf32>
    %1338 = vector.extract_strided_slice %1335 {offsets = [0, 64], sizes = [2, 32], strides = [1, 1]} : vector<2x128xf32> to vector<2x32xf32>
    %cst_479 = arith.constant 2.000000e+00 : f32
    %1339 = vector.broadcast %cst_479 : f32 to vector<2x32xf32>
    %1340 = arith.mulf %1339, %1338 : vector<2x32xf32>
    %cst_480 = arith.constant 1.000000e+00 : f32
    %1341 = vector.broadcast %cst_480 : f32 to vector<2x32xf32>
    %1342 = arith.subf %1340, %1341 : vector<2x32xf32>
    %1343 = vector.extract_strided_slice %1335 {offsets = [0, 96], sizes = [2, 32], strides = [1, 1]} : vector<2x128xf32> to vector<2x32xf32>
    %1344 = arith.mulf %1337, %1138 : vector<2x32xf32>
    %1345 = arith.mulf %1336, %1342 : vector<2x32xf32>
    %1346 = arith.addf %1344, %1345 : vector<2x32xf32>
    %1347 = math.tanh %1346 : vector<2x32xf32>
    %1348 = arith.mulf %1343, %1347 : vector<2x32xf32>
    %1349 = tpu.concatenate %1192, %1166 in 1 : vector<2x32xf32>, vector<2x32xf32> -> vector<2x64xf32>
    %c8_481 = arith.constant 8 : index
    %c0_482 = arith.constant 0 : index
    %c0_483 = arith.constant 0 : index
    %1350 = vector.load %arg1[%c8_481, %c0_482, %c0_483] : memref<10x64x128xf32, #tpu.memory_space<vmem>>, vector<1x64x128xf32>
    %1351 = vector.shape_cast %1350 : vector<1x64x128xf32> to vector<64x128xf32>
    %cst_484 = arith.constant dense<0.000000e+00> : vector<2x128xf32>
    %1352 = tpu.matmul %1349, %1351, %cst_484 {dimension_numbers = #tpu.dot_dimension_numbers<[1], [0], [0], [1], [0, 0, 1, 1], [], []>} : vector<2x64xf32>, vector<64x128xf32>, vector<2x128xf32> -> vector<2x128xf32>
    %c8_485 = arith.constant 8 : index
    %c0_486 = arith.constant 0 : index
    %c0_487 = arith.constant 0 : index
    %1353 = vector.load %arg2[%c8_485, %c0_486, %c0_487] : memref<10x1x128xf32, #tpu.memory_space<vmem>>, vector<1x1x128xf32>
    %1354 = vector.shape_cast %1353 : vector<1x1x128xf32> to vector<1x128xf32>
    %1355 = vector.broadcast %1354 : vector<1x128xf32> to vector<2x128xf32>
    %1356 = arith.addf %1352, %1355 : vector<2x128xf32>
    %1357 = arith.negf %1356 : vector<2x128xf32>
    %1358 = math.exp %1357 : vector<2x128xf32>
    %cst_488 = arith.constant 1.000000e+00 : f32
    %1359 = vector.broadcast %cst_488 : f32 to vector<2x128xf32>
    %1360 = arith.addf %1359, %1358 : vector<2x128xf32>
    %1361 = arith.divf %1359, %1360 : vector<2x128xf32>
    %1362 = vector.extract_strided_slice %1361 {offsets = [0, 0], sizes = [2, 32], strides = [1, 1]} : vector<2x128xf32> to vector<2x32xf32>
    %1363 = vector.extract_strided_slice %1361 {offsets = [0, 32], sizes = [2, 32], strides = [1, 1]} : vector<2x128xf32> to vector<2x32xf32>
    %1364 = vector.extract_strided_slice %1361 {offsets = [0, 64], sizes = [2, 32], strides = [1, 1]} : vector<2x128xf32> to vector<2x32xf32>
    %cst_489 = arith.constant 2.000000e+00 : f32
    %1365 = vector.broadcast %cst_489 : f32 to vector<2x32xf32>
    %1366 = arith.mulf %1365, %1364 : vector<2x32xf32>
    %cst_490 = arith.constant 1.000000e+00 : f32
    %1367 = vector.broadcast %cst_490 : f32 to vector<2x32xf32>
    %1368 = arith.subf %1366, %1367 : vector<2x32xf32>
    %1369 = vector.extract_strided_slice %1361 {offsets = [0, 96], sizes = [2, 32], strides = [1, 1]} : vector<2x128xf32> to vector<2x32xf32>
    %1370 = arith.mulf %1363, %1164 : vector<2x32xf32>
    %1371 = arith.mulf %1362, %1368 : vector<2x32xf32>
    %1372 = arith.addf %1370, %1371 : vector<2x32xf32>
    %1373 = math.tanh %1372 : vector<2x32xf32>
    %1374 = arith.mulf %1369, %1373 : vector<2x32xf32>
    %1375 = tpu.concatenate %1218, %1192 in 1 : vector<2x32xf32>, vector<2x32xf32> -> vector<2x64xf32>
    %c7_491 = arith.constant 7 : index
    %c0_492 = arith.constant 0 : index
    %c0_493 = arith.constant 0 : index
    %1376 = vector.load %arg1[%c7_491, %c0_492, %c0_493] : memref<10x64x128xf32, #tpu.memory_space<vmem>>, vector<1x64x128xf32>
    %1377 = vector.shape_cast %1376 : vector<1x64x128xf32> to vector<64x128xf32>
    %cst_494 = arith.constant dense<0.000000e+00> : vector<2x128xf32>
    %1378 = tpu.matmul %1375, %1377, %cst_494 {dimension_numbers = #tpu.dot_dimension_numbers<[1], [0], [0], [1], [0, 0, 1, 1], [], []>} : vector<2x64xf32>, vector<64x128xf32>, vector<2x128xf32> -> vector<2x128xf32>
    %c7_495 = arith.constant 7 : index
    %c0_496 = arith.constant 0 : index
    %c0_497 = arith.constant 0 : index
    %1379 = vector.load %arg2[%c7_495, %c0_496, %c0_497] : memref<10x1x128xf32, #tpu.memory_space<vmem>>, vector<1x1x128xf32>
    %1380 = vector.shape_cast %1379 : vector<1x1x128xf32> to vector<1x128xf32>
    %1381 = vector.broadcast %1380 : vector<1x128xf32> to vector<2x128xf32>
    %1382 = arith.addf %1378, %1381 : vector<2x128xf32>
    %1383 = arith.negf %1382 : vector<2x128xf32>
    %1384 = math.exp %1383 : vector<2x128xf32>
    %cst_498 = arith.constant 1.000000e+00 : f32
    %1385 = vector.broadcast %cst_498 : f32 to vector<2x128xf32>
    %1386 = arith.addf %1385, %1384 : vector<2x128xf32>
    %1387 = arith.divf %1385, %1386 : vector<2x128xf32>
    %1388 = vector.extract_strided_slice %1387 {offsets = [0, 0], sizes = [2, 32], strides = [1, 1]} : vector<2x128xf32> to vector<2x32xf32>
    %1389 = vector.extract_strided_slice %1387 {offsets = [0, 32], sizes = [2, 32], strides = [1, 1]} : vector<2x128xf32> to vector<2x32xf32>
    %1390 = vector.extract_strided_slice %1387 {offsets = [0, 64], sizes = [2, 32], strides = [1, 1]} : vector<2x128xf32> to vector<2x32xf32>
    %cst_499 = arith.constant 2.000000e+00 : f32
    %1391 = vector.broadcast %cst_499 : f32 to vector<2x32xf32>
    %1392 = arith.mulf %1391, %1390 : vector<2x32xf32>
    %cst_500 = arith.constant 1.000000e+00 : f32
    %1393 = vector.broadcast %cst_500 : f32 to vector<2x32xf32>
    %1394 = arith.subf %1392, %1393 : vector<2x32xf32>
    %1395 = vector.extract_strided_slice %1387 {offsets = [0, 96], sizes = [2, 32], strides = [1, 1]} : vector<2x128xf32> to vector<2x32xf32>
    %1396 = arith.mulf %1389, %1190 : vector<2x32xf32>
    %1397 = arith.mulf %1388, %1394 : vector<2x32xf32>
    %1398 = arith.addf %1396, %1397 : vector<2x32xf32>
    %1399 = math.tanh %1398 : vector<2x32xf32>
    %1400 = arith.mulf %1395, %1399 : vector<2x32xf32>
    %1401 = tpu.concatenate %1244, %1218 in 1 : vector<2x32xf32>, vector<2x32xf32> -> vector<2x64xf32>
    %c6_501 = arith.constant 6 : index
    %c0_502 = arith.constant 0 : index
    %c0_503 = arith.constant 0 : index
    %1402 = vector.load %arg1[%c6_501, %c0_502, %c0_503] : memref<10x64x128xf32, #tpu.memory_space<vmem>>, vector<1x64x128xf32>
    %1403 = vector.shape_cast %1402 : vector<1x64x128xf32> to vector<64x128xf32>
    %cst_504 = arith.constant dense<0.000000e+00> : vector<2x128xf32>
    %1404 = tpu.matmul %1401, %1403, %cst_504 {dimension_numbers = #tpu.dot_dimension_numbers<[1], [0], [0], [1], [0, 0, 1, 1], [], []>} : vector<2x64xf32>, vector<64x128xf32>, vector<2x128xf32> -> vector<2x128xf32>
    %c6_505 = arith.constant 6 : index
    %c0_506 = arith.constant 0 : index
    %c0_507 = arith.constant 0 : index
    %1405 = vector.load %arg2[%c6_505, %c0_506, %c0_507] : memref<10x1x128xf32, #tpu.memory_space<vmem>>, vector<1x1x128xf32>
    %1406 = vector.shape_cast %1405 : vector<1x1x128xf32> to vector<1x128xf32>
    %1407 = vector.broadcast %1406 : vector<1x128xf32> to vector<2x128xf32>
    %1408 = arith.addf %1404, %1407 : vector<2x128xf32>
    %1409 = arith.negf %1408 : vector<2x128xf32>
    %1410 = math.exp %1409 : vector<2x128xf32>
    %cst_508 = arith.constant 1.000000e+00 : f32
    %1411 = vector.broadcast %cst_508 : f32 to vector<2x128xf32>
    %1412 = arith.addf %1411, %1410 : vector<2x128xf32>
    %1413 = arith.divf %1411, %1412 : vector<2x128xf32>
    %1414 = vector.extract_strided_slice %1413 {offsets = [0, 0], sizes = [2, 32], strides = [1, 1]} : vector<2x128xf32> to vector<2x32xf32>
    %1415 = vector.extract_strided_slice %1413 {offsets = [0, 32], sizes = [2, 32], strides = [1, 1]} : vector<2x128xf32> to vector<2x32xf32>
    %1416 = vector.extract_strided_slice %1413 {offsets = [0, 64], sizes = [2, 32], strides = [1, 1]} : vector<2x128xf32> to vector<2x32xf32>
    %cst_509 = arith.constant 2.000000e+00 : f32
    %1417 = vector.broadcast %cst_509 : f32 to vector<2x32xf32>
    %1418 = arith.mulf %1417, %1416 : vector<2x32xf32>
    %cst_510 = arith.constant 1.000000e+00 : f32
    %1419 = vector.broadcast %cst_510 : f32 to vector<2x32xf32>
    %1420 = arith.subf %1418, %1419 : vector<2x32xf32>
    %1421 = vector.extract_strided_slice %1413 {offsets = [0, 96], sizes = [2, 32], strides = [1, 1]} : vector<2x128xf32> to vector<2x32xf32>
    %1422 = arith.mulf %1415, %1216 : vector<2x32xf32>
    %1423 = arith.mulf %1414, %1420 : vector<2x32xf32>
    %1424 = arith.addf %1422, %1423 : vector<2x32xf32>
    %1425 = math.tanh %1424 : vector<2x32xf32>
    %1426 = arith.mulf %1421, %1425 : vector<2x32xf32>
    %1427 = tpu.concatenate %1270, %1244 in 1 : vector<2x32xf32>, vector<2x32xf32> -> vector<2x64xf32>
    %c5_511 = arith.constant 5 : index
    %c0_512 = arith.constant 0 : index
    %c0_513 = arith.constant 0 : index
    %1428 = vector.load %arg1[%c5_511, %c0_512, %c0_513] : memref<10x64x128xf32, #tpu.memory_space<vmem>>, vector<1x64x128xf32>
    %1429 = vector.shape_cast %1428 : vector<1x64x128xf32> to vector<64x128xf32>
    %cst_514 = arith.constant dense<0.000000e+00> : vector<2x128xf32>
    %1430 = tpu.matmul %1427, %1429, %cst_514 {dimension_numbers = #tpu.dot_dimension_numbers<[1], [0], [0], [1], [0, 0, 1, 1], [], []>} : vector<2x64xf32>, vector<64x128xf32>, vector<2x128xf32> -> vector<2x128xf32>
    %c5_515 = arith.constant 5 : index
    %c0_516 = arith.constant 0 : index
    %c0_517 = arith.constant 0 : index
    %1431 = vector.load %arg2[%c5_515, %c0_516, %c0_517] : memref<10x1x128xf32, #tpu.memory_space<vmem>>, vector<1x1x128xf32>
    %1432 = vector.shape_cast %1431 : vector<1x1x128xf32> to vector<1x128xf32>
    %1433 = vector.broadcast %1432 : vector<1x128xf32> to vector<2x128xf32>
    %1434 = arith.addf %1430, %1433 : vector<2x128xf32>
    %1435 = arith.negf %1434 : vector<2x128xf32>
    %1436 = math.exp %1435 : vector<2x128xf32>
    %cst_518 = arith.constant 1.000000e+00 : f32
    %1437 = vector.broadcast %cst_518 : f32 to vector<2x128xf32>
    %1438 = arith.addf %1437, %1436 : vector<2x128xf32>
    %1439 = arith.divf %1437, %1438 : vector<2x128xf32>
    %1440 = vector.extract_strided_slice %1439 {offsets = [0, 0], sizes = [2, 32], strides = [1, 1]} : vector<2x128xf32> to vector<2x32xf32>
    %1441 = vector.extract_strided_slice %1439 {offsets = [0, 32], sizes = [2, 32], strides = [1, 1]} : vector<2x128xf32> to vector<2x32xf32>
    %1442 = vector.extract_strided_slice %1439 {offsets = [0, 64], sizes = [2, 32], strides = [1, 1]} : vector<2x128xf32> to vector<2x32xf32>
    %cst_519 = arith.constant 2.000000e+00 : f32
    %1443 = vector.broadcast %cst_519 : f32 to vector<2x32xf32>
    %1444 = arith.mulf %1443, %1442 : vector<2x32xf32>
    %cst_520 = arith.constant 1.000000e+00 : f32
    %1445 = vector.broadcast %cst_520 : f32 to vector<2x32xf32>
    %1446 = arith.subf %1444, %1445 : vector<2x32xf32>
    %1447 = vector.extract_strided_slice %1439 {offsets = [0, 96], sizes = [2, 32], strides = [1, 1]} : vector<2x128xf32> to vector<2x32xf32>
    %1448 = arith.mulf %1441, %1242 : vector<2x32xf32>
    %1449 = arith.mulf %1440, %1446 : vector<2x32xf32>
    %1450 = arith.addf %1448, %1449 : vector<2x32xf32>
    %1451 = math.tanh %1450 : vector<2x32xf32>
    %1452 = arith.mulf %1447, %1451 : vector<2x32xf32>
    %1453 = tpu.concatenate %1296, %1270 in 1 : vector<2x32xf32>, vector<2x32xf32> -> vector<2x64xf32>
    %c4_521 = arith.constant 4 : index
    %c0_522 = arith.constant 0 : index
    %c0_523 = arith.constant 0 : index
    %1454 = vector.load %arg1[%c4_521, %c0_522, %c0_523] : memref<10x64x128xf32, #tpu.memory_space<vmem>>, vector<1x64x128xf32>
    %1455 = vector.shape_cast %1454 : vector<1x64x128xf32> to vector<64x128xf32>
    %cst_524 = arith.constant dense<0.000000e+00> : vector<2x128xf32>
    %1456 = tpu.matmul %1453, %1455, %cst_524 {dimension_numbers = #tpu.dot_dimension_numbers<[1], [0], [0], [1], [0, 0, 1, 1], [], []>} : vector<2x64xf32>, vector<64x128xf32>, vector<2x128xf32> -> vector<2x128xf32>
    %c4_525 = arith.constant 4 : index
    %c0_526 = arith.constant 0 : index
    %c0_527 = arith.constant 0 : index
    %1457 = vector.load %arg2[%c4_525, %c0_526, %c0_527] : memref<10x1x128xf32, #tpu.memory_space<vmem>>, vector<1x1x128xf32>
    %1458 = vector.shape_cast %1457 : vector<1x1x128xf32> to vector<1x128xf32>
    %1459 = vector.broadcast %1458 : vector<1x128xf32> to vector<2x128xf32>
    %1460 = arith.addf %1456, %1459 : vector<2x128xf32>
    %1461 = arith.negf %1460 : vector<2x128xf32>
    %1462 = math.exp %1461 : vector<2x128xf32>
    %cst_528 = arith.constant 1.000000e+00 : f32
    %1463 = vector.broadcast %cst_528 : f32 to vector<2x128xf32>
    %1464 = arith.addf %1463, %1462 : vector<2x128xf32>
    %1465 = arith.divf %1463, %1464 : vector<2x128xf32>
    %1466 = vector.extract_strided_slice %1465 {offsets = [0, 0], sizes = [2, 32], strides = [1, 1]} : vector<2x128xf32> to vector<2x32xf32>
    %1467 = vector.extract_strided_slice %1465 {offsets = [0, 32], sizes = [2, 32], strides = [1, 1]} : vector<2x128xf32> to vector<2x32xf32>
    %1468 = vector.extract_strided_slice %1465 {offsets = [0, 64], sizes = [2, 32], strides = [1, 1]} : vector<2x128xf32> to vector<2x32xf32>
    %cst_529 = arith.constant 2.000000e+00 : f32
    %1469 = vector.broadcast %cst_529 : f32 to vector<2x32xf32>
    %1470 = arith.mulf %1469, %1468 : vector<2x32xf32>
    %cst_530 = arith.constant 1.000000e+00 : f32
    %1471 = vector.broadcast %cst_530 : f32 to vector<2x32xf32>
    %1472 = arith.subf %1470, %1471 : vector<2x32xf32>
    %1473 = vector.extract_strided_slice %1465 {offsets = [0, 96], sizes = [2, 32], strides = [1, 1]} : vector<2x128xf32> to vector<2x32xf32>
    %1474 = arith.mulf %1467, %1268 : vector<2x32xf32>
    %1475 = arith.mulf %1466, %1472 : vector<2x32xf32>
    %1476 = arith.addf %1474, %1475 : vector<2x32xf32>
    %1477 = math.tanh %1476 : vector<2x32xf32>
    %1478 = arith.mulf %1473, %1477 : vector<2x32xf32>
    %1479 = tpu.concatenate %1322, %1296 in 1 : vector<2x32xf32>, vector<2x32xf32> -> vector<2x64xf32>
    %c3_531 = arith.constant 3 : index
    %c0_532 = arith.constant 0 : index
    %c0_533 = arith.constant 0 : index
    %1480 = vector.load %arg1[%c3_531, %c0_532, %c0_533] : memref<10x64x128xf32, #tpu.memory_space<vmem>>, vector<1x64x128xf32>
    %1481 = vector.shape_cast %1480 : vector<1x64x128xf32> to vector<64x128xf32>
    %cst_534 = arith.constant dense<0.000000e+00> : vector<2x128xf32>
    %1482 = tpu.matmul %1479, %1481, %cst_534 {dimension_numbers = #tpu.dot_dimension_numbers<[1], [0], [0], [1], [0, 0, 1, 1], [], []>} : vector<2x64xf32>, vector<64x128xf32>, vector<2x128xf32> -> vector<2x128xf32>
    %c3_535 = arith.constant 3 : index
    %c0_536 = arith.constant 0 : index
    %c0_537 = arith.constant 0 : index
    %1483 = vector.load %arg2[%c3_535, %c0_536, %c0_537] : memref<10x1x128xf32, #tpu.memory_space<vmem>>, vector<1x1x128xf32>
    %1484 = vector.shape_cast %1483 : vector<1x1x128xf32> to vector<1x128xf32>
    %1485 = vector.broadcast %1484 : vector<1x128xf32> to vector<2x128xf32>
    %1486 = arith.addf %1482, %1485 : vector<2x128xf32>
    %1487 = arith.negf %1486 : vector<2x128xf32>
    %1488 = math.exp %1487 : vector<2x128xf32>
    %cst_538 = arith.constant 1.000000e+00 : f32
    %1489 = vector.broadcast %cst_538 : f32 to vector<2x128xf32>
    %1490 = arith.addf %1489, %1488 : vector<2x128xf32>
    %1491 = arith.divf %1489, %1490 : vector<2x128xf32>
    %1492 = vector.extract_strided_slice %1491 {offsets = [0, 0], sizes = [2, 32], strides = [1, 1]} : vector<2x128xf32> to vector<2x32xf32>
    %1493 = vector.extract_strided_slice %1491 {offsets = [0, 32], sizes = [2, 32], strides = [1, 1]} : vector<2x128xf32> to vector<2x32xf32>
    %1494 = vector.extract_strided_slice %1491 {offsets = [0, 64], sizes = [2, 32], strides = [1, 1]} : vector<2x128xf32> to vector<2x32xf32>
    %cst_539 = arith.constant 2.000000e+00 : f32
    %1495 = vector.broadcast %cst_539 : f32 to vector<2x32xf32>
    %1496 = arith.mulf %1495, %1494 : vector<2x32xf32>
    %cst_540 = arith.constant 1.000000e+00 : f32
    %1497 = vector.broadcast %cst_540 : f32 to vector<2x32xf32>
    %1498 = arith.subf %1496, %1497 : vector<2x32xf32>
    %1499 = vector.extract_strided_slice %1491 {offsets = [0, 96], sizes = [2, 32], strides = [1, 1]} : vector<2x128xf32> to vector<2x32xf32>
    %1500 = arith.mulf %1493, %1294 : vector<2x32xf32>
    %1501 = arith.mulf %1492, %1498 : vector<2x32xf32>
    %1502 = arith.addf %1500, %1501 : vector<2x32xf32>
    %1503 = math.tanh %1502 : vector<2x32xf32>
    %1504 = arith.mulf %1499, %1503 : vector<2x32xf32>
    %1505 = tpu.concatenate %1374, %1348 in 1 : vector<2x32xf32>, vector<2x32xf32> -> vector<2x64xf32>
    %c9_541 = arith.constant 9 : index
    %c0_542 = arith.constant 0 : index
    %c0_543 = arith.constant 0 : index
    %1506 = vector.load %arg1[%c9_541, %c0_542, %c0_543] : memref<10x64x128xf32, #tpu.memory_space<vmem>>, vector<1x64x128xf32>
    %1507 = vector.shape_cast %1506 : vector<1x64x128xf32> to vector<64x128xf32>
    %cst_544 = arith.constant dense<0.000000e+00> : vector<2x128xf32>
    %1508 = tpu.matmul %1505, %1507, %cst_544 {dimension_numbers = #tpu.dot_dimension_numbers<[1], [0], [0], [1], [0, 0, 1, 1], [], []>} : vector<2x64xf32>, vector<64x128xf32>, vector<2x128xf32> -> vector<2x128xf32>
    %c9_545 = arith.constant 9 : index
    %c0_546 = arith.constant 0 : index
    %c0_547 = arith.constant 0 : index
    %1509 = vector.load %arg2[%c9_545, %c0_546, %c0_547] : memref<10x1x128xf32, #tpu.memory_space<vmem>>, vector<1x1x128xf32>
    %1510 = vector.shape_cast %1509 : vector<1x1x128xf32> to vector<1x128xf32>
    %1511 = vector.broadcast %1510 : vector<1x128xf32> to vector<2x128xf32>
    %1512 = arith.addf %1508, %1511 : vector<2x128xf32>
    %1513 = arith.negf %1512 : vector<2x128xf32>
    %1514 = math.exp %1513 : vector<2x128xf32>
    %cst_548 = arith.constant 1.000000e+00 : f32
    %1515 = vector.broadcast %cst_548 : f32 to vector<2x128xf32>
    %1516 = arith.addf %1515, %1514 : vector<2x128xf32>
    %1517 = arith.divf %1515, %1516 : vector<2x128xf32>
    %1518 = vector.extract_strided_slice %1517 {offsets = [0, 0], sizes = [2, 32], strides = [1, 1]} : vector<2x128xf32> to vector<2x32xf32>
    %1519 = vector.extract_strided_slice %1517 {offsets = [0, 32], sizes = [2, 32], strides = [1, 1]} : vector<2x128xf32> to vector<2x32xf32>
    %1520 = vector.extract_strided_slice %1517 {offsets = [0, 64], sizes = [2, 32], strides = [1, 1]} : vector<2x128xf32> to vector<2x32xf32>
    %cst_549 = arith.constant 2.000000e+00 : f32
    %1521 = vector.broadcast %cst_549 : f32 to vector<2x32xf32>
    %1522 = arith.mulf %1521, %1520 : vector<2x32xf32>
    %cst_550 = arith.constant 1.000000e+00 : f32
    %1523 = vector.broadcast %cst_550 : f32 to vector<2x32xf32>
    %1524 = arith.subf %1522, %1523 : vector<2x32xf32>
    %1525 = vector.extract_strided_slice %1517 {offsets = [0, 96], sizes = [2, 32], strides = [1, 1]} : vector<2x128xf32> to vector<2x32xf32>
    %1526 = arith.mulf %1519, %1346 : vector<2x32xf32>
    %1527 = arith.mulf %1518, %1524 : vector<2x32xf32>
    %1528 = arith.addf %1526, %1527 : vector<2x32xf32>
    %1529 = math.tanh %1528 : vector<2x32xf32>
    %1530 = arith.mulf %1525, %1529 : vector<2x32xf32>
    %1531 = tpu.concatenate %1400, %1374 in 1 : vector<2x32xf32>, vector<2x32xf32> -> vector<2x64xf32>
    %c8_551 = arith.constant 8 : index
    %c0_552 = arith.constant 0 : index
    %c0_553 = arith.constant 0 : index
    %1532 = vector.load %arg1[%c8_551, %c0_552, %c0_553] : memref<10x64x128xf32, #tpu.memory_space<vmem>>, vector<1x64x128xf32>
    %1533 = vector.shape_cast %1532 : vector<1x64x128xf32> to vector<64x128xf32>
    %cst_554 = arith.constant dense<0.000000e+00> : vector<2x128xf32>
    %1534 = tpu.matmul %1531, %1533, %cst_554 {dimension_numbers = #tpu.dot_dimension_numbers<[1], [0], [0], [1], [0, 0, 1, 1], [], []>} : vector<2x64xf32>, vector<64x128xf32>, vector<2x128xf32> -> vector<2x128xf32>
    %c8_555 = arith.constant 8 : index
    %c0_556 = arith.constant 0 : index
    %c0_557 = arith.constant 0 : index
    %1535 = vector.load %arg2[%c8_555, %c0_556, %c0_557] : memref<10x1x128xf32, #tpu.memory_space<vmem>>, vector<1x1x128xf32>
    %1536 = vector.shape_cast %1535 : vector<1x1x128xf32> to vector<1x128xf32>
    %1537 = vector.broadcast %1536 : vector<1x128xf32> to vector<2x128xf32>
    %1538 = arith.addf %1534, %1537 : vector<2x128xf32>
    %1539 = arith.negf %1538 : vector<2x128xf32>
    %1540 = math.exp %1539 : vector<2x128xf32>
    %cst_558 = arith.constant 1.000000e+00 : f32
    %1541 = vector.broadcast %cst_558 : f32 to vector<2x128xf32>
    %1542 = arith.addf %1541, %1540 : vector<2x128xf32>
    %1543 = arith.divf %1541, %1542 : vector<2x128xf32>
    %1544 = vector.extract_strided_slice %1543 {offsets = [0, 0], sizes = [2, 32], strides = [1, 1]} : vector<2x128xf32> to vector<2x32xf32>
    %1545 = vector.extract_strided_slice %1543 {offsets = [0, 32], sizes = [2, 32], strides = [1, 1]} : vector<2x128xf32> to vector<2x32xf32>
    %1546 = vector.extract_strided_slice %1543 {offsets = [0, 64], sizes = [2, 32], strides = [1, 1]} : vector<2x128xf32> to vector<2x32xf32>
    %cst_559 = arith.constant 2.000000e+00 : f32
    %1547 = vector.broadcast %cst_559 : f32 to vector<2x32xf32>
    %1548 = arith.mulf %1547, %1546 : vector<2x32xf32>
    %cst_560 = arith.constant 1.000000e+00 : f32
    %1549 = vector.broadcast %cst_560 : f32 to vector<2x32xf32>
    %1550 = arith.subf %1548, %1549 : vector<2x32xf32>
    %1551 = vector.extract_strided_slice %1543 {offsets = [0, 96], sizes = [2, 32], strides = [1, 1]} : vector<2x128xf32> to vector<2x32xf32>
    %1552 = arith.mulf %1545, %1372 : vector<2x32xf32>
    %1553 = arith.mulf %1544, %1550 : vector<2x32xf32>
    %1554 = arith.addf %1552, %1553 : vector<2x32xf32>
    %1555 = math.tanh %1554 : vector<2x32xf32>
    %1556 = arith.mulf %1551, %1555 : vector<2x32xf32>
    %1557 = tpu.concatenate %1426, %1400 in 1 : vector<2x32xf32>, vector<2x32xf32> -> vector<2x64xf32>
    %c7_561 = arith.constant 7 : index
    %c0_562 = arith.constant 0 : index
    %c0_563 = arith.constant 0 : index
    %1558 = vector.load %arg1[%c7_561, %c0_562, %c0_563] : memref<10x64x128xf32, #tpu.memory_space<vmem>>, vector<1x64x128xf32>
    %1559 = vector.shape_cast %1558 : vector<1x64x128xf32> to vector<64x128xf32>
    %cst_564 = arith.constant dense<0.000000e+00> : vector<2x128xf32>
    %1560 = tpu.matmul %1557, %1559, %cst_564 {dimension_numbers = #tpu.dot_dimension_numbers<[1], [0], [0], [1], [0, 0, 1, 1], [], []>} : vector<2x64xf32>, vector<64x128xf32>, vector<2x128xf32> -> vector<2x128xf32>
    %c7_565 = arith.constant 7 : index
    %c0_566 = arith.constant 0 : index
    %c0_567 = arith.constant 0 : index
    %1561 = vector.load %arg2[%c7_565, %c0_566, %c0_567] : memref<10x1x128xf32, #tpu.memory_space<vmem>>, vector<1x1x128xf32>
    %1562 = vector.shape_cast %1561 : vector<1x1x128xf32> to vector<1x128xf32>
    %1563 = vector.broadcast %1562 : vector<1x128xf32> to vector<2x128xf32>
    %1564 = arith.addf %1560, %1563 : vector<2x128xf32>
    %1565 = arith.negf %1564 : vector<2x128xf32>
    %1566 = math.exp %1565 : vector<2x128xf32>
    %cst_568 = arith.constant 1.000000e+00 : f32
    %1567 = vector.broadcast %cst_568 : f32 to vector<2x128xf32>
    %1568 = arith.addf %1567, %1566 : vector<2x128xf32>
    %1569 = arith.divf %1567, %1568 : vector<2x128xf32>
    %1570 = vector.extract_strided_slice %1569 {offsets = [0, 0], sizes = [2, 32], strides = [1, 1]} : vector<2x128xf32> to vector<2x32xf32>
    %1571 = vector.extract_strided_slice %1569 {offsets = [0, 32], sizes = [2, 32], strides = [1, 1]} : vector<2x128xf32> to vector<2x32xf32>
    %1572 = vector.extract_strided_slice %1569 {offsets = [0, 64], sizes = [2, 32], strides = [1, 1]} : vector<2x128xf32> to vector<2x32xf32>
    %cst_569 = arith.constant 2.000000e+00 : f32
    %1573 = vector.broadcast %cst_569 : f32 to vector<2x32xf32>
    %1574 = arith.mulf %1573, %1572 : vector<2x32xf32>
    %cst_570 = arith.constant 1.000000e+00 : f32
    %1575 = vector.broadcast %cst_570 : f32 to vector<2x32xf32>
    %1576 = arith.subf %1574, %1575 : vector<2x32xf32>
    %1577 = vector.extract_strided_slice %1569 {offsets = [0, 96], sizes = [2, 32], strides = [1, 1]} : vector<2x128xf32> to vector<2x32xf32>
    %1578 = arith.mulf %1571, %1398 : vector<2x32xf32>
    %1579 = arith.mulf %1570, %1576 : vector<2x32xf32>
    %1580 = arith.addf %1578, %1579 : vector<2x32xf32>
    %1581 = math.tanh %1580 : vector<2x32xf32>
    %1582 = arith.mulf %1577, %1581 : vector<2x32xf32>
    %1583 = tpu.concatenate %1452, %1426 in 1 : vector<2x32xf32>, vector<2x32xf32> -> vector<2x64xf32>
    %c6_571 = arith.constant 6 : index
    %c0_572 = arith.constant 0 : index
    %c0_573 = arith.constant 0 : index
    %1584 = vector.load %arg1[%c6_571, %c0_572, %c0_573] : memref<10x64x128xf32, #tpu.memory_space<vmem>>, vector<1x64x128xf32>
    %1585 = vector.shape_cast %1584 : vector<1x64x128xf32> to vector<64x128xf32>
    %cst_574 = arith.constant dense<0.000000e+00> : vector<2x128xf32>
    %1586 = tpu.matmul %1583, %1585, %cst_574 {dimension_numbers = #tpu.dot_dimension_numbers<[1], [0], [0], [1], [0, 0, 1, 1], [], []>} : vector<2x64xf32>, vector<64x128xf32>, vector<2x128xf32> -> vector<2x128xf32>
    %c6_575 = arith.constant 6 : index
    %c0_576 = arith.constant 0 : index
    %c0_577 = arith.constant 0 : index
    %1587 = vector.load %arg2[%c6_575, %c0_576, %c0_577] : memref<10x1x128xf32, #tpu.memory_space<vmem>>, vector<1x1x128xf32>
    %1588 = vector.shape_cast %1587 : vector<1x1x128xf32> to vector<1x128xf32>
    %1589 = vector.broadcast %1588 : vector<1x128xf32> to vector<2x128xf32>
    %1590 = arith.addf %1586, %1589 : vector<2x128xf32>
    %1591 = arith.negf %1590 : vector<2x128xf32>
    %1592 = math.exp %1591 : vector<2x128xf32>
    %cst_578 = arith.constant 1.000000e+00 : f32
    %1593 = vector.broadcast %cst_578 : f32 to vector<2x128xf32>
    %1594 = arith.addf %1593, %1592 : vector<2x128xf32>
    %1595 = arith.divf %1593, %1594 : vector<2x128xf32>
    %1596 = vector.extract_strided_slice %1595 {offsets = [0, 0], sizes = [2, 32], strides = [1, 1]} : vector<2x128xf32> to vector<2x32xf32>
    %1597 = vector.extract_strided_slice %1595 {offsets = [0, 32], sizes = [2, 32], strides = [1, 1]} : vector<2x128xf32> to vector<2x32xf32>
    %1598 = vector.extract_strided_slice %1595 {offsets = [0, 64], sizes = [2, 32], strides = [1, 1]} : vector<2x128xf32> to vector<2x32xf32>
    %cst_579 = arith.constant 2.000000e+00 : f32
    %1599 = vector.broadcast %cst_579 : f32 to vector<2x32xf32>
    %1600 = arith.mulf %1599, %1598 : vector<2x32xf32>
    %cst_580 = arith.constant 1.000000e+00 : f32
    %1601 = vector.broadcast %cst_580 : f32 to vector<2x32xf32>
    %1602 = arith.subf %1600, %1601 : vector<2x32xf32>
    %1603 = vector.extract_strided_slice %1595 {offsets = [0, 96], sizes = [2, 32], strides = [1, 1]} : vector<2x128xf32> to vector<2x32xf32>
    %1604 = arith.mulf %1597, %1424 : vector<2x32xf32>
    %1605 = arith.mulf %1596, %1602 : vector<2x32xf32>
    %1606 = arith.addf %1604, %1605 : vector<2x32xf32>
    %1607 = math.tanh %1606 : vector<2x32xf32>
    %1608 = arith.mulf %1603, %1607 : vector<2x32xf32>
    %1609 = tpu.concatenate %1478, %1452 in 1 : vector<2x32xf32>, vector<2x32xf32> -> vector<2x64xf32>
    %c5_581 = arith.constant 5 : index
    %c0_582 = arith.constant 0 : index
    %c0_583 = arith.constant 0 : index
    %1610 = vector.load %arg1[%c5_581, %c0_582, %c0_583] : memref<10x64x128xf32, #tpu.memory_space<vmem>>, vector<1x64x128xf32>
    %1611 = vector.shape_cast %1610 : vector<1x64x128xf32> to vector<64x128xf32>
    %cst_584 = arith.constant dense<0.000000e+00> : vector<2x128xf32>
    %1612 = tpu.matmul %1609, %1611, %cst_584 {dimension_numbers = #tpu.dot_dimension_numbers<[1], [0], [0], [1], [0, 0, 1, 1], [], []>} : vector<2x64xf32>, vector<64x128xf32>, vector<2x128xf32> -> vector<2x128xf32>
    %c5_585 = arith.constant 5 : index
    %c0_586 = arith.constant 0 : index
    %c0_587 = arith.constant 0 : index
    %1613 = vector.load %arg2[%c5_585, %c0_586, %c0_587] : memref<10x1x128xf32, #tpu.memory_space<vmem>>, vector<1x1x128xf32>
    %1614 = vector.shape_cast %1613 : vector<1x1x128xf32> to vector<1x128xf32>
    %1615 = vector.broadcast %1614 : vector<1x128xf32> to vector<2x128xf32>
    %1616 = arith.addf %1612, %1615 : vector<2x128xf32>
    %1617 = arith.negf %1616 : vector<2x128xf32>
    %1618 = math.exp %1617 : vector<2x128xf32>
    %cst_588 = arith.constant 1.000000e+00 : f32
    %1619 = vector.broadcast %cst_588 : f32 to vector<2x128xf32>
    %1620 = arith.addf %1619, %1618 : vector<2x128xf32>
    %1621 = arith.divf %1619, %1620 : vector<2x128xf32>
    %1622 = vector.extract_strided_slice %1621 {offsets = [0, 0], sizes = [2, 32], strides = [1, 1]} : vector<2x128xf32> to vector<2x32xf32>
    %1623 = vector.extract_strided_slice %1621 {offsets = [0, 32], sizes = [2, 32], strides = [1, 1]} : vector<2x128xf32> to vector<2x32xf32>
    %1624 = vector.extract_strided_slice %1621 {offsets = [0, 64], sizes = [2, 32], strides = [1, 1]} : vector<2x128xf32> to vector<2x32xf32>
    %cst_589 = arith.constant 2.000000e+00 : f32
    %1625 = vector.broadcast %cst_589 : f32 to vector<2x32xf32>
    %1626 = arith.mulf %1625, %1624 : vector<2x32xf32>
    %cst_590 = arith.constant 1.000000e+00 : f32
    %1627 = vector.broadcast %cst_590 : f32 to vector<2x32xf32>
    %1628 = arith.subf %1626, %1627 : vector<2x32xf32>
    %1629 = vector.extract_strided_slice %1621 {offsets = [0, 96], sizes = [2, 32], strides = [1, 1]} : vector<2x128xf32> to vector<2x32xf32>
    %1630 = arith.mulf %1623, %1450 : vector<2x32xf32>
    %1631 = arith.mulf %1622, %1628 : vector<2x32xf32>
    %1632 = arith.addf %1630, %1631 : vector<2x32xf32>
    %1633 = math.tanh %1632 : vector<2x32xf32>
    %1634 = arith.mulf %1629, %1633 : vector<2x32xf32>
    %1635 = tpu.concatenate %1504, %1478 in 1 : vector<2x32xf32>, vector<2x32xf32> -> vector<2x64xf32>
    %c4_591 = arith.constant 4 : index
    %c0_592 = arith.constant 0 : index
    %c0_593 = arith.constant 0 : index
    %1636 = vector.load %arg1[%c4_591, %c0_592, %c0_593] : memref<10x64x128xf32, #tpu.memory_space<vmem>>, vector<1x64x128xf32>
    %1637 = vector.shape_cast %1636 : vector<1x64x128xf32> to vector<64x128xf32>
    %cst_594 = arith.constant dense<0.000000e+00> : vector<2x128xf32>
    %1638 = tpu.matmul %1635, %1637, %cst_594 {dimension_numbers = #tpu.dot_dimension_numbers<[1], [0], [0], [1], [0, 0, 1, 1], [], []>} : vector<2x64xf32>, vector<64x128xf32>, vector<2x128xf32> -> vector<2x128xf32>
    %c4_595 = arith.constant 4 : index
    %c0_596 = arith.constant 0 : index
    %c0_597 = arith.constant 0 : index
    %1639 = vector.load %arg2[%c4_595, %c0_596, %c0_597] : memref<10x1x128xf32, #tpu.memory_space<vmem>>, vector<1x1x128xf32>
    %1640 = vector.shape_cast %1639 : vector<1x1x128xf32> to vector<1x128xf32>
    %1641 = vector.broadcast %1640 : vector<1x128xf32> to vector<2x128xf32>
    %1642 = arith.addf %1638, %1641 : vector<2x128xf32>
    %1643 = arith.negf %1642 : vector<2x128xf32>
    %1644 = math.exp %1643 : vector<2x128xf32>
    %cst_598 = arith.constant 1.000000e+00 : f32
    %1645 = vector.broadcast %cst_598 : f32 to vector<2x128xf32>
    %1646 = arith.addf %1645, %1644 : vector<2x128xf32>
    %1647 = arith.divf %1645, %1646 : vector<2x128xf32>
    %1648 = vector.extract_strided_slice %1647 {offsets = [0, 0], sizes = [2, 32], strides = [1, 1]} : vector<2x128xf32> to vector<2x32xf32>
    %1649 = vector.extract_strided_slice %1647 {offsets = [0, 32], sizes = [2, 32], strides = [1, 1]} : vector<2x128xf32> to vector<2x32xf32>
    %1650 = vector.extract_strided_slice %1647 {offsets = [0, 64], sizes = [2, 32], strides = [1, 1]} : vector<2x128xf32> to vector<2x32xf32>
    %cst_599 = arith.constant 2.000000e+00 : f32
    %1651 = vector.broadcast %cst_599 : f32 to vector<2x32xf32>
    %1652 = arith.mulf %1651, %1650 : vector<2x32xf32>
    %cst_600 = arith.constant 1.000000e+00 : f32
    %1653 = vector.broadcast %cst_600 : f32 to vector<2x32xf32>
    %1654 = arith.subf %1652, %1653 : vector<2x32xf32>
    %1655 = vector.extract_strided_slice %1647 {offsets = [0, 96], sizes = [2, 32], strides = [1, 1]} : vector<2x128xf32> to vector<2x32xf32>
    %1656 = arith.mulf %1649, %1476 : vector<2x32xf32>
    %1657 = arith.mulf %1648, %1654 : vector<2x32xf32>
    %1658 = arith.addf %1656, %1657 : vector<2x32xf32>
    %1659 = math.tanh %1658 : vector<2x32xf32>
    %1660 = arith.mulf %1655, %1659 : vector<2x32xf32>
    %1661 = tpu.concatenate %1556, %1530 in 1 : vector<2x32xf32>, vector<2x32xf32> -> vector<2x64xf32>
    %c9_601 = arith.constant 9 : index
    %c0_602 = arith.constant 0 : index
    %c0_603 = arith.constant 0 : index
    %1662 = vector.load %arg1[%c9_601, %c0_602, %c0_603] : memref<10x64x128xf32, #tpu.memory_space<vmem>>, vector<1x64x128xf32>
    %1663 = vector.shape_cast %1662 : vector<1x64x128xf32> to vector<64x128xf32>
    %cst_604 = arith.constant dense<0.000000e+00> : vector<2x128xf32>
    %1664 = tpu.matmul %1661, %1663, %cst_604 {dimension_numbers = #tpu.dot_dimension_numbers<[1], [0], [0], [1], [0, 0, 1, 1], [], []>} : vector<2x64xf32>, vector<64x128xf32>, vector<2x128xf32> -> vector<2x128xf32>
    %c9_605 = arith.constant 9 : index
    %c0_606 = arith.constant 0 : index
    %c0_607 = arith.constant 0 : index
    %1665 = vector.load %arg2[%c9_605, %c0_606, %c0_607] : memref<10x1x128xf32, #tpu.memory_space<vmem>>, vector<1x1x128xf32>
    %1666 = vector.shape_cast %1665 : vector<1x1x128xf32> to vector<1x128xf32>
    %1667 = vector.broadcast %1666 : vector<1x128xf32> to vector<2x128xf32>
    %1668 = arith.addf %1664, %1667 : vector<2x128xf32>
    %1669 = arith.negf %1668 : vector<2x128xf32>
    %1670 = math.exp %1669 : vector<2x128xf32>
    %cst_608 = arith.constant 1.000000e+00 : f32
    %1671 = vector.broadcast %cst_608 : f32 to vector<2x128xf32>
    %1672 = arith.addf %1671, %1670 : vector<2x128xf32>
    %1673 = arith.divf %1671, %1672 : vector<2x128xf32>
    %1674 = vector.extract_strided_slice %1673 {offsets = [0, 0], sizes = [2, 32], strides = [1, 1]} : vector<2x128xf32> to vector<2x32xf32>
    %1675 = vector.extract_strided_slice %1673 {offsets = [0, 32], sizes = [2, 32], strides = [1, 1]} : vector<2x128xf32> to vector<2x32xf32>
    %1676 = vector.extract_strided_slice %1673 {offsets = [0, 64], sizes = [2, 32], strides = [1, 1]} : vector<2x128xf32> to vector<2x32xf32>
    %cst_609 = arith.constant 2.000000e+00 : f32
    %1677 = vector.broadcast %cst_609 : f32 to vector<2x32xf32>
    %1678 = arith.mulf %1677, %1676 : vector<2x32xf32>
    %cst_610 = arith.constant 1.000000e+00 : f32
    %1679 = vector.broadcast %cst_610 : f32 to vector<2x32xf32>
    %1680 = arith.subf %1678, %1679 : vector<2x32xf32>
    %1681 = vector.extract_strided_slice %1673 {offsets = [0, 96], sizes = [2, 32], strides = [1, 1]} : vector<2x128xf32> to vector<2x32xf32>
    %1682 = arith.mulf %1675, %1528 : vector<2x32xf32>
    %1683 = arith.mulf %1674, %1680 : vector<2x32xf32>
    %1684 = arith.addf %1682, %1683 : vector<2x32xf32>
    %1685 = math.tanh %1684 : vector<2x32xf32>
    %1686 = arith.mulf %1681, %1685 : vector<2x32xf32>
    %1687 = tpu.concatenate %1582, %1556 in 1 : vector<2x32xf32>, vector<2x32xf32> -> vector<2x64xf32>
    %c8_611 = arith.constant 8 : index
    %c0_612 = arith.constant 0 : index
    %c0_613 = arith.constant 0 : index
    %1688 = vector.load %arg1[%c8_611, %c0_612, %c0_613] : memref<10x64x128xf32, #tpu.memory_space<vmem>>, vector<1x64x128xf32>
    %1689 = vector.shape_cast %1688 : vector<1x64x128xf32> to vector<64x128xf32>
    %cst_614 = arith.constant dense<0.000000e+00> : vector<2x128xf32>
    %1690 = tpu.matmul %1687, %1689, %cst_614 {dimension_numbers = #tpu.dot_dimension_numbers<[1], [0], [0], [1], [0, 0, 1, 1], [], []>} : vector<2x64xf32>, vector<64x128xf32>, vector<2x128xf32> -> vector<2x128xf32>
    %c8_615 = arith.constant 8 : index
    %c0_616 = arith.constant 0 : index
    %c0_617 = arith.constant 0 : index
    %1691 = vector.load %arg2[%c8_615, %c0_616, %c0_617] : memref<10x1x128xf32, #tpu.memory_space<vmem>>, vector<1x1x128xf32>
    %1692 = vector.shape_cast %1691 : vector<1x1x128xf32> to vector<1x128xf32>
    %1693 = vector.broadcast %1692 : vector<1x128xf32> to vector<2x128xf32>
    %1694 = arith.addf %1690, %1693 : vector<2x128xf32>
    %1695 = arith.negf %1694 : vector<2x128xf32>
    %1696 = math.exp %1695 : vector<2x128xf32>
    %cst_618 = arith.constant 1.000000e+00 : f32
    %1697 = vector.broadcast %cst_618 : f32 to vector<2x128xf32>
    %1698 = arith.addf %1697, %1696 : vector<2x128xf32>
    %1699 = arith.divf %1697, %1698 : vector<2x128xf32>
    %1700 = vector.extract_strided_slice %1699 {offsets = [0, 0], sizes = [2, 32], strides = [1, 1]} : vector<2x128xf32> to vector<2x32xf32>
    %1701 = vector.extract_strided_slice %1699 {offsets = [0, 32], sizes = [2, 32], strides = [1, 1]} : vector<2x128xf32> to vector<2x32xf32>
    %1702 = vector.extract_strided_slice %1699 {offsets = [0, 64], sizes = [2, 32], strides = [1, 1]} : vector<2x128xf32> to vector<2x32xf32>
    %cst_619 = arith.constant 2.000000e+00 : f32
    %1703 = vector.broadcast %cst_619 : f32 to vector<2x32xf32>
    %1704 = arith.mulf %1703, %1702 : vector<2x32xf32>
    %cst_620 = arith.constant 1.000000e+00 : f32
    %1705 = vector.broadcast %cst_620 : f32 to vector<2x32xf32>
    %1706 = arith.subf %1704, %1705 : vector<2x32xf32>
    %1707 = vector.extract_strided_slice %1699 {offsets = [0, 96], sizes = [2, 32], strides = [1, 1]} : vector<2x128xf32> to vector<2x32xf32>
    %1708 = arith.mulf %1701, %1554 : vector<2x32xf32>
    %1709 = arith.mulf %1700, %1706 : vector<2x32xf32>
    %1710 = arith.addf %1708, %1709 : vector<2x32xf32>
    %1711 = math.tanh %1710 : vector<2x32xf32>
    %1712 = arith.mulf %1707, %1711 : vector<2x32xf32>
    %1713 = tpu.concatenate %1608, %1582 in 1 : vector<2x32xf32>, vector<2x32xf32> -> vector<2x64xf32>
    %c7_621 = arith.constant 7 : index
    %c0_622 = arith.constant 0 : index
    %c0_623 = arith.constant 0 : index
    %1714 = vector.load %arg1[%c7_621, %c0_622, %c0_623] : memref<10x64x128xf32, #tpu.memory_space<vmem>>, vector<1x64x128xf32>
    %1715 = vector.shape_cast %1714 : vector<1x64x128xf32> to vector<64x128xf32>
    %cst_624 = arith.constant dense<0.000000e+00> : vector<2x128xf32>
    %1716 = tpu.matmul %1713, %1715, %cst_624 {dimension_numbers = #tpu.dot_dimension_numbers<[1], [0], [0], [1], [0, 0, 1, 1], [], []>} : vector<2x64xf32>, vector<64x128xf32>, vector<2x128xf32> -> vector<2x128xf32>
    %c7_625 = arith.constant 7 : index
    %c0_626 = arith.constant 0 : index
    %c0_627 = arith.constant 0 : index
    %1717 = vector.load %arg2[%c7_625, %c0_626, %c0_627] : memref<10x1x128xf32, #tpu.memory_space<vmem>>, vector<1x1x128xf32>
    %1718 = vector.shape_cast %1717 : vector<1x1x128xf32> to vector<1x128xf32>
    %1719 = vector.broadcast %1718 : vector<1x128xf32> to vector<2x128xf32>
    %1720 = arith.addf %1716, %1719 : vector<2x128xf32>
    %1721 = arith.negf %1720 : vector<2x128xf32>
    %1722 = math.exp %1721 : vector<2x128xf32>
    %cst_628 = arith.constant 1.000000e+00 : f32
    %1723 = vector.broadcast %cst_628 : f32 to vector<2x128xf32>
    %1724 = arith.addf %1723, %1722 : vector<2x128xf32>
    %1725 = arith.divf %1723, %1724 : vector<2x128xf32>
    %1726 = vector.extract_strided_slice %1725 {offsets = [0, 0], sizes = [2, 32], strides = [1, 1]} : vector<2x128xf32> to vector<2x32xf32>
    %1727 = vector.extract_strided_slice %1725 {offsets = [0, 32], sizes = [2, 32], strides = [1, 1]} : vector<2x128xf32> to vector<2x32xf32>
    %1728 = vector.extract_strided_slice %1725 {offsets = [0, 64], sizes = [2, 32], strides = [1, 1]} : vector<2x128xf32> to vector<2x32xf32>
    %cst_629 = arith.constant 2.000000e+00 : f32
    %1729 = vector.broadcast %cst_629 : f32 to vector<2x32xf32>
    %1730 = arith.mulf %1729, %1728 : vector<2x32xf32>
    %cst_630 = arith.constant 1.000000e+00 : f32
    %1731 = vector.broadcast %cst_630 : f32 to vector<2x32xf32>
    %1732 = arith.subf %1730, %1731 : vector<2x32xf32>
    %1733 = vector.extract_strided_slice %1725 {offsets = [0, 96], sizes = [2, 32], strides = [1, 1]} : vector<2x128xf32> to vector<2x32xf32>
    %1734 = arith.mulf %1727, %1580 : vector<2x32xf32>
    %1735 = arith.mulf %1726, %1732 : vector<2x32xf32>
    %1736 = arith.addf %1734, %1735 : vector<2x32xf32>
    %1737 = math.tanh %1736 : vector<2x32xf32>
    %1738 = arith.mulf %1733, %1737 : vector<2x32xf32>
    %1739 = tpu.concatenate %1634, %1608 in 1 : vector<2x32xf32>, vector<2x32xf32> -> vector<2x64xf32>
    %c6_631 = arith.constant 6 : index
    %c0_632 = arith.constant 0 : index
    %c0_633 = arith.constant 0 : index
    %1740 = vector.load %arg1[%c6_631, %c0_632, %c0_633] : memref<10x64x128xf32, #tpu.memory_space<vmem>>, vector<1x64x128xf32>
    %1741 = vector.shape_cast %1740 : vector<1x64x128xf32> to vector<64x128xf32>
    %cst_634 = arith.constant dense<0.000000e+00> : vector<2x128xf32>
    %1742 = tpu.matmul %1739, %1741, %cst_634 {dimension_numbers = #tpu.dot_dimension_numbers<[1], [0], [0], [1], [0, 0, 1, 1], [], []>} : vector<2x64xf32>, vector<64x128xf32>, vector<2x128xf32> -> vector<2x128xf32>
    %c6_635 = arith.constant 6 : index
    %c0_636 = arith.constant 0 : index
    %c0_637 = arith.constant 0 : index
    %1743 = vector.load %arg2[%c6_635, %c0_636, %c0_637] : memref<10x1x128xf32, #tpu.memory_space<vmem>>, vector<1x1x128xf32>
    %1744 = vector.shape_cast %1743 : vector<1x1x128xf32> to vector<1x128xf32>
    %1745 = vector.broadcast %1744 : vector<1x128xf32> to vector<2x128xf32>
    %1746 = arith.addf %1742, %1745 : vector<2x128xf32>
    %1747 = arith.negf %1746 : vector<2x128xf32>
    %1748 = math.exp %1747 : vector<2x128xf32>
    %cst_638 = arith.constant 1.000000e+00 : f32
    %1749 = vector.broadcast %cst_638 : f32 to vector<2x128xf32>
    %1750 = arith.addf %1749, %1748 : vector<2x128xf32>
    %1751 = arith.divf %1749, %1750 : vector<2x128xf32>
    %1752 = vector.extract_strided_slice %1751 {offsets = [0, 0], sizes = [2, 32], strides = [1, 1]} : vector<2x128xf32> to vector<2x32xf32>
    %1753 = vector.extract_strided_slice %1751 {offsets = [0, 32], sizes = [2, 32], strides = [1, 1]} : vector<2x128xf32> to vector<2x32xf32>
    %1754 = vector.extract_strided_slice %1751 {offsets = [0, 64], sizes = [2, 32], strides = [1, 1]} : vector<2x128xf32> to vector<2x32xf32>
    %cst_639 = arith.constant 2.000000e+00 : f32
    %1755 = vector.broadcast %cst_639 : f32 to vector<2x32xf32>
    %1756 = arith.mulf %1755, %1754 : vector<2x32xf32>
    %cst_640 = arith.constant 1.000000e+00 : f32
    %1757 = vector.broadcast %cst_640 : f32 to vector<2x32xf32>
    %1758 = arith.subf %1756, %1757 : vector<2x32xf32>
    %1759 = vector.extract_strided_slice %1751 {offsets = [0, 96], sizes = [2, 32], strides = [1, 1]} : vector<2x128xf32> to vector<2x32xf32>
    %1760 = arith.mulf %1753, %1606 : vector<2x32xf32>
    %1761 = arith.mulf %1752, %1758 : vector<2x32xf32>
    %1762 = arith.addf %1760, %1761 : vector<2x32xf32>
    %1763 = math.tanh %1762 : vector<2x32xf32>
    %1764 = arith.mulf %1759, %1763 : vector<2x32xf32>
    %1765 = tpu.concatenate %1660, %1634 in 1 : vector<2x32xf32>, vector<2x32xf32> -> vector<2x64xf32>
    %c5_641 = arith.constant 5 : index
    %c0_642 = arith.constant 0 : index
    %c0_643 = arith.constant 0 : index
    %1766 = vector.load %arg1[%c5_641, %c0_642, %c0_643] : memref<10x64x128xf32, #tpu.memory_space<vmem>>, vector<1x64x128xf32>
    %1767 = vector.shape_cast %1766 : vector<1x64x128xf32> to vector<64x128xf32>
    %cst_644 = arith.constant dense<0.000000e+00> : vector<2x128xf32>
    %1768 = tpu.matmul %1765, %1767, %cst_644 {dimension_numbers = #tpu.dot_dimension_numbers<[1], [0], [0], [1], [0, 0, 1, 1], [], []>} : vector<2x64xf32>, vector<64x128xf32>, vector<2x128xf32> -> vector<2x128xf32>
    %c5_645 = arith.constant 5 : index
    %c0_646 = arith.constant 0 : index
    %c0_647 = arith.constant 0 : index
    %1769 = vector.load %arg2[%c5_645, %c0_646, %c0_647] : memref<10x1x128xf32, #tpu.memory_space<vmem>>, vector<1x1x128xf32>
    %1770 = vector.shape_cast %1769 : vector<1x1x128xf32> to vector<1x128xf32>
    %1771 = vector.broadcast %1770 : vector<1x128xf32> to vector<2x128xf32>
    %1772 = arith.addf %1768, %1771 : vector<2x128xf32>
    %1773 = arith.negf %1772 : vector<2x128xf32>
    %1774 = math.exp %1773 : vector<2x128xf32>
    %cst_648 = arith.constant 1.000000e+00 : f32
    %1775 = vector.broadcast %cst_648 : f32 to vector<2x128xf32>
    %1776 = arith.addf %1775, %1774 : vector<2x128xf32>
    %1777 = arith.divf %1775, %1776 : vector<2x128xf32>
    %1778 = vector.extract_strided_slice %1777 {offsets = [0, 0], sizes = [2, 32], strides = [1, 1]} : vector<2x128xf32> to vector<2x32xf32>
    %1779 = vector.extract_strided_slice %1777 {offsets = [0, 32], sizes = [2, 32], strides = [1, 1]} : vector<2x128xf32> to vector<2x32xf32>
    %1780 = vector.extract_strided_slice %1777 {offsets = [0, 64], sizes = [2, 32], strides = [1, 1]} : vector<2x128xf32> to vector<2x32xf32>
    %cst_649 = arith.constant 2.000000e+00 : f32
    %1781 = vector.broadcast %cst_649 : f32 to vector<2x32xf32>
    %1782 = arith.mulf %1781, %1780 : vector<2x32xf32>
    %cst_650 = arith.constant 1.000000e+00 : f32
    %1783 = vector.broadcast %cst_650 : f32 to vector<2x32xf32>
    %1784 = arith.subf %1782, %1783 : vector<2x32xf32>
    %1785 = vector.extract_strided_slice %1777 {offsets = [0, 96], sizes = [2, 32], strides = [1, 1]} : vector<2x128xf32> to vector<2x32xf32>
    %1786 = arith.mulf %1779, %1632 : vector<2x32xf32>
    %1787 = arith.mulf %1778, %1784 : vector<2x32xf32>
    %1788 = arith.addf %1786, %1787 : vector<2x32xf32>
    %1789 = math.tanh %1788 : vector<2x32xf32>
    %1790 = arith.mulf %1785, %1789 : vector<2x32xf32>
    %1791 = tpu.concatenate %1712, %1686 in 1 : vector<2x32xf32>, vector<2x32xf32> -> vector<2x64xf32>
    %c9_651 = arith.constant 9 : index
    %c0_652 = arith.constant 0 : index
    %c0_653 = arith.constant 0 : index
    %1792 = vector.load %arg1[%c9_651, %c0_652, %c0_653] : memref<10x64x128xf32, #tpu.memory_space<vmem>>, vector<1x64x128xf32>
    %1793 = vector.shape_cast %1792 : vector<1x64x128xf32> to vector<64x128xf32>
    %cst_654 = arith.constant dense<0.000000e+00> : vector<2x128xf32>
    %1794 = tpu.matmul %1791, %1793, %cst_654 {dimension_numbers = #tpu.dot_dimension_numbers<[1], [0], [0], [1], [0, 0, 1, 1], [], []>} : vector<2x64xf32>, vector<64x128xf32>, vector<2x128xf32> -> vector<2x128xf32>
    %c9_655 = arith.constant 9 : index
    %c0_656 = arith.constant 0 : index
    %c0_657 = arith.constant 0 : index
    %1795 = vector.load %arg2[%c9_655, %c0_656, %c0_657] : memref<10x1x128xf32, #tpu.memory_space<vmem>>, vector<1x1x128xf32>
    %1796 = vector.shape_cast %1795 : vector<1x1x128xf32> to vector<1x128xf32>
    %1797 = vector.broadcast %1796 : vector<1x128xf32> to vector<2x128xf32>
    %1798 = arith.addf %1794, %1797 : vector<2x128xf32>
    %1799 = arith.negf %1798 : vector<2x128xf32>
    %1800 = math.exp %1799 : vector<2x128xf32>
    %cst_658 = arith.constant 1.000000e+00 : f32
    %1801 = vector.broadcast %cst_658 : f32 to vector<2x128xf32>
    %1802 = arith.addf %1801, %1800 : vector<2x128xf32>
    %1803 = arith.divf %1801, %1802 : vector<2x128xf32>
    %1804 = vector.extract_strided_slice %1803 {offsets = [0, 0], sizes = [2, 32], strides = [1, 1]} : vector<2x128xf32> to vector<2x32xf32>
    %1805 = vector.extract_strided_slice %1803 {offsets = [0, 32], sizes = [2, 32], strides = [1, 1]} : vector<2x128xf32> to vector<2x32xf32>
    %1806 = vector.extract_strided_slice %1803 {offsets = [0, 64], sizes = [2, 32], strides = [1, 1]} : vector<2x128xf32> to vector<2x32xf32>
    %cst_659 = arith.constant 2.000000e+00 : f32
    %1807 = vector.broadcast %cst_659 : f32 to vector<2x32xf32>
    %1808 = arith.mulf %1807, %1806 : vector<2x32xf32>
    %cst_660 = arith.constant 1.000000e+00 : f32
    %1809 = vector.broadcast %cst_660 : f32 to vector<2x32xf32>
    %1810 = arith.subf %1808, %1809 : vector<2x32xf32>
    %1811 = vector.extract_strided_slice %1803 {offsets = [0, 96], sizes = [2, 32], strides = [1, 1]} : vector<2x128xf32> to vector<2x32xf32>
    %1812 = arith.mulf %1805, %1684 : vector<2x32xf32>
    %1813 = arith.mulf %1804, %1810 : vector<2x32xf32>
    %1814 = arith.addf %1812, %1813 : vector<2x32xf32>
    %1815 = math.tanh %1814 : vector<2x32xf32>
    %1816 = arith.mulf %1811, %1815 : vector<2x32xf32>
    %1817 = tpu.concatenate %1738, %1712 in 1 : vector<2x32xf32>, vector<2x32xf32> -> vector<2x64xf32>
    %c8_661 = arith.constant 8 : index
    %c0_662 = arith.constant 0 : index
    %c0_663 = arith.constant 0 : index
    %1818 = vector.load %arg1[%c8_661, %c0_662, %c0_663] : memref<10x64x128xf32, #tpu.memory_space<vmem>>, vector<1x64x128xf32>
    %1819 = vector.shape_cast %1818 : vector<1x64x128xf32> to vector<64x128xf32>
    %cst_664 = arith.constant dense<0.000000e+00> : vector<2x128xf32>
    %1820 = tpu.matmul %1817, %1819, %cst_664 {dimension_numbers = #tpu.dot_dimension_numbers<[1], [0], [0], [1], [0, 0, 1, 1], [], []>} : vector<2x64xf32>, vector<64x128xf32>, vector<2x128xf32> -> vector<2x128xf32>
    %c8_665 = arith.constant 8 : index
    %c0_666 = arith.constant 0 : index
    %c0_667 = arith.constant 0 : index
    %1821 = vector.load %arg2[%c8_665, %c0_666, %c0_667] : memref<10x1x128xf32, #tpu.memory_space<vmem>>, vector<1x1x128xf32>
    %1822 = vector.shape_cast %1821 : vector<1x1x128xf32> to vector<1x128xf32>
    %1823 = vector.broadcast %1822 : vector<1x128xf32> to vector<2x128xf32>
    %1824 = arith.addf %1820, %1823 : vector<2x128xf32>
    %1825 = arith.negf %1824 : vector<2x128xf32>
    %1826 = math.exp %1825 : vector<2x128xf32>
    %cst_668 = arith.constant 1.000000e+00 : f32
    %1827 = vector.broadcast %cst_668 : f32 to vector<2x128xf32>
    %1828 = arith.addf %1827, %1826 : vector<2x128xf32>
    %1829 = arith.divf %1827, %1828 : vector<2x128xf32>
    %1830 = vector.extract_strided_slice %1829 {offsets = [0, 0], sizes = [2, 32], strides = [1, 1]} : vector<2x128xf32> to vector<2x32xf32>
    %1831 = vector.extract_strided_slice %1829 {offsets = [0, 32], sizes = [2, 32], strides = [1, 1]} : vector<2x128xf32> to vector<2x32xf32>
    %1832 = vector.extract_strided_slice %1829 {offsets = [0, 64], sizes = [2, 32], strides = [1, 1]} : vector<2x128xf32> to vector<2x32xf32>
    %cst_669 = arith.constant 2.000000e+00 : f32
    %1833 = vector.broadcast %cst_669 : f32 to vector<2x32xf32>
    %1834 = arith.mulf %1833, %1832 : vector<2x32xf32>
    %cst_670 = arith.constant 1.000000e+00 : f32
    %1835 = vector.broadcast %cst_670 : f32 to vector<2x32xf32>
    %1836 = arith.subf %1834, %1835 : vector<2x32xf32>
    %1837 = vector.extract_strided_slice %1829 {offsets = [0, 96], sizes = [2, 32], strides = [1, 1]} : vector<2x128xf32> to vector<2x32xf32>
    %1838 = arith.mulf %1831, %1710 : vector<2x32xf32>
    %1839 = arith.mulf %1830, %1836 : vector<2x32xf32>
    %1840 = arith.addf %1838, %1839 : vector<2x32xf32>
    %1841 = math.tanh %1840 : vector<2x32xf32>
    %1842 = arith.mulf %1837, %1841 : vector<2x32xf32>
    %1843 = tpu.concatenate %1764, %1738 in 1 : vector<2x32xf32>, vector<2x32xf32> -> vector<2x64xf32>
    %c7_671 = arith.constant 7 : index
    %c0_672 = arith.constant 0 : index
    %c0_673 = arith.constant 0 : index
    %1844 = vector.load %arg1[%c7_671, %c0_672, %c0_673] : memref<10x64x128xf32, #tpu.memory_space<vmem>>, vector<1x64x128xf32>
    %1845 = vector.shape_cast %1844 : vector<1x64x128xf32> to vector<64x128xf32>
    %cst_674 = arith.constant dense<0.000000e+00> : vector<2x128xf32>
    %1846 = tpu.matmul %1843, %1845, %cst_674 {dimension_numbers = #tpu.dot_dimension_numbers<[1], [0], [0], [1], [0, 0, 1, 1], [], []>} : vector<2x64xf32>, vector<64x128xf32>, vector<2x128xf32> -> vector<2x128xf32>
    %c7_675 = arith.constant 7 : index
    %c0_676 = arith.constant 0 : index
    %c0_677 = arith.constant 0 : index
    %1847 = vector.load %arg2[%c7_675, %c0_676, %c0_677] : memref<10x1x128xf32, #tpu.memory_space<vmem>>, vector<1x1x128xf32>
    %1848 = vector.shape_cast %1847 : vector<1x1x128xf32> to vector<1x128xf32>
    %1849 = vector.broadcast %1848 : vector<1x128xf32> to vector<2x128xf32>
    %1850 = arith.addf %1846, %1849 : vector<2x128xf32>
    %1851 = arith.negf %1850 : vector<2x128xf32>
    %1852 = math.exp %1851 : vector<2x128xf32>
    %cst_678 = arith.constant 1.000000e+00 : f32
    %1853 = vector.broadcast %cst_678 : f32 to vector<2x128xf32>
    %1854 = arith.addf %1853, %1852 : vector<2x128xf32>
    %1855 = arith.divf %1853, %1854 : vector<2x128xf32>
    %1856 = vector.extract_strided_slice %1855 {offsets = [0, 0], sizes = [2, 32], strides = [1, 1]} : vector<2x128xf32> to vector<2x32xf32>
    %1857 = vector.extract_strided_slice %1855 {offsets = [0, 32], sizes = [2, 32], strides = [1, 1]} : vector<2x128xf32> to vector<2x32xf32>
    %1858 = vector.extract_strided_slice %1855 {offsets = [0, 64], sizes = [2, 32], strides = [1, 1]} : vector<2x128xf32> to vector<2x32xf32>
    %cst_679 = arith.constant 2.000000e+00 : f32
    %1859 = vector.broadcast %cst_679 : f32 to vector<2x32xf32>
    %1860 = arith.mulf %1859, %1858 : vector<2x32xf32>
    %cst_680 = arith.constant 1.000000e+00 : f32
    %1861 = vector.broadcast %cst_680 : f32 to vector<2x32xf32>
    %1862 = arith.subf %1860, %1861 : vector<2x32xf32>
    %1863 = vector.extract_strided_slice %1855 {offsets = [0, 96], sizes = [2, 32], strides = [1, 1]} : vector<2x128xf32> to vector<2x32xf32>
    %1864 = arith.mulf %1857, %1736 : vector<2x32xf32>
    %1865 = arith.mulf %1856, %1862 : vector<2x32xf32>
    %1866 = arith.addf %1864, %1865 : vector<2x32xf32>
    %1867 = math.tanh %1866 : vector<2x32xf32>
    %1868 = arith.mulf %1863, %1867 : vector<2x32xf32>
    %1869 = tpu.concatenate %1790, %1764 in 1 : vector<2x32xf32>, vector<2x32xf32> -> vector<2x64xf32>
    %c6_681 = arith.constant 6 : index
    %c0_682 = arith.constant 0 : index
    %c0_683 = arith.constant 0 : index
    %1870 = vector.load %arg1[%c6_681, %c0_682, %c0_683] : memref<10x64x128xf32, #tpu.memory_space<vmem>>, vector<1x64x128xf32>
    %1871 = vector.shape_cast %1870 : vector<1x64x128xf32> to vector<64x128xf32>
    %cst_684 = arith.constant dense<0.000000e+00> : vector<2x128xf32>
    %1872 = tpu.matmul %1869, %1871, %cst_684 {dimension_numbers = #tpu.dot_dimension_numbers<[1], [0], [0], [1], [0, 0, 1, 1], [], []>} : vector<2x64xf32>, vector<64x128xf32>, vector<2x128xf32> -> vector<2x128xf32>
    %c6_685 = arith.constant 6 : index
    %c0_686 = arith.constant 0 : index
    %c0_687 = arith.constant 0 : index
    %1873 = vector.load %arg2[%c6_685, %c0_686, %c0_687] : memref<10x1x128xf32, #tpu.memory_space<vmem>>, vector<1x1x128xf32>
    %1874 = vector.shape_cast %1873 : vector<1x1x128xf32> to vector<1x128xf32>
    %1875 = vector.broadcast %1874 : vector<1x128xf32> to vector<2x128xf32>
    %1876 = arith.addf %1872, %1875 : vector<2x128xf32>
    %1877 = arith.negf %1876 : vector<2x128xf32>
    %1878 = math.exp %1877 : vector<2x128xf32>
    %cst_688 = arith.constant 1.000000e+00 : f32
    %1879 = vector.broadcast %cst_688 : f32 to vector<2x128xf32>
    %1880 = arith.addf %1879, %1878 : vector<2x128xf32>
    %1881 = arith.divf %1879, %1880 : vector<2x128xf32>
    %1882 = vector.extract_strided_slice %1881 {offsets = [0, 0], sizes = [2, 32], strides = [1, 1]} : vector<2x128xf32> to vector<2x32xf32>
    %1883 = vector.extract_strided_slice %1881 {offsets = [0, 32], sizes = [2, 32], strides = [1, 1]} : vector<2x128xf32> to vector<2x32xf32>
    %1884 = vector.extract_strided_slice %1881 {offsets = [0, 64], sizes = [2, 32], strides = [1, 1]} : vector<2x128xf32> to vector<2x32xf32>
    %cst_689 = arith.constant 2.000000e+00 : f32
    %1885 = vector.broadcast %cst_689 : f32 to vector<2x32xf32>
    %1886 = arith.mulf %1885, %1884 : vector<2x32xf32>
    %cst_690 = arith.constant 1.000000e+00 : f32
    %1887 = vector.broadcast %cst_690 : f32 to vector<2x32xf32>
    %1888 = arith.subf %1886, %1887 : vector<2x32xf32>
    %1889 = vector.extract_strided_slice %1881 {offsets = [0, 96], sizes = [2, 32], strides = [1, 1]} : vector<2x128xf32> to vector<2x32xf32>
    %1890 = arith.mulf %1883, %1762 : vector<2x32xf32>
    %1891 = arith.mulf %1882, %1888 : vector<2x32xf32>
    %1892 = arith.addf %1890, %1891 : vector<2x32xf32>
    %1893 = math.tanh %1892 : vector<2x32xf32>
    %1894 = arith.mulf %1889, %1893 : vector<2x32xf32>
    %1895 = tpu.concatenate %1842, %1816 in 1 : vector<2x32xf32>, vector<2x32xf32> -> vector<2x64xf32>
    %c9_691 = arith.constant 9 : index
    %c0_692 = arith.constant 0 : index
    %c0_693 = arith.constant 0 : index
    %1896 = vector.load %arg1[%c9_691, %c0_692, %c0_693] : memref<10x64x128xf32, #tpu.memory_space<vmem>>, vector<1x64x128xf32>
    %1897 = vector.shape_cast %1896 : vector<1x64x128xf32> to vector<64x128xf32>
    %cst_694 = arith.constant dense<0.000000e+00> : vector<2x128xf32>
    %1898 = tpu.matmul %1895, %1897, %cst_694 {dimension_numbers = #tpu.dot_dimension_numbers<[1], [0], [0], [1], [0, 0, 1, 1], [], []>} : vector<2x64xf32>, vector<64x128xf32>, vector<2x128xf32> -> vector<2x128xf32>
    %c9_695 = arith.constant 9 : index
    %c0_696 = arith.constant 0 : index
    %c0_697 = arith.constant 0 : index
    %1899 = vector.load %arg2[%c9_695, %c0_696, %c0_697] : memref<10x1x128xf32, #tpu.memory_space<vmem>>, vector<1x1x128xf32>
    %1900 = vector.shape_cast %1899 : vector<1x1x128xf32> to vector<1x128xf32>
    %1901 = vector.broadcast %1900 : vector<1x128xf32> to vector<2x128xf32>
    %1902 = arith.addf %1898, %1901 : vector<2x128xf32>
    %1903 = arith.negf %1902 : vector<2x128xf32>
    %1904 = math.exp %1903 : vector<2x128xf32>
    %cst_698 = arith.constant 1.000000e+00 : f32
    %1905 = vector.broadcast %cst_698 : f32 to vector<2x128xf32>
    %1906 = arith.addf %1905, %1904 : vector<2x128xf32>
    %1907 = arith.divf %1905, %1906 : vector<2x128xf32>
    %1908 = vector.extract_strided_slice %1907 {offsets = [0, 0], sizes = [2, 32], strides = [1, 1]} : vector<2x128xf32> to vector<2x32xf32>
    %1909 = vector.extract_strided_slice %1907 {offsets = [0, 32], sizes = [2, 32], strides = [1, 1]} : vector<2x128xf32> to vector<2x32xf32>
    %1910 = vector.extract_strided_slice %1907 {offsets = [0, 64], sizes = [2, 32], strides = [1, 1]} : vector<2x128xf32> to vector<2x32xf32>
    %cst_699 = arith.constant 2.000000e+00 : f32
    %1911 = vector.broadcast %cst_699 : f32 to vector<2x32xf32>
    %1912 = arith.mulf %1911, %1910 : vector<2x32xf32>
    %cst_700 = arith.constant 1.000000e+00 : f32
    %1913 = vector.broadcast %cst_700 : f32 to vector<2x32xf32>
    %1914 = arith.subf %1912, %1913 : vector<2x32xf32>
    %1915 = vector.extract_strided_slice %1907 {offsets = [0, 96], sizes = [2, 32], strides = [1, 1]} : vector<2x128xf32> to vector<2x32xf32>
    %1916 = arith.mulf %1909, %1814 : vector<2x32xf32>
    %1917 = arith.mulf %1908, %1914 : vector<2x32xf32>
    %1918 = arith.addf %1916, %1917 : vector<2x32xf32>
    %1919 = math.tanh %1918 : vector<2x32xf32>
    %1920 = arith.mulf %1915, %1919 : vector<2x32xf32>
    %1921 = tpu.concatenate %1868, %1842 in 1 : vector<2x32xf32>, vector<2x32xf32> -> vector<2x64xf32>
    %c8_701 = arith.constant 8 : index
    %c0_702 = arith.constant 0 : index
    %c0_703 = arith.constant 0 : index
    %1922 = vector.load %arg1[%c8_701, %c0_702, %c0_703] : memref<10x64x128xf32, #tpu.memory_space<vmem>>, vector<1x64x128xf32>
    %1923 = vector.shape_cast %1922 : vector<1x64x128xf32> to vector<64x128xf32>
    %cst_704 = arith.constant dense<0.000000e+00> : vector<2x128xf32>
    %1924 = tpu.matmul %1921, %1923, %cst_704 {dimension_numbers = #tpu.dot_dimension_numbers<[1], [0], [0], [1], [0, 0, 1, 1], [], []>} : vector<2x64xf32>, vector<64x128xf32>, vector<2x128xf32> -> vector<2x128xf32>
    %c8_705 = arith.constant 8 : index
    %c0_706 = arith.constant 0 : index
    %c0_707 = arith.constant 0 : index
    %1925 = vector.load %arg2[%c8_705, %c0_706, %c0_707] : memref<10x1x128xf32, #tpu.memory_space<vmem>>, vector<1x1x128xf32>
    %1926 = vector.shape_cast %1925 : vector<1x1x128xf32> to vector<1x128xf32>
    %1927 = vector.broadcast %1926 : vector<1x128xf32> to vector<2x128xf32>
    %1928 = arith.addf %1924, %1927 : vector<2x128xf32>
    %1929 = arith.negf %1928 : vector<2x128xf32>
    %1930 = math.exp %1929 : vector<2x128xf32>
    %cst_708 = arith.constant 1.000000e+00 : f32
    %1931 = vector.broadcast %cst_708 : f32 to vector<2x128xf32>
    %1932 = arith.addf %1931, %1930 : vector<2x128xf32>
    %1933 = arith.divf %1931, %1932 : vector<2x128xf32>
    %1934 = vector.extract_strided_slice %1933 {offsets = [0, 0], sizes = [2, 32], strides = [1, 1]} : vector<2x128xf32> to vector<2x32xf32>
    %1935 = vector.extract_strided_slice %1933 {offsets = [0, 32], sizes = [2, 32], strides = [1, 1]} : vector<2x128xf32> to vector<2x32xf32>
    %1936 = vector.extract_strided_slice %1933 {offsets = [0, 64], sizes = [2, 32], strides = [1, 1]} : vector<2x128xf32> to vector<2x32xf32>
    %cst_709 = arith.constant 2.000000e+00 : f32
    %1937 = vector.broadcast %cst_709 : f32 to vector<2x32xf32>
    %1938 = arith.mulf %1937, %1936 : vector<2x32xf32>
    %cst_710 = arith.constant 1.000000e+00 : f32
    %1939 = vector.broadcast %cst_710 : f32 to vector<2x32xf32>
    %1940 = arith.subf %1938, %1939 : vector<2x32xf32>
    %1941 = vector.extract_strided_slice %1933 {offsets = [0, 96], sizes = [2, 32], strides = [1, 1]} : vector<2x128xf32> to vector<2x32xf32>
    %1942 = arith.mulf %1935, %1840 : vector<2x32xf32>
    %1943 = arith.mulf %1934, %1940 : vector<2x32xf32>
    %1944 = arith.addf %1942, %1943 : vector<2x32xf32>
    %1945 = math.tanh %1944 : vector<2x32xf32>
    %1946 = arith.mulf %1941, %1945 : vector<2x32xf32>
    %1947 = tpu.concatenate %1894, %1868 in 1 : vector<2x32xf32>, vector<2x32xf32> -> vector<2x64xf32>
    %c7_711 = arith.constant 7 : index
    %c0_712 = arith.constant 0 : index
    %c0_713 = arith.constant 0 : index
    %1948 = vector.load %arg1[%c7_711, %c0_712, %c0_713] : memref<10x64x128xf32, #tpu.memory_space<vmem>>, vector<1x64x128xf32>
    %1949 = vector.shape_cast %1948 : vector<1x64x128xf32> to vector<64x128xf32>
    %cst_714 = arith.constant dense<0.000000e+00> : vector<2x128xf32>
    %1950 = tpu.matmul %1947, %1949, %cst_714 {dimension_numbers = #tpu.dot_dimension_numbers<[1], [0], [0], [1], [0, 0, 1, 1], [], []>} : vector<2x64xf32>, vector<64x128xf32>, vector<2x128xf32> -> vector<2x128xf32>
    %c7_715 = arith.constant 7 : index
    %c0_716 = arith.constant 0 : index
    %c0_717 = arith.constant 0 : index
    %1951 = vector.load %arg2[%c7_715, %c0_716, %c0_717] : memref<10x1x128xf32, #tpu.memory_space<vmem>>, vector<1x1x128xf32>
    %1952 = vector.shape_cast %1951 : vector<1x1x128xf32> to vector<1x128xf32>
    %1953 = vector.broadcast %1952 : vector<1x128xf32> to vector<2x128xf32>
    %1954 = arith.addf %1950, %1953 : vector<2x128xf32>
    %1955 = arith.negf %1954 : vector<2x128xf32>
    %1956 = math.exp %1955 : vector<2x128xf32>
    %cst_718 = arith.constant 1.000000e+00 : f32
    %1957 = vector.broadcast %cst_718 : f32 to vector<2x128xf32>
    %1958 = arith.addf %1957, %1956 : vector<2x128xf32>
    %1959 = arith.divf %1957, %1958 : vector<2x128xf32>
    %1960 = vector.extract_strided_slice %1959 {offsets = [0, 0], sizes = [2, 32], strides = [1, 1]} : vector<2x128xf32> to vector<2x32xf32>
    %1961 = vector.extract_strided_slice %1959 {offsets = [0, 32], sizes = [2, 32], strides = [1, 1]} : vector<2x128xf32> to vector<2x32xf32>
    %1962 = vector.extract_strided_slice %1959 {offsets = [0, 64], sizes = [2, 32], strides = [1, 1]} : vector<2x128xf32> to vector<2x32xf32>
    %cst_719 = arith.constant 2.000000e+00 : f32
    %1963 = vector.broadcast %cst_719 : f32 to vector<2x32xf32>
    %1964 = arith.mulf %1963, %1962 : vector<2x32xf32>
    %cst_720 = arith.constant 1.000000e+00 : f32
    %1965 = vector.broadcast %cst_720 : f32 to vector<2x32xf32>
    %1966 = arith.subf %1964, %1965 : vector<2x32xf32>
    %1967 = vector.extract_strided_slice %1959 {offsets = [0, 96], sizes = [2, 32], strides = [1, 1]} : vector<2x128xf32> to vector<2x32xf32>
    %1968 = arith.mulf %1961, %1866 : vector<2x32xf32>
    %1969 = arith.mulf %1960, %1966 : vector<2x32xf32>
    %1970 = arith.addf %1968, %1969 : vector<2x32xf32>
    %1971 = math.tanh %1970 : vector<2x32xf32>
    %1972 = arith.mulf %1967, %1971 : vector<2x32xf32>
    %1973 = tpu.concatenate %1946, %1920 in 1 : vector<2x32xf32>, vector<2x32xf32> -> vector<2x64xf32>
    %c9_721 = arith.constant 9 : index
    %c0_722 = arith.constant 0 : index
    %c0_723 = arith.constant 0 : index
    %1974 = vector.load %arg1[%c9_721, %c0_722, %c0_723] : memref<10x64x128xf32, #tpu.memory_space<vmem>>, vector<1x64x128xf32>
    %1975 = vector.shape_cast %1974 : vector<1x64x128xf32> to vector<64x128xf32>
    %cst_724 = arith.constant dense<0.000000e+00> : vector<2x128xf32>
    %1976 = tpu.matmul %1973, %1975, %cst_724 {dimension_numbers = #tpu.dot_dimension_numbers<[1], [0], [0], [1], [0, 0, 1, 1], [], []>} : vector<2x64xf32>, vector<64x128xf32>, vector<2x128xf32> -> vector<2x128xf32>
    %c9_725 = arith.constant 9 : index
    %c0_726 = arith.constant 0 : index
    %c0_727 = arith.constant 0 : index
    %1977 = vector.load %arg2[%c9_725, %c0_726, %c0_727] : memref<10x1x128xf32, #tpu.memory_space<vmem>>, vector<1x1x128xf32>
    %1978 = vector.shape_cast %1977 : vector<1x1x128xf32> to vector<1x128xf32>
    %1979 = vector.broadcast %1978 : vector<1x128xf32> to vector<2x128xf32>
    %1980 = arith.addf %1976, %1979 : vector<2x128xf32>
    %1981 = arith.negf %1980 : vector<2x128xf32>
    %1982 = math.exp %1981 : vector<2x128xf32>
    %cst_728 = arith.constant 1.000000e+00 : f32
    %1983 = vector.broadcast %cst_728 : f32 to vector<2x128xf32>
    %1984 = arith.addf %1983, %1982 : vector<2x128xf32>
    %1985 = arith.divf %1983, %1984 : vector<2x128xf32>
    %1986 = vector.extract_strided_slice %1985 {offsets = [0, 0], sizes = [2, 32], strides = [1, 1]} : vector<2x128xf32> to vector<2x32xf32>
    %1987 = vector.extract_strided_slice %1985 {offsets = [0, 32], sizes = [2, 32], strides = [1, 1]} : vector<2x128xf32> to vector<2x32xf32>
    %1988 = vector.extract_strided_slice %1985 {offsets = [0, 64], sizes = [2, 32], strides = [1, 1]} : vector<2x128xf32> to vector<2x32xf32>
    %cst_729 = arith.constant 2.000000e+00 : f32
    %1989 = vector.broadcast %cst_729 : f32 to vector<2x32xf32>
    %1990 = arith.mulf %1989, %1988 : vector<2x32xf32>
    %cst_730 = arith.constant 1.000000e+00 : f32
    %1991 = vector.broadcast %cst_730 : f32 to vector<2x32xf32>
    %1992 = arith.subf %1990, %1991 : vector<2x32xf32>
    %1993 = vector.extract_strided_slice %1985 {offsets = [0, 96], sizes = [2, 32], strides = [1, 1]} : vector<2x128xf32> to vector<2x32xf32>
    %1994 = arith.mulf %1987, %1918 : vector<2x32xf32>
    %1995 = arith.mulf %1986, %1992 : vector<2x32xf32>
    %1996 = arith.addf %1994, %1995 : vector<2x32xf32>
    %1997 = math.tanh %1996 : vector<2x32xf32>
    %1998 = arith.mulf %1993, %1997 : vector<2x32xf32>
    %1999 = tpu.concatenate %1972, %1946 in 1 : vector<2x32xf32>, vector<2x32xf32> -> vector<2x64xf32>
    %c8_731 = arith.constant 8 : index
    %c0_732 = arith.constant 0 : index
    %c0_733 = arith.constant 0 : index
    %2000 = vector.load %arg1[%c8_731, %c0_732, %c0_733] : memref<10x64x128xf32, #tpu.memory_space<vmem>>, vector<1x64x128xf32>
    %2001 = vector.shape_cast %2000 : vector<1x64x128xf32> to vector<64x128xf32>
    %cst_734 = arith.constant dense<0.000000e+00> : vector<2x128xf32>
    %2002 = tpu.matmul %1999, %2001, %cst_734 {dimension_numbers = #tpu.dot_dimension_numbers<[1], [0], [0], [1], [0, 0, 1, 1], [], []>} : vector<2x64xf32>, vector<64x128xf32>, vector<2x128xf32> -> vector<2x128xf32>
    %c8_735 = arith.constant 8 : index
    %c0_736 = arith.constant 0 : index
    %c0_737 = arith.constant 0 : index
    %2003 = vector.load %arg2[%c8_735, %c0_736, %c0_737] : memref<10x1x128xf32, #tpu.memory_space<vmem>>, vector<1x1x128xf32>
    %2004 = vector.shape_cast %2003 : vector<1x1x128xf32> to vector<1x128xf32>
    %2005 = vector.broadcast %2004 : vector<1x128xf32> to vector<2x128xf32>
    %2006 = arith.addf %2002, %2005 : vector<2x128xf32>
    %2007 = arith.negf %2006 : vector<2x128xf32>
    %2008 = math.exp %2007 : vector<2x128xf32>
    %cst_738 = arith.constant 1.000000e+00 : f32
    %2009 = vector.broadcast %cst_738 : f32 to vector<2x128xf32>
    %2010 = arith.addf %2009, %2008 : vector<2x128xf32>
    %2011 = arith.divf %2009, %2010 : vector<2x128xf32>
    %2012 = vector.extract_strided_slice %2011 {offsets = [0, 0], sizes = [2, 32], strides = [1, 1]} : vector<2x128xf32> to vector<2x32xf32>
    %2013 = vector.extract_strided_slice %2011 {offsets = [0, 32], sizes = [2, 32], strides = [1, 1]} : vector<2x128xf32> to vector<2x32xf32>
    %2014 = vector.extract_strided_slice %2011 {offsets = [0, 64], sizes = [2, 32], strides = [1, 1]} : vector<2x128xf32> to vector<2x32xf32>
    %cst_739 = arith.constant 2.000000e+00 : f32
    %2015 = vector.broadcast %cst_739 : f32 to vector<2x32xf32>
    %2016 = arith.mulf %2015, %2014 : vector<2x32xf32>
    %cst_740 = arith.constant 1.000000e+00 : f32
    %2017 = vector.broadcast %cst_740 : f32 to vector<2x32xf32>
    %2018 = arith.subf %2016, %2017 : vector<2x32xf32>
    %2019 = vector.extract_strided_slice %2011 {offsets = [0, 96], sizes = [2, 32], strides = [1, 1]} : vector<2x128xf32> to vector<2x32xf32>
    %2020 = arith.mulf %2013, %1944 : vector<2x32xf32>
    %2021 = arith.mulf %2012, %2018 : vector<2x32xf32>
    %2022 = arith.addf %2020, %2021 : vector<2x32xf32>
    %2023 = math.tanh %2022 : vector<2x32xf32>
    %2024 = arith.mulf %2019, %2023 : vector<2x32xf32>
    %2025 = tpu.concatenate %2024, %1998 in 1 : vector<2x32xf32>, vector<2x32xf32> -> vector<2x64xf32>
    %c9_741 = arith.constant 9 : index
    %c0_742 = arith.constant 0 : index
    %c0_743 = arith.constant 0 : index
    %2026 = vector.load %arg1[%c9_741, %c0_742, %c0_743] : memref<10x64x128xf32, #tpu.memory_space<vmem>>, vector<1x64x128xf32>
    %2027 = vector.shape_cast %2026 : vector<1x64x128xf32> to vector<64x128xf32>
    %cst_744 = arith.constant dense<0.000000e+00> : vector<2x128xf32>
    %2028 = tpu.matmul %2025, %2027, %cst_744 {dimension_numbers = #tpu.dot_dimension_numbers<[1], [0], [0], [1], [0, 0, 1, 1], [], []>} : vector<2x64xf32>, vector<64x128xf32>, vector<2x128xf32> -> vector<2x128xf32>
    %c9_745 = arith.constant 9 : index
    %c0_746 = arith.constant 0 : index
    %c0_747 = arith.constant 0 : index
    %2029 = vector.load %arg2[%c9_745, %c0_746, %c0_747] : memref<10x1x128xf32, #tpu.memory_space<vmem>>, vector<1x1x128xf32>
    %2030 = vector.shape_cast %2029 : vector<1x1x128xf32> to vector<1x128xf32>
    %2031 = vector.broadcast %2030 : vector<1x128xf32> to vector<2x128xf32>
    %2032 = arith.addf %2028, %2031 : vector<2x128xf32>
    %2033 = arith.negf %2032 : vector<2x128xf32>
    %2034 = math.exp %2033 : vector<2x128xf32>
    %cst_748 = arith.constant 1.000000e+00 : f32
    %2035 = vector.broadcast %cst_748 : f32 to vector<2x128xf32>
    %2036 = arith.addf %2035, %2034 : vector<2x128xf32>
    %2037 = arith.divf %2035, %2036 : vector<2x128xf32>
    %2038 = vector.extract_strided_slice %2037 {offsets = [0, 0], sizes = [2, 32], strides = [1, 1]} : vector<2x128xf32> to vector<2x32xf32>
    %2039 = vector.extract_strided_slice %2037 {offsets = [0, 32], sizes = [2, 32], strides = [1, 1]} : vector<2x128xf32> to vector<2x32xf32>
    %2040 = vector.extract_strided_slice %2037 {offsets = [0, 64], sizes = [2, 32], strides = [1, 1]} : vector<2x128xf32> to vector<2x32xf32>
    %cst_749 = arith.constant 2.000000e+00 : f32
    %2041 = vector.broadcast %cst_749 : f32 to vector<2x32xf32>
    %2042 = arith.mulf %2041, %2040 : vector<2x32xf32>
    %cst_750 = arith.constant 1.000000e+00 : f32
    %2043 = vector.broadcast %cst_750 : f32 to vector<2x32xf32>
    %2044 = arith.subf %2042, %2043 : vector<2x32xf32>
    %2045 = vector.extract_strided_slice %2037 {offsets = [0, 96], sizes = [2, 32], strides = [1, 1]} : vector<2x128xf32> to vector<2x32xf32>
    %2046 = arith.mulf %2039, %1996 : vector<2x32xf32>
    %2047 = arith.mulf %2038, %2044 : vector<2x32xf32>
    %2048 = arith.addf %2046, %2047 : vector<2x32xf32>
    %2049 = math.tanh %2048 : vector<2x32xf32>
    %2050 = arith.mulf %2045, %2049 : vector<2x32xf32>
    %2051 = tpu.concatenate %1140, %1348, %1530, %1686, %1816, %1920, %1998, %2050 in 1 : vector<2x32xf32>, vector<2x32xf32>, vector<2x32xf32>, vector<2x32xf32>, vector<2x32xf32>, vector<2x32xf32>, vector<2x32xf32>, vector<2x32xf32> -> vector<2x256xf32>
    %c0_751 = arith.constant 0 : index
    %c0_752 = arith.constant 0 : index
    %2052 = vector.load %arg3[%c0_751, %c0_752] : memref<256x256xf32, #tpu.memory_space<vmem>>, vector<256x256xf32>
    %cst_753 = arith.constant dense<0.000000e+00> : vector<2x256xf32>
    %2053 = tpu.matmul %2051, %2052, %cst_753 {dimension_numbers = #tpu.dot_dimension_numbers<[1], [0], [0], [1], [0, 0, 1, 1], [], []>} : vector<2x256xf32>, vector<256x256xf32>, vector<2x256xf32> -> vector<2x256xf32>
    %c0_754 = arith.constant 0 : index
    %c0_755 = arith.constant 0 : index
    %2054 = vector.load %arg4[%c0_754, %c0_755] : memref<1x256xf32, #tpu.memory_space<vmem>>, vector<1x256xf32>
    %2055 = vector.broadcast %2054 : vector<1x256xf32> to vector<2x256xf32>
    %2056 = arith.addf %2053, %2055 : vector<2x256xf32>
    %cst_756 = arith.constant 0.000000e+00 : f32
    %2057 = vector.broadcast %cst_756 : f32 to vector<2x256xf32>
    %2058 = arith.maximumf %2056, %2057 : vector<2x256xf32>
    %c0_757 = arith.constant 0 : index
    %c0_758 = arith.constant 0 : index
    %2059 = vector.load %arg5[%c0_757, %c0_758] : memref<256x64xf32, #tpu.memory_space<vmem>>, vector<256x64xf32>
    %cst_759 = arith.constant dense<0.000000e+00> : vector<2x64xf32>
    %2060 = tpu.matmul %2058, %2059, %cst_759 {dimension_numbers = #tpu.dot_dimension_numbers<[1], [0], [0], [1], [0, 0, 1, 1], [], []>} : vector<2x256xf32>, vector<256x64xf32>, vector<2x64xf32> -> vector<2x64xf32>
    %c0_760 = arith.constant 0 : index
    %c0_761 = arith.constant 0 : index
    %2061 = vector.load %arg6[%c0_760, %c0_761] : memref<1x64xf32, #tpu.memory_space<vmem>>, vector<1x64xf32>
    %2062 = vector.broadcast %2061 : vector<1x64xf32> to vector<2x64xf32>
    %2063 = arith.addf %2060, %2062 : vector<2x64xf32>
    %c0_762 = arith.constant 0 : index
    %c0_763 = arith.constant 0 : index
    %2064 = vector.load %arg7[%c0_762, %c0_763] : memref<2x64xf32, #tpu.memory_space<vmem>>, vector<2x64xf32>
    tpu.vector_store %arg7[%c0_762, %c0_763], %2063 {strides = array<i32>} : memref<2x64xf32, #tpu.memory_space<vmem>>, vector<2x64xf32>,
    return
  }
}

</mosaic_0001>

<llo_original>
// kernel: forward.1
$region0: #{forward.1}
  #allocation0 [shape = 'u32[]', space=smem, size = 0x4, offset = 0x4, fixed_abs, tag = 'smem constant byte address 0x4 - core index']
  #allocation1 [shape = 'u32[72,128]{1,0:T(1,128)}', space=vmem, size = 0x9000, scoped, tag = 'internal scratch']
  %s0 = inlined_call_operand.vmem [shape: f32[16,32], index: 0, kind: input, shape index: {}]
  %s1 = inlined_call_operand.hbm [shape: f32[10,64,128], index: 1, kind: input, shape index: {}]
  %s2 = inlined_call_operand.vmem [shape: f32[10,1,128], index: 2, kind: input, shape index: {}]
  %s3 = inlined_call_operand.hbm [shape: f32[256,256], index: 3, kind: input, shape index: {}]
  %s4 = inlined_call_operand.vmem [shape: f32[1,256], index: 4, kind: input, shape index: {}]
  %s5 = inlined_call_operand.vmem [shape: f32[256,64], index: 5, kind: input, shape index: {}]
  %s6 = inlined_call_operand.vmem [shape: f32[1,64], index: 6, kind: input, shape index: {}]
  %s7 = inlined_call_operand.hbm [shape: f32[2,64], index: 7, kind: output, shape index: {}]
  %s8 = sld [smem:[#allocation0]]
  $region46: #{forward.1} parent=0
    _
  %s10 = ssub.s32 1, %s8
  %s11 = scalar_select 0, %s10, %s8
  $region1: #{forward.1} parent=0
    #allocation2 [shape = 'u8[327680]{0}', space=vmem, size = 0x50000, scoped, tag = 'input window, operand 1, single buffered']
    #allocation3 [shape = 's32[1]{0}', space=sflag, size = 0x4, scoped, tag = 'scoped memory for forward.1']
    #allocation4 [shape = 's32[1]{0}', space=sflag, size = 0x4, scoped, tag = 'scoped memory for forward.1']
    #allocation5 [shape = 'u8[262144]{0}', space=vmem, size = 0x40000, scoped, tag = 'input window, operand 3, single buffered']
    #allocation6 [shape = 's32[1]{0}', space=sflag, size = 0x4, scoped, tag = 'scoped memory for forward.1']
    #allocation7 [shape = 'u8[1024]{0}', space=vmem, size = 0x400, scoped, tag = 'output window, operand 0, single buffered']
    %12 = vsyncpa [#allocation3], 0
    %13 = vsyncpa [#allocation6], 0
    %14 = vsyncpa [#allocation4], 0
    // Predicated region
    $region2: #{forward.1} parent=1 // pred_check
      _
    $region3: #{forward.1} parent=1 // pred_check_branch
      %16 = sbr.rel (0) target = $region5
    $region4: #{forward.1} parent=1 // pred_region
      _
    $region5: #{forward.1} parent=1 // pred_fallthru
      _
    // Predicated region
    $region6: #{forward.1} parent=1 // pred_check
      _
    $region7: #{forward.1} parent=1 // pred_check_branch
      %18 = sbr.rel (0) target = $region9
    $region8: #{forward.1} parent=1 // pred_region
      %20 = vsyncadd [#allocation3], 0
      %s21 = sshll.u32 %s1, 4
      %s22 = int_to_ptr.hbm [resolvable:$true] %s21
      %s23 = sshll.u32 [#allocation2], 4
      %s24 = int_to_ptr.vmem [resolvable:$true] %s23
      %29 = dma.hbm_to_vmem [thread:$0]  %s22, 10240, %s24, [#allocation3], 128, 128, 8
    $region9: #{forward.1} parent=1 // pred_fallthru
      _
    // Predicated region
    $region10: #{forward.1} parent=1 // pred_check
      _
    $region11: #{forward.1} parent=1 // pred_check_branch
      %31 = sbr.rel (0) target = $region13
    $region12: #{forward.1} parent=1 // pred_region
      _
    $region13: #{forward.1} parent=1 // pred_fallthru
      _
    // Predicated region
    $region14: #{forward.1} parent=1 // pred_check
      _
    $region15: #{forward.1} parent=1 // pred_check_branch
      %33 = sbr.rel (0) target = $region17
    $region16: #{forward.1} parent=1 // pred_region
      %35 = vsyncadd [#allocation6], 0
      %s36 = sshll.u32 %s3, 4
      %s37 = int_to_ptr.hbm [resolvable:$true] %s36
      %s38 = sshll.u32 [#allocation5], 4
      %s39 = int_to_ptr.vmem [resolvable:$true] %s38
      %44 = dma.hbm_to_vmem [thread:$0]  %s37, 8192, %s39, [#allocation6], 256, 256, 16
    $region17: #{forward.1} parent=1 // pred_fallthru
      _
    // Predicated region
    $region18: #{forward.1} parent=1 // pred_check
      _
    $region19: #{forward.1} parent=1 // pred_check_branch
      %46 = sbr.rel (0) target = $region21
    $region20: #{forward.1} parent=1 // pred_region
      _
    $region21: #{forward.1} parent=1 // pred_fallthru
      _
    // Predicated region
    $region22: #{forward.1} parent=1 // pred_check
      _
    $region23: #{forward.1} parent=1 // pred_check_branch
      %48 = sbr.rel (0) target = $region25
    $region24: #{forward.1} parent=1 // pred_region
      _
    $region25: #{forward.1} parent=1 // pred_fallthru
      _
    // Predicated region
    $region26: #{forward.1} parent=1 // pred_check
      _
    $region27: #{forward.1} parent=1 // pred_check_branch
      %50 = sbr.rel (0) target = $region29
    $region28: #{forward.1} parent=1 // pred_region
      _
    $region29: #{forward.1} parent=1 // pred_fallthru
      _
    // Predicated region
    $region30: #{forward.1} parent=1 // pred_check
      _
    $region31: #{forward.1} parent=1 // pred_check_branch
      %52 = sbr.rel (0) target = $region33
    $region32: #{forward.1} parent=1 // pred_region
      %54 = dma.done [#allocation3], 10240
    $region33: #{forward.1} parent=1 // pred_fallthru
      _
    // Predicated region
    $region34: #{forward.1} parent=1 // pred_check
      _
    $region35: #{forward.1} parent=1 // pred_check_branch
      %56 = sbr.rel (0) target = $region37
    $region36: #{forward.1} parent=1 // pred_region
      %58 = dma.done [#allocation6], 8192
    $region37: #{forward.1} parent=1 // pred_fallthru
      _
    %v59 = vld [vmem:[#allocation2] sm:$0xff]
    %v60 = vld [vmem:[#allocation2 + $0x8] sm:$0xff]
    %v61 = vld [vmem:[#allocation2 + $0x10] sm:$0xff]
    %v62 = vld [vmem:[#allocation2 + $0x18] sm:$0xff]
    %v63 = vld [vmem:[#allocation2 + $0x20] sm:$0xff]
    %v64 = vld [vmem:[#allocation2 + $0x28] sm:$0xff]
    %v65 = vld [vmem:[#allocation2 + $0x30] sm:$0xff]
    %v66 = vld [vmem:[#allocation2 + $0x38] sm:$0xff]
    %v67 = vld [vmem:[%s0] sm:$0xff]
    %v68 = vld [vmem:[%s0 + $0x8] sm:$0xff]
    %v69 = vld [vmem:[%s2] sm:$0x1]
    %v71 = vperm.slane %v69, 0
    %vm73 = vcmask 261120
    %v75 = vsel %vm73, %v67, 0
    %v78 = vsel %vm73, %v68, 0
    %80 = vmatpush.msra.mxu0 0.0
    %81 = vmatpush.msra.mxu0 0.0
    %82 = vmatpush.msra.mxu0 0.0
    %83 = vmatpush.msra.mxu0 0.0
    %84 = vmatpush.msra.mxu0 0.0
    %85 = vmatpush.msra.mxu0 0.0
    %86 = vmatpush.msra.mxu0 0.0
    %87 = vmatpush.msra.mxu0 0.0
    %88 = vmatpush.msra.mxu0 0.0
    %89 = vmatpush.msra.mxu0 0.0
    %90 = vmatpush.msra.mxu0 0.0
    %91 = vmatpush.msra.mxu0 0.0
    %92 = vmatpush.msra.mxu0 %v62
    %93 = vmatpush.msra.mxu0 %v61
    %94 = vmatpush.msra.mxu0 %v60
    %95 = vmatpush.msra.mxu0 %v59
    %96 = vmatmul.f32.gmra.mxu0 %v75
    %v97 = vpop.f32.mrf.mxu0
    %v98 = vadd.f32 %v71, %v97
    %99 = vmatmul.f32.gmra.mxu0 %v78
    %v100 = vpop.f32.mrf.mxu0
    %v101 = vadd.f32 %v71, %v100
    %102 = vdwg.mxu0
    %v104 = vsel %vm73, 0.0, 0
    %106 = vmatpush.msra.mxu0 0.0
    %107 = vmatpush.msra.mxu0 0.0
    %108 = vmatpush.msra.mxu0 0.0
    %109 = vmatpush.msra.mxu0 0.0
    %110 = vmatpush.msra.mxu0 0.0
    %111 = vmatpush.msra.mxu0 0.0
    %112 = vmatpush.msra.mxu0 0.0
    %113 = vmatpush.msra.mxu0 0.0
    %114 = vmatpush.msra.mxu0 0.0
    %115 = vmatpush.msra.mxu0 0.0
    %116 = vmatpush.msra.mxu0 0.0
    %117 = vmatpush.msra.mxu0 0.0
    %118 = vmatpush.msra.mxu0 %v66
    %119 = vmatpush.msra.mxu0 %v65
    %120 = vmatpush.msra.mxu0 %v64
    %121 = vmatpush.msra.mxu0 %v63
    %122 = vmatmul.f32.gmra.mxu0 %v104
    %v123 = vpop.f32.mrf.mxu0
    %v124 = vadd.f32 0.0, %v123
    %125 = vdwg.mxu0
    %v126 = vadd.f32 %v98, %v124
    %v127 = vxor.u32 %v126, 2147483648
    %v128 = vmul.f32 %v127, 1.442695
    %v129 = vpow.pop %v128
    %v130 = vadd.f32 %v129, 1.0
    %v131 = vrcp.pop %v130
    %v132 = vmul.f32 %v130, %v131
    %v133 = vsub.f32 1.0, %v132
    %v134 = vmul.f32 %v131, %v133
    %v135 = vadd.f32 %v131, %v134
    %vm136 = vweird.f32 %v130
    %vm137 = vweird.f32 %v131
    %vm138 = vmor %vm136, %vm137
    %v139 = vsel %vm138, %v131, %v135
    %v140 = vand.u32 2147483647, %v130
    %vm141 = vcmp.eq.f32.partialorder %v140, 8.507059e+37
    %v142 = vand.u32 %v130, 2147483648
    %v143 = vor.u32 1.1754944e-38, %v142
    %v144 = vsel %vm141, %v143, %v139
    %v145 = vmul.f32 1.0, %v144
    %v146 = vmul.f32 %v145, 2.0
    %v147 = vsub.f32 %v146, 1.0
    %v148 = vmul.f32 %v145, 0.0
    %150 = vrot.lane.b32.xlu0 %v147, 64
    %v151 = vpop.permute.xlu0 %150
    %v153 = vmul.f32 %v145, %v151
    %155 = vrot.lane.b32.xlu0 %v153, 32
    %v156 = vpop.permute.xlu0 %155
    %v158 = vadd.f32 %v148, %v156
    %v159 = vtanh.pop %v158
    %161 = vrot.lane.b32.xlu0 %v159, 64
    %v162 = vpop.permute.xlu0 %161
    %v164 = vmul.f32 %v145, %v162
    %166 = vrot.lane.b32.xlu0 %v164, 32
    %v167 = vpop.permute.xlu0 %166
    %v169 = vsel %vm73, %v167, 0.0
    %s170 = scalar_lea.vmem [#allocation2], 64
    %v171 = vld [vmem:[%s170] sm:$0xff]
    %v172 = vld [vmem:[%s170 + $0x8] sm:$0xff]
    %v173 = vld [vmem:[%s170 + $0x10] sm:$0xff]
    %v174 = vld [vmem:[%s170 + $0x18] sm:$0xff]
    %v175 = vld [vmem:[%s170 + $0x20] sm:$0xff]
    %v176 = vld [vmem:[%s170 + $0x28] sm:$0xff]
    %v177 = vld [vmem:[%s170 + $0x30] sm:$0xff]
    %v178 = vld [vmem:[%s170 + $0x38] sm:$0xff]
    %s179 = scalar_lea.vmem %s2, 1
    %v180 = vld [vmem:[%s179] sm:$0x1]
    %v182 = vperm.slane %v180, 0
    %vm184 = vcmask 523264
    %v186 = vsel %vm184, %v169, 0
    %188 = vmatpush.msra.mxu0 0.0
    %189 = vmatpush.msra.mxu0 0.0
    %190 = vmatpush.msra.mxu0 0.0
    %191 = vmatpush.msra.mxu0 0.0
    %192 = vmatpush.msra.mxu0 0.0
    %193 = vmatpush.msra.mxu0 0.0
    %194 = vmatpush.msra.mxu0 0.0
    %195 = vmatpush.msra.mxu0 0.0
    %196 = vmatpush.msra.mxu0 %v178
    %197 = vmatpush.msra.mxu0 %v177
    %198 = vmatpush.msra.mxu0 %v176
    %199 = vmatpush.msra.mxu0 %v175
    %200 = vmatpush.msra.mxu0 %v174
    %201 = vmatpush.msra.mxu0 %v173
    %202 = vmatpush.msra.mxu0 %v172
    %203 = vmatpush.msra.mxu0 %v171
    %204 = vmatmul.f32.gmra.mxu0 %v186
    %v205 = vpop.f32.mrf.mxu0
    %v206 = vadd.f32 %v182, %v205
    %207 = vdwg.mxu0
    %v208 = vxor.u32 %v206, 2147483648
    %v209 = vmul.f32 %v208, 1.442695
    %v210 = vpow.pop %v209
    %v211 = vadd.f32 %v210, 1.0
    %v212 = vrcp.pop %v211
    %v213 = vmul.f32 %v211, %v212
    %v214 = vsub.f32 1.0, %v213
    %v215 = vmul.f32 %v212, %v214
    %v216 = vadd.f32 %v212, %v215
    %vm217 = vweird.f32 %v211
    %vm218 = vweird.f32 %v212
    %vm219 = vmor %vm217, %vm218
    %v220 = vsel %vm219, %v212, %v216
    %v221 = vand.u32 2147483647, %v211
    %vm222 = vcmp.eq.f32.partialorder %v221, 8.507059e+37
    %v223 = vand.u32 %v211, 2147483648
    %v224 = vor.u32 1.1754944e-38, %v223
    %v225 = vsel %vm222, %v224, %v220
    %v226 = vmul.f32 1.0, %v225
    %v227 = vmul.f32 %v226, 2.0
    %v228 = vsub.f32 %v227, 1.0
    %v229 = vmul.f32 %v226, 0.0
    %231 = vrot.lane.b32.xlu0 %v228, 64
    %v232 = vpop.permute.xlu0 %231
    %v234 = vmul.f32 %v226, %v232
    %236 = vrot.lane.b32.xlu0 %v234, 32
    %v237 = vpop.permute.xlu0 %236
    %v239 = vadd.f32 %v229, %v237
    %v240 = vtanh.pop %v239
    %242 = vrot.lane.b32.xlu0 %v240, 64
    %v243 = vpop.permute.xlu0 %242
    %v245 = vmul.f32 %v226, %v243
    %v246 = vsel %vm73, %v167, 0
    %248 = vmatpush.msra.mxu0 0.0
    %249 = vmatpush.msra.mxu0 0.0
    %250 = vmatpush.msra.mxu0 0.0
    %251 = vmatpush.msra.mxu0 0.0
    %252 = vmatpush.msra.mxu0 0.0
    %253 = vmatpush.msra.mxu0 0.0
    %254 = vmatpush.msra.mxu0 0.0
    %255 = vmatpush.msra.mxu0 0.0
    %256 = vmatpush.msra.mxu0 0.0
    %257 = vmatpush.msra.mxu0 0.0
    %258 = vmatpush.msra.mxu0 0.0
    %259 = vmatpush.msra.mxu0 0.0
    %260 = vmatpush.msra.mxu0 %v66
    %261 = vmatpush.msra.mxu0 %v65
    %262 = vmatpush.msra.mxu0 %v64
    %263 = vmatpush.msra.mxu0 %v63
    %264 = vmatmul.f32.gmra.mxu0 %v246
    %v265 = vpop.f32.mrf.mxu0
    %v266 = vadd.f32 0.0, %v265
    %267 = vdwg.mxu0
    %v269 = vrot.slane %v266, 6
    %v271 = vadd.f32 %v98, %v269
    %v272 = vxor.u32 %v271, 2147483648
    %v273 = vmul.f32 %v272, 1.442695
    %v274 = vpow.pop %v273
    %v275 = vadd.f32 %v274, 1.0
    %v276 = vrcp.pop %v275
    %v277 = vmul.f32 %v275, %v276
    %v278 = vsub.f32 1.0, %v277
    %v279 = vmul.f32 %v276, %v278
    %v280 = vadd.f32 %v276, %v279
    %vm281 = vweird.f32 %v275
    %vm282 = vweird.f32 %v276
    %vm283 = vmor %vm281, %vm282
    %v284 = vsel %vm283, %v276, %v280
    %v285 = vand.u32 2147483647, %v275
    %vm286 = vcmp.eq.f32.partialorder %v285, 8.507059e+37
    %v287 = vand.u32 %v275, 2147483648
    %v288 = vor.u32 1.1754944e-38, %v287
    %v289 = vsel %vm286, %v288, %v284
    %v290 = vmul.f32 1.0, %v289
    %v291 = vmul.f32 %v290, 2.0
    %v292 = vsub.f32 %v291, 1.0
    %v294 = vrot.slane %v158, 6
    %v296 = vmul.f32 %v290, %v294
    %298 = vrot.lane.b32.xlu0 %v292, 64
    %v299 = vpop.permute.xlu0 %298
    %v301 = vmul.f32 %v290, %v299
    %303 = vrot.lane.b32.xlu0 %v301, 32
    %v304 = vpop.permute.xlu0 %303
    %v306 = vadd.f32 %v296, %v304
    %v307 = vtanh.pop %v306
    %309 = vrot.lane.b32.xlu0 %v307, 64
    %v310 = vpop.permute.xlu0 %309
    %v312 = vmul.f32 %v290, %v310
    %314 = vrot.lane.b32.xlu0 %v245, 32
    %v315 = vpop.permute.xlu0 %314
    %v317 = vsel %vm73, %v315, 0.0
    %s318 = scalar_lea.vmem [#allocation2], 128
    %v319 = vld [vmem:[%s318] sm:$0xff]
    %v320 = vld [vmem:[%s318 + $0x8] sm:$0xff]
    %v321 = vld [vmem:[%s318 + $0x10] sm:$0xff]
    %v322 = vld [vmem:[%s318 + $0x18] sm:$0xff]
    %v323 = vld [vmem:[%s318 + $0x20] sm:$0xff]
    %v324 = vld [vmem:[%s318 + $0x28] sm:$0xff]
    %v325 = vld [vmem:[%s318 + $0x30] sm:$0xff]
    %v326 = vld [vmem:[%s318 + $0x38] sm:$0xff]
    %s327 = scalar_lea.vmem %s2, 2
    %v328 = vld [vmem:[%s327] sm:$0x1]
    %v330 = vperm.slane %v328, 0
    %v333 = vsel %vm184, %v317, 0
    %335 = vmatpush.msra.mxu0 0.0
    %336 = vmatpush.msra.mxu0 0.0
    %337 = vmatpush.msra.mxu0 0.0
    %338 = vmatpush.msra.mxu0 0.0
    %339 = vmatpush.msra.mxu0 0.0
    %340 = vmatpush.msra.mxu0 0.0
    %341 = vmatpush.msra.mxu0 0.0
    %342 = vmatpush.msra.mxu0 0.0
    %343 = vmatpush.msra.mxu0 %v326
    %344 = vmatpush.msra.mxu0 %v325
    %345 = vmatpush.msra.mxu0 %v324
    %346 = vmatpush.msra.mxu0 %v323
    %347 = vmatpush.msra.mxu0 %v322
    %348 = vmatpush.msra.mxu0 %v321
    %349 = vmatpush.msra.mxu0 %v320
    %350 = vmatpush.msra.mxu0 %v319
    %351 = vmatmul.f32.gmra.mxu0 %v333
    %v352 = vpop.f32.mrf.mxu0
    %v353 = vadd.f32 %v330, %v352
    %354 = vdwg.mxu0
    %v355 = vxor.u32 %v353, 2147483648
    %v356 = vmul.f32 %v355, 1.442695
    %v357 = vpow.pop %v356
    %v358 = vadd.f32 %v357, 1.0
    %v359 = vrcp.pop %v358
    %v360 = vmul.f32 %v358, %v359
    %v361 = vsub.f32 1.0, %v360
    %v362 = vmul.f32 %v359, %v361
    %v363 = vadd.f32 %v359, %v362
    %vm364 = vweird.f32 %v358
    %vm365 = vweird.f32 %v359
    %vm366 = vmor %vm364, %vm365
    %v367 = vsel %vm366, %v359, %v363
    %v368 = vand.u32 2147483647, %v358
    %vm369 = vcmp.eq.f32.partialorder %v368, 8.507059e+37
    %v370 = vand.u32 %v358, 2147483648
    %v371 = vor.u32 1.1754944e-38, %v370
    %v372 = vsel %vm369, %v371, %v367
    %v373 = vmul.f32 1.0, %v372
    %v374 = vmul.f32 %v373, 2.0
    %v375 = vsub.f32 %v374, 1.0
    %v376 = vmul.f32 %v373, 0.0
    %378 = vrot.lane.b32.xlu0 %v375, 64
    %v379 = vpop.permute.xlu0 %378
    %v381 = vmul.f32 %v373, %v379
    %383 = vrot.lane.b32.xlu0 %v381, 32
    %v384 = vpop.permute.xlu0 %383
    %v386 = vadd.f32 %v376, %v384
    %v387 = vtanh.pop %v386
    %389 = vrot.lane.b32.xlu0 %v387, 64
    %v390 = vpop.permute.xlu0 %389
    %v392 = vmul.f32 %v373, %v390
    %394 = vrot.lane.b32.xlu0 %v312, 32
    %v395 = vpop.permute.xlu0 %394
    %v397 = vrot.slane %v245, 6
    %398 = vrot.lane.b32.xlu0 %v397, 64
    %v399 = vpop.permute.xlu0 %398
    %v401 = vsel %vm73, %v395, %v399
    %v403 = vrot.slane %v401, 2
    %v404 = vsel %vm184, %v403, 0
    %406 = vmatpush.msra.mxu0 0.0
    %407 = vmatpush.msra.mxu0 0.0
    %408 = vmatpush.msra.mxu0 0.0
    %409 = vmatpush.msra.mxu0 0.0
    %410 = vmatpush.msra.mxu0 0.0
    %411 = vmatpush.msra.mxu0 0.0
    %412 = vmatpush.msra.mxu0 0.0
    %413 = vmatpush.msra.mxu0 0.0
    %414 = vmatpush.msra.mxu0 %v178
    %415 = vmatpush.msra.mxu0 %v177
    %416 = vmatpush.msra.mxu0 %v176
    %417 = vmatpush.msra.mxu0 %v175
    %418 = vmatpush.msra.mxu0 %v174
    %419 = vmatpush.msra.mxu0 %v173
    %420 = vmatpush.msra.mxu0 %v172
    %421 = vmatpush.msra.mxu0 %v171
    %422 = vmatmul.f32.gmra.mxu0 %v404
    %v423 = vpop.f32.mrf.mxu0
    %v424 = vadd.f32 %v182, %v423
    %425 = vdwg.mxu0
    %v426 = vxor.u32 %v424, 2147483648
    %v427 = vmul.f32 %v426, 1.442695
    %v428 = vpow.pop %v427
    %v429 = vadd.f32 %v428, 1.0
    %v430 = vrcp.pop %v429
    %v431 = vmul.f32 %v429, %v430
    %v432 = vsub.f32 1.0, %v431
    %v433 = vmul.f32 %v430, %v432
    %v434 = vadd.f32 %v430, %v433
    %vm435 = vweird.f32 %v429
    %vm436 = vweird.f32 %v430
    %vm437 = vmor %vm435, %vm436
    %v438 = vsel %vm437, %v430, %v434
    %v439 = vand.u32 2147483647, %v429
    %vm440 = vcmp.eq.f32.partialorder %v439, 8.507059e+37
    %v441 = vand.u32 %v429, 2147483648
    %v442 = vor.u32 1.1754944e-38, %v441
    %v443 = vsel %vm440, %v442, %v438
    %v444 = vmul.f32 1.0, %v443
    %v445 = vmul.f32 %v444, 2.0
    %v446 = vsub.f32 %v445, 1.0
    %v447 = vmul.f32 %v444, %v239
    %449 = vrot.lane.b32.xlu0 %v446, 64
    %v450 = vpop.permute.xlu0 %449
    %v452 = vmul.f32 %v444, %v450
    %454 = vrot.lane.b32.xlu0 %v452, 32
    %v455 = vpop.permute.xlu0 %454
    %v457 = vadd.f32 %v447, %v455
    %v458 = vtanh.pop %v457
    %460 = vrot.lane.b32.xlu0 %v458, 64
    %v461 = vpop.permute.xlu0 %460
    %v463 = vmul.f32 %v444, %v461
    %v464 = vrot.slane %v312, 2
    %465 = vrot.lane.b32.xlu0 %v464, 32
    %v466 = vpop.permute.xlu0 %465
    %v467 = vsel %vm73, %v466, 0
    %469 = vmatpush.msra.mxu0 0.0
    %470 = vmatpush.msra.mxu0 0.0
    %471 = vmatpush.msra.mxu0 0.0
    %472 = vmatpush.msra.mxu0 0.0
    %473 = vmatpush.msra.mxu0 0.0
    %474 = vmatpush.msra.mxu0 0.0
    %475 = vmatpush.msra.mxu0 0.0
    %476 = vmatpush.msra.mxu0 0.0
    %477 = vmatpush.msra.mxu0 0.0
    %478 = vmatpush.msra.mxu0 0.0
    %479 = vmatpush.msra.mxu0 0.0
    %480 = vmatpush.msra.mxu0 0.0
    %481 = vmatpush.msra.mxu0 %v66
    %482 = vmatpush.msra.mxu0 %v65
    %483 = vmatpush.msra.mxu0 %v64
    %484 = vmatpush.msra.mxu0 %v63
    %485 = vmatmul.f32.gmra.mxu0 %v467
    %v486 = vpop.f32.mrf.mxu0
    %v487 = vadd.f32 0.0, %v486
    %488 = vdwg.mxu0
    %v490 = vrot.slane %v487, 4
    %v492 = vadd.f32 %v98, %v490
    %v493 = vxor.u32 %v492, 2147483648
    %v494 = vmul.f32 %v493, 1.442695
    %v495 = vpow.pop %v494
    %v496 = vadd.f32 %v495, 1.0
    %v497 = vrcp.pop %v496
    %v498 = vmul.f32 %v496, %v497
    %v499 = vsub.f32 1.0, %v498
    %v500 = vmul.f32 %v497, %v499
    %v501 = vadd.f32 %v497, %v500
    %vm502 = vweird.f32 %v496
    %vm503 = vweird.f32 %v497
    %vm504 = vmor %vm502, %vm503
    %v505 = vsel %vm504, %v497, %v501
    %v506 = vand.u32 2147483647, %v496
    %vm507 = vcmp.eq.f32.partialorder %v506, 8.507059e+37
    %v508 = vand.u32 %v496, 2147483648
    %v509 = vor.u32 1.1754944e-38, %v508
    %v510 = vsel %vm507, %v509, %v505
    %v511 = vmul.f32 1.0, %v510
    %v512 = vmul.f32 %v511, 2.0
    %v513 = vsub.f32 %v512, 1.0
    %v515 = vrot.slane %v306, 6
    %v517 = vmul.f32 %v511, %v515
    %519 = vrot.lane.b32.xlu0 %v513, 64
    %v520 = vpop.permute.xlu0 %519
    %v522 = vmul.f32 %v511, %v520
    %524 = vrot.lane.b32.xlu0 %v522, 32
    %v525 = vpop.permute.xlu0 %524
    %v527 = vadd.f32 %v517, %v525
    %v528 = vtanh.pop %v527
    %530 = vrot.lane.b32.xlu0 %v528, 64
    %v531 = vpop.permute.xlu0 %530
    %v533 = vmul.f32 %v511, %v531
    %535 = vrot.lane.b32.xlu0 %v392, 32
    %v536 = vpop.permute.xlu0 %535
    %v538 = vsel %vm73, %v536, 0.0
    %s539 = scalar_lea.vmem [#allocation2], 192
    %v540 = vld [vmem:[%s539] sm:$0xff]
    %v541 = vld [vmem:[%s539 + $0x8] sm:$0xff]
    %v542 = vld [vmem:[%s539 + $0x10] sm:$0xff]
    %v543 = vld [vmem:[%s539 + $0x18] sm:$0xff]
    %v544 = vld [vmem:[%s539 + $0x20] sm:$0xff]
    %v545 = vld [vmem:[%s539 + $0x28] sm:$0xff]
    %v546 = vld [vmem:[%s539 + $0x30] sm:$0xff]
    %v547 = vld [vmem:[%s539 + $0x38] sm:$0xff]
    %s548 = scalar_lea.vmem %s2, 3
    %v549 = vld [vmem:[%s548] sm:$0x1]
    %v551 = vperm.slane %v549, 0
    %v554 = vsel %vm184, %v538, 0
    %556 = vmatpush.msra.mxu0 0.0
    %557 = vmatpush.msra.mxu0 0.0
    %558 = vmatpush.msra.mxu0 0.0
    %559 = vmatpush.msra.mxu0 0.0
    %560 = vmatpush.msra.mxu0 0.0
    %561 = vmatpush.msra.mxu0 0.0
    %562 = vmatpush.msra.mxu0 0.0
    %563 = vmatpush.msra.mxu0 0.0
    %564 = vmatpush.msra.mxu0 %v547
    %565 = vmatpush.msra.mxu0 %v546
    %566 = vmatpush.msra.mxu0 %v545
    %567 = vmatpush.msra.mxu0 %v544
    %568 = vmatpush.msra.mxu0 %v543
    %569 = vmatpush.msra.mxu0 %v542
    %570 = vmatpush.msra.mxu0 %v541
    %571 = vmatpush.msra.mxu0 %v540
    %572 = vmatmul.f32.gmra.mxu0 %v554
    %v573 = vpop.f32.mrf.mxu0
    %v574 = vadd.f32 %v551, %v573
    %575 = vdwg.mxu0
    %v576 = vxor.u32 %v574, 2147483648
    %v577 = vmul.f32 %v576, 1.442695
    %v578 = vpow.pop %v577
    %v579 = vadd.f32 %v578, 1.0
    %v580 = vrcp.pop %v579
    %v581 = vmul.f32 %v579, %v580
    %v582 = vsub.f32 1.0, %v581
    %v583 = vmul.f32 %v580, %v582
    %v584 = vadd.f32 %v580, %v583
    %vm585 = vweird.f32 %v579
    %vm586 = vweird.f32 %v580
    %vm587 = vmor %vm585, %vm586
    %v588 = vsel %vm587, %v580, %v584
    %v589 = vand.u32 2147483647, %v579
    %vm590 = vcmp.eq.f32.partialorder %v589, 8.507059e+37
    %v591 = vand.u32 %v579, 2147483648
    %v592 = vor.u32 1.1754944e-38, %v591
    %v593 = vsel %vm590, %v592, %v588
    %v594 = vmul.f32 1.0, %v593
    %v595 = vmul.f32 %v594, 2.0
    %v596 = vsub.f32 %v595, 1.0
    %v597 = vmul.f32 %v594, 0.0
    %599 = vrot.lane.b32.xlu0 %v596, 64
    %v600 = vpop.permute.xlu0 %599
    %v602 = vmul.f32 %v594, %v600
    %604 = vrot.lane.b32.xlu0 %v602, 32
    %v605 = vpop.permute.xlu0 %604
    %v607 = vadd.f32 %v597, %v605
    %v608 = vtanh.pop %v607
    %610 = vrot.lane.b32.xlu0 %v608, 64
    %v611 = vpop.permute.xlu0 %610
    %v613 = vmul.f32 %v594, %v611
    %615 = vrot.lane.b32.xlu0 %v463, 32
    %v616 = vpop.permute.xlu0 %615
    %618 = vrot.lane.b32.xlu0 %v392, 64
    %v619 = vpop.permute.xlu0 %618
    %v621 = vsel %vm73, %v616, %v619
    %v623 = vsel %vm184, %v621, 0
    %625 = vmatpush.msra.mxu0 0.0
    %626 = vmatpush.msra.mxu0 0.0
    %627 = vmatpush.msra.mxu0 0.0
    %628 = vmatpush.msra.mxu0 0.0
    %629 = vmatpush.msra.mxu0 0.0
    %630 = vmatpush.msra.mxu0 0.0
    %631 = vmatpush.msra.mxu0 0.0
    %632 = vmatpush.msra.mxu0 0.0
    %633 = vmatpush.msra.mxu0 %v326
    %634 = vmatpush.msra.mxu0 %v325
    %635 = vmatpush.msra.mxu0 %v324
    %636 = vmatpush.msra.mxu0 %v323
    %637 = vmatpush.msra.mxu0 %v322
    %638 = vmatpush.msra.mxu0 %v321
    %639 = vmatpush.msra.mxu0 %v320
    %640 = vmatpush.msra.mxu0 %v319
    %641 = vmatmul.f32.gmra.mxu0 %v623
    %v642 = vpop.f32.mrf.mxu0
    %v643 = vadd.f32 %v330, %v642
    %644 = vdwg.mxu0
    %v645 = vxor.u32 %v643, 2147483648
    %v646 = vmul.f32 %v645, 1.442695
    %v647 = vpow.pop %v646
    %v648 = vadd.f32 %v647, 1.0
    %v649 = vrcp.pop %v648
    %v650 = vmul.f32 %v648, %v649
    %v651 = vsub.f32 1.0, %v650
    %v652 = vmul.f32 %v649, %v651
    %v653 = vadd.f32 %v649, %v652
    %vm654 = vweird.f32 %v648
    %vm655 = vweird.f32 %v649
    %vm656 = vmor %vm654, %vm655
    %v657 = vsel %vm656, %v649, %v653
    %v658 = vand.u32 2147483647, %v648
    %vm659 = vcmp.eq.f32.partialorder %v658, 8.507059e+37
    %v660 = vand.u32 %v648, 2147483648
    %v661 = vor.u32 1.1754944e-38, %v660
    %v662 = vsel %vm659, %v661, %v657
    %v663 = vmul.f32 1.0, %v662
    %v664 = vmul.f32 %v663, 2.0
    %v665 = vsub.f32 %v664, 1.0
    %v666 = vmul.f32 %v663, %v386
    %668 = vrot.lane.b32.xlu0 %v665, 64
    %v669 = vpop.permute.xlu0 %668
    %v671 = vmul.f32 %v663, %v669
    %673 = vrot.lane.b32.xlu0 %v671, 32
    %v674 = vpop.permute.xlu0 %673
    %v676 = vadd.f32 %v666, %v674
    %v677 = vtanh.pop %v676
    %679 = vrot.lane.b32.xlu0 %v677, 64
    %v680 = vpop.permute.xlu0 %679
    %v682 = vmul.f32 %v663, %v680
    %684 = vrot.lane.b32.xlu0 %v533, 32
    %v685 = vpop.permute.xlu0 %684
    %v687 = vrot.slane %v463, 4
    %688 = vrot.lane.b32.xlu0 %v687, 64
    %v689 = vpop.permute.xlu0 %688
    %v691 = vsel %vm73, %v685, %v689
    %v693 = vrot.slane %v691, 4
    %v694 = vsel %vm184, %v693, 0
    %696 = vmatpush.msra.mxu0 0.0
    %697 = vmatpush.msra.mxu0 0.0
    %698 = vmatpush.msra.mxu0 0.0
    %699 = vmatpush.msra.mxu0 0.0
    %700 = vmatpush.msra.mxu0 0.0
    %701 = vmatpush.msra.mxu0 0.0
    %702 = vmatpush.msra.mxu0 0.0
    %703 = vmatpush.msra.mxu0 0.0
    %704 = vmatpush.msra.mxu0 %v178
    %705 = vmatpush.msra.mxu0 %v177
    %706 = vmatpush.msra.mxu0 %v176
    %707 = vmatpush.msra.mxu0 %v175
    %708 = vmatpush.msra.mxu0 %v174
    %709 = vmatpush.msra.mxu0 %v173
    %710 = vmatpush.msra.mxu0 %v172
    %711 = vmatpush.msra.mxu0 %v171
    %712 = vmatmul.f32.gmra.mxu0 %v694
    %v713 = vpop.f32.mrf.mxu0
    %v714 = vadd.f32 %v182, %v713
    %715 = vdwg.mxu0
    %v716 = vxor.u32 %v714, 2147483648
    %v717 = vmul.f32 %v716, 1.442695
    %v718 = vpow.pop %v717
    %v719 = vadd.f32 %v718, 1.0
    %v720 = vrcp.pop %v719
    %v721 = vmul.f32 %v719, %v720
    %v722 = vsub.f32 1.0, %v721
    %v723 = vmul.f32 %v720, %v722
    %v724 = vadd.f32 %v720, %v723
    %vm725 = vweird.f32 %v719
    %vm726 = vweird.f32 %v720
    %vm727 = vmor %vm725, %vm726
    %v728 = vsel %vm727, %v720, %v724
    %v729 = vand.u32 2147483647, %v719
    %vm730 = vcmp.eq.f32.partialorder %v729, 8.507059e+37
    %v731 = vand.u32 %v719, 2147483648
    %v732 = vor.u32 1.1754944e-38, %v731
    %v733 = vsel %vm730, %v732, %v728
    %v734 = vmul.f32 1.0, %v733
    %v735 = vmul.f32 %v734, 2.0
    %v736 = vsub.f32 %v735, 1.0
    %v737 = vmul.f32 %v734, %v457
    %739 = vrot.lane.b32.xlu0 %v736, 64
    %v740 = vpop.permute.xlu0 %739
    %v742 = vmul.f32 %v734, %v740
    %744 = vrot.lane.b32.xlu0 %v742, 32
    %v745 = vpop.permute.xlu0 %744
    %v747 = vadd.f32 %v737, %v745
    %v748 = vtanh.pop %v747
    %750 = vrot.lane.b32.xlu0 %v748, 64
    %v751 = vpop.permute.xlu0 %750
    %v753 = vmul.f32 %v734, %v751
    %v754 = vrot.slane %v533, 4
    %755 = vrot.lane.b32.xlu0 %v754, 32
    %v756 = vpop.permute.xlu0 %755
    %v757 = vsel %vm73, %v756, 0
    %759 = vmatpush.msra.mxu0 0.0
    %760 = vmatpush.msra.mxu0 0.0
    %761 = vmatpush.msra.mxu0 0.0
    %762 = vmatpush.msra.mxu0 0.0
    %763 = vmatpush.msra.mxu0 0.0
    %764 = vmatpush.msra.mxu0 0.0
    %765 = vmatpush.msra.mxu0 0.0
    %766 = vmatpush.msra.mxu0 0.0
    %767 = vmatpush.msra.mxu0 0.0
    %768 = vmatpush.msra.mxu0 0.0
    %769 = vmatpush.msra.mxu0 0.0
    %770 = vmatpush.msra.mxu0 0.0
    %771 = vmatpush.msra.mxu0 %v66
    %772 = vmatpush.msra.mxu0 %v65
    %773 = vmatpush.msra.mxu0 %v64
    %774 = vmatpush.msra.mxu0 %v63
    %775 = vmatmul.f32.gmra.mxu0 %v757
    %v776 = vpop.f32.mrf.mxu0
    %v777 = vadd.f32 0.0, %v776
    %778 = vdwg.mxu0
    %v780 = vrot.slane %v777, 2
    %v782 = vadd.f32 %v98, %v780
    %v783 = vxor.u32 %v782, 2147483648
    %v784 = vmul.f32 %v783, 1.442695
    %v785 = vpow.pop %v784
    %v786 = vadd.f32 %v785, 1.0
    %v787 = vrcp.pop %v786
    %v788 = vmul.f32 %v786, %v787
    %v789 = vsub.f32 1.0, %v788
    %v790 = vmul.f32 %v787, %v789
    %v791 = vadd.f32 %v787, %v790
    %vm792 = vweird.f32 %v786
    %vm793 = vweird.f32 %v787
    %vm794 = vmor %vm792, %vm793
    %v795 = vsel %vm794, %v787, %v791
    %v796 = vand.u32 2147483647, %v786
    %vm797 = vcmp.eq.f32.partialorder %v796, 8.507059e+37
    %v798 = vand.u32 %v786, 2147483648
    %v799 = vor.u32 1.1754944e-38, %v798
    %v800 = vsel %vm797, %v799, %v795
    %v801 = vmul.f32 1.0, %v800
    %v802 = vmul.f32 %v801, 2.0
    %v803 = vsub.f32 %v802, 1.0
    %v805 = vrot.slane %v527, 6
    %v807 = vmul.f32 %v801, %v805
    %809 = vrot.lane.b32.xlu0 %v803, 64
    %v810 = vpop.permute.xlu0 %809
    %v812 = vmul.f32 %v801, %v810
    %814 = vrot.lane.b32.xlu0 %v812, 32
    %v815 = vpop.permute.xlu0 %814
    %v817 = vadd.f32 %v807, %v815
    %v818 = vtanh.pop %v817
    %820 = vrot.lane.b32.xlu0 %v818, 64
    %v821 = vpop.permute.xlu0 %820
    %v823 = vmul.f32 %v801, %v821
    %825 = vrot.lane.b32.xlu0 %v613, 32
    %v826 = vpop.permute.xlu0 %825
    %v828 = vsel %vm73, %v826, 0.0
    %s829 = scalar_lea.vmem [#allocation2], 256
    %v830 = vld [vmem:[%s829] sm:$0xff]
    %v831 = vld [vmem:[%s829 + $0x8] sm:$0xff]
    %v832 = vld [vmem:[%s829 + $0x10] sm:$0xff]
    %v833 = vld [vmem:[%s829 + $0x18] sm:$0xff]
    %v834 = vld [vmem:[%s829 + $0x20] sm:$0xff]
    %v835 = vld [vmem:[%s829 + $0x28] sm:$0xff]
    %v836 = vld [vmem:[%s829 + $0x30] sm:$0xff]
    %v837 = vld [vmem:[%s829 + $0x38] sm:$0xff]
    %s838 = scalar_lea.vmem %s2, 4
    %v839 = vld [vmem:[%s838] sm:$0x1]
    %v841 = vperm.slane %v839, 0
    %v844 = vsel %vm184, %v828, 0
    %846 = vmatpush.msra.mxu0 0.0
    %847 = vmatpush.msra.mxu0 0.0
    %848 = vmatpush.msra.mxu0 0.0
    %849 = vmatpush.msra.mxu0 0.0
    %850 = vmatpush.msra.mxu0 0.0
    %851 = vmatpush.msra.mxu0 0.0
    %852 = vmatpush.msra.mxu0 0.0
    %853 = vmatpush.msra.mxu0 0.0
    %854 = vmatpush.msra.mxu0 %v837
    %855 = vmatpush.msra.mxu0 %v836
    %856 = vmatpush.msra.mxu0 %v835
    %857 = vmatpush.msra.mxu0 %v834
    %858 = vmatpush.msra.mxu0 %v833
    %859 = vmatpush.msra.mxu0 %v832
    %860 = vmatpush.msra.mxu0 %v831
    %861 = vmatpush.msra.mxu0 %v830
    %862 = vmatmul.f32.gmra.mxu0 %v844
    %v863 = vpop.f32.mrf.mxu0
    %v864 = vadd.f32 %v841, %v863
    %865 = vdwg.mxu0
    %v866 = vxor.u32 %v864, 2147483648
    %v867 = vmul.f32 %v866, 1.442695
    %v868 = vpow.pop %v867
    %v869 = vadd.f32 %v868, 1.0
    %v870 = vrcp.pop %v869
    %v871 = vmul.f32 %v869, %v870
    %v872 = vsub.f32 1.0, %v871
    %v873 = vmul.f32 %v870, %v872
    %v874 = vadd.f32 %v870, %v873
    %vm875 = vweird.f32 %v869
    %vm876 = vweird.f32 %v870
    %vm877 = vmor %vm875, %vm876
    %v878 = vsel %vm877, %v870, %v874
    %v879 = vand.u32 2147483647, %v869
    %vm880 = vcmp.eq.f32.partialorder %v879, 8.507059e+37
    %v881 = vand.u32 %v869, 2147483648
    %v882 = vor.u32 1.1754944e-38, %v881
    %v883 = vsel %vm880, %v882, %v878
    %v884 = vmul.f32 1.0, %v883
    %v885 = vmul.f32 %v884, 2.0
    %v886 = vsub.f32 %v885, 1.0
    %v887 = vmul.f32 %v884, 0.0
    %889 = vrot.lane.b32.xlu0 %v886, 64
    %v890 = vpop.permute.xlu0 %889
    %v892 = vmul.f32 %v884, %v890
    %894 = vrot.lane.b32.xlu0 %v892, 32
    %v895 = vpop.permute.xlu0 %894
    %v897 = vadd.f32 %v887, %v895
    %v898 = vtanh.pop %v897
    %900 = vrot.lane.b32.xlu0 %v898, 64
    %v901 = vpop.permute.xlu0 %900
    %v903 = vmul.f32 %v884, %v901
    %905 = vrot.lane.b32.xlu0 %v682, 32
    %v906 = vpop.permute.xlu0 %905
    %908 = vrot.lane.b32.xlu0 %v613, 64
    %v909 = vpop.permute.xlu0 %908
    %v911 = vsel %vm73, %v906, %v909
    %v913 = vsel %vm184, %v911, 0
    %915 = vmatpush.msra.mxu0 0.0
    %916 = vmatpush.msra.mxu0 0.0
    %917 = vmatpush.msra.mxu0 0.0
    %918 = vmatpush.msra.mxu0 0.0
    %919 = vmatpush.msra.mxu0 0.0
    %920 = vmatpush.msra.mxu0 0.0
    %921 = vmatpush.msra.mxu0 0.0
    %922 = vmatpush.msra.mxu0 0.0
    %923 = vmatpush.msra.mxu0 %v547
    %924 = vmatpush.msra.mxu0 %v546
    %925 = vmatpush.msra.mxu0 %v545
    %926 = vmatpush.msra.mxu0 %v544
    %927 = vmatpush.msra.mxu0 %v543
    %928 = vmatpush.msra.mxu0 %v542
    %929 = vmatpush.msra.mxu0 %v541
    %930 = vmatpush.msra.mxu0 %v540
    %931 = vmatmul.f32.gmra.mxu0 %v913
    %v932 = vpop.f32.mrf.mxu0
    %v933 = vadd.f32 %v551, %v932
    %934 = vdwg.mxu0
    %v935 = vxor.u32 %v933, 2147483648
    %v936 = vmul.f32 %v935, 1.442695
    %v937 = vpow.pop %v936
    %v938 = vadd.f32 %v937, 1.0
    %v939 = vrcp.pop %v938
    %v940 = vmul.f32 %v938, %v939
    %v941 = vsub.f32 1.0, %v940
    %v942 = vmul.f32 %v939, %v941
    %v943 = vadd.f32 %v939, %v942
    %vm944 = vweird.f32 %v938
    %vm945 = vweird.f32 %v939
    %vm946 = vmor %vm944, %vm945
    %v947 = vsel %vm946, %v939, %v943
    %v948 = vand.u32 2147483647, %v938
    %vm949 = vcmp.eq.f32.partialorder %v948, 8.507059e+37
    %v950 = vand.u32 %v938, 2147483648
    %v951 = vor.u32 1.1754944e-38, %v950
    %v952 = vsel %vm949, %v951, %v947
    %v953 = vmul.f32 1.0, %v952
    %v954 = vmul.f32 %v953, 2.0
    %v955 = vsub.f32 %v954, 1.0
    %v956 = vmul.f32 %v953, %v607
    %958 = vrot.lane.b32.xlu0 %v955, 64
    %v959 = vpop.permute.xlu0 %958
    %v961 = vmul.f32 %v953, %v959
    %963 = vrot.lane.b32.xlu0 %v961, 32
    %v964 = vpop.permute.xlu0 %963
    %v966 = vadd.f32 %v956, %v964
    %v967 = vtanh.pop %v966
    %969 = vrot.lane.b32.xlu0 %v967, 64
    %v970 = vpop.permute.xlu0 %969
    %v972 = vmul.f32 %v953, %v970
    %974 = vrot.lane.b32.xlu0 %v753, 32
    %v975 = vpop.permute.xlu0 %974
    %977 = vrot.lane.b32.xlu0 %v682, 64
    %v978 = vpop.permute.xlu0 %977
    %v980 = vsel %vm73, %v975, %v978
    %v982 = vsel %vm184, %v980, 0
    %984 = vmatpush.msra.mxu0 0.0
    %985 = vmatpush.msra.mxu0 0.0
    %986 = vmatpush.msra.mxu0 0.0
    %987 = vmatpush.msra.mxu0 0.0
    %988 = vmatpush.msra.mxu0 0.0
    %989 = vmatpush.msra.mxu0 0.0
    %990 = vmatpush.msra.mxu0 0.0
    %991 = vmatpush.msra.mxu0 0.0
    %992 = vmatpush.msra.mxu0 %v326
    %993 = vmatpush.msra.mxu0 %v325
    %994 = vmatpush.msra.mxu0 %v324
    %995 = vmatpush.msra.mxu0 %v323
    %996 = vmatpush.msra.mxu0 %v322
    %997 = vmatpush.msra.mxu0 %v321
    %998 = vmatpush.msra.mxu0 %v320
    %999 = vmatpush.msra.mxu0 %v319
    %1000 = vmatmul.f32.gmra.mxu0 %v982
    %v1001 = vpop.f32.mrf.mxu0
    %v1002 = vadd.f32 %v330, %v1001
    %1003 = vdwg.mxu0
    %v1004 = vxor.u32 %v1002, 2147483648
    %v1005 = vmul.f32 %v1004, 1.442695
    %v1006 = vpow.pop %v1005
    %v1007 = vadd.f32 %v1006, 1.0
    %v1008 = vrcp.pop %v1007
    %v1009 = vmul.f32 %v1007, %v1008
    %v1010 = vsub.f32 1.0, %v1009
    %v1011 = vmul.f32 %v1008, %v1010
    %v1012 = vadd.f32 %v1008, %v1011
    %vm1013 = vweird.f32 %v1007
    %vm1014 = vweird.f32 %v1008
    %vm1015 = vmor %vm1013, %vm1014
    %v1016 = vsel %vm1015, %v1008, %v1012
    %v1017 = vand.u32 2147483647, %v1007
    %vm1018 = vcmp.eq.f32.partialorder %v1017, 8.507059e+37
    %v1019 = vand.u32 %v1007, 2147483648
    %v1020 = vor.u32 1.1754944e-38, %v1019
    %v1021 = vsel %vm1018, %v1020, %v1016
    %v1022 = vmul.f32 1.0, %v1021
    %v1023 = vmul.f32 %v1022, 2.0
    %v1024 = vsub.f32 %v1023, 1.0
    %v1025 = vmul.f32 %v1022, %v676
    %1027 = vrot.lane.b32.xlu0 %v1024, 64
    %v1028 = vpop.permute.xlu0 %1027
    %v1030 = vmul.f32 %v1022, %v1028
    %1032 = vrot.lane.b32.xlu0 %v1030, 32
    %v1033 = vpop.permute.xlu0 %1032
    %v1035 = vadd.f32 %v1025, %v1033
    %v1036 = vtanh.pop %v1035
    %1038 = vrot.lane.b32.xlu0 %v1036, 64
    %v1039 = vpop.permute.xlu0 %1038
    %v1041 = vmul.f32 %v1022, %v1039
    %1043 = vrot.lane.b32.xlu0 %v823, 32
    %v1044 = vpop.permute.xlu0 %1043
    %v1046 = vrot.slane %v753, 2
    %1047 = vrot.lane.b32.xlu0 %v1046, 64
    %v1048 = vpop.permute.xlu0 %1047
    %v1050 = vsel %vm73, %v1044, %v1048
    %v1052 = vrot.slane %v1050, 6
    %v1053 = vsel %vm184, %v1052, 0
    %1055 = vmatpush.msra.mxu0 0.0
    %1056 = vmatpush.msra.mxu0 0.0
    %1057 = vmatpush.msra.mxu0 0.0
    %1058 = vmatpush.msra.mxu0 0.0
    %1059 = vmatpush.msra.mxu0 0.0
    %1060 = vmatpush.msra.mxu0 0.0
    %1061 = vmatpush.msra.mxu0 0.0
    %1062 = vmatpush.msra.mxu0 0.0
    %1063 = vmatpush.msra.mxu0 %v178
    %1064 = vmatpush.msra.mxu0 %v177
    %1065 = vmatpush.msra.mxu0 %v176
    %1066 = vmatpush.msra.mxu0 %v175
    %1067 = vmatpush.msra.mxu0 %v174
    %1068 = vmatpush.msra.mxu0 %v173
    %1069 = vmatpush.msra.mxu0 %v172
    %1070 = vmatpush.msra.mxu0 %v171
    %1071 = vmatmul.f32.gmra.mxu0 %v1053
    %v1072 = vpop.f32.mrf.mxu0
    %v1073 = vadd.f32 %v182, %v1072
    %1074 = vdwg.mxu0
    %v1075 = vxor.u32 %v1073, 2147483648
    %v1076 = vmul.f32 %v1075, 1.442695
    %v1077 = vpow.pop %v1076
    %v1078 = vadd.f32 %v1077, 1.0
    %v1079 = vrcp.pop %v1078
    %v1080 = vmul.f32 %v1078, %v1079
    %v1081 = vsub.f32 1.0, %v1080
    %v1082 = vmul.f32 %v1079, %v1081
    %v1083 = vadd.f32 %v1079, %v1082
    %vm1084 = vweird.f32 %v1078
    %vm1085 = vweird.f32 %v1079
    %vm1086 = vmor %vm1084, %vm1085
    %v1087 = vsel %vm1086, %v1079, %v1083
    %v1088 = vand.u32 2147483647, %v1078
    %vm1089 = vcmp.eq.f32.partialorder %v1088, 8.507059e+37
    %v1090 = vand.u32 %v1078, 2147483648
    %v1091 = vor.u32 1.1754944e-38, %v1090
    %v1092 = vsel %vm1089, %v1091, %v1087
    %v1093 = vmul.f32 1.0, %v1092
    %v1094 = vmul.f32 %v1093, 2.0
    %v1095 = vsub.f32 %v1094, 1.0
    %v1096 = vmul.f32 %v1093, %v747
    %1098 = vrot.lane.b32.xlu0 %v1095, 64
    %v1099 = vpop.permute.xlu0 %1098
    %v1101 = vmul.f32 %v1093, %v1099
    %1103 = vrot.lane.b32.xlu0 %v1101, 32
    %v1104 = vpop.permute.xlu0 %1103
    %v1106 = vadd.f32 %v1096, %v1104
    %v1107 = vtanh.pop %v1106
    %1109 = vrot.lane.b32.xlu0 %v1107, 64
    %v1110 = vpop.permute.xlu0 %1109
    %v1112 = vmul.f32 %v1093, %v1110
    %v1113 = vrot.slane %v823, 6
    %1114 = vrot.lane.b32.xlu0 %v1113, 32
    %v1115 = vpop.permute.xlu0 %1114
    %v1116 = vsel %vm73, %v1115, 0
    %1118 = vmatpush.msra.mxu0 0.0
    %1119 = vmatpush.msra.mxu0 0.0
    %1120 = vmatpush.msra.mxu0 0.0
    %1121 = vmatpush.msra.mxu0 0.0
    %1122 = vmatpush.msra.mxu0 0.0
    %1123 = vmatpush.msra.mxu0 0.0
    %1124 = vmatpush.msra.mxu0 0.0
    %1125 = vmatpush.msra.mxu0 0.0
    %1126 = vmatpush.msra.mxu0 0.0
    %1127 = vmatpush.msra.mxu0 0.0
    %1128 = vmatpush.msra.mxu0 0.0
    %1129 = vmatpush.msra.mxu0 0.0
    %1130 = vmatpush.msra.mxu0 %v66
    %1131 = vmatpush.msra.mxu0 %v65
    %1132 = vmatpush.msra.mxu0 %v64
    %1133 = vmatpush.msra.mxu0 %v63
    %1134 = vmatmul.f32.gmra.mxu0 %v1116
    %v1135 = vpop.f32.mrf.mxu0
    %v1136 = vadd.f32 0.0, %v1135
    %1137 = vdwg.mxu0
    %v1138 = vadd.f32 %v101, %v1136
    %v1139 = vxor.u32 %v1138, 2147483648
    %v1140 = vmul.f32 %v1139, 1.442695
    %v1141 = vpow.pop %v1140
    %v1142 = vadd.f32 %v1141, 1.0
    %v1143 = vrcp.pop %v1142
    %v1144 = vmul.f32 %v1142, %v1143
    %v1145 = vsub.f32 1.0, %v1144
    %v1146 = vmul.f32 %v1143, %v1145
    %v1147 = vadd.f32 %v1143, %v1146
    %vm1148 = vweird.f32 %v1142
    %vm1149 = vweird.f32 %v1143
    %vm1150 = vmor %vm1148, %vm1149
    %v1151 = vsel %vm1150, %v1143, %v1147
    %v1152 = vand.u32 2147483647, %v1142
    %vm1153 = vcmp.eq.f32.partialorder %v1152, 8.507059e+37
    %v1154 = vand.u32 %v1142, 2147483648
    %v1155 = vor.u32 1.1754944e-38, %v1154
    %v1156 = vsel %vm1153, %v1155, %v1151
    %v1157 = vmul.f32 1.0, %v1156
    %v1158 = vmul.f32 %v1157, 2.0
    %v1159 = vsub.f32 %v1158, 1.0
    %v1161 = vrot.slane %v817, 6
    %v1163 = vmul.f32 %v1157, %v1161
    %1165 = vrot.lane.b32.xlu0 %v1159, 64
    %v1166 = vpop.permute.xlu0 %1165
    %v1168 = vmul.f32 %v1157, %v1166
    %1170 = vrot.lane.b32.xlu0 %v1168, 32
    %v1171 = vpop.permute.xlu0 %1170
    %v1173 = vadd.f32 %v1163, %v1171
    %v1174 = vtanh.pop %v1173
    %1176 = vrot.lane.b32.xlu0 %v1174, 64
    %v1177 = vpop.permute.xlu0 %1176
    %v1179 = vmul.f32 %v1157, %v1177
    %1181 = vrot.lane.b32.xlu0 %v903, 32
    %v1182 = vpop.permute.xlu0 %1181
    %v1184 = vsel %vm73, %v1182, 0.0
    %s1185 = scalar_lea.vmem [#allocation2], 320
    %v1186 = vld [vmem:[%s1185] sm:$0xff]
    %v1187 = vld [vmem:[%s1185 + $0x8] sm:$0xff]
    %v1188 = vld [vmem:[%s1185 + $0x10] sm:$0xff]
    %v1189 = vld [vmem:[%s1185 + $0x18] sm:$0xff]
    %v1190 = vld [vmem:[%s1185 + $0x20] sm:$0xff]
    %v1191 = vld [vmem:[%s1185 + $0x28] sm:$0xff]
    %v1192 = vld [vmem:[%s1185 + $0x30] sm:$0xff]
    %v1193 = vld [vmem:[%s1185 + $0x38] sm:$0xff]
    %s1194 = scalar_lea.vmem %s2, 5
    %v1195 = vld [vmem:[%s1194] sm:$0x1]
    %v1197 = vperm.slane %v1195, 0
    %v1200 = vsel %vm184, %v1184, 0
    %1202 = vmatpush.msra.mxu0 0.0
    %1203 = vmatpush.msra.mxu0 0.0
    %1204 = vmatpush.msra.mxu0 0.0
    %1205 = vmatpush.msra.mxu0 0.0
    %1206 = vmatpush.msra.mxu0 0.0
    %1207 = vmatpush.msra.mxu0 0.0
    %1208 = vmatpush.msra.mxu0 0.0
    %1209 = vmatpush.msra.mxu0 0.0
    %1210 = vmatpush.msra.mxu0 %v1193
    %1211 = vmatpush.msra.mxu0 %v1192
    %1212 = vmatpush.msra.mxu0 %v1191
    %1213 = vmatpush.msra.mxu0 %v1190
    %1214 = vmatpush.msra.mxu0 %v1189
    %1215 = vmatpush.msra.mxu0 %v1188
    %1216 = vmatpush.msra.mxu0 %v1187
    %1217 = vmatpush.msra.mxu0 %v1186
    %1218 = vmatmul.f32.gmra.mxu0 %v1200
    %v1219 = vpop.f32.mrf.mxu0
    %v1220 = vadd.f32 %v1197, %v1219
    %1221 = vdwg.mxu0
    %v1222 = vxor.u32 %v1220, 2147483648
    %v1223 = vmul.f32 %v1222, 1.442695
    %v1224 = vpow.pop %v1223
    %v1225 = vadd.f32 %v1224, 1.0
    %v1226 = vrcp.pop %v1225
    %v1227 = vmul.f32 %v1225, %v1226
    %v1228 = vsub.f32 1.0, %v1227
    %v1229 = vmul.f32 %v1226, %v1228
    %v1230 = vadd.f32 %v1226, %v1229
    %vm1231 = vweird.f32 %v1225
    %vm1232 = vweird.f32 %v1226
    %vm1233 = vmor %vm1231, %vm1232
    %v1234 = vsel %vm1233, %v1226, %v1230
    %v1235 = vand.u32 2147483647, %v1225
    %vm1236 = vcmp.eq.f32.partialorder %v1235, 8.507059e+37
    %v1237 = vand.u32 %v1225, 2147483648
    %v1238 = vor.u32 1.1754944e-38, %v1237
    %v1239 = vsel %vm1236, %v1238, %v1234
    %v1240 = vmul.f32 1.0, %v1239
    %v1241 = vmul.f32 %v1240, 2.0
    %v1242 = vsub.f32 %v1241, 1.0
    %v1243 = vmul.f32 %v1240, 0.0
    %1245 = vrot.lane.b32.xlu0 %v1242, 64
    %v1246 = vpop.permute.xlu0 %1245
    %v1248 = vmul.f32 %v1240, %v1246
    %1250 = vrot.lane.b32.xlu0 %v1248, 32
    %v1251 = vpop.permute.xlu0 %1250
    %v1253 = vadd.f32 %v1243, %v1251
    %v1254 = vtanh.pop %v1253
    %1256 = vrot.lane.b32.xlu0 %v1254, 64
    %v1257 = vpop.permute.xlu0 %1256
    %v1259 = vmul.f32 %v1240, %v1257
    %1261 = vrot.lane.b32.xlu0 %v972, 32
    %v1262 = vpop.permute.xlu0 %1261
    %1264 = vrot.lane.b32.xlu0 %v903, 64
    %v1265 = vpop.permute.xlu0 %1264
    %v1267 = vsel %vm73, %v1262, %v1265
    %v1269 = vsel %vm184, %v1267, 0
    %1271 = vmatpush.msra.mxu0 0.0
    %1272 = vmatpush.msra.mxu0 0.0
    %1273 = vmatpush.msra.mxu0 0.0
    %1274 = vmatpush.msra.mxu0 0.0
    %1275 = vmatpush.msra.mxu0 0.0
    %1276 = vmatpush.msra.mxu0 0.0
    %1277 = vmatpush.msra.mxu0 0.0
    %1278 = vmatpush.msra.mxu0 0.0
    %1279 = vmatpush.msra.mxu0 %v837
    %1280 = vmatpush.msra.mxu0 %v836
    %1281 = vmatpush.msra.mxu0 %v835
    %1282 = vmatpush.msra.mxu0 %v834
    %1283 = vmatpush.msra.mxu0 %v833
    %1284 = vmatpush.msra.mxu0 %v832
    %1285 = vmatpush.msra.mxu0 %v831
    %1286 = vmatpush.msra.mxu0 %v830
    %1287 = vmatmul.f32.gmra.mxu0 %v1269
    %v1288 = vpop.f32.mrf.mxu0
    %v1289 = vadd.f32 %v841, %v1288
    %1290 = vdwg.mxu0
    %v1291 = vxor.u32 %v1289, 2147483648
    %v1292 = vmul.f32 %v1291, 1.442695
    %v1293 = vpow.pop %v1292
    %v1294 = vadd.f32 %v1293, 1.0
    %v1295 = vrcp.pop %v1294
    %v1296 = vmul.f32 %v1294, %v1295
    %v1297 = vsub.f32 1.0, %v1296
    %v1298 = vmul.f32 %v1295, %v1297
    %v1299 = vadd.f32 %v1295, %v1298
    %vm1300 = vweird.f32 %v1294
    %vm1301 = vweird.f32 %v1295
    %vm1302 = vmor %vm1300, %vm1301
    %v1303 = vsel %vm1302, %v1295, %v1299
    %v1304 = vand.u32 2147483647, %v1294
    %vm1305 = vcmp.eq.f32.partialorder %v1304, 8.507059e+37
    %v1306 = vand.u32 %v1294, 2147483648
    %v1307 = vor.u32 1.1754944e-38, %v1306
    %v1308 = vsel %vm1305, %v1307, %v1303
    %v1309 = vmul.f32 1.0, %v1308
    %v1310 = vmul.f32 %v1309, 2.0
    %v1311 = vsub.f32 %v1310, 1.0
    %v1312 = vmul.f32 %v1309, %v897
    %1314 = vrot.lane.b32.xlu0 %v1311, 64
    %v1315 = vpop.permute.xlu0 %1314
    %v1317 = vmul.f32 %v1309, %v1315
    %1319 = vrot.lane.b32.xlu0 %v1317, 32
    %v1320 = vpop.permute.xlu0 %1319
    %v1322 = vadd.f32 %v1312, %v1320
    %v1323 = vtanh.pop %v1322
    %1325 = vrot.lane.b32.xlu0 %v1323, 64
    %v1326 = vpop.permute.xlu0 %1325
    %v1328 = vmul.f32 %v1309, %v1326
    %1330 = vrot.lane.b32.xlu0 %v1041, 32
    %v1331 = vpop.permute.xlu0 %1330
    %1333 = vrot.lane.b32.xlu0 %v972, 64
    %v1334 = vpop.permute.xlu0 %1333
    %v1336 = vsel %vm73, %v1331, %v1334
    %v1338 = vsel %vm184, %v1336, 0
    %1340 = vmatpush.msra.mxu0 0.0
    %1341 = vmatpush.msra.mxu0 0.0
    %1342 = vmatpush.msra.mxu0 0.0
    %1343 = vmatpush.msra.mxu0 0.0
    %1344 = vmatpush.msra.mxu0 0.0
    %1345 = vmatpush.msra.mxu0 0.0
    %1346 = vmatpush.msra.mxu0 0.0
    %1347 = vmatpush.msra.mxu0 0.0
    %1348 = vmatpush.msra.mxu0 %v547
    %1349 = vmatpush.msra.mxu0 %v546
    %1350 = vmatpush.msra.mxu0 %v545
    %1351 = vmatpush.msra.mxu0 %v544
    %1352 = vmatpush.msra.mxu0 %v543
    %1353 = vmatpush.msra.mxu0 %v542
    %1354 = vmatpush.msra.mxu0 %v541
    %1355 = vmatpush.msra.mxu0 %v540
    %1356 = vmatmul.f32.gmra.mxu0 %v1338
    %v1357 = vpop.f32.mrf.mxu0
    %v1358 = vadd.f32 %v551, %v1357
    %1359 = vdwg.mxu0
    %v1360 = vxor.u32 %v1358, 2147483648
    %v1361 = vmul.f32 %v1360, 1.442695
    %v1362 = vpow.pop %v1361
    %v1363 = vadd.f32 %v1362, 1.0
    %v1364 = vrcp.pop %v1363
    %v1365 = vmul.f32 %v1363, %v1364
    %v1366 = vsub.f32 1.0, %v1365
    %v1367 = vmul.f32 %v1364, %v1366
    %v1368 = vadd.f32 %v1364, %v1367
    %vm1369 = vweird.f32 %v1363
    %vm1370 = vweird.f32 %v1364
    %vm1371 = vmor %vm1369, %vm1370
    %v1372 = vsel %vm1371, %v1364, %v1368
    %v1373 = vand.u32 2147483647, %v1363
    %vm1374 = vcmp.eq.f32.partialorder %v1373, 8.507059e+37
    %v1375 = vand.u32 %v1363, 2147483648
    %v1376 = vor.u32 1.1754944e-38, %v1375
    %v1377 = vsel %vm1374, %v1376, %v1372
    %v1378 = vmul.f32 1.0, %v1377
    %v1379 = vmul.f32 %v1378, 2.0
    %v1380 = vsub.f32 %v1379, 1.0
    %v1381 = vmul.f32 %v1378, %v966
    %1383 = vrot.lane.b32.xlu0 %v1380, 64
    %v1384 = vpop.permute.xlu0 %1383
    %v1386 = vmul.f32 %v1378, %v1384
    %1388 = vrot.lane.b32.xlu0 %v1386, 32
    %v1389 = vpop.permute.xlu0 %1388
    %v1391 = vadd.f32 %v1381, %v1389
    %v1392 = vtanh.pop %v1391
    %1394 = vrot.lane.b32.xlu0 %v1392, 64
    %v1395 = vpop.permute.xlu0 %1394
    %v1397 = vmul.f32 %v1378, %v1395
    %1399 = vrot.lane.b32.xlu0 %v1112, 32
    %v1400 = vpop.permute.xlu0 %1399
    %1402 = vrot.lane.b32.xlu0 %v1041, 64
    %v1403 = vpop.permute.xlu0 %1402
    %v1405 = vsel %vm73, %v1400, %v1403
    %v1407 = vsel %vm184, %v1405, 0
    %1409 = vmatpush.msra.mxu0 0.0
    %1410 = vmatpush.msra.mxu0 0.0
    %1411 = vmatpush.msra.mxu0 0.0
    %1412 = vmatpush.msra.mxu0 0.0
    %1413 = vmatpush.msra.mxu0 0.0
    %1414 = vmatpush.msra.mxu0 0.0
    %1415 = vmatpush.msra.mxu0 0.0
    %1416 = vmatpush.msra.mxu0 0.0
    %1417 = vmatpush.msra.mxu0 %v326
    %1418 = vmatpush.msra.mxu0 %v325
    %1419 = vmatpush.msra.mxu0 %v324
    %1420 = vmatpush.msra.mxu0 %v323
    %1421 = vmatpush.msra.mxu0 %v322
    %1422 = vmatpush.msra.mxu0 %v321
    %1423 = vmatpush.msra.mxu0 %v320
    %1424 = vmatpush.msra.mxu0 %v319
    %1425 = vmatmul.f32.gmra.mxu0 %v1407
    %v1426 = vpop.f32.mrf.mxu0
    %v1427 = vadd.f32 %v330, %v1426
    %1428 = vdwg.mxu0
    %v1429 = vxor.u32 %v1427, 2147483648
    %v1430 = vmul.f32 %v1429, 1.442695
    %v1431 = vpow.pop %v1430
    %v1432 = vadd.f32 %v1431, 1.0
    %v1433 = vrcp.pop %v1432
    %v1434 = vmul.f32 %v1432, %v1433
    %v1435 = vsub.f32 1.0, %v1434
    %v1436 = vmul.f32 %v1433, %v1435
    %v1437 = vadd.f32 %v1433, %v1436
    %vm1438 = vweird.f32 %v1432
    %vm1439 = vweird.f32 %v1433
    %vm1440 = vmor %vm1438, %vm1439
    %v1441 = vsel %vm1440, %v1433, %v1437
    %v1442 = vand.u32 2147483647, %v1432
    %vm1443 = vcmp.eq.f32.partialorder %v1442, 8.507059e+37
    %v1444 = vand.u32 %v1432, 2147483648
    %v1445 = vor.u32 1.1754944e-38, %v1444
    %v1446 = vsel %vm1443, %v1445, %v1441
    %v1447 = vmul.f32 1.0, %v1446
    %v1448 = vmul.f32 %v1447, 2.0
    %v1449 = vsub.f32 %v1448, 1.0
    %v1450 = vmul.f32 %v1447, %v1035
    %1452 = vrot.lane.b32.xlu0 %v1449, 64
    %v1453 = vpop.permute.xlu0 %1452
    %v1455 = vmul.f32 %v1447, %v1453
    %1457 = vrot.lane.b32.xlu0 %v1455, 32
    %v1458 = vpop.permute.xlu0 %1457
    %v1460 = vadd.f32 %v1450, %v1458
    %v1461 = vtanh.pop %v1460
    %1463 = vrot.lane.b32.xlu0 %v1461, 64
    %v1464 = vpop.permute.xlu0 %1463
    %v1466 = vmul.f32 %v1447, %v1464
    %1468 = vrot.lane.b32.xlu0 %v1179, 32
    %v1469 = vpop.permute.xlu0 %1468
    %1471 = vrot.lane.b32.xlu0 %v1112, 64
    %v1472 = vpop.permute.xlu0 %1471
    %v1474 = vsel %vm73, %v1469, %v1472
    %v1476 = vsel %vm184, %v1474, 0
    %1478 = vmatpush.msra.mxu0 0.0
    %1479 = vmatpush.msra.mxu0 0.0
    %1480 = vmatpush.msra.mxu0 0.0
    %1481 = vmatpush.msra.mxu0 0.0
    %1482 = vmatpush.msra.mxu0 0.0
    %1483 = vmatpush.msra.mxu0 0.0
    %1484 = vmatpush.msra.mxu0 0.0
    %1485 = vmatpush.msra.mxu0 0.0
    %1486 = vmatpush.msra.mxu0 %v178
    %1487 = vmatpush.msra.mxu0 %v177
    %1488 = vmatpush.msra.mxu0 %v176
    %1489 = vmatpush.msra.mxu0 %v175
    %1490 = vmatpush.msra.mxu0 %v174
    %1491 = vmatpush.msra.mxu0 %v173
    %1492 = vmatpush.msra.mxu0 %v172
    %1493 = vmatpush.msra.mxu0 %v171
    %1494 = vmatmul.f32.gmra.mxu0 %v1476
    %v1495 = vpop.f32.mrf.mxu0
    %v1496 = vadd.f32 %v182, %v1495
    %1497 = vdwg.mxu0
    %v1498 = vxor.u32 %v1496, 2147483648
    %v1499 = vmul.f32 %v1498, 1.442695
    %v1500 = vpow.pop %v1499
    %v1501 = vadd.f32 %v1500, 1.0
    %v1502 = vrcp.pop %v1501
    %v1503 = vmul.f32 %v1501, %v1502
    %v1504 = vsub.f32 1.0, %v1503
    %v1505 = vmul.f32 %v1502, %v1504
    %v1506 = vadd.f32 %v1502, %v1505
    %vm1507 = vweird.f32 %v1501
    %vm1508 = vweird.f32 %v1502
    %vm1509 = vmor %vm1507, %vm1508
    %v1510 = vsel %vm1509, %v1502, %v1506
    %v1511 = vand.u32 2147483647, %v1501
    %vm1512 = vcmp.eq.f32.partialorder %v1511, 8.507059e+37
    %v1513 = vand.u32 %v1501, 2147483648
    %v1514 = vor.u32 1.1754944e-38, %v1513
    %v1515 = vsel %vm1512, %v1514, %v1510
    %v1516 = vmul.f32 1.0, %v1515
    %v1517 = vmul.f32 %v1516, 2.0
    %v1518 = vsub.f32 %v1517, 1.0
    %v1519 = vmul.f32 %v1516, %v1106
    %1521 = vrot.lane.b32.xlu0 %v1518, 64
    %v1522 = vpop.permute.xlu0 %1521
    %v1524 = vmul.f32 %v1516, %v1522
    %1526 = vrot.lane.b32.xlu0 %v1524, 32
    %v1527 = vpop.permute.xlu0 %1526
    %v1529 = vadd.f32 %v1519, %v1527
    %v1530 = vtanh.pop %v1529
    %1532 = vrot.lane.b32.xlu0 %v1530, 64
    %v1533 = vpop.permute.xlu0 %1532
    %v1535 = vmul.f32 %v1516, %v1533
    %v1536 = vsel %vm73, %v1469, 0
    %1538 = vmatpush.msra.mxu0 0.0
    %1539 = vmatpush.msra.mxu0 0.0
    %1540 = vmatpush.msra.mxu0 0.0
    %1541 = vmatpush.msra.mxu0 0.0
    %1542 = vmatpush.msra.mxu0 0.0
    %1543 = vmatpush.msra.mxu0 0.0
    %1544 = vmatpush.msra.mxu0 0.0
    %1545 = vmatpush.msra.mxu0 0.0
    %1546 = vmatpush.msra.mxu0 0.0
    %1547 = vmatpush.msra.mxu0 0.0
    %1548 = vmatpush.msra.mxu0 0.0
    %1549 = vmatpush.msra.mxu0 0.0
    %1550 = vmatpush.msra.mxu0 %v66
    %1551 = vmatpush.msra.mxu0 %v65
    %1552 = vmatpush.msra.mxu0 %v64
    %1553 = vmatpush.msra.mxu0 %v63
    %1554 = vmatmul.f32.gmra.mxu0 %v1536
    %v1555 = vpop.f32.mrf.mxu0
    %v1556 = vadd.f32 0.0, %v1555
    %1557 = vdwg.mxu0
    %v1559 = vrot.slane %v1556, 6
    %v1561 = vadd.f32 %v101, %v1559
    %v1562 = vxor.u32 %v1561, 2147483648
    %v1563 = vmul.f32 %v1562, 1.442695
    %v1564 = vpow.pop %v1563
    %v1565 = vadd.f32 %v1564, 1.0
    %v1566 = vrcp.pop %v1565
    %v1567 = vmul.f32 %v1565, %v1566
    %v1568 = vsub.f32 1.0, %v1567
    %v1569 = vmul.f32 %v1566, %v1568
    %v1570 = vadd.f32 %v1566, %v1569
    %vm1571 = vweird.f32 %v1565
    %vm1572 = vweird.f32 %v1566
    %vm1573 = vmor %vm1571, %vm1572
    %v1574 = vsel %vm1573, %v1566, %v1570
    %v1575 = vand.u32 2147483647, %v1565
    %vm1576 = vcmp.eq.f32.partialorder %v1575, 8.507059e+37
    %v1577 = vand.u32 %v1565, 2147483648
    %v1578 = vor.u32 1.1754944e-38, %v1577
    %v1579 = vsel %vm1576, %v1578, %v1574
    %v1580 = vmul.f32 1.0, %v1579
    %v1581 = vmul.f32 %v1580, 2.0
    %v1582 = vsub.f32 %v1581, 1.0
    %v1584 = vrot.slane %v1173, 6
    %v1586 = vmul.f32 %v1580, %v1584
    %1588 = vrot.lane.b32.xlu0 %v1582, 64
    %v1589 = vpop.permute.xlu0 %1588
    %v1591 = vmul.f32 %v1580, %v1589
    %1593 = vrot.lane.b32.xlu0 %v1591, 32
    %v1594 = vpop.permute.xlu0 %1593
    %v1596 = vadd.f32 %v1586, %v1594
    %v1597 = vtanh.pop %v1596
    %1599 = vrot.lane.b32.xlu0 %v1597, 64
    %v1600 = vpop.permute.xlu0 %1599
    %v1602 = vmul.f32 %v1580, %v1600
    %1604 = vrot.lane.b32.xlu0 %v1259, 32
    %v1605 = vpop.permute.xlu0 %1604
    %v1607 = vsel %vm73, %v1605, 0.0
    %s1608 = scalar_lea.vmem [#allocation2], 384
    %v1609 = vld [vmem:[%s1608] sm:$0xff]
    %v1610 = vld [vmem:[%s1608 + $0x8] sm:$0xff]
    %v1611 = vld [vmem:[%s1608 + $0x10] sm:$0xff]
    %v1612 = vld [vmem:[%s1608 + $0x18] sm:$0xff]
    %v1613 = vld [vmem:[%s1608 + $0x20] sm:$0xff]
    %v1614 = vld [vmem:[%s1608 + $0x28] sm:$0xff]
    %v1615 = vld [vmem:[%s1608 + $0x30] sm:$0xff]
    %v1616 = vld [vmem:[%s1608 + $0x38] sm:$0xff]
    %s1617 = scalar_lea.vmem %s2, 6
    %v1618 = vld [vmem:[%s1617] sm:$0x1]
    %v1620 = vperm.slane %v1618, 0
    %v1623 = vsel %vm184, %v1607, 0
    %1625 = vmatpush.msra.mxu0 0.0
    %1626 = vmatpush.msra.mxu0 0.0
    %1627 = vmatpush.msra.mxu0 0.0
    %1628 = vmatpush.msra.mxu0 0.0
    %1629 = vmatpush.msra.mxu0 0.0
    %1630 = vmatpush.msra.mxu0 0.0
    %1631 = vmatpush.msra.mxu0 0.0
    %1632 = vmatpush.msra.mxu0 0.0
    %1633 = vmatpush.msra.mxu0 %v1616
    %1634 = vmatpush.msra.mxu0 %v1615
    %1635 = vmatpush.msra.mxu0 %v1614
    %1636 = vmatpush.msra.mxu0 %v1613
    %1637 = vmatpush.msra.mxu0 %v1612
    %1638 = vmatpush.msra.mxu0 %v1611
    %1639 = vmatpush.msra.mxu0 %v1610
    %1640 = vmatpush.msra.mxu0 %v1609
    %1641 = vmatmul.f32.gmra.mxu0 %v1623
    %v1642 = vpop.f32.mrf.mxu0
    %v1643 = vadd.f32 %v1620, %v1642
    %1644 = vdwg.mxu0
    %v1645 = vxor.u32 %v1643, 2147483648
    %v1646 = vmul.f32 %v1645, 1.442695
    %v1647 = vpow.pop %v1646
    %v1648 = vadd.f32 %v1647, 1.0
    %v1649 = vrcp.pop %v1648
    %v1650 = vmul.f32 %v1648, %v1649
    %v1651 = vsub.f32 1.0, %v1650
    %v1652 = vmul.f32 %v1649, %v1651
    %v1653 = vadd.f32 %v1649, %v1652
    %vm1654 = vweird.f32 %v1648
    %vm1655 = vweird.f32 %v1649
    %vm1656 = vmor %vm1654, %vm1655
    %v1657 = vsel %vm1656, %v1649, %v1653
    %v1658 = vand.u32 2147483647, %v1648
    %vm1659 = vcmp.eq.f32.partialorder %v1658, 8.507059e+37
    %v1660 = vand.u32 %v1648, 2147483648
    %v1661 = vor.u32 1.1754944e-38, %v1660
    %v1662 = vsel %vm1659, %v1661, %v1657
    %v1663 = vmul.f32 1.0, %v1662
    %v1664 = vmul.f32 %v1663, 2.0
    %v1665 = vsub.f32 %v1664, 1.0
    %v1666 = vmul.f32 %v1663, 0.0
    %1668 = vrot.lane.b32.xlu0 %v1665, 64
    %v1669 = vpop.permute.xlu0 %1668
    %v1671 = vmul.f32 %v1663, %v1669
    %1673 = vrot.lane.b32.xlu0 %v1671, 32
    %v1674 = vpop.permute.xlu0 %1673
    %v1676 = vadd.f32 %v1666, %v1674
    %v1677 = vtanh.pop %v1676
    %1679 = vrot.lane.b32.xlu0 %v1677, 64
    %v1680 = vpop.permute.xlu0 %1679
    %v1682 = vmul.f32 %v1663, %v1680
    %1684 = vrot.lane.b32.xlu0 %v1328, 32
    %v1685 = vpop.permute.xlu0 %1684
    %1687 = vrot.lane.b32.xlu0 %v1259, 64
    %v1688 = vpop.permute.xlu0 %1687
    %v1690 = vsel %vm73, %v1685, %v1688
    %v1692 = vsel %vm184, %v1690, 0
    %1694 = vmatpush.msra.mxu0 0.0
    %1695 = vmatpush.msra.mxu0 0.0
    %1696 = vmatpush.msra.mxu0 0.0
    %1697 = vmatpush.msra.mxu0 0.0
    %1698 = vmatpush.msra.mxu0 0.0
    %1699 = vmatpush.msra.mxu0 0.0
    %1700 = vmatpush.msra.mxu0 0.0
    %1701 = vmatpush.msra.mxu0 0.0
    %1702 = vmatpush.msra.mxu0 %v1193
    %1703 = vmatpush.msra.mxu0 %v1192
    %1704 = vmatpush.msra.mxu0 %v1191
    %1705 = vmatpush.msra.mxu0 %v1190
    %1706 = vmatpush.msra.mxu0 %v1189
    %1707 = vmatpush.msra.mxu0 %v1188
    %1708 = vmatpush.msra.mxu0 %v1187
    %1709 = vmatpush.msra.mxu0 %v1186
    %1710 = vmatmul.f32.gmra.mxu0 %v1692
    %v1711 = vpop.f32.mrf.mxu0
    %v1712 = vadd.f32 %v1197, %v1711
    %1713 = vdwg.mxu0
    %v1714 = vxor.u32 %v1712, 2147483648
    %v1715 = vmul.f32 %v1714, 1.442695
    %v1716 = vpow.pop %v1715
    %v1717 = vadd.f32 %v1716, 1.0
    %v1718 = vrcp.pop %v1717
    %v1719 = vmul.f32 %v1717, %v1718
    %v1720 = vsub.f32 1.0, %v1719
    %v1721 = vmul.f32 %v1718, %v1720
    %v1722 = vadd.f32 %v1718, %v1721
    %vm1723 = vweird.f32 %v1717
    %vm1724 = vweird.f32 %v1718
    %vm1725 = vmor %vm1723, %vm1724
    %v1726 = vsel %vm1725, %v1718, %v1722
    %v1727 = vand.u32 2147483647, %v1717
    %vm1728 = vcmp.eq.f32.partialorder %v1727, 8.507059e+37
    %v1729 = vand.u32 %v1717, 2147483648
    %v1730 = vor.u32 1.1754944e-38, %v1729
    %v1731 = vsel %vm1728, %v1730, %v1726
    %v1732 = vmul.f32 1.0, %v1731
    %v1733 = vmul.f32 %v1732, 2.0
    %v1734 = vsub.f32 %v1733, 1.0
    %v1735 = vmul.f32 %v1732, %v1253
    %1737 = vrot.lane.b32.xlu0 %v1734, 64
    %v1738 = vpop.permute.xlu0 %1737
    %v1740 = vmul.f32 %v1732, %v1738
    %1742 = vrot.lane.b32.xlu0 %v1740, 32
    %v1743 = vpop.permute.xlu0 %1742
    %v1745 = vadd.f32 %v1735, %v1743
    %v1746 = vtanh.pop %v1745
    %1748 = vrot.lane.b32.xlu0 %v1746, 64
    %v1749 = vpop.permute.xlu0 %1748
    %v1751 = vmul.f32 %v1732, %v1749
    %1753 = vrot.lane.b32.xlu0 %v1397, 32
    %v1754 = vpop.permute.xlu0 %1753
    %1756 = vrot.lane.b32.xlu0 %v1328, 64
    %v1757 = vpop.permute.xlu0 %1756
    %v1759 = vsel %vm73, %v1754, %v1757
    %v1761 = vsel %vm184, %v1759, 0
    %1763 = vmatpush.msra.mxu0 0.0
    %1764 = vmatpush.msra.mxu0 0.0
    %1765 = vmatpush.msra.mxu0 0.0
    %1766 = vmatpush.msra.mxu0 0.0
    %1767 = vmatpush.msra.mxu0 0.0
    %1768 = vmatpush.msra.mxu0 0.0
    %1769 = vmatpush.msra.mxu0 0.0
    %1770 = vmatpush.msra.mxu0 0.0
    %1771 = vmatpush.msra.mxu0 %v837
    %1772 = vmatpush.msra.mxu0 %v836
    %1773 = vmatpush.msra.mxu0 %v835
    %1774 = vmatpush.msra.mxu0 %v834
    %1775 = vmatpush.msra.mxu0 %v833
    %1776 = vmatpush.msra.mxu0 %v832
    %1777 = vmatpush.msra.mxu0 %v831
    %1778 = vmatpush.msra.mxu0 %v830
    %1779 = vmatmul.f32.gmra.mxu0 %v1761
    %v1780 = vpop.f32.mrf.mxu0
    %v1781 = vadd.f32 %v841, %v1780
    %1782 = vdwg.mxu0
    %v1783 = vxor.u32 %v1781, 2147483648
    %v1784 = vmul.f32 %v1783, 1.442695
    %v1785 = vpow.pop %v1784
    %v1786 = vadd.f32 %v1785, 1.0
    %v1787 = vrcp.pop %v1786
    %v1788 = vmul.f32 %v1786, %v1787
    %v1789 = vsub.f32 1.0, %v1788
    %v1790 = vmul.f32 %v1787, %v1789
    %v1791 = vadd.f32 %v1787, %v1790
    %vm1792 = vweird.f32 %v1786
    %vm1793 = vweird.f32 %v1787
    %vm1794 = vmor %vm1792, %vm1793
    %v1795 = vsel %vm1794, %v1787, %v1791
    %v1796 = vand.u32 2147483647, %v1786
    %vm1797 = vcmp.eq.f32.partialorder %v1796, 8.507059e+37
    %v1798 = vand.u32 %v1786, 2147483648
    %v1799 = vor.u32 1.1754944e-38, %v1798
    %v1800 = vsel %vm1797, %v1799, %v1795
    %v1801 = vmul.f32 1.0, %v1800
    %v1802 = vmul.f32 %v1801, 2.0
    %v1803 = vsub.f32 %v1802, 1.0
    %v1804 = vmul.f32 %v1801, %v1322
    %1806 = vrot.lane.b32.xlu0 %v1803, 64
    %v1807 = vpop.permute.xlu0 %1806
    %v1809 = vmul.f32 %v1801, %v1807
    %1811 = vrot.lane.b32.xlu0 %v1809, 32
    %v1812 = vpop.permute.xlu0 %1811
    %v1814 = vadd.f32 %v1804, %v1812
    %v1815 = vtanh.pop %v1814
    %1817 = vrot.lane.b32.xlu0 %v1815, 64
    %v1818 = vpop.permute.xlu0 %1817
    %v1820 = vmul.f32 %v1801, %v1818
    %1822 = vrot.lane.b32.xlu0 %v1466, 32
    %v1823 = vpop.permute.xlu0 %1822
    %1825 = vrot.lane.b32.xlu0 %v1397, 64
    %v1826 = vpop.permute.xlu0 %1825
    %v1828 = vsel %vm73, %v1823, %v1826
    %v1830 = vsel %vm184, %v1828, 0
    %1832 = vmatpush.msra.mxu0 0.0
    %1833 = vmatpush.msra.mxu0 0.0
    %1834 = vmatpush.msra.mxu0 0.0
    %1835 = vmatpush.msra.mxu0 0.0
    %1836 = vmatpush.msra.mxu0 0.0
    %1837 = vmatpush.msra.mxu0 0.0
    %1838 = vmatpush.msra.mxu0 0.0
    %1839 = vmatpush.msra.mxu0 0.0
    %1840 = vmatpush.msra.mxu0 %v547
    %1841 = vmatpush.msra.mxu0 %v546
    %1842 = vmatpush.msra.mxu0 %v545
    %1843 = vmatpush.msra.mxu0 %v544
    %1844 = vmatpush.msra.mxu0 %v543
    %1845 = vmatpush.msra.mxu0 %v542
    %1846 = vmatpush.msra.mxu0 %v541
    %1847 = vmatpush.msra.mxu0 %v540
    %1848 = vmatmul.f32.gmra.mxu0 %v1830
    %v1849 = vpop.f32.mrf.mxu0
    %v1850 = vadd.f32 %v551, %v1849
    %1851 = vdwg.mxu0
    %v1852 = vxor.u32 %v1850, 2147483648
    %v1853 = vmul.f32 %v1852, 1.442695
    %v1854 = vpow.pop %v1853
    %v1855 = vadd.f32 %v1854, 1.0
    %v1856 = vrcp.pop %v1855
    %v1857 = vmul.f32 %v1855, %v1856
    %v1858 = vsub.f32 1.0, %v1857
    %v1859 = vmul.f32 %v1856, %v1858
    %v1860 = vadd.f32 %v1856, %v1859
    %vm1861 = vweird.f32 %v1855
    %vm1862 = vweird.f32 %v1856
    %vm1863 = vmor %vm1861, %vm1862
    %v1864 = vsel %vm1863, %v1856, %v1860
    %v1865 = vand.u32 2147483647, %v1855
    %vm1866 = vcmp.eq.f32.partialorder %v1865, 8.507059e+37
    %v1867 = vand.u32 %v1855, 2147483648
    %v1868 = vor.u32 1.1754944e-38, %v1867
    %v1869 = vsel %vm1866, %v1868, %v1864
    %v1870 = vmul.f32 1.0, %v1869
    %v1871 = vmul.f32 %v1870, 2.0
    %v1872 = vsub.f32 %v1871, 1.0
    %v1873 = vmul.f32 %v1870, %v1391
    %1875 = vrot.lane.b32.xlu0 %v1872, 64
    %v1876 = vpop.permute.xlu0 %1875
    %v1878 = vmul.f32 %v1870, %v1876
    %1880 = vrot.lane.b32.xlu0 %v1878, 32
    %v1881 = vpop.permute.xlu0 %1880
    %v1883 = vadd.f32 %v1873, %v1881
    %v1884 = vtanh.pop %v1883
    %1886 = vrot.lane.b32.xlu0 %v1884, 64
    %v1887 = vpop.permute.xlu0 %1886
    %v1889 = vmul.f32 %v1870, %v1887
    %1891 = vrot.lane.b32.xlu0 %v1535, 32
    %v1892 = vpop.permute.xlu0 %1891
    %1894 = vrot.lane.b32.xlu0 %v1466, 64
    %v1895 = vpop.permute.xlu0 %1894
    %v1897 = vsel %vm73, %v1892, %v1895
    %v1899 = vsel %vm184, %v1897, 0
    %1901 = vmatpush.msra.mxu0 0.0
    %1902 = vmatpush.msra.mxu0 0.0
    %1903 = vmatpush.msra.mxu0 0.0
    %1904 = vmatpush.msra.mxu0 0.0
    %1905 = vmatpush.msra.mxu0 0.0
    %1906 = vmatpush.msra.mxu0 0.0
    %1907 = vmatpush.msra.mxu0 0.0
    %1908 = vmatpush.msra.mxu0 0.0
    %1909 = vmatpush.msra.mxu0 %v326
    %1910 = vmatpush.msra.mxu0 %v325
    %1911 = vmatpush.msra.mxu0 %v324
    %1912 = vmatpush.msra.mxu0 %v323
    %1913 = vmatpush.msra.mxu0 %v322
    %1914 = vmatpush.msra.mxu0 %v321
    %1915 = vmatpush.msra.mxu0 %v320
    %1916 = vmatpush.msra.mxu0 %v319
    %1917 = vmatmul.f32.gmra.mxu0 %v1899
    %v1918 = vpop.f32.mrf.mxu0
    %v1919 = vadd.f32 %v330, %v1918
    %1920 = vdwg.mxu0
    %v1921 = vxor.u32 %v1919, 2147483648
    %v1922 = vmul.f32 %v1921, 1.442695
    %v1923 = vpow.pop %v1922
    %v1924 = vadd.f32 %v1923, 1.0
    %v1925 = vrcp.pop %v1924
    %v1926 = vmul.f32 %v1924, %v1925
    %v1927 = vsub.f32 1.0, %v1926
    %v1928 = vmul.f32 %v1925, %v1927
    %v1929 = vadd.f32 %v1925, %v1928
    %vm1930 = vweird.f32 %v1924
    %vm1931 = vweird.f32 %v1925
    %vm1932 = vmor %vm1930, %vm1931
    %v1933 = vsel %vm1932, %v1925, %v1929
    %v1934 = vand.u32 2147483647, %v1924
    %vm1935 = vcmp.eq.f32.partialorder %v1934, 8.507059e+37
    %v1936 = vand.u32 %v1924, 2147483648
    %v1937 = vor.u32 1.1754944e-38, %v1936
    %v1938 = vsel %vm1935, %v1937, %v1933
    %v1939 = vmul.f32 1.0, %v1938
    %v1940 = vmul.f32 %v1939, 2.0
    %v1941 = vsub.f32 %v1940, 1.0
    %v1942 = vmul.f32 %v1939, %v1460
    %1944 = vrot.lane.b32.xlu0 %v1941, 64
    %v1945 = vpop.permute.xlu0 %1944
    %v1947 = vmul.f32 %v1939, %v1945
    %1949 = vrot.lane.b32.xlu0 %v1947, 32
    %v1950 = vpop.permute.xlu0 %1949
    %v1952 = vadd.f32 %v1942, %v1950
    %v1953 = vtanh.pop %v1952
    %1955 = vrot.lane.b32.xlu0 %v1953, 64
    %v1956 = vpop.permute.xlu0 %1955
    %v1958 = vmul.f32 %v1939, %v1956
    %1960 = vrot.lane.b32.xlu0 %v1602, 32
    %v1961 = vpop.permute.xlu0 %1960
    %v1963 = vrot.slane %v1535, 6
    %1964 = vrot.lane.b32.xlu0 %v1963, 64
    %v1965 = vpop.permute.xlu0 %1964
    %v1967 = vsel %vm73, %v1961, %v1965
    %v1969 = vrot.slane %v1967, 2
    %v1970 = vsel %vm184, %v1969, 0
    %1972 = vmatpush.msra.mxu0 0.0
    %1973 = vmatpush.msra.mxu0 0.0
    %1974 = vmatpush.msra.mxu0 0.0
    %1975 = vmatpush.msra.mxu0 0.0
    %1976 = vmatpush.msra.mxu0 0.0
    %1977 = vmatpush.msra.mxu0 0.0
    %1978 = vmatpush.msra.mxu0 0.0
    %1979 = vmatpush.msra.mxu0 0.0
    %1980 = vmatpush.msra.mxu0 %v178
    %1981 = vmatpush.msra.mxu0 %v177
    %1982 = vmatpush.msra.mxu0 %v176
    %1983 = vmatpush.msra.mxu0 %v175
    %1984 = vmatpush.msra.mxu0 %v174
    %1985 = vmatpush.msra.mxu0 %v173
    %1986 = vmatpush.msra.mxu0 %v172
    %1987 = vmatpush.msra.mxu0 %v171
    %1988 = vmatmul.f32.gmra.mxu0 %v1970
    %v1989 = vpop.f32.mrf.mxu0
    %v1990 = vadd.f32 %v182, %v1989
    %1991 = vdwg.mxu0
    %v1992 = vxor.u32 %v1990, 2147483648
    %v1993 = vmul.f32 %v1992, 1.442695
    %v1994 = vpow.pop %v1993
    %v1995 = vadd.f32 %v1994, 1.0
    %v1996 = vrcp.pop %v1995
    %v1997 = vmul.f32 %v1995, %v1996
    %v1998 = vsub.f32 1.0, %v1997
    %v1999 = vmul.f32 %v1996, %v1998
    %v2000 = vadd.f32 %v1996, %v1999
    %vm2001 = vweird.f32 %v1995
    %vm2002 = vweird.f32 %v1996
    %vm2003 = vmor %vm2001, %vm2002
    %v2004 = vsel %vm2003, %v1996, %v2000
    %v2005 = vand.u32 2147483647, %v1995
    %vm2006 = vcmp.eq.f32.partialorder %v2005, 8.507059e+37
    %v2007 = vand.u32 %v1995, 2147483648
    %v2008 = vor.u32 1.1754944e-38, %v2007
    %v2009 = vsel %vm2006, %v2008, %v2004
    %v2010 = vmul.f32 1.0, %v2009
    %v2011 = vmul.f32 %v2010, 2.0
    %v2012 = vsub.f32 %v2011, 1.0
    %v2013 = vmul.f32 %v2010, %v1529
    %2015 = vrot.lane.b32.xlu0 %v2012, 64
    %v2016 = vpop.permute.xlu0 %2015
    %v2018 = vmul.f32 %v2010, %v2016
    %2020 = vrot.lane.b32.xlu0 %v2018, 32
    %v2021 = vpop.permute.xlu0 %2020
    %v2023 = vadd.f32 %v2013, %v2021
    %v2024 = vtanh.pop %v2023
    %2026 = vrot.lane.b32.xlu0 %v2024, 64
    %v2027 = vpop.permute.xlu0 %2026
    %v2029 = vmul.f32 %v2010, %v2027
    %v2030 = vrot.slane %v1602, 2
    %2031 = vrot.lane.b32.xlu0 %v2030, 32
    %v2032 = vpop.permute.xlu0 %2031
    %v2033 = vsel %vm73, %v2032, 0
    %2035 = vmatpush.msra.mxu0 0.0
    %2036 = vmatpush.msra.mxu0 0.0
    %2037 = vmatpush.msra.mxu0 0.0
    %2038 = vmatpush.msra.mxu0 0.0
    %2039 = vmatpush.msra.mxu0 0.0
    %2040 = vmatpush.msra.mxu0 0.0
    %2041 = vmatpush.msra.mxu0 0.0
    %2042 = vmatpush.msra.mxu0 0.0
    %2043 = vmatpush.msra.mxu0 0.0
    %2044 = vmatpush.msra.mxu0 0.0
    %2045 = vmatpush.msra.mxu0 0.0
    %2046 = vmatpush.msra.mxu0 0.0
    %2047 = vmatpush.msra.mxu0 %v66
    %2048 = vmatpush.msra.mxu0 %v65
    %2049 = vmatpush.msra.mxu0 %v64
    %2050 = vmatpush.msra.mxu0 %v63
    %2051 = vmatmul.f32.gmra.mxu0 %v2033
    %v2052 = vpop.f32.mrf.mxu0
    %v2053 = vadd.f32 0.0, %v2052
    %2054 = vdwg.mxu0
    %v2056 = vrot.slane %v2053, 4
    %v2058 = vadd.f32 %v101, %v2056
    %v2059 = vxor.u32 %v2058, 2147483648
    %v2060 = vmul.f32 %v2059, 1.442695
    %v2061 = vpow.pop %v2060
    %v2062 = vadd.f32 %v2061, 1.0
    %v2063 = vrcp.pop %v2062
    %v2064 = vmul.f32 %v2062, %v2063
    %v2065 = vsub.f32 1.0, %v2064
    %v2066 = vmul.f32 %v2063, %v2065
    %v2067 = vadd.f32 %v2063, %v2066
    %vm2068 = vweird.f32 %v2062
    %vm2069 = vweird.f32 %v2063
    %vm2070 = vmor %vm2068, %vm2069
    %v2071 = vsel %vm2070, %v2063, %v2067
    %v2072 = vand.u32 2147483647, %v2062
    %vm2073 = vcmp.eq.f32.partialorder %v2072, 8.507059e+37
    %v2074 = vand.u32 %v2062, 2147483648
    %v2075 = vor.u32 1.1754944e-38, %v2074
    %v2076 = vsel %vm2073, %v2075, %v2071
    %v2077 = vmul.f32 1.0, %v2076
    %v2078 = vmul.f32 %v2077, 2.0
    %v2079 = vsub.f32 %v2078, 1.0
    %v2081 = vrot.slane %v1596, 6
    %v2083 = vmul.f32 %v2077, %v2081
    %2085 = vrot.lane.b32.xlu0 %v2079, 64
    %v2086 = vpop.permute.xlu0 %2085
    %v2088 = vmul.f32 %v2077, %v2086
    %2090 = vrot.lane.b32.xlu0 %v2088, 32
    %v2091 = vpop.permute.xlu0 %2090
    %v2093 = vadd.f32 %v2083, %v2091
    %v2094 = vtanh.pop %v2093
    %2096 = vrot.lane.b32.xlu0 %v2094, 64
    %v2097 = vpop.permute.xlu0 %2096
    %v2099 = vmul.f32 %v2077, %v2097
    %2101 = vrot.lane.b32.xlu0 %v1682, 32
    %v2102 = vpop.permute.xlu0 %2101
    %v2104 = vsel %vm73, %v2102, 0.0
    %s2105 = scalar_lea.vmem [#allocation2], 448
    %v2106 = vld [vmem:[%s2105] sm:$0xff]
    %v2107 = vld [vmem:[%s2105 + $0x8] sm:$0xff]
    %v2108 = vld [vmem:[%s2105 + $0x10] sm:$0xff]
    %v2109 = vld [vmem:[%s2105 + $0x18] sm:$0xff]
    %v2110 = vld [vmem:[%s2105 + $0x20] sm:$0xff]
    %v2111 = vld [vmem:[%s2105 + $0x28] sm:$0xff]
    %v2112 = vld [vmem:[%s2105 + $0x30] sm:$0xff]
    %v2113 = vld [vmem:[%s2105 + $0x38] sm:$0xff]
    %s2114 = scalar_lea.vmem %s2, 7
    %v2115 = vld [vmem:[%s2114] sm:$0x1]
    %v2117 = vperm.slane %v2115, 0
    %v2120 = vsel %vm184, %v2104, 0
    %2122 = vmatpush.msra.mxu0 0.0
    %2123 = vmatpush.msra.mxu0 0.0
    %2124 = vmatpush.msra.mxu0 0.0
    %2125 = vmatpush.msra.mxu0 0.0
    %2126 = vmatpush.msra.mxu0 0.0
    %2127 = vmatpush.msra.mxu0 0.0
    %2128 = vmatpush.msra.mxu0 0.0
    %2129 = vmatpush.msra.mxu0 0.0
    %2130 = vmatpush.msra.mxu0 %v2113
    %2131 = vmatpush.msra.mxu0 %v2112
    %2132 = vmatpush.msra.mxu0 %v2111
    %2133 = vmatpush.msra.mxu0 %v2110
    %2134 = vmatpush.msra.mxu0 %v2109
    %2135 = vmatpush.msra.mxu0 %v2108
    %2136 = vmatpush.msra.mxu0 %v2107
    %2137 = vmatpush.msra.mxu0 %v2106
    %2138 = vmatmul.f32.gmra.mxu0 %v2120
    %v2139 = vpop.f32.mrf.mxu0
    %v2140 = vadd.f32 %v2117, %v2139
    %2141 = vdwg.mxu0
    %v2142 = vxor.u32 %v2140, 2147483648
    %v2143 = vmul.f32 %v2142, 1.442695
    %v2144 = vpow.pop %v2143
    %v2145 = vadd.f32 %v2144, 1.0
    %v2146 = vrcp.pop %v2145
    %v2147 = vmul.f32 %v2145, %v2146
    %v2148 = vsub.f32 1.0, %v2147
    %v2149 = vmul.f32 %v2146, %v2148
    %v2150 = vadd.f32 %v2146, %v2149
    %vm2151 = vweird.f32 %v2145
    %vm2152 = vweird.f32 %v2146
    %vm2153 = vmor %vm2151, %vm2152
    %v2154 = vsel %vm2153, %v2146, %v2150
    %v2155 = vand.u32 2147483647, %v2145
    %vm2156 = vcmp.eq.f32.partialorder %v2155, 8.507059e+37
    %v2157 = vand.u32 %v2145, 2147483648
    %v2158 = vor.u32 1.1754944e-38, %v2157
    %v2159 = vsel %vm2156, %v2158, %v2154
    %v2160 = vmul.f32 1.0, %v2159
    %v2161 = vmul.f32 %v2160, 2.0
    %v2162 = vsub.f32 %v2161, 1.0
    %v2163 = vmul.f32 %v2160, 0.0
    %2165 = vrot.lane.b32.xlu0 %v2162, 64
    %v2166 = vpop.permute.xlu0 %2165
    %v2168 = vmul.f32 %v2160, %v2166
    %2170 = vrot.lane.b32.xlu0 %v2168, 32
    %v2171 = vpop.permute.xlu0 %2170
    %v2173 = vadd.f32 %v2163, %v2171
    %v2174 = vtanh.pop %v2173
    %2176 = vrot.lane.b32.xlu0 %v2174, 64
    %v2177 = vpop.permute.xlu0 %2176
    %v2179 = vmul.f32 %v2160, %v2177
    %2181 = vrot.lane.b32.xlu0 %v1751, 32
    %v2182 = vpop.permute.xlu0 %2181
    %2184 = vrot.lane.b32.xlu0 %v1682, 64
    %v2185 = vpop.permute.xlu0 %2184
    %v2187 = vsel %vm73, %v2182, %v2185
    %v2189 = vsel %vm184, %v2187, 0
    %2191 = vmatpush.msra.mxu0 0.0
    %2192 = vmatpush.msra.mxu0 0.0
    %2193 = vmatpush.msra.mxu0 0.0
    %2194 = vmatpush.msra.mxu0 0.0
    %2195 = vmatpush.msra.mxu0 0.0
    %2196 = vmatpush.msra.mxu0 0.0
    %2197 = vmatpush.msra.mxu0 0.0
    %2198 = vmatpush.msra.mxu0 0.0
    %2199 = vmatpush.msra.mxu0 %v1616
    %2200 = vmatpush.msra.mxu0 %v1615
    %2201 = vmatpush.msra.mxu0 %v1614
    %2202 = vmatpush.msra.mxu0 %v1613
    %2203 = vmatpush.msra.mxu0 %v1612
    %2204 = vmatpush.msra.mxu0 %v1611
    %2205 = vmatpush.msra.mxu0 %v1610
    %2206 = vmatpush.msra.mxu0 %v1609
    %2207 = vmatmul.f32.gmra.mxu0 %v2189
    %v2208 = vpop.f32.mrf.mxu0
    %v2209 = vadd.f32 %v1620, %v2208
    %2210 = vdwg.mxu0
    %v2211 = vxor.u32 %v2209, 2147483648
    %v2212 = vmul.f32 %v2211, 1.442695
    %v2213 = vpow.pop %v2212
    %v2214 = vadd.f32 %v2213, 1.0
    %v2215 = vrcp.pop %v2214
    %v2216 = vmul.f32 %v2214, %v2215
    %v2217 = vsub.f32 1.0, %v2216
    %v2218 = vmul.f32 %v2215, %v2217
    %v2219 = vadd.f32 %v2215, %v2218
    %vm2220 = vweird.f32 %v2214
    %vm2221 = vweird.f32 %v2215
    %vm2222 = vmor %vm2220, %vm2221
    %v2223 = vsel %vm2222, %v2215, %v2219
    %v2224 = vand.u32 2147483647, %v2214
    %vm2225 = vcmp.eq.f32.partialorder %v2224, 8.507059e+37
    %v2226 = vand.u32 %v2214, 2147483648
    %v2227 = vor.u32 1.1754944e-38, %v2226
    %v2228 = vsel %vm2225, %v2227, %v2223
    %v2229 = vmul.f32 1.0, %v2228
    %v2230 = vmul.f32 %v2229, 2.0
    %v2231 = vsub.f32 %v2230, 1.0
    %v2232 = vmul.f32 %v2229, %v1676
    %2234 = vrot.lane.b32.xlu0 %v2231, 64
    %v2235 = vpop.permute.xlu0 %2234
    %v2237 = vmul.f32 %v2229, %v2235
    %2239 = vrot.lane.b32.xlu0 %v2237, 32
    %v2240 = vpop.permute.xlu0 %2239
    %v2242 = vadd.f32 %v2232, %v2240
    %v2243 = vtanh.pop %v2242
    %2245 = vrot.lane.b32.xlu0 %v2243, 64
    %v2246 = vpop.permute.xlu0 %2245
    %v2248 = vmul.f32 %v2229, %v2246
    %2250 = vrot.lane.b32.xlu0 %v1820, 32
    %v2251 = vpop.permute.xlu0 %2250
    %2253 = vrot.lane.b32.xlu0 %v1751, 64
    %v2254 = vpop.permute.xlu0 %2253
    %v2256 = vsel %vm73, %v2251, %v2254
    %v2258 = vsel %vm184, %v2256, 0
    %2260 = vmatpush.msra.mxu0 0.0
    %2261 = vmatpush.msra.mxu0 0.0
    %2262 = vmatpush.msra.mxu0 0.0
    %2263 = vmatpush.msra.mxu0 0.0
    %2264 = vmatpush.msra.mxu0 0.0
    %2265 = vmatpush.msra.mxu0 0.0
    %2266 = vmatpush.msra.mxu0 0.0
    %2267 = vmatpush.msra.mxu0 0.0
    %2268 = vmatpush.msra.mxu0 %v1193
    %2269 = vmatpush.msra.mxu0 %v1192
    %2270 = vmatpush.msra.mxu0 %v1191
    %2271 = vmatpush.msra.mxu0 %v1190
    %2272 = vmatpush.msra.mxu0 %v1189
    %2273 = vmatpush.msra.mxu0 %v1188
    %2274 = vmatpush.msra.mxu0 %v1187
    %2275 = vmatpush.msra.mxu0 %v1186
    %2276 = vmatmul.f32.gmra.mxu0 %v2258
    %v2277 = vpop.f32.mrf.mxu0
    %v2278 = vadd.f32 %v1197, %v2277
    %2279 = vdwg.mxu0
    %v2280 = vxor.u32 %v2278, 2147483648
    %v2281 = vmul.f32 %v2280, 1.442695
    %v2282 = vpow.pop %v2281
    %v2283 = vadd.f32 %v2282, 1.0
    %v2284 = vrcp.pop %v2283
    %v2285 = vmul.f32 %v2283, %v2284
    %v2286 = vsub.f32 1.0, %v2285
    %v2287 = vmul.f32 %v2284, %v2286
    %v2288 = vadd.f32 %v2284, %v2287
    %vm2289 = vweird.f32 %v2283
    %vm2290 = vweird.f32 %v2284
    %vm2291 = vmor %vm2289, %vm2290
    %v2292 = vsel %vm2291, %v2284, %v2288
    %v2293 = vand.u32 2147483647, %v2283
    %vm2294 = vcmp.eq.f32.partialorder %v2293, 8.507059e+37
    %v2295 = vand.u32 %v2283, 2147483648
    %v2296 = vor.u32 1.1754944e-38, %v2295
    %v2297 = vsel %vm2294, %v2296, %v2292
    %v2298 = vmul.f32 1.0, %v2297
    %v2299 = vmul.f32 %v2298, 2.0
    %v2300 = vsub.f32 %v2299, 1.0
    %v2301 = vmul.f32 %v2298, %v1745
    %2303 = vrot.lane.b32.xlu0 %v2300, 64
    %v2304 = vpop.permute.xlu0 %2303
    %v2306 = vmul.f32 %v2298, %v2304
    %2308 = vrot.lane.b32.xlu0 %v2306, 32
    %v2309 = vpop.permute.xlu0 %2308
    %v2311 = vadd.f32 %v2301, %v2309
    %v2312 = vtanh.pop %v2311
    %2314 = vrot.lane.b32.xlu0 %v2312, 64
    %v2315 = vpop.permute.xlu0 %2314
    %v2317 = vmul.f32 %v2298, %v2315
    %2319 = vrot.lane.b32.xlu0 %v1889, 32
    %v2320 = vpop.permute.xlu0 %2319
    %2322 = vrot.lane.b32.xlu0 %v1820, 64
    %v2323 = vpop.permute.xlu0 %2322
    %v2325 = vsel %vm73, %v2320, %v2323
    %v2327 = vsel %vm184, %v2325, 0
    %2329 = vmatpush.msra.mxu0 0.0
    %2330 = vmatpush.msra.mxu0 0.0
    %2331 = vmatpush.msra.mxu0 0.0
    %2332 = vmatpush.msra.mxu0 0.0
    %2333 = vmatpush.msra.mxu0 0.0
    %2334 = vmatpush.msra.mxu0 0.0
    %2335 = vmatpush.msra.mxu0 0.0
    %2336 = vmatpush.msra.mxu0 0.0
    %2337 = vmatpush.msra.mxu0 %v837
    %2338 = vmatpush.msra.mxu0 %v836
    %2339 = vmatpush.msra.mxu0 %v835
    %2340 = vmatpush.msra.mxu0 %v834
    %2341 = vmatpush.msra.mxu0 %v833
    %2342 = vmatpush.msra.mxu0 %v832
    %2343 = vmatpush.msra.mxu0 %v831
    %2344 = vmatpush.msra.mxu0 %v830
    %2345 = vmatmul.f32.gmra.mxu0 %v2327
    %v2346 = vpop.f32.mrf.mxu0
    %v2347 = vadd.f32 %v841, %v2346
    %2348 = vdwg.mxu0
    %v2349 = vxor.u32 %v2347, 2147483648
    %v2350 = vmul.f32 %v2349, 1.442695
    %v2351 = vpow.pop %v2350
    %v2352 = vadd.f32 %v2351, 1.0
    %v2353 = vrcp.pop %v2352
    %v2354 = vmul.f32 %v2352, %v2353
    %v2355 = vsub.f32 1.0, %v2354
    %v2356 = vmul.f32 %v2353, %v2355
    %v2357 = vadd.f32 %v2353, %v2356
    %vm2358 = vweird.f32 %v2352
    %vm2359 = vweird.f32 %v2353
    %vm2360 = vmor %vm2358, %vm2359
    %v2361 = vsel %vm2360, %v2353, %v2357
    %v2362 = vand.u32 2147483647, %v2352
    %vm2363 = vcmp.eq.f32.partialorder %v2362, 8.507059e+37
    %v2364 = vand.u32 %v2352, 2147483648
    %v2365 = vor.u32 1.1754944e-38, %v2364
    %v2366 = vsel %vm2363, %v2365, %v2361
    %v2367 = vmul.f32 1.0, %v2366
    %v2368 = vmul.f32 %v2367, 2.0
    %v2369 = vsub.f32 %v2368, 1.0
    %v2370 = vmul.f32 %v2367, %v1814
    %2372 = vrot.lane.b32.xlu0 %v2369, 64
    %v2373 = vpop.permute.xlu0 %2372
    %v2375 = vmul.f32 %v2367, %v2373
    %2377 = vrot.lane.b32.xlu0 %v2375, 32
    %v2378 = vpop.permute.xlu0 %2377
    %v2380 = vadd.f32 %v2370, %v2378
    %v2381 = vtanh.pop %v2380
    %2383 = vrot.lane.b32.xlu0 %v2381, 64
    %v2384 = vpop.permute.xlu0 %2383
    %v2386 = vmul.f32 %v2367, %v2384
    %2388 = vrot.lane.b32.xlu0 %v1958, 32
    %v2389 = vpop.permute.xlu0 %2388
    %2391 = vrot.lane.b32.xlu0 %v1889, 64
    %v2392 = vpop.permute.xlu0 %2391
    %v2394 = vsel %vm73, %v2389, %v2392
    %v2396 = vsel %vm184, %v2394, 0
    %2398 = vmatpush.msra.mxu0 0.0
    %2399 = vmatpush.msra.mxu0 0.0
    %2400 = vmatpush.msra.mxu0 0.0
    %2401 = vmatpush.msra.mxu0 0.0
    %2402 = vmatpush.msra.mxu0 0.0
    %2403 = vmatpush.msra.mxu0 0.0
    %2404 = vmatpush.msra.mxu0 0.0
    %2405 = vmatpush.msra.mxu0 0.0
    %2406 = vmatpush.msra.mxu0 %v547
    %2407 = vmatpush.msra.mxu0 %v546
    %2408 = vmatpush.msra.mxu0 %v545
    %2409 = vmatpush.msra.mxu0 %v544
    %2410 = vmatpush.msra.mxu0 %v543
    %2411 = vmatpush.msra.mxu0 %v542
    %2412 = vmatpush.msra.mxu0 %v541
    %2413 = vmatpush.msra.mxu0 %v540
    %2414 = vmatmul.f32.gmra.mxu0 %v2396
    %v2415 = vpop.f32.mrf.mxu0
    %v2416 = vadd.f32 %v551, %v2415
    %2417 = vdwg.mxu0
    %v2418 = vxor.u32 %v2416, 2147483648
    %v2419 = vmul.f32 %v2418, 1.442695
    %v2420 = vpow.pop %v2419
    %v2421 = vadd.f32 %v2420, 1.0
    %v2422 = vrcp.pop %v2421
    %v2423 = vmul.f32 %v2421, %v2422
    %v2424 = vsub.f32 1.0, %v2423
    %v2425 = vmul.f32 %v2422, %v2424
    %v2426 = vadd.f32 %v2422, %v2425
    %vm2427 = vweird.f32 %v2421
    %vm2428 = vweird.f32 %v2422
    %vm2429 = vmor %vm2427, %vm2428
    %v2430 = vsel %vm2429, %v2422, %v2426
    %v2431 = vand.u32 2147483647, %v2421
    %vm2432 = vcmp.eq.f32.partialorder %v2431, 8.507059e+37
    %v2433 = vand.u32 %v2421, 2147483648
    %v2434 = vor.u32 1.1754944e-38, %v2433
    %v2435 = vsel %vm2432, %v2434, %v2430
    %v2436 = vmul.f32 1.0, %v2435
    %v2437 = vmul.f32 %v2436, 2.0
    %v2438 = vsub.f32 %v2437, 1.0
    %v2439 = vmul.f32 %v2436, %v1883
    %2441 = vrot.lane.b32.xlu0 %v2438, 64
    %v2442 = vpop.permute.xlu0 %2441
    %v2444 = vmul.f32 %v2436, %v2442
    %2446 = vrot.lane.b32.xlu0 %v2444, 32
    %v2447 = vpop.permute.xlu0 %2446
    %v2449 = vadd.f32 %v2439, %v2447
    %v2450 = vtanh.pop %v2449
    %2452 = vrot.lane.b32.xlu0 %v2450, 64
    %v2453 = vpop.permute.xlu0 %2452
    %v2455 = vmul.f32 %v2436, %v2453
    %2457 = vrot.lane.b32.xlu0 %v2029, 32
    %v2458 = vpop.permute.xlu0 %2457
    %2460 = vrot.lane.b32.xlu0 %v1958, 64
    %v2461 = vpop.permute.xlu0 %2460
    %v2463 = vsel %vm73, %v2458, %v2461
    %v2465 = vsel %vm184, %v2463, 0
    %2467 = vmatpush.msra.mxu0 0.0
    %2468 = vmatpush.msra.mxu0 0.0
    %2469 = vmatpush.msra.mxu0 0.0
    %2470 = vmatpush.msra.mxu0 0.0
    %2471 = vmatpush.msra.mxu0 0.0
    %2472 = vmatpush.msra.mxu0 0.0
    %2473 = vmatpush.msra.mxu0 0.0
    %2474 = vmatpush.msra.mxu0 0.0
    %2475 = vmatpush.msra.mxu0 %v326
    %2476 = vmatpush.msra.mxu0 %v325
    %2477 = vmatpush.msra.mxu0 %v324
    %2478 = vmatpush.msra.mxu0 %v323
    %2479 = vmatpush.msra.mxu0 %v322
    %2480 = vmatpush.msra.mxu0 %v321
    %2481 = vmatpush.msra.mxu0 %v320
    %2482 = vmatpush.msra.mxu0 %v319
    %2483 = vmatmul.f32.gmra.mxu0 %v2465
    %v2484 = vpop.f32.mrf.mxu0
    %v2485 = vadd.f32 %v330, %v2484
    %2486 = vdwg.mxu0
    %v2487 = vxor.u32 %v2485, 2147483648
    %v2488 = vmul.f32 %v2487, 1.442695
    %v2489 = vpow.pop %v2488
    %v2490 = vadd.f32 %v2489, 1.0
    %v2491 = vrcp.pop %v2490
    %v2492 = vmul.f32 %v2490, %v2491
    %v2493 = vsub.f32 1.0, %v2492
    %v2494 = vmul.f32 %v2491, %v2493
    %v2495 = vadd.f32 %v2491, %v2494
    %vm2496 = vweird.f32 %v2490
    %vm2497 = vweird.f32 %v2491
    %vm2498 = vmor %vm2496, %vm2497
    %v2499 = vsel %vm2498, %v2491, %v2495
    %v2500 = vand.u32 2147483647, %v2490
    %vm2501 = vcmp.eq.f32.partialorder %v2500, 8.507059e+37
    %v2502 = vand.u32 %v2490, 2147483648
    %v2503 = vor.u32 1.1754944e-38, %v2502
    %v2504 = vsel %vm2501, %v2503, %v2499
    %v2505 = vmul.f32 1.0, %v2504
    %v2506 = vmul.f32 %v2505, 2.0
    %v2507 = vsub.f32 %v2506, 1.0
    %v2508 = vmul.f32 %v2505, %v1952
    %2510 = vrot.lane.b32.xlu0 %v2507, 64
    %v2511 = vpop.permute.xlu0 %2510
    %v2513 = vmul.f32 %v2505, %v2511
    %2515 = vrot.lane.b32.xlu0 %v2513, 32
    %v2516 = vpop.permute.xlu0 %2515
    %v2518 = vadd.f32 %v2508, %v2516
    %v2519 = vtanh.pop %v2518
    %2521 = vrot.lane.b32.xlu0 %v2519, 64
    %v2522 = vpop.permute.xlu0 %2521
    %v2524 = vmul.f32 %v2505, %v2522
    %2526 = vrot.lane.b32.xlu0 %v2099, 32
    %v2527 = vpop.permute.xlu0 %2526
    %v2529 = vrot.slane %v2029, 4
    %2530 = vrot.lane.b32.xlu0 %v2529, 64
    %v2531 = vpop.permute.xlu0 %2530
    %v2533 = vsel %vm73, %v2527, %v2531
    %v2535 = vrot.slane %v2533, 4
    %v2536 = vsel %vm184, %v2535, 0
    %2538 = vmatpush.msra.mxu0 0.0
    %2539 = vmatpush.msra.mxu0 0.0
    %2540 = vmatpush.msra.mxu0 0.0
    %2541 = vmatpush.msra.mxu0 0.0
    %2542 = vmatpush.msra.mxu0 0.0
    %2543 = vmatpush.msra.mxu0 0.0
    %2544 = vmatpush.msra.mxu0 0.0
    %2545 = vmatpush.msra.mxu0 0.0
    %2546 = vmatpush.msra.mxu0 %v178
    %2547 = vmatpush.msra.mxu0 %v177
    %2548 = vmatpush.msra.mxu0 %v176
    %2549 = vmatpush.msra.mxu0 %v175
    %2550 = vmatpush.msra.mxu0 %v174
    %2551 = vmatpush.msra.mxu0 %v173
    %2552 = vmatpush.msra.mxu0 %v172
    %2553 = vmatpush.msra.mxu0 %v171
    %2554 = vmatmul.f32.gmra.mxu0 %v2536
    %v2555 = vpop.f32.mrf.mxu0
    %v2556 = vadd.f32 %v182, %v2555
    %2557 = vdwg.mxu0
    %v2558 = vxor.u32 %v2556, 2147483648
    %v2559 = vmul.f32 %v2558, 1.442695
    %v2560 = vpow.pop %v2559
    %v2561 = vadd.f32 %v2560, 1.0
    %v2562 = vrcp.pop %v2561
    %v2563 = vmul.f32 %v2561, %v2562
    %v2564 = vsub.f32 1.0, %v2563
    %v2565 = vmul.f32 %v2562, %v2564
    %v2566 = vadd.f32 %v2562, %v2565
    %vm2567 = vweird.f32 %v2561
    %vm2568 = vweird.f32 %v2562
    %vm2569 = vmor %vm2567, %vm2568
    %v2570 = vsel %vm2569, %v2562, %v2566
    %v2571 = vand.u32 2147483647, %v2561
    %vm2572 = vcmp.eq.f32.partialorder %v2571, 8.507059e+37
    %v2573 = vand.u32 %v2561, 2147483648
    %v2574 = vor.u32 1.1754944e-38, %v2573
    %v2575 = vsel %vm2572, %v2574, %v2570
    %v2576 = vmul.f32 1.0, %v2575
    %v2577 = vmul.f32 %v2576, 2.0
    %v2578 = vsub.f32 %v2577, 1.0
    %v2579 = vmul.f32 %v2576, %v2023
    %2581 = vrot.lane.b32.xlu0 %v2578, 64
    %v2582 = vpop.permute.xlu0 %2581
    %v2584 = vmul.f32 %v2576, %v2582
    %2586 = vrot.lane.b32.xlu0 %v2584, 32
    %v2587 = vpop.permute.xlu0 %2586
    %v2589 = vadd.f32 %v2579, %v2587
    %v2590 = vtanh.pop %v2589
    %2592 = vrot.lane.b32.xlu0 %v2590, 64
    %v2593 = vpop.permute.xlu0 %2592
    %v2595 = vmul.f32 %v2576, %v2593
    %v2596 = vrot.slane %v2099, 4
    %2597 = vrot.lane.b32.xlu0 %v2596, 32
    %v2598 = vpop.permute.xlu0 %2597
    %v2599 = vsel %vm73, %v2598, 0
    %2601 = vmatpush.msra.mxu0 0.0
    %2602 = vmatpush.msra.mxu0 0.0
    %2603 = vmatpush.msra.mxu0 0.0
    %2604 = vmatpush.msra.mxu0 0.0
    %2605 = vmatpush.msra.mxu0 0.0
    %2606 = vmatpush.msra.mxu0 0.0
    %2607 = vmatpush.msra.mxu0 0.0
    %2608 = vmatpush.msra.mxu0 0.0
    %2609 = vmatpush.msra.mxu0 0.0
    %2610 = vmatpush.msra.mxu0 0.0
    %2611 = vmatpush.msra.mxu0 0.0
    %2612 = vmatpush.msra.mxu0 0.0
    %2613 = vmatpush.msra.mxu0 %v66
    %2614 = vmatpush.msra.mxu0 %v65
    %2615 = vmatpush.msra.mxu0 %v64
    %2616 = vmatpush.msra.mxu0 %v63
    %2617 = vmatmul.f32.gmra.mxu0 %v2599
    %v2618 = vpop.f32.mrf.mxu0
    %v2619 = vadd.f32 0.0, %v2618
    %2620 = vdwg.mxu0
    %v2622 = vrot.slane %v2619, 2
    %v2624 = vadd.f32 %v101, %v2622
    %v2625 = vxor.u32 %v2624, 2147483648
    %v2626 = vmul.f32 %v2625, 1.442695
    %v2627 = vpow.pop %v2626
    %v2628 = vadd.f32 %v2627, 1.0
    %v2629 = vrcp.pop %v2628
    %v2630 = vmul.f32 %v2628, %v2629
    %v2631 = vsub.f32 1.0, %v2630
    %v2632 = vmul.f32 %v2629, %v2631
    %v2633 = vadd.f32 %v2629, %v2632
    %vm2634 = vweird.f32 %v2628
    %vm2635 = vweird.f32 %v2629
    %vm2636 = vmor %vm2634, %vm2635
    %v2637 = vsel %vm2636, %v2629, %v2633
    %v2638 = vand.u32 2147483647, %v2628
    %vm2639 = vcmp.eq.f32.partialorder %v2638, 8.507059e+37
    %v2640 = vand.u32 %v2628, 2147483648
    %v2641 = vor.u32 1.1754944e-38, %v2640
    %v2642 = vsel %vm2639, %v2641, %v2637
    %v2643 = vmul.f32 1.0, %v2642
    %v2644 = vmul.f32 %v2643, 2.0
    %v2645 = vsub.f32 %v2644, 1.0
    %v2647 = vrot.slane %v2093, 6
    %v2649 = vmul.f32 %v2643, %v2647
    %2651 = vrot.lane.b32.xlu0 %v2645, 64
    %v2652 = vpop.permute.xlu0 %2651
    %v2654 = vmul.f32 %v2643, %v2652
    %2656 = vrot.lane.b32.xlu0 %v2654, 32
    %v2657 = vpop.permute.xlu0 %2656
    %v2659 = vadd.f32 %v2649, %v2657
    %v2660 = vtanh.pop %v2659
    %2662 = vrot.lane.b32.xlu0 %v2660, 64
    %v2663 = vpop.permute.xlu0 %2662
    %v2665 = vmul.f32 %v2643, %v2663
    %2667 = vrot.lane.b32.xlu0 %v2179, 32
    %v2668 = vpop.permute.xlu0 %2667
    %v2670 = vsel %vm73, %v2668, 0.0
    %s2671 = scalar_lea.vmem [#allocation2], 512
    %v2672 = vld [vmem:[%s2671] sm:$0xff]
    %v2673 = vld [vmem:[%s2671 + $0x8] sm:$0xff]
    %v2674 = vld [vmem:[%s2671 + $0x10] sm:$0xff]
    %v2675 = vld [vmem:[%s2671 + $0x18] sm:$0xff]
    %v2676 = vld [vmem:[%s2671 + $0x20] sm:$0xff]
    %v2677 = vld [vmem:[%s2671 + $0x28] sm:$0xff]
    %v2678 = vld [vmem:[%s2671 + $0x30] sm:$0xff]
    %v2679 = vld [vmem:[%s2671 + $0x38] sm:$0xff]
    %s2680 = scalar_lea.vmem %s2, 8
    %v2681 = vld [vmem:[%s2680] sm:$0x1]
    %v2683 = vperm.slane %v2681, 0
    %v2686 = vsel %vm184, %v2670, 0
    %2688 = vmatpush.msra.mxu0 0.0
    %2689 = vmatpush.msra.mxu0 0.0
    %2690 = vmatpush.msra.mxu0 0.0
    %2691 = vmatpush.msra.mxu0 0.0
    %2692 = vmatpush.msra.mxu0 0.0
    %2693 = vmatpush.msra.mxu0 0.0
    %2694 = vmatpush.msra.mxu0 0.0
    %2695 = vmatpush.msra.mxu0 0.0
    %2696 = vmatpush.msra.mxu0 %v2679
    %2697 = vmatpush.msra.mxu0 %v2678
    %2698 = vmatpush.msra.mxu0 %v2677
    %2699 = vmatpush.msra.mxu0 %v2676
    %2700 = vmatpush.msra.mxu0 %v2675
    %2701 = vmatpush.msra.mxu0 %v2674
    %2702 = vmatpush.msra.mxu0 %v2673
    %2703 = vmatpush.msra.mxu0 %v2672
    %2704 = vmatmul.f32.gmra.mxu0 %v2686
    %v2705 = vpop.f32.mrf.mxu0
    %v2706 = vadd.f32 %v2683, %v2705
    %2707 = vdwg.mxu0
    %v2708 = vxor.u32 %v2706, 2147483648
    %v2709 = vmul.f32 %v2708, 1.442695
    %v2710 = vpow.pop %v2709
    %v2711 = vadd.f32 %v2710, 1.0
    %v2712 = vrcp.pop %v2711
    %v2713 = vmul.f32 %v2711, %v2712
    %v2714 = vsub.f32 1.0, %v2713
    %v2715 = vmul.f32 %v2712, %v2714
    %v2716 = vadd.f32 %v2712, %v2715
    %vm2717 = vweird.f32 %v2711
    %vm2718 = vweird.f32 %v2712
    %vm2719 = vmor %vm2717, %vm2718
    %v2720 = vsel %vm2719, %v2712, %v2716
    %v2721 = vand.u32 2147483647, %v2711
    %vm2722 = vcmp.eq.f32.partialorder %v2721, 8.507059e+37
    %v2723 = vand.u32 %v2711, 2147483648
    %v2724 = vor.u32 1.1754944e-38, %v2723
    %v2725 = vsel %vm2722, %v2724, %v2720
    %v2726 = vmul.f32 1.0, %v2725
    %v2727 = vmul.f32 %v2726, 2.0
    %v2728 = vsub.f32 %v2727, 1.0
    %v2729 = vmul.f32 %v2726, 0.0
    %2731 = vrot.lane.b32.xlu0 %v2728, 64
    %v2732 = vpop.permute.xlu0 %2731
    %v2734 = vmul.f32 %v2726, %v2732
    %2736 = vrot.lane.b32.xlu0 %v2734, 32
    %v2737 = vpop.permute.xlu0 %2736
    %v2739 = vadd.f32 %v2729, %v2737
    %v2740 = vtanh.pop %v2739
    %2742 = vrot.lane.b32.xlu0 %v2740, 64
    %v2743 = vpop.permute.xlu0 %2742
    %v2745 = vmul.f32 %v2726, %v2743
    %2747 = vrot.lane.b32.xlu0 %v2248, 32
    %v2748 = vpop.permute.xlu0 %2747
    %2750 = vrot.lane.b32.xlu0 %v2179, 64
    %v2751 = vpop.permute.xlu0 %2750
    %v2753 = vsel %vm73, %v2748, %v2751
    %v2755 = vsel %vm184, %v2753, 0
    %2757 = vmatpush.msra.mxu0 0.0
    %2758 = vmatpush.msra.mxu0 0.0
    %2759 = vmatpush.msra.mxu0 0.0
    %2760 = vmatpush.msra.mxu0 0.0
    %2761 = vmatpush.msra.mxu0 0.0
    %2762 = vmatpush.msra.mxu0 0.0
    %2763 = vmatpush.msra.mxu0 0.0
    %2764 = vmatpush.msra.mxu0 0.0
    %2765 = vmatpush.msra.mxu0 %v2113
    %2766 = vmatpush.msra.mxu0 %v2112
    %2767 = vmatpush.msra.mxu0 %v2111
    %2768 = vmatpush.msra.mxu0 %v2110
    %2769 = vmatpush.msra.mxu0 %v2109
    %2770 = vmatpush.msra.mxu0 %v2108
    %2771 = vmatpush.msra.mxu0 %v2107
    %2772 = vmatpush.msra.mxu0 %v2106
    %2773 = vmatmul.f32.gmra.mxu0 %v2755
    %v2774 = vpop.f32.mrf.mxu0
    %v2775 = vadd.f32 %v2117, %v2774
    %2776 = vdwg.mxu0
    %v2777 = vxor.u32 %v2775, 2147483648
    %v2778 = vmul.f32 %v2777, 1.442695
    %v2779 = vpow.pop %v2778
    %v2780 = vadd.f32 %v2779, 1.0
    %v2781 = vrcp.pop %v2780
    %v2782 = vmul.f32 %v2780, %v2781
    %v2783 = vsub.f32 1.0, %v2782
    %v2784 = vmul.f32 %v2781, %v2783
    %v2785 = vadd.f32 %v2781, %v2784
    %vm2786 = vweird.f32 %v2780
    %vm2787 = vweird.f32 %v2781
    %vm2788 = vmor %vm2786, %vm2787
    %v2789 = vsel %vm2788, %v2781, %v2785
    %v2790 = vand.u32 2147483647, %v2780
    %vm2791 = vcmp.eq.f32.partialorder %v2790, 8.507059e+37
    %v2792 = vand.u32 %v2780, 2147483648
    %v2793 = vor.u32 1.1754944e-38, %v2792
    %v2794 = vsel %vm2791, %v2793, %v2789
    %v2795 = vmul.f32 1.0, %v2794
    %v2796 = vmul.f32 %v2795, 2.0
    %v2797 = vsub.f32 %v2796, 1.0
    %v2798 = vmul.f32 %v2795, %v2173
    %2800 = vrot.lane.b32.xlu0 %v2797, 64
    %v2801 = vpop.permute.xlu0 %2800
    %v2803 = vmul.f32 %v2795, %v2801
    %2805 = vrot.lane.b32.xlu0 %v2803, 32
    %v2806 = vpop.permute.xlu0 %2805
    %v2808 = vadd.f32 %v2798, %v2806
    %v2809 = vtanh.pop %v2808
    %2811 = vrot.lane.b32.xlu0 %v2809, 64
    %v2812 = vpop.permute.xlu0 %2811
    %v2814 = vmul.f32 %v2795, %v2812
    %2816 = vrot.lane.b32.xlu0 %v2317, 32
    %v2817 = vpop.permute.xlu0 %2816
    %2819 = vrot.lane.b32.xlu0 %v2248, 64
    %v2820 = vpop.permute.xlu0 %2819
    %v2822 = vsel %vm73, %v2817, %v2820
    %v2824 = vsel %vm184, %v2822, 0
    %2826 = vmatpush.msra.mxu0 0.0
    %2827 = vmatpush.msra.mxu0 0.0
    %2828 = vmatpush.msra.mxu0 0.0
    %2829 = vmatpush.msra.mxu0 0.0
    %2830 = vmatpush.msra.mxu0 0.0
    %2831 = vmatpush.msra.mxu0 0.0
    %2832 = vmatpush.msra.mxu0 0.0
    %2833 = vmatpush.msra.mxu0 0.0
    %2834 = vmatpush.msra.mxu0 %v1616
    %2835 = vmatpush.msra.mxu0 %v1615
    %2836 = vmatpush.msra.mxu0 %v1614
    %2837 = vmatpush.msra.mxu0 %v1613
    %2838 = vmatpush.msra.mxu0 %v1612
    %2839 = vmatpush.msra.mxu0 %v1611
    %2840 = vmatpush.msra.mxu0 %v1610
    %2841 = vmatpush.msra.mxu0 %v1609
    %2842 = vmatmul.f32.gmra.mxu0 %v2824
    %v2843 = vpop.f32.mrf.mxu0
    %v2844 = vadd.f32 %v1620, %v2843
    %2845 = vdwg.mxu0
    %v2846 = vxor.u32 %v2844, 2147483648
    %v2847 = vmul.f32 %v2846, 1.442695
    %v2848 = vpow.pop %v2847
    %v2849 = vadd.f32 %v2848, 1.0
    %v2850 = vrcp.pop %v2849
    %v2851 = vmul.f32 %v2849, %v2850
    %v2852 = vsub.f32 1.0, %v2851
    %v2853 = vmul.f32 %v2850, %v2852
    %v2854 = vadd.f32 %v2850, %v2853
    %vm2855 = vweird.f32 %v2849
    %vm2856 = vweird.f32 %v2850
    %vm2857 = vmor %vm2855, %vm2856
    %v2858 = vsel %vm2857, %v2850, %v2854
    %v2859 = vand.u32 2147483647, %v2849
    %vm2860 = vcmp.eq.f32.partialorder %v2859, 8.507059e+37
    %v2861 = vand.u32 %v2849, 2147483648
    %v2862 = vor.u32 1.1754944e-38, %v2861
    %v2863 = vsel %vm2860, %v2862, %v2858
    %v2864 = vmul.f32 1.0, %v2863
    %v2865 = vmul.f32 %v2864, 2.0
    %v2866 = vsub.f32 %v2865, 1.0
    %v2867 = vmul.f32 %v2864, %v2242
    %2869 = vrot.lane.b32.xlu0 %v2866, 64
    %v2870 = vpop.permute.xlu0 %2869
    %v2872 = vmul.f32 %v2864, %v2870
    %2874 = vrot.lane.b32.xlu0 %v2872, 32
    %v2875 = vpop.permute.xlu0 %2874
    %v2877 = vadd.f32 %v2867, %v2875
    %v2878 = vtanh.pop %v2877
    %2880 = vrot.lane.b32.xlu0 %v2878, 64
    %v2881 = vpop.permute.xlu0 %2880
    %v2883 = vmul.f32 %v2864, %v2881
    %2885 = vrot.lane.b32.xlu0 %v2386, 32
    %v2886 = vpop.permute.xlu0 %2885
    %2888 = vrot.lane.b32.xlu0 %v2317, 64
    %v2889 = vpop.permute.xlu0 %2888
    %v2891 = vsel %vm73, %v2886, %v2889
    %v2893 = vsel %vm184, %v2891, 0
    %2895 = vmatpush.msra.mxu0 0.0
    %2896 = vmatpush.msra.mxu0 0.0
    %2897 = vmatpush.msra.mxu0 0.0
    %2898 = vmatpush.msra.mxu0 0.0
    %2899 = vmatpush.msra.mxu0 0.0
    %2900 = vmatpush.msra.mxu0 0.0
    %2901 = vmatpush.msra.mxu0 0.0
    %2902 = vmatpush.msra.mxu0 0.0
    %2903 = vmatpush.msra.mxu0 %v1193
    %2904 = vmatpush.msra.mxu0 %v1192
    %2905 = vmatpush.msra.mxu0 %v1191
    %2906 = vmatpush.msra.mxu0 %v1190
    %2907 = vmatpush.msra.mxu0 %v1189
    %2908 = vmatpush.msra.mxu0 %v1188
    %2909 = vmatpush.msra.mxu0 %v1187
    %2910 = vmatpush.msra.mxu0 %v1186
    %2911 = vmatmul.f32.gmra.mxu0 %v2893
    %v2912 = vpop.f32.mrf.mxu0
    %v2913 = vadd.f32 %v1197, %v2912
    %2914 = vdwg.mxu0
    %v2915 = vxor.u32 %v2913, 2147483648
    %v2916 = vmul.f32 %v2915, 1.442695
    %v2917 = vpow.pop %v2916
    %v2918 = vadd.f32 %v2917, 1.0
    %v2919 = vrcp.pop %v2918
    %v2920 = vmul.f32 %v2918, %v2919
    %v2921 = vsub.f32 1.0, %v2920
    %v2922 = vmul.f32 %v2919, %v2921
    %v2923 = vadd.f32 %v2919, %v2922
    %vm2924 = vweird.f32 %v2918
    %vm2925 = vweird.f32 %v2919
    %vm2926 = vmor %vm2924, %vm2925
    %v2927 = vsel %vm2926, %v2919, %v2923
    %v2928 = vand.u32 2147483647, %v2918
    %vm2929 = vcmp.eq.f32.partialorder %v2928, 8.507059e+37
    %v2930 = vand.u32 %v2918, 2147483648
    %v2931 = vor.u32 1.1754944e-38, %v2930
    %v2932 = vsel %vm2929, %v2931, %v2927
    %v2933 = vmul.f32 1.0, %v2932
    %v2934 = vmul.f32 %v2933, 2.0
    %v2935 = vsub.f32 %v2934, 1.0
    %v2936 = vmul.f32 %v2933, %v2311
    %2938 = vrot.lane.b32.xlu0 %v2935, 64
    %v2939 = vpop.permute.xlu0 %2938
    %v2941 = vmul.f32 %v2933, %v2939
    %2943 = vrot.lane.b32.xlu0 %v2941, 32
    %v2944 = vpop.permute.xlu0 %2943
    %v2946 = vadd.f32 %v2936, %v2944
    %v2947 = vtanh.pop %v2946
    %2949 = vrot.lane.b32.xlu0 %v2947, 64
    %v2950 = vpop.permute.xlu0 %2949
    %v2952 = vmul.f32 %v2933, %v2950
    %2954 = vrot.lane.b32.xlu0 %v2455, 32
    %v2955 = vpop.permute.xlu0 %2954
    %2957 = vrot.lane.b32.xlu0 %v2386, 64
    %v2958 = vpop.permute.xlu0 %2957
    %v2960 = vsel %vm73, %v2955, %v2958
    %v2962 = vsel %vm184, %v2960, 0
    %2964 = vmatpush.msra.mxu0 0.0
    %2965 = vmatpush.msra.mxu0 0.0
    %2966 = vmatpush.msra.mxu0 0.0
    %2967 = vmatpush.msra.mxu0 0.0
    %2968 = vmatpush.msra.mxu0 0.0
    %2969 = vmatpush.msra.mxu0 0.0
    %2970 = vmatpush.msra.mxu0 0.0
    %2971 = vmatpush.msra.mxu0 0.0
    %2972 = vmatpush.msra.mxu0 %v837
    %2973 = vmatpush.msra.mxu0 %v836
    %2974 = vmatpush.msra.mxu0 %v835
    %2975 = vmatpush.msra.mxu0 %v834
    %2976 = vmatpush.msra.mxu0 %v833
    %2977 = vmatpush.msra.mxu0 %v832
    %2978 = vmatpush.msra.mxu0 %v831
    %2979 = vmatpush.msra.mxu0 %v830
    %2980 = vmatmul.f32.gmra.mxu0 %v2962
    %v2981 = vpop.f32.mrf.mxu0
    %v2982 = vadd.f32 %v841, %v2981
    %2983 = vdwg.mxu0
    %v2984 = vxor.u32 %v2982, 2147483648
    %v2985 = vmul.f32 %v2984, 1.442695
    %v2986 = vpow.pop %v2985
    %v2987 = vadd.f32 %v2986, 1.0
    %v2988 = vrcp.pop %v2987
    %v2989 = vmul.f32 %v2987, %v2988
    %v2990 = vsub.f32 1.0, %v2989
    %v2991 = vmul.f32 %v2988, %v2990
    %v2992 = vadd.f32 %v2988, %v2991
    %vm2993 = vweird.f32 %v2987
    %vm2994 = vweird.f32 %v2988
    %vm2995 = vmor %vm2993, %vm2994
    %v2996 = vsel %vm2995, %v2988, %v2992
    %v2997 = vand.u32 2147483647, %v2987
    %vm2998 = vcmp.eq.f32.partialorder %v2997, 8.507059e+37
    %v2999 = vand.u32 %v2987, 2147483648
    %v3000 = vor.u32 1.1754944e-38, %v2999
    %v3001 = vsel %vm2998, %v3000, %v2996
    %v3002 = vmul.f32 1.0, %v3001
    %v3003 = vmul.f32 %v3002, 2.0
    %v3004 = vsub.f32 %v3003, 1.0
    %v3005 = vmul.f32 %v3002, %v2380
    %3007 = vrot.lane.b32.xlu0 %v3004, 64
    %v3008 = vpop.permute.xlu0 %3007
    %v3010 = vmul.f32 %v3002, %v3008
    %3012 = vrot.lane.b32.xlu0 %v3010, 32
    %v3013 = vpop.permute.xlu0 %3012
    %v3015 = vadd.f32 %v3005, %v3013
    %v3016 = vtanh.pop %v3015
    %3018 = vrot.lane.b32.xlu0 %v3016, 64
    %v3019 = vpop.permute.xlu0 %3018
    %v3021 = vmul.f32 %v3002, %v3019
    %3023 = vrot.lane.b32.xlu0 %v2524, 32
    %v3024 = vpop.permute.xlu0 %3023
    %3026 = vrot.lane.b32.xlu0 %v2455, 64
    %v3027 = vpop.permute.xlu0 %3026
    %v3029 = vsel %vm73, %v3024, %v3027
    %v3031 = vsel %vm184, %v3029, 0
    %3033 = vmatpush.msra.mxu0 0.0
    %3034 = vmatpush.msra.mxu0 0.0
    %3035 = vmatpush.msra.mxu0 0.0
    %3036 = vmatpush.msra.mxu0 0.0
    %3037 = vmatpush.msra.mxu0 0.0
    %3038 = vmatpush.msra.mxu0 0.0
    %3039 = vmatpush.msra.mxu0 0.0
    %3040 = vmatpush.msra.mxu0 0.0
    %3041 = vmatpush.msra.mxu0 %v547
    %3042 = vmatpush.msra.mxu0 %v546
    %3043 = vmatpush.msra.mxu0 %v545
    %3044 = vmatpush.msra.mxu0 %v544
    %3045 = vmatpush.msra.mxu0 %v543
    %3046 = vmatpush.msra.mxu0 %v542
    %3047 = vmatpush.msra.mxu0 %v541
    %3048 = vmatpush.msra.mxu0 %v540
    %3049 = vmatmul.f32.gmra.mxu0 %v3031
    %v3050 = vpop.f32.mrf.mxu0
    %v3051 = vadd.f32 %v551, %v3050
    %3052 = vdwg.mxu0
    %v3053 = vxor.u32 %v3051, 2147483648
    %v3054 = vmul.f32 %v3053, 1.442695
    %v3055 = vpow.pop %v3054
    %v3056 = vadd.f32 %v3055, 1.0
    %v3057 = vrcp.pop %v3056
    %v3058 = vmul.f32 %v3056, %v3057
    %v3059 = vsub.f32 1.0, %v3058
    %v3060 = vmul.f32 %v3057, %v3059
    %v3061 = vadd.f32 %v3057, %v3060
    %vm3062 = vweird.f32 %v3056
    %vm3063 = vweird.f32 %v3057
    %vm3064 = vmor %vm3062, %vm3063
    %v3065 = vsel %vm3064, %v3057, %v3061
    %v3066 = vand.u32 2147483647, %v3056
    %vm3067 = vcmp.eq.f32.partialorder %v3066, 8.507059e+37
    %v3068 = vand.u32 %v3056, 2147483648
    %v3069 = vor.u32 1.1754944e-38, %v3068
    %v3070 = vsel %vm3067, %v3069, %v3065
    %v3071 = vmul.f32 1.0, %v3070
    %v3072 = vmul.f32 %v3071, 2.0
    %v3073 = vsub.f32 %v3072, 1.0
    %v3074 = vmul.f32 %v3071, %v2449
    %3076 = vrot.lane.b32.xlu0 %v3073, 64
    %v3077 = vpop.permute.xlu0 %3076
    %v3079 = vmul.f32 %v3071, %v3077
    %3081 = vrot.lane.b32.xlu0 %v3079, 32
    %v3082 = vpop.permute.xlu0 %3081
    %v3084 = vadd.f32 %v3074, %v3082
    %v3085 = vtanh.pop %v3084
    %3087 = vrot.lane.b32.xlu0 %v3085, 64
    %v3088 = vpop.permute.xlu0 %3087
    %v3090 = vmul.f32 %v3071, %v3088
    %3092 = vrot.lane.b32.xlu0 %v2595, 32
    %v3093 = vpop.permute.xlu0 %3092
    %3095 = vrot.lane.b32.xlu0 %v2524, 64
    %v3096 = vpop.permute.xlu0 %3095
    %v3098 = vsel %vm73, %v3093, %v3096
    %v3100 = vsel %vm184, %v3098, 0
    %3102 = vmatpush.msra.mxu0 0.0
    %3103 = vmatpush.msra.mxu0 0.0
    %3104 = vmatpush.msra.mxu0 0.0
    %3105 = vmatpush.msra.mxu0 0.0
    %3106 = vmatpush.msra.mxu0 0.0
    %3107 = vmatpush.msra.mxu0 0.0
    %3108 = vmatpush.msra.mxu0 0.0
    %3109 = vmatpush.msra.mxu0 0.0
    %3110 = vmatpush.msra.mxu0 %v326
    %3111 = vmatpush.msra.mxu0 %v325
    %3112 = vmatpush.msra.mxu0 %v324
    %3113 = vmatpush.msra.mxu0 %v323
    %3114 = vmatpush.msra.mxu0 %v322
    %3115 = vmatpush.msra.mxu0 %v321
    %3116 = vmatpush.msra.mxu0 %v320
    %3117 = vmatpush.msra.mxu0 %v319
    %3118 = vmatmul.f32.gmra.mxu0 %v3100
    %v3119 = vpop.f32.mrf.mxu0
    %v3120 = vadd.f32 %v330, %v3119
    %3121 = vdwg.mxu0
    %v3122 = vxor.u32 %v3120, 2147483648
    %v3123 = vmul.f32 %v3122, 1.442695
    %v3124 = vpow.pop %v3123
    %v3125 = vadd.f32 %v3124, 1.0
    %v3126 = vrcp.pop %v3125
    %v3127 = vmul.f32 %v3125, %v3126
    %v3128 = vsub.f32 1.0, %v3127
    %v3129 = vmul.f32 %v3126, %v3128
    %v3130 = vadd.f32 %v3126, %v3129
    %vm3131 = vweird.f32 %v3125
    %vm3132 = vweird.f32 %v3126
    %vm3133 = vmor %vm3131, %vm3132
    %v3134 = vsel %vm3133, %v3126, %v3130
    %v3135 = vand.u32 2147483647, %v3125
    %vm3136 = vcmp.eq.f32.partialorder %v3135, 8.507059e+37
    %v3137 = vand.u32 %v3125, 2147483648
    %v3138 = vor.u32 1.1754944e-38, %v3137
    %v3139 = vsel %vm3136, %v3138, %v3134
    %v3140 = vmul.f32 1.0, %v3139
    %v3141 = vmul.f32 %v3140, 2.0
    %v3142 = vsub.f32 %v3141, 1.0
    %v3143 = vmul.f32 %v3140, %v2518
    %3145 = vrot.lane.b32.xlu0 %v3142, 64
    %v3146 = vpop.permute.xlu0 %3145
    %v3148 = vmul.f32 %v3140, %v3146
    %3150 = vrot.lane.b32.xlu0 %v3148, 32
    %v3151 = vpop.permute.xlu0 %3150
    %v3153 = vadd.f32 %v3143, %v3151
    %v3154 = vtanh.pop %v3153
    %3156 = vrot.lane.b32.xlu0 %v3154, 64
    %v3157 = vpop.permute.xlu0 %3156
    %v3159 = vmul.f32 %v3140, %v3157
    %3161 = vrot.lane.b32.xlu0 %v2665, 32
    %v3162 = vpop.permute.xlu0 %3161
    %v3164 = vrot.slane %v2595, 2
    %3165 = vrot.lane.b32.xlu0 %v3164, 64
    %v3166 = vpop.permute.xlu0 %3165
    %v3168 = vsel %vm73, %v3162, %v3166
    %v3170 = vrot.slane %v3168, 6
    %v3171 = vsel %vm184, %v3170, 0
    %3173 = vmatpush.msra.mxu0 0.0
    %3174 = vmatpush.msra.mxu0 0.0
    %3175 = vmatpush.msra.mxu0 0.0
    %3176 = vmatpush.msra.mxu0 0.0
    %3177 = vmatpush.msra.mxu0 0.0
    %3178 = vmatpush.msra.mxu0 0.0
    %3179 = vmatpush.msra.mxu0 0.0
    %3180 = vmatpush.msra.mxu0 0.0
    %3181 = vmatpush.msra.mxu0 %v178
    %3182 = vmatpush.msra.mxu0 %v177
    %3183 = vmatpush.msra.mxu0 %v176
    %3184 = vmatpush.msra.mxu0 %v175
    %3185 = vmatpush.msra.mxu0 %v174
    %3186 = vmatpush.msra.mxu0 %v173
    %3187 = vmatpush.msra.mxu0 %v172
    %3188 = vmatpush.msra.mxu0 %v171
    %3189 = vmatmul.f32.gmra.mxu0 %v3171
    %v3190 = vpop.f32.mrf.mxu0
    %v3191 = vadd.f32 %v182, %v3190
    %3192 = vdwg.mxu0
    %v3193 = vxor.u32 %v3191, 2147483648
    %v3194 = vmul.f32 %v3193, 1.442695
    %v3195 = vpow.pop %v3194
    %v3196 = vadd.f32 %v3195, 1.0
    %v3197 = vrcp.pop %v3196
    %v3198 = vmul.f32 %v3196, %v3197
    %v3199 = vsub.f32 1.0, %v3198
    %v3200 = vmul.f32 %v3197, %v3199
    %v3201 = vadd.f32 %v3197, %v3200
    %vm3202 = vweird.f32 %v3196
    %vm3203 = vweird.f32 %v3197
    %vm3204 = vmor %vm3202, %vm3203
    %v3205 = vsel %vm3204, %v3197, %v3201
    %v3206 = vand.u32 2147483647, %v3196
    %vm3207 = vcmp.eq.f32.partialorder %v3206, 8.507059e+37
    %v3208 = vand.u32 %v3196, 2147483648
    %v3209 = vor.u32 1.1754944e-38, %v3208
    %v3210 = vsel %vm3207, %v3209, %v3205
    %v3211 = vmul.f32 1.0, %v3210
    %v3212 = vmul.f32 %v3211, 2.0
    %v3213 = vsub.f32 %v3212, 1.0
    %v3214 = vmul.f32 %v3211, %v2589
    %3216 = vrot.lane.b32.xlu0 %v3213, 64
    %v3217 = vpop.permute.xlu0 %3216
    %v3219 = vmul.f32 %v3211, %v3217
    %3221 = vrot.lane.b32.xlu0 %v3219, 32
    %v3222 = vpop.permute.xlu0 %3221
    %v3224 = vadd.f32 %v3214, %v3222
    %v3225 = vtanh.pop %v3224
    %3227 = vrot.lane.b32.xlu0 %v3225, 64
    %v3228 = vpop.permute.xlu0 %3227
    %v3230 = vmul.f32 %v3211, %v3228
    %3232 = vrot.lane.b32.xlu0 %v2745, 32
    %v3233 = vpop.permute.xlu0 %3232
    %v3235 = vsel %vm73, %v3233, 0.0
    %s3236 = scalar_lea.vmem [#allocation2], 576
    %v3237 = vld [vmem:[%s3236] sm:$0xff]
    %v3238 = vld [vmem:[%s3236 + $0x8] sm:$0xff]
    %v3239 = vld [vmem:[%s3236 + $0x10] sm:$0xff]
    %v3240 = vld [vmem:[%s3236 + $0x18] sm:$0xff]
    %v3241 = vld [vmem:[%s3236 + $0x20] sm:$0xff]
    %v3242 = vld [vmem:[%s3236 + $0x28] sm:$0xff]
    %v3243 = vld [vmem:[%s3236 + $0x30] sm:$0xff]
    %v3244 = vld [vmem:[%s3236 + $0x38] sm:$0xff]
    %s3245 = scalar_lea.vmem %s2, 9
    %v3246 = vld [vmem:[%s3245] sm:$0x1]
    %v3248 = vperm.slane %v3246, 0
    %v3251 = vsel %vm184, %v3235, 0
    %3253 = vmatpush.msra.mxu0 0.0
    %3254 = vmatpush.msra.mxu0 0.0
    %3255 = vmatpush.msra.mxu0 0.0
    %3256 = vmatpush.msra.mxu0 0.0
    %3257 = vmatpush.msra.mxu0 0.0
    %3258 = vmatpush.msra.mxu0 0.0
    %3259 = vmatpush.msra.mxu0 0.0
    %3260 = vmatpush.msra.mxu0 0.0
    %3261 = vmatpush.msra.mxu0 %v3244
    %3262 = vmatpush.msra.mxu0 %v3243
    %3263 = vmatpush.msra.mxu0 %v3242
    %3264 = vmatpush.msra.mxu0 %v3241
    %3265 = vmatpush.msra.mxu0 %v3240
    %3266 = vmatpush.msra.mxu0 %v3239
    %3267 = vmatpush.msra.mxu0 %v3238
    %3268 = vmatpush.msra.mxu0 %v3237
    %3269 = vmatmul.f32.gmra.mxu0 %v3251
    %v3270 = vpop.f32.mrf.mxu0
    %v3271 = vadd.f32 %v3248, %v3270
    %3272 = vdwg.mxu0
    %v3273 = vxor.u32 %v3271, 2147483648
    %v3274 = vmul.f32 %v3273, 1.442695
    %v3275 = vpow.pop %v3274
    %v3276 = vadd.f32 %v3275, 1.0
    %v3277 = vrcp.pop %v3276
    %v3278 = vmul.f32 %v3276, %v3277
    %v3279 = vsub.f32 1.0, %v3278
    %v3280 = vmul.f32 %v3277, %v3279
    %v3281 = vadd.f32 %v3277, %v3280
    %vm3282 = vweird.f32 %v3276
    %vm3283 = vweird.f32 %v3277
    %vm3284 = vmor %vm3282, %vm3283
    %v3285 = vsel %vm3284, %v3277, %v3281
    %v3286 = vand.u32 2147483647, %v3276
    %vm3287 = vcmp.eq.f32.partialorder %v3286, 8.507059e+37
    %v3288 = vand.u32 %v3276, 2147483648
    %v3289 = vor.u32 1.1754944e-38, %v3288
    %v3290 = vsel %vm3287, %v3289, %v3285
    %v3291 = vmul.f32 1.0, %v3290
    %v3292 = vmul.f32 %v3291, 2.0
    %v3293 = vsub.f32 %v3292, 1.0
    %v3294 = vmul.f32 %v3291, 0.0
    %3296 = vrot.lane.b32.xlu0 %v3293, 64
    %v3297 = vpop.permute.xlu0 %3296
    %v3299 = vmul.f32 %v3291, %v3297
    %3301 = vrot.lane.b32.xlu0 %v3299, 32
    %v3302 = vpop.permute.xlu0 %3301
    %v3304 = vadd.f32 %v3294, %v3302
    %v3305 = vtanh.pop %v3304
    %3307 = vrot.lane.b32.xlu0 %v3305, 64
    %v3308 = vpop.permute.xlu0 %3307
    %v3310 = vmul.f32 %v3291, %v3308
    %3312 = vrot.lane.b32.xlu0 %v2814, 32
    %v3313 = vpop.permute.xlu0 %3312
    %3315 = vrot.lane.b32.xlu0 %v2745, 64
    %v3316 = vpop.permute.xlu0 %3315
    %v3318 = vsel %vm73, %v3313, %v3316
    %v3320 = vsel %vm184, %v3318, 0
    %3322 = vmatpush.msra.mxu0 0.0
    %3323 = vmatpush.msra.mxu0 0.0
    %3324 = vmatpush.msra.mxu0 0.0
    %3325 = vmatpush.msra.mxu0 0.0
    %3326 = vmatpush.msra.mxu0 0.0
    %3327 = vmatpush.msra.mxu0 0.0
    %3328 = vmatpush.msra.mxu0 0.0
    %3329 = vmatpush.msra.mxu0 0.0
    %3330 = vmatpush.msra.mxu0 %v2679
    %3331 = vmatpush.msra.mxu0 %v2678
    %3332 = vmatpush.msra.mxu0 %v2677
    %3333 = vmatpush.msra.mxu0 %v2676
    %3334 = vmatpush.msra.mxu0 %v2675
    %3335 = vmatpush.msra.mxu0 %v2674
    %3336 = vmatpush.msra.mxu0 %v2673
    %3337 = vmatpush.msra.mxu0 %v2672
    %3338 = vmatmul.f32.gmra.mxu0 %v3320
    %v3339 = vpop.f32.mrf.mxu0
    %v3340 = vadd.f32 %v2683, %v3339
    %3341 = vdwg.mxu0
    %v3342 = vxor.u32 %v3340, 2147483648
    %v3343 = vmul.f32 %v3342, 1.442695
    %v3344 = vpow.pop %v3343
    %v3345 = vadd.f32 %v3344, 1.0
    %v3346 = vrcp.pop %v3345
    %v3347 = vmul.f32 %v3345, %v3346
    %v3348 = vsub.f32 1.0, %v3347
    %v3349 = vmul.f32 %v3346, %v3348
    %v3350 = vadd.f32 %v3346, %v3349
    %vm3351 = vweird.f32 %v3345
    %vm3352 = vweird.f32 %v3346
    %vm3353 = vmor %vm3351, %vm3352
    %v3354 = vsel %vm3353, %v3346, %v3350
    %v3355 = vand.u32 2147483647, %v3345
    %vm3356 = vcmp.eq.f32.partialorder %v3355, 8.507059e+37
    %v3357 = vand.u32 %v3345, 2147483648
    %v3358 = vor.u32 1.1754944e-38, %v3357
    %v3359 = vsel %vm3356, %v3358, %v3354
    %v3360 = vmul.f32 1.0, %v3359
    %v3361 = vmul.f32 %v3360, 2.0
    %v3362 = vsub.f32 %v3361, 1.0
    %v3363 = vmul.f32 %v3360, %v2739
    %3365 = vrot.lane.b32.xlu0 %v3362, 64
    %v3366 = vpop.permute.xlu0 %3365
    %v3368 = vmul.f32 %v3360, %v3366
    %3370 = vrot.lane.b32.xlu0 %v3368, 32
    %v3371 = vpop.permute.xlu0 %3370
    %v3373 = vadd.f32 %v3363, %v3371
    %v3374 = vtanh.pop %v3373
    %3376 = vrot.lane.b32.xlu0 %v3374, 64
    %v3377 = vpop.permute.xlu0 %3376
    %v3379 = vmul.f32 %v3360, %v3377
    %3381 = vrot.lane.b32.xlu0 %v2883, 32
    %v3382 = vpop.permute.xlu0 %3381
    %3384 = vrot.lane.b32.xlu0 %v2814, 64
    %v3385 = vpop.permute.xlu0 %3384
    %v3387 = vsel %vm73, %v3382, %v3385
    %v3389 = vsel %vm184, %v3387, 0
    %3391 = vmatpush.msra.mxu0 0.0
    %3392 = vmatpush.msra.mxu0 0.0
    %3393 = vmatpush.msra.mxu0 0.0
    %3394 = vmatpush.msra.mxu0 0.0
    %3395 = vmatpush.msra.mxu0 0.0
    %3396 = vmatpush.msra.mxu0 0.0
    %3397 = vmatpush.msra.mxu0 0.0
    %3398 = vmatpush.msra.mxu0 0.0
    %3399 = vmatpush.msra.mxu0 %v2113
    %3400 = vmatpush.msra.mxu0 %v2112
    %3401 = vmatpush.msra.mxu0 %v2111
    %3402 = vmatpush.msra.mxu0 %v2110
    %3403 = vmatpush.msra.mxu0 %v2109
    %3404 = vmatpush.msra.mxu0 %v2108
    %3405 = vmatpush.msra.mxu0 %v2107
    %3406 = vmatpush.msra.mxu0 %v2106
    %3407 = vmatmul.f32.gmra.mxu0 %v3389
    %v3408 = vpop.f32.mrf.mxu0
    %v3409 = vadd.f32 %v2117, %v3408
    %3410 = vdwg.mxu0
    %v3411 = vxor.u32 %v3409, 2147483648
    %v3412 = vmul.f32 %v3411, 1.442695
    %v3413 = vpow.pop %v3412
    %v3414 = vadd.f32 %v3413, 1.0
    %v3415 = vrcp.pop %v3414
    %v3416 = vmul.f32 %v3414, %v3415
    %v3417 = vsub.f32 1.0, %v3416
    %v3418 = vmul.f32 %v3415, %v3417
    %v3419 = vadd.f32 %v3415, %v3418
    %vm3420 = vweird.f32 %v3414
    %vm3421 = vweird.f32 %v3415
    %vm3422 = vmor %vm3420, %vm3421
    %v3423 = vsel %vm3422, %v3415, %v3419
    %v3424 = vand.u32 2147483647, %v3414
    %vm3425 = vcmp.eq.f32.partialorder %v3424, 8.507059e+37
    %v3426 = vand.u32 %v3414, 2147483648
    %v3427 = vor.u32 1.1754944e-38, %v3426
    %v3428 = vsel %vm3425, %v3427, %v3423
    %v3429 = vmul.f32 1.0, %v3428
    %v3430 = vmul.f32 %v3429, 2.0
    %v3431 = vsub.f32 %v3430, 1.0
    %v3432 = vmul.f32 %v3429, %v2808
    %3434 = vrot.lane.b32.xlu0 %v3431, 64
    %v3435 = vpop.permute.xlu0 %3434
    %v3437 = vmul.f32 %v3429, %v3435
    %3439 = vrot.lane.b32.xlu0 %v3437, 32
    %v3440 = vpop.permute.xlu0 %3439
    %v3442 = vadd.f32 %v3432, %v3440
    %v3443 = vtanh.pop %v3442
    %3445 = vrot.lane.b32.xlu0 %v3443, 64
    %v3446 = vpop.permute.xlu0 %3445
    %v3448 = vmul.f32 %v3429, %v3446
    %3450 = vrot.lane.b32.xlu0 %v2952, 32
    %v3451 = vpop.permute.xlu0 %3450
    %3453 = vrot.lane.b32.xlu0 %v2883, 64
    %v3454 = vpop.permute.xlu0 %3453
    %v3456 = vsel %vm73, %v3451, %v3454
    %v3458 = vsel %vm184, %v3456, 0
    %3460 = vmatpush.msra.mxu0 0.0
    %3461 = vmatpush.msra.mxu0 0.0
    %3462 = vmatpush.msra.mxu0 0.0
    %3463 = vmatpush.msra.mxu0 0.0
    %3464 = vmatpush.msra.mxu0 0.0
    %3465 = vmatpush.msra.mxu0 0.0
    %3466 = vmatpush.msra.mxu0 0.0
    %3467 = vmatpush.msra.mxu0 0.0
    %3468 = vmatpush.msra.mxu0 %v1616
    %3469 = vmatpush.msra.mxu0 %v1615
    %3470 = vmatpush.msra.mxu0 %v1614
    %3471 = vmatpush.msra.mxu0 %v1613
    %3472 = vmatpush.msra.mxu0 %v1612
    %3473 = vmatpush.msra.mxu0 %v1611
    %3474 = vmatpush.msra.mxu0 %v1610
    %3475 = vmatpush.msra.mxu0 %v1609
    %3476 = vmatmul.f32.gmra.mxu0 %v3458
    %v3477 = vpop.f32.mrf.mxu0
    %v3478 = vadd.f32 %v1620, %v3477
    %3479 = vdwg.mxu0
    %v3480 = vxor.u32 %v3478, 2147483648
    %v3481 = vmul.f32 %v3480, 1.442695
    %v3482 = vpow.pop %v3481
    %v3483 = vadd.f32 %v3482, 1.0
    %v3484 = vrcp.pop %v3483
    %v3485 = vmul.f32 %v3483, %v3484
    %v3486 = vsub.f32 1.0, %v3485
    %v3487 = vmul.f32 %v3484, %v3486
    %v3488 = vadd.f32 %v3484, %v3487
    %vm3489 = vweird.f32 %v3483
    %vm3490 = vweird.f32 %v3484
    %vm3491 = vmor %vm3489, %vm3490
    %v3492 = vsel %vm3491, %v3484, %v3488
    %v3493 = vand.u32 2147483647, %v3483
    %vm3494 = vcmp.eq.f32.partialorder %v3493, 8.507059e+37
    %v3495 = vand.u32 %v3483, 2147483648
    %v3496 = vor.u32 1.1754944e-38, %v3495
    %v3497 = vsel %vm3494, %v3496, %v3492
    %v3498 = vmul.f32 1.0, %v3497
    %v3499 = vmul.f32 %v3498, 2.0
    %v3500 = vsub.f32 %v3499, 1.0
    %v3501 = vmul.f32 %v3498, %v2877
    %3503 = vrot.lane.b32.xlu0 %v3500, 64
    %v3504 = vpop.permute.xlu0 %3503
    %v3506 = vmul.f32 %v3498, %v3504
    %3508 = vrot.lane.b32.xlu0 %v3506, 32
    %v3509 = vpop.permute.xlu0 %3508
    %v3511 = vadd.f32 %v3501, %v3509
    %v3512 = vtanh.pop %v3511
    %3514 = vrot.lane.b32.xlu0 %v3512, 64
    %v3515 = vpop.permute.xlu0 %3514
    %v3517 = vmul.f32 %v3498, %v3515
    %3519 = vrot.lane.b32.xlu0 %v3021, 32
    %v3520 = vpop.permute.xlu0 %3519
    %3522 = vrot.lane.b32.xlu0 %v2952, 64
    %v3523 = vpop.permute.xlu0 %3522
    %v3525 = vsel %vm73, %v3520, %v3523
    %v3527 = vsel %vm184, %v3525, 0
    %3529 = vmatpush.msra.mxu0 0.0
    %3530 = vmatpush.msra.mxu0 0.0
    %3531 = vmatpush.msra.mxu0 0.0
    %3532 = vmatpush.msra.mxu0 0.0
    %3533 = vmatpush.msra.mxu0 0.0
    %3534 = vmatpush.msra.mxu0 0.0
    %3535 = vmatpush.msra.mxu0 0.0
    %3536 = vmatpush.msra.mxu0 0.0
    %3537 = vmatpush.msra.mxu0 %v1193
    %3538 = vmatpush.msra.mxu0 %v1192
    %3539 = vmatpush.msra.mxu0 %v1191
    %3540 = vmatpush.msra.mxu0 %v1190
    %3541 = vmatpush.msra.mxu0 %v1189
    %3542 = vmatpush.msra.mxu0 %v1188
    %3543 = vmatpush.msra.mxu0 %v1187
    %3544 = vmatpush.msra.mxu0 %v1186
    %3545 = vmatmul.f32.gmra.mxu0 %v3527
    %v3546 = vpop.f32.mrf.mxu0
    %v3547 = vadd.f32 %v1197, %v3546
    %3548 = vdwg.mxu0
    %v3549 = vxor.u32 %v3547, 2147483648
    %v3550 = vmul.f32 %v3549, 1.442695
    %v3551 = vpow.pop %v3550
    %v3552 = vadd.f32 %v3551, 1.0
    %v3553 = vrcp.pop %v3552
    %v3554 = vmul.f32 %v3552, %v3553
    %v3555 = vsub.f32 1.0, %v3554
    %v3556 = vmul.f32 %v3553, %v3555
    %v3557 = vadd.f32 %v3553, %v3556
    %vm3558 = vweird.f32 %v3552
    %vm3559 = vweird.f32 %v3553
    %vm3560 = vmor %vm3558, %vm3559
    %v3561 = vsel %vm3560, %v3553, %v3557
    %v3562 = vand.u32 2147483647, %v3552
    %vm3563 = vcmp.eq.f32.partialorder %v3562, 8.507059e+37
    %v3564 = vand.u32 %v3552, 2147483648
    %v3565 = vor.u32 1.1754944e-38, %v3564
    %v3566 = vsel %vm3563, %v3565, %v3561
    %v3567 = vmul.f32 1.0, %v3566
    %v3568 = vmul.f32 %v3567, 2.0
    %v3569 = vsub.f32 %v3568, 1.0
    %v3570 = vmul.f32 %v3567, %v2946
    %3572 = vrot.lane.b32.xlu0 %v3569, 64
    %v3573 = vpop.permute.xlu0 %3572
    %v3575 = vmul.f32 %v3567, %v3573
    %3577 = vrot.lane.b32.xlu0 %v3575, 32
    %v3578 = vpop.permute.xlu0 %3577
    %v3580 = vadd.f32 %v3570, %v3578
    %v3581 = vtanh.pop %v3580
    %3583 = vrot.lane.b32.xlu0 %v3581, 64
    %v3584 = vpop.permute.xlu0 %3583
    %v3586 = vmul.f32 %v3567, %v3584
    %3588 = vrot.lane.b32.xlu0 %v3090, 32
    %v3589 = vpop.permute.xlu0 %3588
    %3591 = vrot.lane.b32.xlu0 %v3021, 64
    %v3592 = vpop.permute.xlu0 %3591
    %v3594 = vsel %vm73, %v3589, %v3592
    %v3596 = vsel %vm184, %v3594, 0
    %3598 = vmatpush.msra.mxu0 0.0
    %3599 = vmatpush.msra.mxu0 0.0
    %3600 = vmatpush.msra.mxu0 0.0
    %3601 = vmatpush.msra.mxu0 0.0
    %3602 = vmatpush.msra.mxu0 0.0
    %3603 = vmatpush.msra.mxu0 0.0
    %3604 = vmatpush.msra.mxu0 0.0
    %3605 = vmatpush.msra.mxu0 0.0
    %3606 = vmatpush.msra.mxu0 %v837
    %3607 = vmatpush.msra.mxu0 %v836
    %3608 = vmatpush.msra.mxu0 %v835
    %3609 = vmatpush.msra.mxu0 %v834
    %3610 = vmatpush.msra.mxu0 %v833
    %3611 = vmatpush.msra.mxu0 %v832
    %3612 = vmatpush.msra.mxu0 %v831
    %3613 = vmatpush.msra.mxu0 %v830
    %3614 = vmatmul.f32.gmra.mxu0 %v3596
    %v3615 = vpop.f32.mrf.mxu0
    %v3616 = vadd.f32 %v841, %v3615
    %3617 = vdwg.mxu0
    %v3618 = vxor.u32 %v3616, 2147483648
    %v3619 = vmul.f32 %v3618, 1.442695
    %v3620 = vpow.pop %v3619
    %v3621 = vadd.f32 %v3620, 1.0
    %v3622 = vrcp.pop %v3621
    %v3623 = vmul.f32 %v3621, %v3622
    %v3624 = vsub.f32 1.0, %v3623
    %v3625 = vmul.f32 %v3622, %v3624
    %v3626 = vadd.f32 %v3622, %v3625
    %vm3627 = vweird.f32 %v3621
    %vm3628 = vweird.f32 %v3622
    %vm3629 = vmor %vm3627, %vm3628
    %v3630 = vsel %vm3629, %v3622, %v3626
    %v3631 = vand.u32 2147483647, %v3621
    %vm3632 = vcmp.eq.f32.partialorder %v3631, 8.507059e+37
    %v3633 = vand.u32 %v3621, 2147483648
    %v3634 = vor.u32 1.1754944e-38, %v3633
    %v3635 = vsel %vm3632, %v3634, %v3630
    %v3636 = vmul.f32 1.0, %v3635
    %v3637 = vmul.f32 %v3636, 2.0
    %v3638 = vsub.f32 %v3637, 1.0
    %v3639 = vmul.f32 %v3636, %v3015
    %3641 = vrot.lane.b32.xlu0 %v3638, 64
    %v3642 = vpop.permute.xlu0 %3641
    %v3644 = vmul.f32 %v3636, %v3642
    %3646 = vrot.lane.b32.xlu0 %v3644, 32
    %v3647 = vpop.permute.xlu0 %3646
    %v3649 = vadd.f32 %v3639, %v3647
    %v3650 = vtanh.pop %v3649
    %3652 = vrot.lane.b32.xlu0 %v3650, 64
    %v3653 = vpop.permute.xlu0 %3652
    %v3655 = vmul.f32 %v3636, %v3653
    %3657 = vrot.lane.b32.xlu0 %v3159, 32
    %v3658 = vpop.permute.xlu0 %3657
    %3660 = vrot.lane.b32.xlu0 %v3090, 64
    %v3661 = vpop.permute.xlu0 %3660
    %v3663 = vsel %vm73, %v3658, %v3661
    %v3665 = vsel %vm184, %v3663, 0
    %3667 = vmatpush.msra.mxu0 0.0
    %3668 = vmatpush.msra.mxu0 0.0
    %3669 = vmatpush.msra.mxu0 0.0
    %3670 = vmatpush.msra.mxu0 0.0
    %3671 = vmatpush.msra.mxu0 0.0
    %3672 = vmatpush.msra.mxu0 0.0
    %3673 = vmatpush.msra.mxu0 0.0
    %3674 = vmatpush.msra.mxu0 0.0
    %3675 = vmatpush.msra.mxu0 %v547
    %3676 = vmatpush.msra.mxu0 %v546
    %3677 = vmatpush.msra.mxu0 %v545
    %3678 = vmatpush.msra.mxu0 %v544
    %3679 = vmatpush.msra.mxu0 %v543
    %3680 = vmatpush.msra.mxu0 %v542
    %3681 = vmatpush.msra.mxu0 %v541
    %3682 = vmatpush.msra.mxu0 %v540
    %3683 = vmatmul.f32.gmra.mxu0 %v3665
    %v3684 = vpop.f32.mrf.mxu0
    %v3685 = vadd.f32 %v551, %v3684
    %3686 = vdwg.mxu0
    %v3687 = vxor.u32 %v3685, 2147483648
    %v3688 = vmul.f32 %v3687, 1.442695
    %v3689 = vpow.pop %v3688
    %v3690 = vadd.f32 %v3689, 1.0
    %v3691 = vrcp.pop %v3690
    %v3692 = vmul.f32 %v3690, %v3691
    %v3693 = vsub.f32 1.0, %v3692
    %v3694 = vmul.f32 %v3691, %v3693
    %v3695 = vadd.f32 %v3691, %v3694
    %vm3696 = vweird.f32 %v3690
    %vm3697 = vweird.f32 %v3691
    %vm3698 = vmor %vm3696, %vm3697
    %v3699 = vsel %vm3698, %v3691, %v3695
    %v3700 = vand.u32 2147483647, %v3690
    %vm3701 = vcmp.eq.f32.partialorder %v3700, 8.507059e+37
    %v3702 = vand.u32 %v3690, 2147483648
    %v3703 = vor.u32 1.1754944e-38, %v3702
    %v3704 = vsel %vm3701, %v3703, %v3699
    %v3705 = vmul.f32 1.0, %v3704
    %v3706 = vmul.f32 %v3705, 2.0
    %v3707 = vsub.f32 %v3706, 1.0
    %v3708 = vmul.f32 %v3705, %v3084
    %3710 = vrot.lane.b32.xlu0 %v3707, 64
    %v3711 = vpop.permute.xlu0 %3710
    %v3713 = vmul.f32 %v3705, %v3711
    %3715 = vrot.lane.b32.xlu0 %v3713, 32
    %v3716 = vpop.permute.xlu0 %3715
    %v3718 = vadd.f32 %v3708, %v3716
    %v3719 = vtanh.pop %v3718
    %3721 = vrot.lane.b32.xlu0 %v3719, 64
    %v3722 = vpop.permute.xlu0 %3721
    %v3724 = vmul.f32 %v3705, %v3722
    %3726 = vrot.lane.b32.xlu0 %v3230, 32
    %v3727 = vpop.permute.xlu0 %3726
    %3729 = vrot.lane.b32.xlu0 %v3159, 64
    %v3730 = vpop.permute.xlu0 %3729
    %v3732 = vsel %vm73, %v3727, %v3730
    %v3734 = vsel %vm184, %v3732, 0
    %3736 = vmatpush.msra.mxu0 0.0
    %3737 = vmatpush.msra.mxu0 0.0
    %3738 = vmatpush.msra.mxu0 0.0
    %3739 = vmatpush.msra.mxu0 0.0
    %3740 = vmatpush.msra.mxu0 0.0
    %3741 = vmatpush.msra.mxu0 0.0
    %3742 = vmatpush.msra.mxu0 0.0
    %3743 = vmatpush.msra.mxu0 0.0
    %3744 = vmatpush.msra.mxu0 %v326
    %3745 = vmatpush.msra.mxu0 %v325
    %3746 = vmatpush.msra.mxu0 %v324
    %3747 = vmatpush.msra.mxu0 %v323
    %3748 = vmatpush.msra.mxu0 %v322
    %3749 = vmatpush.msra.mxu0 %v321
    %3750 = vmatpush.msra.mxu0 %v320
    %3751 = vmatpush.msra.mxu0 %v319
    %3752 = vmatmul.f32.gmra.mxu0 %v3734
    %v3753 = vpop.f32.mrf.mxu0
    %v3754 = vadd.f32 %v330, %v3753
    %3755 = vdwg.mxu0
    %v3756 = vxor.u32 %v3754, 2147483648
    %v3757 = vmul.f32 %v3756, 1.442695
    %v3758 = vpow.pop %v3757
    %v3759 = vadd.f32 %v3758, 1.0
    %v3760 = vrcp.pop %v3759
    %v3761 = vmul.f32 %v3759, %v3760
    %v3762 = vsub.f32 1.0, %v3761
    %v3763 = vmul.f32 %v3760, %v3762
    %v3764 = vadd.f32 %v3760, %v3763
    %vm3765 = vweird.f32 %v3759
    %vm3766 = vweird.f32 %v3760
    %vm3767 = vmor %vm3765, %vm3766
    %v3768 = vsel %vm3767, %v3760, %v3764
    %v3769 = vand.u32 2147483647, %v3759
    %vm3770 = vcmp.eq.f32.partialorder %v3769, 8.507059e+37
    %v3771 = vand.u32 %v3759, 2147483648
    %v3772 = vor.u32 1.1754944e-38, %v3771
    %v3773 = vsel %vm3770, %v3772, %v3768
    %v3774 = vmul.f32 1.0, %v3773
    %v3775 = vmul.f32 %v3774, 2.0
    %v3776 = vsub.f32 %v3775, 1.0
    %v3777 = vmul.f32 %v3774, %v3153
    %3779 = vrot.lane.b32.xlu0 %v3776, 64
    %v3780 = vpop.permute.xlu0 %3779
    %v3782 = vmul.f32 %v3774, %v3780
    %3784 = vrot.lane.b32.xlu0 %v3782, 32
    %v3785 = vpop.permute.xlu0 %3784
    %v3787 = vadd.f32 %v3777, %v3785
    %v3788 = vtanh.pop %v3787
    %3790 = vrot.lane.b32.xlu0 %v3788, 64
    %v3791 = vpop.permute.xlu0 %3790
    %v3793 = vmul.f32 %v3774, %v3791
    %3795 = vrot.lane.b32.xlu0 %v3379, 32
    %v3796 = vpop.permute.xlu0 %3795
    %3799 = vrot.lane.b32.xlu0 %v3310, 64
    %v3800 = vpop.permute.xlu0 %3799
    %v3802 = vsel %vm73, %v3796, %v3800
    %v3804 = vsel %vm184, %v3802, 0
    %3806 = vmatpush.msra.mxu0 0.0
    %3807 = vmatpush.msra.mxu0 0.0
    %3808 = vmatpush.msra.mxu0 0.0
    %3809 = vmatpush.msra.mxu0 0.0
    %3810 = vmatpush.msra.mxu0 0.0
    %3811 = vmatpush.msra.mxu0 0.0
    %3812 = vmatpush.msra.mxu0 0.0
    %3813 = vmatpush.msra.mxu0 0.0
    %3814 = vmatpush.msra.mxu0 %v3244
    %3815 = vmatpush.msra.mxu0 %v3243
    %3816 = vmatpush.msra.mxu0 %v3242
    %3817 = vmatpush.msra.mxu0 %v3241
    %3818 = vmatpush.msra.mxu0 %v3240
    %3819 = vmatpush.msra.mxu0 %v3239
    %3820 = vmatpush.msra.mxu0 %v3238
    %3821 = vmatpush.msra.mxu0 %v3237
    %3822 = vmatmul.f32.gmra.mxu0 %v3804
    %v3823 = vpop.f32.mrf.mxu0
    %v3824 = vadd.f32 %v3248, %v3823
    %3825 = vdwg.mxu0
    %v3826 = vxor.u32 %v3824, 2147483648
    %v3827 = vmul.f32 %v3826, 1.442695
    %v3828 = vpow.pop %v3827
    %v3829 = vadd.f32 %v3828, 1.0
    %v3830 = vrcp.pop %v3829
    %v3831 = vmul.f32 %v3829, %v3830
    %v3832 = vsub.f32 1.0, %v3831
    %v3833 = vmul.f32 %v3830, %v3832
    %v3834 = vadd.f32 %v3830, %v3833
    %vm3835 = vweird.f32 %v3829
    %vm3836 = vweird.f32 %v3830
    %vm3837 = vmor %vm3835, %vm3836
    %v3838 = vsel %vm3837, %v3830, %v3834
    %v3839 = vand.u32 2147483647, %v3829
    %vm3840 = vcmp.eq.f32.partialorder %v3839, 8.507059e+37
    %v3841 = vand.u32 %v3829, 2147483648
    %v3842 = vor.u32 1.1754944e-38, %v3841
    %v3843 = vsel %vm3840, %v3842, %v3838
    %v3844 = vmul.f32 1.0, %v3843
    %v3845 = vmul.f32 %v3844, 2.0
    %v3846 = vsub.f32 %v3845, 1.0
    %v3847 = vmul.f32 %v3844, %v3304
    %3849 = vrot.lane.b32.xlu0 %v3846, 64
    %v3850 = vpop.permute.xlu0 %3849
    %v3852 = vmul.f32 %v3844, %v3850
    %3854 = vrot.lane.b32.xlu0 %v3852, 32
    %v3855 = vpop.permute.xlu0 %3854
    %v3857 = vadd.f32 %v3847, %v3855
    %v3858 = vtanh.pop %v3857
    %3860 = vrot.lane.b32.xlu0 %v3858, 64
    %v3861 = vpop.permute.xlu0 %3860
    %v3863 = vmul.f32 %v3844, %v3861
    %3865 = vrot.lane.b32.xlu0 %v3448, 32
    %v3866 = vpop.permute.xlu0 %3865
    %3868 = vrot.lane.b32.xlu0 %v3379, 64
    %v3869 = vpop.permute.xlu0 %3868
    %v3871 = vsel %vm73, %v3866, %v3869
    %v3873 = vsel %vm184, %v3871, 0
    %3875 = vmatpush.msra.mxu0 0.0
    %3876 = vmatpush.msra.mxu0 0.0
    %3877 = vmatpush.msra.mxu0 0.0
    %3878 = vmatpush.msra.mxu0 0.0
    %3879 = vmatpush.msra.mxu0 0.0
    %3880 = vmatpush.msra.mxu0 0.0
    %3881 = vmatpush.msra.mxu0 0.0
    %3882 = vmatpush.msra.mxu0 0.0
    %3883 = vmatpush.msra.mxu0 %v2679
    %3884 = vmatpush.msra.mxu0 %v2678
    %3885 = vmatpush.msra.mxu0 %v2677
    %3886 = vmatpush.msra.mxu0 %v2676
    %3887 = vmatpush.msra.mxu0 %v2675
    %3888 = vmatpush.msra.mxu0 %v2674
    %3889 = vmatpush.msra.mxu0 %v2673
    %3890 = vmatpush.msra.mxu0 %v2672
    %3891 = vmatmul.f32.gmra.mxu0 %v3873
    %v3892 = vpop.f32.mrf.mxu0
    %v3893 = vadd.f32 %v2683, %v3892
    %3894 = vdwg.mxu0
    %v3895 = vxor.u32 %v3893, 2147483648
    %v3896 = vmul.f32 %v3895, 1.442695
    %v3897 = vpow.pop %v3896
    %v3898 = vadd.f32 %v3897, 1.0
    %v3899 = vrcp.pop %v3898
    %v3900 = vmul.f32 %v3898, %v3899
    %v3901 = vsub.f32 1.0, %v3900
    %v3902 = vmul.f32 %v3899, %v3901
    %v3903 = vadd.f32 %v3899, %v3902
    %vm3904 = vweird.f32 %v3898
    %vm3905 = vweird.f32 %v3899
    %vm3906 = vmor %vm3904, %vm3905
    %v3907 = vsel %vm3906, %v3899, %v3903
    %v3908 = vand.u32 2147483647, %v3898
    %vm3909 = vcmp.eq.f32.partialorder %v3908, 8.507059e+37
    %v3910 = vand.u32 %v3898, 2147483648
    %v3911 = vor.u32 1.1754944e-38, %v3910
    %v3912 = vsel %vm3909, %v3911, %v3907
    %v3913 = vmul.f32 1.0, %v3912
    %v3914 = vmul.f32 %v3913, 2.0
    %v3915 = vsub.f32 %v3914, 1.0
    %v3916 = vmul.f32 %v3913, %v3373
    %3918 = vrot.lane.b32.xlu0 %v3915, 64
    %v3919 = vpop.permute.xlu0 %3918
    %v3921 = vmul.f32 %v3913, %v3919
    %3923 = vrot.lane.b32.xlu0 %v3921, 32
    %v3924 = vpop.permute.xlu0 %3923
    %v3926 = vadd.f32 %v3916, %v3924
    %v3927 = vtanh.pop %v3926
    %3929 = vrot.lane.b32.xlu0 %v3927, 64
    %v3930 = vpop.permute.xlu0 %3929
    %v3932 = vmul.f32 %v3913, %v3930
    %3934 = vrot.lane.b32.xlu0 %v3517, 32
    %v3935 = vpop.permute.xlu0 %3934
    %3937 = vrot.lane.b32.xlu0 %v3448, 64
    %v3938 = vpop.permute.xlu0 %3937
    %v3940 = vsel %vm73, %v3935, %v3938
    %v3942 = vsel %vm184, %v3940, 0
    %3944 = vmatpush.msra.mxu0 0.0
    %3945 = vmatpush.msra.mxu0 0.0
    %3946 = vmatpush.msra.mxu0 0.0
    %3947 = vmatpush.msra.mxu0 0.0
    %3948 = vmatpush.msra.mxu0 0.0
    %3949 = vmatpush.msra.mxu0 0.0
    %3950 = vmatpush.msra.mxu0 0.0
    %3951 = vmatpush.msra.mxu0 0.0
    %3952 = vmatpush.msra.mxu0 %v2113
    %3953 = vmatpush.msra.mxu0 %v2112
    %3954 = vmatpush.msra.mxu0 %v2111
    %3955 = vmatpush.msra.mxu0 %v2110
    %3956 = vmatpush.msra.mxu0 %v2109
    %3957 = vmatpush.msra.mxu0 %v2108
    %3958 = vmatpush.msra.mxu0 %v2107
    %3959 = vmatpush.msra.mxu0 %v2106
    %3960 = vmatmul.f32.gmra.mxu0 %v3942
    %v3961 = vpop.f32.mrf.mxu0
    %v3962 = vadd.f32 %v2117, %v3961
    %3963 = vdwg.mxu0
    %v3964 = vxor.u32 %v3962, 2147483648
    %v3965 = vmul.f32 %v3964, 1.442695
    %v3966 = vpow.pop %v3965
    %v3967 = vadd.f32 %v3966, 1.0
    %v3968 = vrcp.pop %v3967
    %v3969 = vmul.f32 %v3967, %v3968
    %v3970 = vsub.f32 1.0, %v3969
    %v3971 = vmul.f32 %v3968, %v3970
    %v3972 = vadd.f32 %v3968, %v3971
    %vm3973 = vweird.f32 %v3967
    %vm3974 = vweird.f32 %v3968
    %vm3975 = vmor %vm3973, %vm3974
    %v3976 = vsel %vm3975, %v3968, %v3972
    %v3977 = vand.u32 2147483647, %v3967
    %vm3978 = vcmp.eq.f32.partialorder %v3977, 8.507059e+37
    %v3979 = vand.u32 %v3967, 2147483648
    %v3980 = vor.u32 1.1754944e-38, %v3979
    %v3981 = vsel %vm3978, %v3980, %v3976
    %v3982 = vmul.f32 1.0, %v3981
    %v3983 = vmul.f32 %v3982, 2.0
    %v3984 = vsub.f32 %v3983, 1.0
    %v3985 = vmul.f32 %v3982, %v3442
    %3987 = vrot.lane.b32.xlu0 %v3984, 64
    %v3988 = vpop.permute.xlu0 %3987
    %v3990 = vmul.f32 %v3982, %v3988
    %3992 = vrot.lane.b32.xlu0 %v3990, 32
    %v3993 = vpop.permute.xlu0 %3992
    %v3995 = vadd.f32 %v3985, %v3993
    %v3996 = vtanh.pop %v3995
    %3998 = vrot.lane.b32.xlu0 %v3996, 64
    %v3999 = vpop.permute.xlu0 %3998
    %v4001 = vmul.f32 %v3982, %v3999
    %4003 = vrot.lane.b32.xlu0 %v3586, 32
    %v4004 = vpop.permute.xlu0 %4003
    %4006 = vrot.lane.b32.xlu0 %v3517, 64
    %v4007 = vpop.permute.xlu0 %4006
    %v4009 = vsel %vm73, %v4004, %v4007
    %v4011 = vsel %vm184, %v4009, 0
    %4013 = vmatpush.msra.mxu0 0.0
    %4014 = vmatpush.msra.mxu0 0.0
    %4015 = vmatpush.msra.mxu0 0.0
    %4016 = vmatpush.msra.mxu0 0.0
    %4017 = vmatpush.msra.mxu0 0.0
    %4018 = vmatpush.msra.mxu0 0.0
    %4019 = vmatpush.msra.mxu0 0.0
    %4020 = vmatpush.msra.mxu0 0.0
    %4021 = vmatpush.msra.mxu0 %v1616
    %4022 = vmatpush.msra.mxu0 %v1615
    %4023 = vmatpush.msra.mxu0 %v1614
    %4024 = vmatpush.msra.mxu0 %v1613
    %4025 = vmatpush.msra.mxu0 %v1612
    %4026 = vmatpush.msra.mxu0 %v1611
    %4027 = vmatpush.msra.mxu0 %v1610
    %4028 = vmatpush.msra.mxu0 %v1609
    %4029 = vmatmul.f32.gmra.mxu0 %v4011
    %v4030 = vpop.f32.mrf.mxu0
    %v4031 = vadd.f32 %v1620, %v4030
    %4032 = vdwg.mxu0
    %v4033 = vxor.u32 %v4031, 2147483648
    %v4034 = vmul.f32 %v4033, 1.442695
    %v4035 = vpow.pop %v4034
    %v4036 = vadd.f32 %v4035, 1.0
    %v4037 = vrcp.pop %v4036
    %v4038 = vmul.f32 %v4036, %v4037
    %v4039 = vsub.f32 1.0, %v4038
    %v4040 = vmul.f32 %v4037, %v4039
    %v4041 = vadd.f32 %v4037, %v4040
    %vm4042 = vweird.f32 %v4036
    %vm4043 = vweird.f32 %v4037
    %vm4044 = vmor %vm4042, %vm4043
    %v4045 = vsel %vm4044, %v4037, %v4041
    %v4046 = vand.u32 2147483647, %v4036
    %vm4047 = vcmp.eq.f32.partialorder %v4046, 8.507059e+37
    %v4048 = vand.u32 %v4036, 2147483648
    %v4049 = vor.u32 1.1754944e-38, %v4048
    %v4050 = vsel %vm4047, %v4049, %v4045
    %v4051 = vmul.f32 1.0, %v4050
    %v4052 = vmul.f32 %v4051, 2.0
    %v4053 = vsub.f32 %v4052, 1.0
    %v4054 = vmul.f32 %v4051, %v3511
    %4056 = vrot.lane.b32.xlu0 %v4053, 64
    %v4057 = vpop.permute.xlu0 %4056
    %v4059 = vmul.f32 %v4051, %v4057
    %4061 = vrot.lane.b32.xlu0 %v4059, 32
    %v4062 = vpop.permute.xlu0 %4061
    %v4064 = vadd.f32 %v4054, %v4062
    %v4065 = vtanh.pop %v4064
    %4067 = vrot.lane.b32.xlu0 %v4065, 64
    %v4068 = vpop.permute.xlu0 %4067
    %v4070 = vmul.f32 %v4051, %v4068
    %4072 = vrot.lane.b32.xlu0 %v3655, 32
    %v4073 = vpop.permute.xlu0 %4072
    %4075 = vrot.lane.b32.xlu0 %v3586, 64
    %v4076 = vpop.permute.xlu0 %4075
    %v4078 = vsel %vm73, %v4073, %v4076
    %v4080 = vsel %vm184, %v4078, 0
    %4082 = vmatpush.msra.mxu0 0.0
    %4083 = vmatpush.msra.mxu0 0.0
    %4084 = vmatpush.msra.mxu0 0.0
    %4085 = vmatpush.msra.mxu0 0.0
    %4086 = vmatpush.msra.mxu0 0.0
    %4087 = vmatpush.msra.mxu0 0.0
    %4088 = vmatpush.msra.mxu0 0.0
    %4089 = vmatpush.msra.mxu0 0.0
    %4090 = vmatpush.msra.mxu0 %v1193
    %4091 = vmatpush.msra.mxu0 %v1192
    %4092 = vmatpush.msra.mxu0 %v1191
    %4093 = vmatpush.msra.mxu0 %v1190
    %4094 = vmatpush.msra.mxu0 %v1189
    %4095 = vmatpush.msra.mxu0 %v1188
    %4096 = vmatpush.msra.mxu0 %v1187
    %4097 = vmatpush.msra.mxu0 %v1186
    %4098 = vmatmul.f32.gmra.mxu0 %v4080
    %v4099 = vpop.f32.mrf.mxu0
    %v4100 = vadd.f32 %v1197, %v4099
    %4101 = vdwg.mxu0
    %v4102 = vxor.u32 %v4100, 2147483648
    %v4103 = vmul.f32 %v4102, 1.442695
    %v4104 = vpow.pop %v4103
    %v4105 = vadd.f32 %v4104, 1.0
    %v4106 = vrcp.pop %v4105
    %v4107 = vmul.f32 %v4105, %v4106
    %v4108 = vsub.f32 1.0, %v4107
    %v4109 = vmul.f32 %v4106, %v4108
    %v4110 = vadd.f32 %v4106, %v4109
    %vm4111 = vweird.f32 %v4105
    %vm4112 = vweird.f32 %v4106
    %vm4113 = vmor %vm4111, %vm4112
    %v4114 = vsel %vm4113, %v4106, %v4110
    %v4115 = vand.u32 2147483647, %v4105
    %vm4116 = vcmp.eq.f32.partialorder %v4115, 8.507059e+37
    %v4117 = vand.u32 %v4105, 2147483648
    %v4118 = vor.u32 1.1754944e-38, %v4117
    %v4119 = vsel %vm4116, %v4118, %v4114
    %v4120 = vmul.f32 1.0, %v4119
    %v4121 = vmul.f32 %v4120, 2.0
    %v4122 = vsub.f32 %v4121, 1.0
    %v4123 = vmul.f32 %v4120, %v3580
    %4125 = vrot.lane.b32.xlu0 %v4122, 64
    %v4126 = vpop.permute.xlu0 %4125
    %v4128 = vmul.f32 %v4120, %v4126
    %4130 = vrot.lane.b32.xlu0 %v4128, 32
    %v4131 = vpop.permute.xlu0 %4130
    %v4133 = vadd.f32 %v4123, %v4131
    %v4134 = vtanh.pop %v4133
    %4136 = vrot.lane.b32.xlu0 %v4134, 64
    %v4137 = vpop.permute.xlu0 %4136
    %v4139 = vmul.f32 %v4120, %v4137
    %4141 = vrot.lane.b32.xlu0 %v3724, 32
    %v4142 = vpop.permute.xlu0 %4141
    %4144 = vrot.lane.b32.xlu0 %v3655, 64
    %v4145 = vpop.permute.xlu0 %4144
    %v4147 = vsel %vm73, %v4142, %v4145
    %v4149 = vsel %vm184, %v4147, 0
    %4151 = vmatpush.msra.mxu0 0.0
    %4152 = vmatpush.msra.mxu0 0.0
    %4153 = vmatpush.msra.mxu0 0.0
    %4154 = vmatpush.msra.mxu0 0.0
    %4155 = vmatpush.msra.mxu0 0.0
    %4156 = vmatpush.msra.mxu0 0.0
    %4157 = vmatpush.msra.mxu0 0.0
    %4158 = vmatpush.msra.mxu0 0.0
    %4159 = vmatpush.msra.mxu0 %v837
    %4160 = vmatpush.msra.mxu0 %v836
    %4161 = vmatpush.msra.mxu0 %v835
    %4162 = vmatpush.msra.mxu0 %v834
    %4163 = vmatpush.msra.mxu0 %v833
    %4164 = vmatpush.msra.mxu0 %v832
    %4165 = vmatpush.msra.mxu0 %v831
    %4166 = vmatpush.msra.mxu0 %v830
    %4167 = vmatmul.f32.gmra.mxu0 %v4149
    %v4168 = vpop.f32.mrf.mxu0
    %v4169 = vadd.f32 %v841, %v4168
    %4170 = vdwg.mxu0
    %v4171 = vxor.u32 %v4169, 2147483648
    %v4172 = vmul.f32 %v4171, 1.442695
    %v4173 = vpow.pop %v4172
    %v4174 = vadd.f32 %v4173, 1.0
    %v4175 = vrcp.pop %v4174
    %v4176 = vmul.f32 %v4174, %v4175
    %v4177 = vsub.f32 1.0, %v4176
    %v4178 = vmul.f32 %v4175, %v4177
    %v4179 = vadd.f32 %v4175, %v4178
    %vm4180 = vweird.f32 %v4174
    %vm4181 = vweird.f32 %v4175
    %vm4182 = vmor %vm4180, %vm4181
    %v4183 = vsel %vm4182, %v4175, %v4179
    %v4184 = vand.u32 2147483647, %v4174
    %vm4185 = vcmp.eq.f32.partialorder %v4184, 8.507059e+37
    %v4186 = vand.u32 %v4174, 2147483648
    %v4187 = vor.u32 1.1754944e-38, %v4186
    %v4188 = vsel %vm4185, %v4187, %v4183
    %v4189 = vmul.f32 1.0, %v4188
    %v4190 = vmul.f32 %v4189, 2.0
    %v4191 = vsub.f32 %v4190, 1.0
    %v4192 = vmul.f32 %v4189, %v3649
    %4194 = vrot.lane.b32.xlu0 %v4191, 64
    %v4195 = vpop.permute.xlu0 %4194
    %v4197 = vmul.f32 %v4189, %v4195
    %4199 = vrot.lane.b32.xlu0 %v4197, 32
    %v4200 = vpop.permute.xlu0 %4199
    %v4202 = vadd.f32 %v4192, %v4200
    %v4203 = vtanh.pop %v4202
    %4205 = vrot.lane.b32.xlu0 %v4203, 64
    %v4206 = vpop.permute.xlu0 %4205
    %v4208 = vmul.f32 %v4189, %v4206
    %4210 = vrot.lane.b32.xlu0 %v3793, 32
    %v4211 = vpop.permute.xlu0 %4210
    %4213 = vrot.lane.b32.xlu0 %v3724, 64
    %v4214 = vpop.permute.xlu0 %4213
    %v4216 = vsel %vm73, %v4211, %v4214
    %v4218 = vsel %vm184, %v4216, 0
    %4220 = vmatpush.msra.mxu0 0.0
    %4221 = vmatpush.msra.mxu0 0.0
    %4222 = vmatpush.msra.mxu0 0.0
    %4223 = vmatpush.msra.mxu0 0.0
    %4224 = vmatpush.msra.mxu0 0.0
    %4225 = vmatpush.msra.mxu0 0.0
    %4226 = vmatpush.msra.mxu0 0.0
    %4227 = vmatpush.msra.mxu0 0.0
    %4228 = vmatpush.msra.mxu0 %v547
    %4229 = vmatpush.msra.mxu0 %v546
    %4230 = vmatpush.msra.mxu0 %v545
    %4231 = vmatpush.msra.mxu0 %v544
    %4232 = vmatpush.msra.mxu0 %v543
    %4233 = vmatpush.msra.mxu0 %v542
    %4234 = vmatpush.msra.mxu0 %v541
    %4235 = vmatpush.msra.mxu0 %v540
    %4236 = vmatmul.f32.gmra.mxu0 %v4218
    %v4237 = vpop.f32.mrf.mxu0
    %v4238 = vadd.f32 %v551, %v4237
    %4239 = vdwg.mxu0
    %v4240 = vxor.u32 %v4238, 2147483648
    %v4241 = vmul.f32 %v4240, 1.442695
    %v4242 = vpow.pop %v4241
    %v4243 = vadd.f32 %v4242, 1.0
    %v4244 = vrcp.pop %v4243
    %v4245 = vmul.f32 %v4243, %v4244
    %v4246 = vsub.f32 1.0, %v4245
    %v4247 = vmul.f32 %v4244, %v4246
    %v4248 = vadd.f32 %v4244, %v4247
    %vm4249 = vweird.f32 %v4243
    %vm4250 = vweird.f32 %v4244
    %vm4251 = vmor %vm4249, %vm4250
    %v4252 = vsel %vm4251, %v4244, %v4248
    %v4253 = vand.u32 2147483647, %v4243
    %vm4254 = vcmp.eq.f32.partialorder %v4253, 8.507059e+37
    %v4255 = vand.u32 %v4243, 2147483648
    %v4256 = vor.u32 1.1754944e-38, %v4255
    %v4257 = vsel %vm4254, %v4256, %v4252
    %v4258 = vmul.f32 1.0, %v4257
    %v4259 = vmul.f32 %v4258, 2.0
    %v4260 = vsub.f32 %v4259, 1.0
    %v4261 = vmul.f32 %v4258, %v3718
    %4263 = vrot.lane.b32.xlu0 %v4260, 64
    %v4264 = vpop.permute.xlu0 %4263
    %v4266 = vmul.f32 %v4258, %v4264
    %4268 = vrot.lane.b32.xlu0 %v4266, 32
    %v4269 = vpop.permute.xlu0 %4268
    %v4271 = vadd.f32 %v4261, %v4269
    %v4272 = vtanh.pop %v4271
    %4274 = vrot.lane.b32.xlu0 %v4272, 64
    %v4275 = vpop.permute.xlu0 %4274
    %v4277 = vmul.f32 %v4258, %v4275
    %4279 = vrot.lane.b32.xlu0 %v3932, 32
    %v4280 = vpop.permute.xlu0 %4279
    %4283 = vrot.lane.b32.xlu0 %v3863, 64
    %v4284 = vpop.permute.xlu0 %4283
    %v4286 = vsel %vm73, %v4280, %v4284
    %v4288 = vsel %vm184, %v4286, 0
    %4290 = vmatpush.msra.mxu0 0.0
    %4291 = vmatpush.msra.mxu0 0.0
    %4292 = vmatpush.msra.mxu0 0.0
    %4293 = vmatpush.msra.mxu0 0.0
    %4294 = vmatpush.msra.mxu0 0.0
    %4295 = vmatpush.msra.mxu0 0.0
    %4296 = vmatpush.msra.mxu0 0.0
    %4297 = vmatpush.msra.mxu0 0.0
    %4298 = vmatpush.msra.mxu0 %v3244
    %4299 = vmatpush.msra.mxu0 %v3243
    %4300 = vmatpush.msra.mxu0 %v3242
    %4301 = vmatpush.msra.mxu0 %v3241
    %4302 = vmatpush.msra.mxu0 %v3240
    %4303 = vmatpush.msra.mxu0 %v3239
    %4304 = vmatpush.msra.mxu0 %v3238
    %4305 = vmatpush.msra.mxu0 %v3237
    %4306 = vmatmul.f32.gmra.mxu0 %v4288
    %v4307 = vpop.f32.mrf.mxu0
    %v4308 = vadd.f32 %v3248, %v4307
    %4309 = vdwg.mxu0
    %v4310 = vxor.u32 %v4308, 2147483648
    %v4311 = vmul.f32 %v4310, 1.442695
    %v4312 = vpow.pop %v4311
    %v4313 = vadd.f32 %v4312, 1.0
    %v4314 = vrcp.pop %v4313
    %v4315 = vmul.f32 %v4313, %v4314
    %v4316 = vsub.f32 1.0, %v4315
    %v4317 = vmul.f32 %v4314, %v4316
    %v4318 = vadd.f32 %v4314, %v4317
    %vm4319 = vweird.f32 %v4313
    %vm4320 = vweird.f32 %v4314
    %vm4321 = vmor %vm4319, %vm4320
    %v4322 = vsel %vm4321, %v4314, %v4318
    %v4323 = vand.u32 2147483647, %v4313
    %vm4324 = vcmp.eq.f32.partialorder %v4323, 8.507059e+37
    %v4325 = vand.u32 %v4313, 2147483648
    %v4326 = vor.u32 1.1754944e-38, %v4325
    %v4327 = vsel %vm4324, %v4326, %v4322
    %v4328 = vmul.f32 1.0, %v4327
    %v4329 = vmul.f32 %v4328, 2.0
    %v4330 = vsub.f32 %v4329, 1.0
    %v4331 = vmul.f32 %v4328, %v3857
    %4333 = vrot.lane.b32.xlu0 %v4330, 64
    %v4334 = vpop.permute.xlu0 %4333
    %v4336 = vmul.f32 %v4328, %v4334
    %4338 = vrot.lane.b32.xlu0 %v4336, 32
    %v4339 = vpop.permute.xlu0 %4338
    %v4341 = vadd.f32 %v4331, %v4339
    %v4342 = vtanh.pop %v4341
    %4344 = vrot.lane.b32.xlu0 %v4342, 64
    %v4345 = vpop.permute.xlu0 %4344
    %v4347 = vmul.f32 %v4328, %v4345
    %4349 = vrot.lane.b32.xlu0 %v4001, 32
    %v4350 = vpop.permute.xlu0 %4349
    %4352 = vrot.lane.b32.xlu0 %v3932, 64
    %v4353 = vpop.permute.xlu0 %4352
    %v4355 = vsel %vm73, %v4350, %v4353
    %v4357 = vsel %vm184, %v4355, 0
    %4359 = vmatpush.msra.mxu0 0.0
    %4360 = vmatpush.msra.mxu0 0.0
    %4361 = vmatpush.msra.mxu0 0.0
    %4362 = vmatpush.msra.mxu0 0.0
    %4363 = vmatpush.msra.mxu0 0.0
    %4364 = vmatpush.msra.mxu0 0.0
    %4365 = vmatpush.msra.mxu0 0.0
    %4366 = vmatpush.msra.mxu0 0.0
    %4367 = vmatpush.msra.mxu0 %v2679
    %4368 = vmatpush.msra.mxu0 %v2678
    %4369 = vmatpush.msra.mxu0 %v2677
    %4370 = vmatpush.msra.mxu0 %v2676
    %4371 = vmatpush.msra.mxu0 %v2675
    %4372 = vmatpush.msra.mxu0 %v2674
    %4373 = vmatpush.msra.mxu0 %v2673
    %4374 = vmatpush.msra.mxu0 %v2672
    %4375 = vmatmul.f32.gmra.mxu0 %v4357
    %v4376 = vpop.f32.mrf.mxu0
    %v4377 = vadd.f32 %v2683, %v4376
    %4378 = vdwg.mxu0
    %v4379 = vxor.u32 %v4377, 2147483648
    %v4380 = vmul.f32 %v4379, 1.442695
    %v4381 = vpow.pop %v4380
    %v4382 = vadd.f32 %v4381, 1.0
    %v4383 = vrcp.pop %v4382
    %v4384 = vmul.f32 %v4382, %v4383
    %v4385 = vsub.f32 1.0, %v4384
    %v4386 = vmul.f32 %v4383, %v4385
    %v4387 = vadd.f32 %v4383, %v4386
    %vm4388 = vweird.f32 %v4382
    %vm4389 = vweird.f32 %v4383
    %vm4390 = vmor %vm4388, %vm4389
    %v4391 = vsel %vm4390, %v4383, %v4387
    %v4392 = vand.u32 2147483647, %v4382
    %vm4393 = vcmp.eq.f32.partialorder %v4392, 8.507059e+37
    %v4394 = vand.u32 %v4382, 2147483648
    %v4395 = vor.u32 1.1754944e-38, %v4394
    %v4396 = vsel %vm4393, %v4395, %v4391
    %v4397 = vmul.f32 1.0, %v4396
    %v4398 = vmul.f32 %v4397, 2.0
    %v4399 = vsub.f32 %v4398, 1.0
    %v4400 = vmul.f32 %v4397, %v3926
    %4402 = vrot.lane.b32.xlu0 %v4399, 64
    %v4403 = vpop.permute.xlu0 %4402
    %v4405 = vmul.f32 %v4397, %v4403
    %4407 = vrot.lane.b32.xlu0 %v4405, 32
    %v4408 = vpop.permute.xlu0 %4407
    %v4410 = vadd.f32 %v4400, %v4408
    %v4411 = vtanh.pop %v4410
    %4413 = vrot.lane.b32.xlu0 %v4411, 64
    %v4414 = vpop.permute.xlu0 %4413
    %v4416 = vmul.f32 %v4397, %v4414
    %4418 = vrot.lane.b32.xlu0 %v4070, 32
    %v4419 = vpop.permute.xlu0 %4418
    %4421 = vrot.lane.b32.xlu0 %v4001, 64
    %v4422 = vpop.permute.xlu0 %4421
    %v4424 = vsel %vm73, %v4419, %v4422
    %v4426 = vsel %vm184, %v4424, 0
    %4428 = vmatpush.msra.mxu0 0.0
    %4429 = vmatpush.msra.mxu0 0.0
    %4430 = vmatpush.msra.mxu0 0.0
    %4431 = vmatpush.msra.mxu0 0.0
    %4432 = vmatpush.msra.mxu0 0.0
    %4433 = vmatpush.msra.mxu0 0.0
    %4434 = vmatpush.msra.mxu0 0.0
    %4435 = vmatpush.msra.mxu0 0.0
    %4436 = vmatpush.msra.mxu0 %v2113
    %4437 = vmatpush.msra.mxu0 %v2112
    %4438 = vmatpush.msra.mxu0 %v2111
    %4439 = vmatpush.msra.mxu0 %v2110
    %4440 = vmatpush.msra.mxu0 %v2109
    %4441 = vmatpush.msra.mxu0 %v2108
    %4442 = vmatpush.msra.mxu0 %v2107
    %4443 = vmatpush.msra.mxu0 %v2106
    %4444 = vmatmul.f32.gmra.mxu0 %v4426
    %v4445 = vpop.f32.mrf.mxu0
    %v4446 = vadd.f32 %v2117, %v4445
    %4447 = vdwg.mxu0
    %v4448 = vxor.u32 %v4446, 2147483648
    %v4449 = vmul.f32 %v4448, 1.442695
    %v4450 = vpow.pop %v4449
    %v4451 = vadd.f32 %v4450, 1.0
    %v4452 = vrcp.pop %v4451
    %v4453 = vmul.f32 %v4451, %v4452
    %v4454 = vsub.f32 1.0, %v4453
    %v4455 = vmul.f32 %v4452, %v4454
    %v4456 = vadd.f32 %v4452, %v4455
    %vm4457 = vweird.f32 %v4451
    %vm4458 = vweird.f32 %v4452
    %vm4459 = vmor %vm4457, %vm4458
    %v4460 = vsel %vm4459, %v4452, %v4456
    %v4461 = vand.u32 2147483647, %v4451
    %vm4462 = vcmp.eq.f32.partialorder %v4461, 8.507059e+37
    %v4463 = vand.u32 %v4451, 2147483648
    %v4464 = vor.u32 1.1754944e-38, %v4463
    %v4465 = vsel %vm4462, %v4464, %v4460
    %v4466 = vmul.f32 1.0, %v4465
    %v4467 = vmul.f32 %v4466, 2.0
    %v4468 = vsub.f32 %v4467, 1.0
    %v4469 = vmul.f32 %v4466, %v3995
    %4471 = vrot.lane.b32.xlu0 %v4468, 64
    %v4472 = vpop.permute.xlu0 %4471
    %v4474 = vmul.f32 %v4466, %v4472
    %4476 = vrot.lane.b32.xlu0 %v4474, 32
    %v4477 = vpop.permute.xlu0 %4476
    %v4479 = vadd.f32 %v4469, %v4477
    %v4480 = vtanh.pop %v4479
    %4482 = vrot.lane.b32.xlu0 %v4480, 64
    %v4483 = vpop.permute.xlu0 %4482
    %v4485 = vmul.f32 %v4466, %v4483
    %4487 = vrot.lane.b32.xlu0 %v4139, 32
    %v4488 = vpop.permute.xlu0 %4487
    %4490 = vrot.lane.b32.xlu0 %v4070, 64
    %v4491 = vpop.permute.xlu0 %4490
    %v4493 = vsel %vm73, %v4488, %v4491
    %v4495 = vsel %vm184, %v4493, 0
    %4497 = vmatpush.msra.mxu0 0.0
    %4498 = vmatpush.msra.mxu0 0.0
    %4499 = vmatpush.msra.mxu0 0.0
    %4500 = vmatpush.msra.mxu0 0.0
    %4501 = vmatpush.msra.mxu0 0.0
    %4502 = vmatpush.msra.mxu0 0.0
    %4503 = vmatpush.msra.mxu0 0.0
    %4504 = vmatpush.msra.mxu0 0.0
    %4505 = vmatpush.msra.mxu0 %v1616
    %4506 = vmatpush.msra.mxu0 %v1615
    %4507 = vmatpush.msra.mxu0 %v1614
    %4508 = vmatpush.msra.mxu0 %v1613
    %4509 = vmatpush.msra.mxu0 %v1612
    %4510 = vmatpush.msra.mxu0 %v1611
    %4511 = vmatpush.msra.mxu0 %v1610
    %4512 = vmatpush.msra.mxu0 %v1609
    %4513 = vmatmul.f32.gmra.mxu0 %v4495
    %v4514 = vpop.f32.mrf.mxu0
    %v4515 = vadd.f32 %v1620, %v4514
    %4516 = vdwg.mxu0
    %v4517 = vxor.u32 %v4515, 2147483648
    %v4518 = vmul.f32 %v4517, 1.442695
    %v4519 = vpow.pop %v4518
    %v4520 = vadd.f32 %v4519, 1.0
    %v4521 = vrcp.pop %v4520
    %v4522 = vmul.f32 %v4520, %v4521
    %v4523 = vsub.f32 1.0, %v4522
    %v4524 = vmul.f32 %v4521, %v4523
    %v4525 = vadd.f32 %v4521, %v4524
    %vm4526 = vweird.f32 %v4520
    %vm4527 = vweird.f32 %v4521
    %vm4528 = vmor %vm4526, %vm4527
    %v4529 = vsel %vm4528, %v4521, %v4525
    %v4530 = vand.u32 2147483647, %v4520
    %vm4531 = vcmp.eq.f32.partialorder %v4530, 8.507059e+37
    %v4532 = vand.u32 %v4520, 2147483648
    %v4533 = vor.u32 1.1754944e-38, %v4532
    %v4534 = vsel %vm4531, %v4533, %v4529
    %v4535 = vmul.f32 1.0, %v4534
    %v4536 = vmul.f32 %v4535, 2.0
    %v4537 = vsub.f32 %v4536, 1.0
    %v4538 = vmul.f32 %v4535, %v4064
    %4540 = vrot.lane.b32.xlu0 %v4537, 64
    %v4541 = vpop.permute.xlu0 %4540
    %v4543 = vmul.f32 %v4535, %v4541
    %4545 = vrot.lane.b32.xlu0 %v4543, 32
    %v4546 = vpop.permute.xlu0 %4545
    %v4548 = vadd.f32 %v4538, %v4546
    %v4549 = vtanh.pop %v4548
    %4551 = vrot.lane.b32.xlu0 %v4549, 64
    %v4552 = vpop.permute.xlu0 %4551
    %v4554 = vmul.f32 %v4535, %v4552
    %4556 = vrot.lane.b32.xlu0 %v4208, 32
    %v4557 = vpop.permute.xlu0 %4556
    %4559 = vrot.lane.b32.xlu0 %v4139, 64
    %v4560 = vpop.permute.xlu0 %4559
    %v4562 = vsel %vm73, %v4557, %v4560
    %v4564 = vsel %vm184, %v4562, 0
    %4566 = vmatpush.msra.mxu0 0.0
    %4567 = vmatpush.msra.mxu0 0.0
    %4568 = vmatpush.msra.mxu0 0.0
    %4569 = vmatpush.msra.mxu0 0.0
    %4570 = vmatpush.msra.mxu0 0.0
    %4571 = vmatpush.msra.mxu0 0.0
    %4572 = vmatpush.msra.mxu0 0.0
    %4573 = vmatpush.msra.mxu0 0.0
    %4574 = vmatpush.msra.mxu0 %v1193
    %4575 = vmatpush.msra.mxu0 %v1192
    %4576 = vmatpush.msra.mxu0 %v1191
    %4577 = vmatpush.msra.mxu0 %v1190
    %4578 = vmatpush.msra.mxu0 %v1189
    %4579 = vmatpush.msra.mxu0 %v1188
    %4580 = vmatpush.msra.mxu0 %v1187
    %4581 = vmatpush.msra.mxu0 %v1186
    %4582 = vmatmul.f32.gmra.mxu0 %v4564
    %v4583 = vpop.f32.mrf.mxu0
    %v4584 = vadd.f32 %v1197, %v4583
    %4585 = vdwg.mxu0
    %v4586 = vxor.u32 %v4584, 2147483648
    %v4587 = vmul.f32 %v4586, 1.442695
    %v4588 = vpow.pop %v4587
    %v4589 = vadd.f32 %v4588, 1.0
    %v4590 = vrcp.pop %v4589
    %v4591 = vmul.f32 %v4589, %v4590
    %v4592 = vsub.f32 1.0, %v4591
    %v4593 = vmul.f32 %v4590, %v4592
    %v4594 = vadd.f32 %v4590, %v4593
    %vm4595 = vweird.f32 %v4589
    %vm4596 = vweird.f32 %v4590
    %vm4597 = vmor %vm4595, %vm4596
    %v4598 = vsel %vm4597, %v4590, %v4594
    %v4599 = vand.u32 2147483647, %v4589
    %vm4600 = vcmp.eq.f32.partialorder %v4599, 8.507059e+37
    %v4601 = vand.u32 %v4589, 2147483648
    %v4602 = vor.u32 1.1754944e-38, %v4601
    %v4603 = vsel %vm4600, %v4602, %v4598
    %v4604 = vmul.f32 1.0, %v4603
    %v4605 = vmul.f32 %v4604, 2.0
    %v4606 = vsub.f32 %v4605, 1.0
    %v4607 = vmul.f32 %v4604, %v4133
    %4609 = vrot.lane.b32.xlu0 %v4606, 64
    %v4610 = vpop.permute.xlu0 %4609
    %v4612 = vmul.f32 %v4604, %v4610
    %4614 = vrot.lane.b32.xlu0 %v4612, 32
    %v4615 = vpop.permute.xlu0 %4614
    %v4617 = vadd.f32 %v4607, %v4615
    %v4618 = vtanh.pop %v4617
    %4620 = vrot.lane.b32.xlu0 %v4618, 64
    %v4621 = vpop.permute.xlu0 %4620
    %v4623 = vmul.f32 %v4604, %v4621
    %4625 = vrot.lane.b32.xlu0 %v4277, 32
    %v4626 = vpop.permute.xlu0 %4625
    %4628 = vrot.lane.b32.xlu0 %v4208, 64
    %v4629 = vpop.permute.xlu0 %4628
    %v4631 = vsel %vm73, %v4626, %v4629
    %v4633 = vsel %vm184, %v4631, 0
    %4635 = vmatpush.msra.mxu0 0.0
    %4636 = vmatpush.msra.mxu0 0.0
    %4637 = vmatpush.msra.mxu0 0.0
    %4638 = vmatpush.msra.mxu0 0.0
    %4639 = vmatpush.msra.mxu0 0.0
    %4640 = vmatpush.msra.mxu0 0.0
    %4641 = vmatpush.msra.mxu0 0.0
    %4642 = vmatpush.msra.mxu0 0.0
    %4643 = vmatpush.msra.mxu0 %v837
    %4644 = vmatpush.msra.mxu0 %v836
    %4645 = vmatpush.msra.mxu0 %v835
    %4646 = vmatpush.msra.mxu0 %v834
    %4647 = vmatpush.msra.mxu0 %v833
    %4648 = vmatpush.msra.mxu0 %v832
    %4649 = vmatpush.msra.mxu0 %v831
    %4650 = vmatpush.msra.mxu0 %v830
    %4651 = vmatmul.f32.gmra.mxu0 %v4633
    %v4652 = vpop.f32.mrf.mxu0
    %v4653 = vadd.f32 %v841, %v4652
    %4654 = vdwg.mxu0
    %v4655 = vxor.u32 %v4653, 2147483648
    %v4656 = vmul.f32 %v4655, 1.442695
    %v4657 = vpow.pop %v4656
    %v4658 = vadd.f32 %v4657, 1.0
    %v4659 = vrcp.pop %v4658
    %v4660 = vmul.f32 %v4658, %v4659
    %v4661 = vsub.f32 1.0, %v4660
    %v4662 = vmul.f32 %v4659, %v4661
    %v4663 = vadd.f32 %v4659, %v4662
    %vm4664 = vweird.f32 %v4658
    %vm4665 = vweird.f32 %v4659
    %vm4666 = vmor %vm4664, %vm4665
    %v4667 = vsel %vm4666, %v4659, %v4663
    %v4668 = vand.u32 2147483647, %v4658
    %vm4669 = vcmp.eq.f32.partialorder %v4668, 8.507059e+37
    %v4670 = vand.u32 %v4658, 2147483648
    %v4671 = vor.u32 1.1754944e-38, %v4670
    %v4672 = vsel %vm4669, %v4671, %v4667
    %v4673 = vmul.f32 1.0, %v4672
    %v4674 = vmul.f32 %v4673, 2.0
    %v4675 = vsub.f32 %v4674, 1.0
    %v4676 = vmul.f32 %v4673, %v4202
    %4678 = vrot.lane.b32.xlu0 %v4675, 64
    %v4679 = vpop.permute.xlu0 %4678
    %v4681 = vmul.f32 %v4673, %v4679
    %4683 = vrot.lane.b32.xlu0 %v4681, 32
    %v4684 = vpop.permute.xlu0 %4683
    %v4686 = vadd.f32 %v4676, %v4684
    %v4687 = vtanh.pop %v4686
    %4689 = vrot.lane.b32.xlu0 %v4687, 64
    %v4690 = vpop.permute.xlu0 %4689
    %v4692 = vmul.f32 %v4673, %v4690
    %4694 = vrot.lane.b32.xlu0 %v4416, 32
    %v4695 = vpop.permute.xlu0 %4694
    %4698 = vrot.lane.b32.xlu0 %v4347, 64
    %v4699 = vpop.permute.xlu0 %4698
    %v4701 = vsel %vm73, %v4695, %v4699
    %v4703 = vsel %vm184, %v4701, 0
    %4705 = vmatpush.msra.mxu0 0.0
    %4706 = vmatpush.msra.mxu0 0.0
    %4707 = vmatpush.msra.mxu0 0.0
    %4708 = vmatpush.msra.mxu0 0.0
    %4709 = vmatpush.msra.mxu0 0.0
    %4710 = vmatpush.msra.mxu0 0.0
    %4711 = vmatpush.msra.mxu0 0.0
    %4712 = vmatpush.msra.mxu0 0.0
    %4713 = vmatpush.msra.mxu0 %v3244
    %4714 = vmatpush.msra.mxu0 %v3243
    %4715 = vmatpush.msra.mxu0 %v3242
    %4716 = vmatpush.msra.mxu0 %v3241
    %4717 = vmatpush.msra.mxu0 %v3240
    %4718 = vmatpush.msra.mxu0 %v3239
    %4719 = vmatpush.msra.mxu0 %v3238
    %4720 = vmatpush.msra.mxu0 %v3237
    %4721 = vmatmul.f32.gmra.mxu0 %v4703
    %v4722 = vpop.f32.mrf.mxu0
    %v4723 = vadd.f32 %v3248, %v4722
    %4724 = vdwg.mxu0
    %v4725 = vxor.u32 %v4723, 2147483648
    %v4726 = vmul.f32 %v4725, 1.442695
    %v4727 = vpow.pop %v4726
    %v4728 = vadd.f32 %v4727, 1.0
    %v4729 = vrcp.pop %v4728
    %v4730 = vmul.f32 %v4728, %v4729
    %v4731 = vsub.f32 1.0, %v4730
    %v4732 = vmul.f32 %v4729, %v4731
    %v4733 = vadd.f32 %v4729, %v4732
    %vm4734 = vweird.f32 %v4728
    %vm4735 = vweird.f32 %v4729
    %vm4736 = vmor %vm4734, %vm4735
    %v4737 = vsel %vm4736, %v4729, %v4733
    %v4738 = vand.u32 2147483647, %v4728
    %vm4739 = vcmp.eq.f32.partialorder %v4738, 8.507059e+37
    %v4740 = vand.u32 %v4728, 2147483648
    %v4741 = vor.u32 1.1754944e-38, %v4740
    %v4742 = vsel %vm4739, %v4741, %v4737
    %v4743 = vmul.f32 1.0, %v4742
    %v4744 = vmul.f32 %v4743, 2.0
    %v4745 = vsub.f32 %v4744, 1.0
    %v4746 = vmul.f32 %v4743, %v4341
    %4748 = vrot.lane.b32.xlu0 %v4745, 64
    %v4749 = vpop.permute.xlu0 %4748
    %v4751 = vmul.f32 %v4743, %v4749
    %4753 = vrot.lane.b32.xlu0 %v4751, 32
    %v4754 = vpop.permute.xlu0 %4753
    %v4756 = vadd.f32 %v4746, %v4754
    %v4757 = vtanh.pop %v4756
    %4759 = vrot.lane.b32.xlu0 %v4757, 64
    %v4760 = vpop.permute.xlu0 %4759
    %v4762 = vmul.f32 %v4743, %v4760
    %4764 = vrot.lane.b32.xlu0 %v4485, 32
    %v4765 = vpop.permute.xlu0 %4764
    %4767 = vrot.lane.b32.xlu0 %v4416, 64
    %v4768 = vpop.permute.xlu0 %4767
    %v4770 = vsel %vm73, %v4765, %v4768
    %v4772 = vsel %vm184, %v4770, 0
    %4774 = vmatpush.msra.mxu0 0.0
    %4775 = vmatpush.msra.mxu0 0.0
    %4776 = vmatpush.msra.mxu0 0.0
    %4777 = vmatpush.msra.mxu0 0.0
    %4778 = vmatpush.msra.mxu0 0.0
    %4779 = vmatpush.msra.mxu0 0.0
    %4780 = vmatpush.msra.mxu0 0.0
    %4781 = vmatpush.msra.mxu0 0.0
    %4782 = vmatpush.msra.mxu0 %v2679
    %4783 = vmatpush.msra.mxu0 %v2678
    %4784 = vmatpush.msra.mxu0 %v2677
    %4785 = vmatpush.msra.mxu0 %v2676
    %4786 = vmatpush.msra.mxu0 %v2675
    %4787 = vmatpush.msra.mxu0 %v2674
    %4788 = vmatpush.msra.mxu0 %v2673
    %4789 = vmatpush.msra.mxu0 %v2672
    %4790 = vmatmul.f32.gmra.mxu0 %v4772
    %v4791 = vpop.f32.mrf.mxu0
    %v4792 = vadd.f32 %v2683, %v4791
    %4793 = vdwg.mxu0
    %v4794 = vxor.u32 %v4792, 2147483648
    %v4795 = vmul.f32 %v4794, 1.442695
    %v4796 = vpow.pop %v4795
    %v4797 = vadd.f32 %v4796, 1.0
    %v4798 = vrcp.pop %v4797
    %v4799 = vmul.f32 %v4797, %v4798
    %v4800 = vsub.f32 1.0, %v4799
    %v4801 = vmul.f32 %v4798, %v4800
    %v4802 = vadd.f32 %v4798, %v4801
    %vm4803 = vweird.f32 %v4797
    %vm4804 = vweird.f32 %v4798
    %vm4805 = vmor %vm4803, %vm4804
    %v4806 = vsel %vm4805, %v4798, %v4802
    %v4807 = vand.u32 2147483647, %v4797
    %vm4808 = vcmp.eq.f32.partialorder %v4807, 8.507059e+37
    %v4809 = vand.u32 %v4797, 2147483648
    %v4810 = vor.u32 1.1754944e-38, %v4809
    %v4811 = vsel %vm4808, %v4810, %v4806
    %v4812 = vmul.f32 1.0, %v4811
    %v4813 = vmul.f32 %v4812, 2.0
    %v4814 = vsub.f32 %v4813, 1.0
    %v4815 = vmul.f32 %v4812, %v4410
    %4817 = vrot.lane.b32.xlu0 %v4814, 64
    %v4818 = vpop.permute.xlu0 %4817
    %v4820 = vmul.f32 %v4812, %v4818
    %4822 = vrot.lane.b32.xlu0 %v4820, 32
    %v4823 = vpop.permute.xlu0 %4822
    %v4825 = vadd.f32 %v4815, %v4823
    %v4826 = vtanh.pop %v4825
    %4828 = vrot.lane.b32.xlu0 %v4826, 64
    %v4829 = vpop.permute.xlu0 %4828
    %v4831 = vmul.f32 %v4812, %v4829
    %4833 = vrot.lane.b32.xlu0 %v4554, 32
    %v4834 = vpop.permute.xlu0 %4833
    %4836 = vrot.lane.b32.xlu0 %v4485, 64
    %v4837 = vpop.permute.xlu0 %4836
    %v4839 = vsel %vm73, %v4834, %v4837
    %v4841 = vsel %vm184, %v4839, 0
    %4843 = vmatpush.msra.mxu0 0.0
    %4844 = vmatpush.msra.mxu0 0.0
    %4845 = vmatpush.msra.mxu0 0.0
    %4846 = vmatpush.msra.mxu0 0.0
    %4847 = vmatpush.msra.mxu0 0.0
    %4848 = vmatpush.msra.mxu0 0.0
    %4849 = vmatpush.msra.mxu0 0.0
    %4850 = vmatpush.msra.mxu0 0.0
    %4851 = vmatpush.msra.mxu0 %v2113
    %4852 = vmatpush.msra.mxu0 %v2112
    %4853 = vmatpush.msra.mxu0 %v2111
    %4854 = vmatpush.msra.mxu0 %v2110
    %4855 = vmatpush.msra.mxu0 %v2109
    %4856 = vmatpush.msra.mxu0 %v2108
    %4857 = vmatpush.msra.mxu0 %v2107
    %4858 = vmatpush.msra.mxu0 %v2106
    %4859 = vmatmul.f32.gmra.mxu0 %v4841
    %v4860 = vpop.f32.mrf.mxu0
    %v4861 = vadd.f32 %v2117, %v4860
    %4862 = vdwg.mxu0
    %v4863 = vxor.u32 %v4861, 2147483648
    %v4864 = vmul.f32 %v4863, 1.442695
    %v4865 = vpow.pop %v4864
    %v4866 = vadd.f32 %v4865, 1.0
    %v4867 = vrcp.pop %v4866
    %v4868 = vmul.f32 %v4866, %v4867
    %v4869 = vsub.f32 1.0, %v4868
    %v4870 = vmul.f32 %v4867, %v4869
    %v4871 = vadd.f32 %v4867, %v4870
    %vm4872 = vweird.f32 %v4866
    %vm4873 = vweird.f32 %v4867
    %vm4874 = vmor %vm4872, %vm4873
    %v4875 = vsel %vm4874, %v4867, %v4871
    %v4876 = vand.u32 2147483647, %v4866
    %vm4877 = vcmp.eq.f32.partialorder %v4876, 8.507059e+37
    %v4878 = vand.u32 %v4866, 2147483648
    %v4879 = vor.u32 1.1754944e-38, %v4878
    %v4880 = vsel %vm4877, %v4879, %v4875
    %v4881 = vmul.f32 1.0, %v4880
    %v4882 = vmul.f32 %v4881, 2.0
    %v4883 = vsub.f32 %v4882, 1.0
    %v4884 = vmul.f32 %v4881, %v4479
    %4886 = vrot.lane.b32.xlu0 %v4883, 64
    %v4887 = vpop.permute.xlu0 %4886
    %v4889 = vmul.f32 %v4881, %v4887
    %4891 = vrot.lane.b32.xlu0 %v4889, 32
    %v4892 = vpop.permute.xlu0 %4891
    %v4894 = vadd.f32 %v4884, %v4892
    %v4895 = vtanh.pop %v4894
    %4897 = vrot.lane.b32.xlu0 %v4895, 64
    %v4898 = vpop.permute.xlu0 %4897
    %v4900 = vmul.f32 %v4881, %v4898
    %4902 = vrot.lane.b32.xlu0 %v4623, 32
    %v4903 = vpop.permute.xlu0 %4902
    %4905 = vrot.lane.b32.xlu0 %v4554, 64
    %v4906 = vpop.permute.xlu0 %4905
    %v4908 = vsel %vm73, %v4903, %v4906
    %v4910 = vsel %vm184, %v4908, 0
    %4912 = vmatpush.msra.mxu0 0.0
    %4913 = vmatpush.msra.mxu0 0.0
    %4914 = vmatpush.msra.mxu0 0.0
    %4915 = vmatpush.msra.mxu0 0.0
    %4916 = vmatpush.msra.mxu0 0.0
    %4917 = vmatpush.msra.mxu0 0.0
    %4918 = vmatpush.msra.mxu0 0.0
    %4919 = vmatpush.msra.mxu0 0.0
    %4920 = vmatpush.msra.mxu0 %v1616
    %4921 = vmatpush.msra.mxu0 %v1615
    %4922 = vmatpush.msra.mxu0 %v1614
    %4923 = vmatpush.msra.mxu0 %v1613
    %4924 = vmatpush.msra.mxu0 %v1612
    %4925 = vmatpush.msra.mxu0 %v1611
    %4926 = vmatpush.msra.mxu0 %v1610
    %4927 = vmatpush.msra.mxu0 %v1609
    %4928 = vmatmul.f32.gmra.mxu0 %v4910
    %v4929 = vpop.f32.mrf.mxu0
    %v4930 = vadd.f32 %v1620, %v4929
    %4931 = vdwg.mxu0
    %v4932 = vxor.u32 %v4930, 2147483648
    %v4933 = vmul.f32 %v4932, 1.442695
    %v4934 = vpow.pop %v4933
    %v4935 = vadd.f32 %v4934, 1.0
    %v4936 = vrcp.pop %v4935
    %v4937 = vmul.f32 %v4935, %v4936
    %v4938 = vsub.f32 1.0, %v4937
    %v4939 = vmul.f32 %v4936, %v4938
    %v4940 = vadd.f32 %v4936, %v4939
    %vm4941 = vweird.f32 %v4935
    %vm4942 = vweird.f32 %v4936
    %vm4943 = vmor %vm4941, %vm4942
    %v4944 = vsel %vm4943, %v4936, %v4940
    %v4945 = vand.u32 2147483647, %v4935
    %vm4946 = vcmp.eq.f32.partialorder %v4945, 8.507059e+37
    %v4947 = vand.u32 %v4935, 2147483648
    %v4948 = vor.u32 1.1754944e-38, %v4947
    %v4949 = vsel %vm4946, %v4948, %v4944
    %v4950 = vmul.f32 1.0, %v4949
    %v4951 = vmul.f32 %v4950, 2.0
    %v4952 = vsub.f32 %v4951, 1.0
    %v4953 = vmul.f32 %v4950, %v4548
    %4955 = vrot.lane.b32.xlu0 %v4952, 64
    %v4956 = vpop.permute.xlu0 %4955
    %v4958 = vmul.f32 %v4950, %v4956
    %4960 = vrot.lane.b32.xlu0 %v4958, 32
    %v4961 = vpop.permute.xlu0 %4960
    %v4963 = vadd.f32 %v4953, %v4961
    %v4964 = vtanh.pop %v4963
    %4966 = vrot.lane.b32.xlu0 %v4964, 64
    %v4967 = vpop.permute.xlu0 %4966
    %v4969 = vmul.f32 %v4950, %v4967
    %4971 = vrot.lane.b32.xlu0 %v4692, 32
    %v4972 = vpop.permute.xlu0 %4971
    %4974 = vrot.lane.b32.xlu0 %v4623, 64
    %v4975 = vpop.permute.xlu0 %4974
    %v4977 = vsel %vm73, %v4972, %v4975
    %v4979 = vsel %vm184, %v4977, 0
    %4981 = vmatpush.msra.mxu0 0.0
    %4982 = vmatpush.msra.mxu0 0.0
    %4983 = vmatpush.msra.mxu0 0.0
    %4984 = vmatpush.msra.mxu0 0.0
    %4985 = vmatpush.msra.mxu0 0.0
    %4986 = vmatpush.msra.mxu0 0.0
    %4987 = vmatpush.msra.mxu0 0.0
    %4988 = vmatpush.msra.mxu0 0.0
    %4989 = vmatpush.msra.mxu0 %v1193
    %4990 = vmatpush.msra.mxu0 %v1192
    %4991 = vmatpush.msra.mxu0 %v1191
    %4992 = vmatpush.msra.mxu0 %v1190
    %4993 = vmatpush.msra.mxu0 %v1189
    %4994 = vmatpush.msra.mxu0 %v1188
    %4995 = vmatpush.msra.mxu0 %v1187
    %4996 = vmatpush.msra.mxu0 %v1186
    %4997 = vmatmul.f32.gmra.mxu0 %v4979
    %v4998 = vpop.f32.mrf.mxu0
    %v4999 = vadd.f32 %v1197, %v4998
    %5000 = vdwg.mxu0
    %v5001 = vxor.u32 %v4999, 2147483648
    %v5002 = vmul.f32 %v5001, 1.442695
    %v5003 = vpow.pop %v5002
    %v5004 = vadd.f32 %v5003, 1.0
    %v5005 = vrcp.pop %v5004
    %v5006 = vmul.f32 %v5004, %v5005
    %v5007 = vsub.f32 1.0, %v5006
    %v5008 = vmul.f32 %v5005, %v5007
    %v5009 = vadd.f32 %v5005, %v5008
    %vm5010 = vweird.f32 %v5004
    %vm5011 = vweird.f32 %v5005
    %vm5012 = vmor %vm5010, %vm5011
    %v5013 = vsel %vm5012, %v5005, %v5009
    %v5014 = vand.u32 2147483647, %v5004
    %vm5015 = vcmp.eq.f32.partialorder %v5014, 8.507059e+37
    %v5016 = vand.u32 %v5004, 2147483648
    %v5017 = vor.u32 1.1754944e-38, %v5016
    %v5018 = vsel %vm5015, %v5017, %v5013
    %v5019 = vmul.f32 1.0, %v5018
    %v5020 = vmul.f32 %v5019, 2.0
    %v5021 = vsub.f32 %v5020, 1.0
    %v5022 = vmul.f32 %v5019, %v4617
    %5024 = vrot.lane.b32.xlu0 %v5021, 64
    %v5025 = vpop.permute.xlu0 %5024
    %v5027 = vmul.f32 %v5019, %v5025
    %5029 = vrot.lane.b32.xlu0 %v5027, 32
    %v5030 = vpop.permute.xlu0 %5029
    %v5032 = vadd.f32 %v5022, %v5030
    %v5033 = vtanh.pop %v5032
    %5035 = vrot.lane.b32.xlu0 %v5033, 64
    %v5036 = vpop.permute.xlu0 %5035
    %v5038 = vmul.f32 %v5019, %v5036
    %5040 = vrot.lane.b32.xlu0 %v4831, 32
    %v5041 = vpop.permute.xlu0 %5040
    %5044 = vrot.lane.b32.xlu0 %v4762, 64
    %v5045 = vpop.permute.xlu0 %5044
    %v5047 = vsel %vm73, %v5041, %v5045
    %v5049 = vsel %vm184, %v5047, 0
    %5051 = vmatpush.msra.mxu0 0.0
    %5052 = vmatpush.msra.mxu0 0.0
    %5053 = vmatpush.msra.mxu0 0.0
    %5054 = vmatpush.msra.mxu0 0.0
    %5055 = vmatpush.msra.mxu0 0.0
    %5056 = vmatpush.msra.mxu0 0.0
    %5057 = vmatpush.msra.mxu0 0.0
    %5058 = vmatpush.msra.mxu0 0.0
    %5059 = vmatpush.msra.mxu0 %v3244
    %5060 = vmatpush.msra.mxu0 %v3243
    %5061 = vmatpush.msra.mxu0 %v3242
    %5062 = vmatpush.msra.mxu0 %v3241
    %5063 = vmatpush.msra.mxu0 %v3240
    %5064 = vmatpush.msra.mxu0 %v3239
    %5065 = vmatpush.msra.mxu0 %v3238
    %5066 = vmatpush.msra.mxu0 %v3237
    %5067 = vmatmul.f32.gmra.mxu0 %v5049
    %v5068 = vpop.f32.mrf.mxu0
    %v5069 = vadd.f32 %v3248, %v5068
    %5070 = vdwg.mxu0
    %v5071 = vxor.u32 %v5069, 2147483648
    %v5072 = vmul.f32 %v5071, 1.442695
    %v5073 = vpow.pop %v5072
    %v5074 = vadd.f32 %v5073, 1.0
    %v5075 = vrcp.pop %v5074
    %v5076 = vmul.f32 %v5074, %v5075
    %v5077 = vsub.f32 1.0, %v5076
    %v5078 = vmul.f32 %v5075, %v5077
    %v5079 = vadd.f32 %v5075, %v5078
    %vm5080 = vweird.f32 %v5074
    %vm5081 = vweird.f32 %v5075
    %vm5082 = vmor %vm5080, %vm5081
    %v5083 = vsel %vm5082, %v5075, %v5079
    %v5084 = vand.u32 2147483647, %v5074
    %vm5085 = vcmp.eq.f32.partialorder %v5084, 8.507059e+37
    %v5086 = vand.u32 %v5074, 2147483648
    %v5087 = vor.u32 1.1754944e-38, %v5086
    %v5088 = vsel %vm5085, %v5087, %v5083
    %v5089 = vmul.f32 1.0, %v5088
    %v5090 = vmul.f32 %v5089, 2.0
    %v5091 = vsub.f32 %v5090, 1.0
    %v5092 = vmul.f32 %v5089, %v4756
    %5094 = vrot.lane.b32.xlu0 %v5091, 64
    %v5095 = vpop.permute.xlu0 %5094
    %v5097 = vmul.f32 %v5089, %v5095
    %5099 = vrot.lane.b32.xlu0 %v5097, 32
    %v5100 = vpop.permute.xlu0 %5099
    %v5102 = vadd.f32 %v5092, %v5100
    %v5103 = vtanh.pop %v5102
    %5105 = vrot.lane.b32.xlu0 %v5103, 64
    %v5106 = vpop.permute.xlu0 %5105
    %v5108 = vmul.f32 %v5089, %v5106
    %5110 = vrot.lane.b32.xlu0 %v4900, 32
    %v5111 = vpop.permute.xlu0 %5110
    %5113 = vrot.lane.b32.xlu0 %v4831, 64
    %v5114 = vpop.permute.xlu0 %5113
    %v5116 = vsel %vm73, %v5111, %v5114
    %v5118 = vsel %vm184, %v5116, 0
    %5120 = vmatpush.msra.mxu0 0.0
    %5121 = vmatpush.msra.mxu0 0.0
    %5122 = vmatpush.msra.mxu0 0.0
    %5123 = vmatpush.msra.mxu0 0.0
    %5124 = vmatpush.msra.mxu0 0.0
    %5125 = vmatpush.msra.mxu0 0.0
    %5126 = vmatpush.msra.mxu0 0.0
    %5127 = vmatpush.msra.mxu0 0.0
    %5128 = vmatpush.msra.mxu0 %v2679
    %5129 = vmatpush.msra.mxu0 %v2678
    %5130 = vmatpush.msra.mxu0 %v2677
    %5131 = vmatpush.msra.mxu0 %v2676
    %5132 = vmatpush.msra.mxu0 %v2675
    %5133 = vmatpush.msra.mxu0 %v2674
    %5134 = vmatpush.msra.mxu0 %v2673
    %5135 = vmatpush.msra.mxu0 %v2672
    %5136 = vmatmul.f32.gmra.mxu0 %v5118
    %v5137 = vpop.f32.mrf.mxu0
    %v5138 = vadd.f32 %v2683, %v5137
    %5139 = vdwg.mxu0
    %v5140 = vxor.u32 %v5138, 2147483648
    %v5141 = vmul.f32 %v5140, 1.442695
    %v5142 = vpow.pop %v5141
    %v5143 = vadd.f32 %v5142, 1.0
    %v5144 = vrcp.pop %v5143
    %v5145 = vmul.f32 %v5143, %v5144
    %v5146 = vsub.f32 1.0, %v5145
    %v5147 = vmul.f32 %v5144, %v5146
    %v5148 = vadd.f32 %v5144, %v5147
    %vm5149 = vweird.f32 %v5143
    %vm5150 = vweird.f32 %v5144
    %vm5151 = vmor %vm5149, %vm5150
    %v5152 = vsel %vm5151, %v5144, %v5148
    %v5153 = vand.u32 2147483647, %v5143
    %vm5154 = vcmp.eq.f32.partialorder %v5153, 8.507059e+37
    %v5155 = vand.u32 %v5143, 2147483648
    %v5156 = vor.u32 1.1754944e-38, %v5155
    %v5157 = vsel %vm5154, %v5156, %v5152
    %v5158 = vmul.f32 1.0, %v5157
    %v5159 = vmul.f32 %v5158, 2.0
    %v5160 = vsub.f32 %v5159, 1.0
    %v5161 = vmul.f32 %v5158, %v4825
    %5163 = vrot.lane.b32.xlu0 %v5160, 64
    %v5164 = vpop.permute.xlu0 %5163
    %v5166 = vmul.f32 %v5158, %v5164
    %5168 = vrot.lane.b32.xlu0 %v5166, 32
    %v5169 = vpop.permute.xlu0 %5168
    %v5171 = vadd.f32 %v5161, %v5169
    %v5172 = vtanh.pop %v5171
    %5174 = vrot.lane.b32.xlu0 %v5172, 64
    %v5175 = vpop.permute.xlu0 %5174
    %v5177 = vmul.f32 %v5158, %v5175
    %5179 = vrot.lane.b32.xlu0 %v4969, 32
    %v5180 = vpop.permute.xlu0 %5179
    %5182 = vrot.lane.b32.xlu0 %v4900, 64
    %v5183 = vpop.permute.xlu0 %5182
    %v5185 = vsel %vm73, %v5180, %v5183
    %v5187 = vsel %vm184, %v5185, 0
    %5189 = vmatpush.msra.mxu0 0.0
    %5190 = vmatpush.msra.mxu0 0.0
    %5191 = vmatpush.msra.mxu0 0.0
    %5192 = vmatpush.msra.mxu0 0.0
    %5193 = vmatpush.msra.mxu0 0.0
    %5194 = vmatpush.msra.mxu0 0.0
    %5195 = vmatpush.msra.mxu0 0.0
    %5196 = vmatpush.msra.mxu0 0.0
    %5197 = vmatpush.msra.mxu0 %v2113
    %5198 = vmatpush.msra.mxu0 %v2112
    %5199 = vmatpush.msra.mxu0 %v2111
    %5200 = vmatpush.msra.mxu0 %v2110
    %5201 = vmatpush.msra.mxu0 %v2109
    %5202 = vmatpush.msra.mxu0 %v2108
    %5203 = vmatpush.msra.mxu0 %v2107
    %5204 = vmatpush.msra.mxu0 %v2106
    %5205 = vmatmul.f32.gmra.mxu0 %v5187
    %v5206 = vpop.f32.mrf.mxu0
    %v5207 = vadd.f32 %v2117, %v5206
    %5208 = vdwg.mxu0
    %v5209 = vxor.u32 %v5207, 2147483648
    %v5210 = vmul.f32 %v5209, 1.442695
    %v5211 = vpow.pop %v5210
    %v5212 = vadd.f32 %v5211, 1.0
    %v5213 = vrcp.pop %v5212
    %v5214 = vmul.f32 %v5212, %v5213
    %v5215 = vsub.f32 1.0, %v5214
    %v5216 = vmul.f32 %v5213, %v5215
    %v5217 = vadd.f32 %v5213, %v5216
    %vm5218 = vweird.f32 %v5212
    %vm5219 = vweird.f32 %v5213
    %vm5220 = vmor %vm5218, %vm5219
    %v5221 = vsel %vm5220, %v5213, %v5217
    %v5222 = vand.u32 2147483647, %v5212
    %vm5223 = vcmp.eq.f32.partialorder %v5222, 8.507059e+37
    %v5224 = vand.u32 %v5212, 2147483648
    %v5225 = vor.u32 1.1754944e-38, %v5224
    %v5226 = vsel %vm5223, %v5225, %v5221
    %v5227 = vmul.f32 1.0, %v5226
    %v5228 = vmul.f32 %v5227, 2.0
    %v5229 = vsub.f32 %v5228, 1.0
    %v5230 = vmul.f32 %v5227, %v4894
    %5232 = vrot.lane.b32.xlu0 %v5229, 64
    %v5233 = vpop.permute.xlu0 %5232
    %v5235 = vmul.f32 %v5227, %v5233
    %5237 = vrot.lane.b32.xlu0 %v5235, 32
    %v5238 = vpop.permute.xlu0 %5237
    %v5240 = vadd.f32 %v5230, %v5238
    %v5241 = vtanh.pop %v5240
    %5243 = vrot.lane.b32.xlu0 %v5241, 64
    %v5244 = vpop.permute.xlu0 %5243
    %v5246 = vmul.f32 %v5227, %v5244
    %5248 = vrot.lane.b32.xlu0 %v5038, 32
    %v5249 = vpop.permute.xlu0 %5248
    %5251 = vrot.lane.b32.xlu0 %v4969, 64
    %v5252 = vpop.permute.xlu0 %5251
    %v5254 = vsel %vm73, %v5249, %v5252
    %v5256 = vsel %vm184, %v5254, 0
    %5258 = vmatpush.msra.mxu0 0.0
    %5259 = vmatpush.msra.mxu0 0.0
    %5260 = vmatpush.msra.mxu0 0.0
    %5261 = vmatpush.msra.mxu0 0.0
    %5262 = vmatpush.msra.mxu0 0.0
    %5263 = vmatpush.msra.mxu0 0.0
    %5264 = vmatpush.msra.mxu0 0.0
    %5265 = vmatpush.msra.mxu0 0.0
    %5266 = vmatpush.msra.mxu0 %v1616
    %5267 = vmatpush.msra.mxu0 %v1615
    %5268 = vmatpush.msra.mxu0 %v1614
    %5269 = vmatpush.msra.mxu0 %v1613
    %5270 = vmatpush.msra.mxu0 %v1612
    %5271 = vmatpush.msra.mxu0 %v1611
    %5272 = vmatpush.msra.mxu0 %v1610
    %5273 = vmatpush.msra.mxu0 %v1609
    %5274 = vmatmul.f32.gmra.mxu0 %v5256
    %v5275 = vpop.f32.mrf.mxu0
    %v5276 = vadd.f32 %v1620, %v5275
    %5277 = vdwg.mxu0
    %v5278 = vxor.u32 %v5276, 2147483648
    %v5279 = vmul.f32 %v5278, 1.442695
    %v5280 = vpow.pop %v5279
    %v5281 = vadd.f32 %v5280, 1.0
    %v5282 = vrcp.pop %v5281
    %v5283 = vmul.f32 %v5281, %v5282
    %v5284 = vsub.f32 1.0, %v5283
    %v5285 = vmul.f32 %v5282, %v5284
    %v5286 = vadd.f32 %v5282, %v5285
    %vm5287 = vweird.f32 %v5281
    %vm5288 = vweird.f32 %v5282
    %vm5289 = vmor %vm5287, %vm5288
    %v5290 = vsel %vm5289, %v5282, %v5286
    %v5291 = vand.u32 2147483647, %v5281
    %vm5292 = vcmp.eq.f32.partialorder %v5291, 8.507059e+37
    %v5293 = vand.u32 %v5281, 2147483648
    %v5294 = vor.u32 1.1754944e-38, %v5293
    %v5295 = vsel %vm5292, %v5294, %v5290
    %v5296 = vmul.f32 1.0, %v5295
    %v5297 = vmul.f32 %v5296, 2.0
    %v5298 = vsub.f32 %v5297, 1.0
    %v5299 = vmul.f32 %v5296, %v4963
    %5301 = vrot.lane.b32.xlu0 %v5298, 64
    %v5302 = vpop.permute.xlu0 %5301
    %v5304 = vmul.f32 %v5296, %v5302
    %5306 = vrot.lane.b32.xlu0 %v5304, 32
    %v5307 = vpop.permute.xlu0 %5306
    %v5309 = vadd.f32 %v5299, %v5307
    %v5310 = vtanh.pop %v5309
    %5312 = vrot.lane.b32.xlu0 %v5310, 64
    %v5313 = vpop.permute.xlu0 %5312
    %v5315 = vmul.f32 %v5296, %v5313
    %5317 = vrot.lane.b32.xlu0 %v5177, 32
    %v5318 = vpop.permute.xlu0 %5317
    %5321 = vrot.lane.b32.xlu0 %v5108, 64
    %v5322 = vpop.permute.xlu0 %5321
    %v5324 = vsel %vm73, %v5318, %v5322
    %v5326 = vsel %vm184, %v5324, 0
    %5328 = vmatpush.msra.mxu0 0.0
    %5329 = vmatpush.msra.mxu0 0.0
    %5330 = vmatpush.msra.mxu0 0.0
    %5331 = vmatpush.msra.mxu0 0.0
    %5332 = vmatpush.msra.mxu0 0.0
    %5333 = vmatpush.msra.mxu0 0.0
    %5334 = vmatpush.msra.mxu0 0.0
    %5335 = vmatpush.msra.mxu0 0.0
    %5336 = vmatpush.msra.mxu0 %v3244
    %5337 = vmatpush.msra.mxu0 %v3243
    %5338 = vmatpush.msra.mxu0 %v3242
    %5339 = vmatpush.msra.mxu0 %v3241
    %5340 = vmatpush.msra.mxu0 %v3240
    %5341 = vmatpush.msra.mxu0 %v3239
    %5342 = vmatpush.msra.mxu0 %v3238
    %5343 = vmatpush.msra.mxu0 %v3237
    %5344 = vmatmul.f32.gmra.mxu0 %v5326
    %v5345 = vpop.f32.mrf.mxu0
    %v5346 = vadd.f32 %v3248, %v5345
    %5347 = vdwg.mxu0
    %v5348 = vxor.u32 %v5346, 2147483648
    %v5349 = vmul.f32 %v5348, 1.442695
    %v5350 = vpow.pop %v5349
    %v5351 = vadd.f32 %v5350, 1.0
    %v5352 = vrcp.pop %v5351
    %v5353 = vmul.f32 %v5351, %v5352
    %v5354 = vsub.f32 1.0, %v5353
    %v5355 = vmul.f32 %v5352, %v5354
    %v5356 = vadd.f32 %v5352, %v5355
    %vm5357 = vweird.f32 %v5351
    %vm5358 = vweird.f32 %v5352
    %vm5359 = vmor %vm5357, %vm5358
    %v5360 = vsel %vm5359, %v5352, %v5356
    %v5361 = vand.u32 2147483647, %v5351
    %vm5362 = vcmp.eq.f32.partialorder %v5361, 8.507059e+37
    %v5363 = vand.u32 %v5351, 2147483648
    %v5364 = vor.u32 1.1754944e-38, %v5363
    %v5365 = vsel %vm5362, %v5364, %v5360
    %v5366 = vmul.f32 1.0, %v5365
    %v5367 = vmul.f32 %v5366, 2.0
    %v5368 = vsub.f32 %v5367, 1.0
    %v5369 = vmul.f32 %v5366, %v5102
    %5371 = vrot.lane.b32.xlu0 %v5368, 64
    %v5372 = vpop.permute.xlu0 %5371
    %v5374 = vmul.f32 %v5366, %v5372
    %5376 = vrot.lane.b32.xlu0 %v5374, 32
    %v5377 = vpop.permute.xlu0 %5376
    %v5379 = vadd.f32 %v5369, %v5377
    %v5380 = vtanh.pop %v5379
    %5382 = vrot.lane.b32.xlu0 %v5380, 64
    %v5383 = vpop.permute.xlu0 %5382
    %v5385 = vmul.f32 %v5366, %v5383
    %5387 = vrot.lane.b32.xlu0 %v5246, 32
    %v5388 = vpop.permute.xlu0 %5387
    %5390 = vrot.lane.b32.xlu0 %v5177, 64
    %v5391 = vpop.permute.xlu0 %5390
    %v5393 = vsel %vm73, %v5388, %v5391
    %v5395 = vsel %vm184, %v5393, 0
    %5397 = vmatpush.msra.mxu0 0.0
    %5398 = vmatpush.msra.mxu0 0.0
    %5399 = vmatpush.msra.mxu0 0.0
    %5400 = vmatpush.msra.mxu0 0.0
    %5401 = vmatpush.msra.mxu0 0.0
    %5402 = vmatpush.msra.mxu0 0.0
    %5403 = vmatpush.msra.mxu0 0.0
    %5404 = vmatpush.msra.mxu0 0.0
    %5405 = vmatpush.msra.mxu0 %v2679
    %5406 = vmatpush.msra.mxu0 %v2678
    %5407 = vmatpush.msra.mxu0 %v2677
    %5408 = vmatpush.msra.mxu0 %v2676
    %5409 = vmatpush.msra.mxu0 %v2675
    %5410 = vmatpush.msra.mxu0 %v2674
    %5411 = vmatpush.msra.mxu0 %v2673
    %5412 = vmatpush.msra.mxu0 %v2672
    %5413 = vmatmul.f32.gmra.mxu0 %v5395
    %v5414 = vpop.f32.mrf.mxu0
    %v5415 = vadd.f32 %v2683, %v5414
    %5416 = vdwg.mxu0
    %v5417 = vxor.u32 %v5415, 2147483648
    %v5418 = vmul.f32 %v5417, 1.442695
    %v5419 = vpow.pop %v5418
    %v5420 = vadd.f32 %v5419, 1.0
    %v5421 = vrcp.pop %v5420
    %v5422 = vmul.f32 %v5420, %v5421
    %v5423 = vsub.f32 1.0, %v5422
    %v5424 = vmul.f32 %v5421, %v5423
    %v5425 = vadd.f32 %v5421, %v5424
    %vm5426 = vweird.f32 %v5420
    %vm5427 = vweird.f32 %v5421
    %vm5428 = vmor %vm5426, %vm5427
    %v5429 = vsel %vm5428, %v5421, %v5425
    %v5430 = vand.u32 2147483647, %v5420
    %vm5431 = vcmp.eq.f32.partialorder %v5430, 8.507059e+37
    %v5432 = vand.u32 %v5420, 2147483648
    %v5433 = vor.u32 1.1754944e-38, %v5432
    %v5434 = vsel %vm5431, %v5433, %v5429
    %v5435 = vmul.f32 1.0, %v5434
    %v5436 = vmul.f32 %v5435, 2.0
    %v5437 = vsub.f32 %v5436, 1.0
    %v5438 = vmul.f32 %v5435, %v5171
    %5440 = vrot.lane.b32.xlu0 %v5437, 64
    %v5441 = vpop.permute.xlu0 %5440
    %v5443 = vmul.f32 %v5435, %v5441
    %5445 = vrot.lane.b32.xlu0 %v5443, 32
    %v5446 = vpop.permute.xlu0 %5445
    %v5448 = vadd.f32 %v5438, %v5446
    %v5449 = vtanh.pop %v5448
    %5451 = vrot.lane.b32.xlu0 %v5449, 64
    %v5452 = vpop.permute.xlu0 %5451
    %v5454 = vmul.f32 %v5435, %v5452
    %5456 = vrot.lane.b32.xlu0 %v5315, 32
    %v5457 = vpop.permute.xlu0 %5456
    %5459 = vrot.lane.b32.xlu0 %v5246, 64
    %v5460 = vpop.permute.xlu0 %5459
    %v5462 = vsel %vm73, %v5457, %v5460
    %v5464 = vsel %vm184, %v5462, 0
    %5466 = vmatpush.msra.mxu0 0.0
    %5467 = vmatpush.msra.mxu0 0.0
    %5468 = vmatpush.msra.mxu0 0.0
    %5469 = vmatpush.msra.mxu0 0.0
    %5470 = vmatpush.msra.mxu0 0.0
    %5471 = vmatpush.msra.mxu0 0.0
    %5472 = vmatpush.msra.mxu0 0.0
    %5473 = vmatpush.msra.mxu0 0.0
    %5474 = vmatpush.msra.mxu0 %v2113
    %5475 = vmatpush.msra.mxu0 %v2112
    %5476 = vmatpush.msra.mxu0 %v2111
    %5477 = vmatpush.msra.mxu0 %v2110
    %5478 = vmatpush.msra.mxu0 %v2109
    %5479 = vmatpush.msra.mxu0 %v2108
    %5480 = vmatpush.msra.mxu0 %v2107
    %5481 = vmatpush.msra.mxu0 %v2106
    %5482 = vmatmul.f32.gmra.mxu0 %v5464
    %v5483 = vpop.f32.mrf.mxu0
    %v5484 = vadd.f32 %v2117, %v5483
    %5485 = vdwg.mxu0
    %v5486 = vxor.u32 %v5484, 2147483648
    %v5487 = vmul.f32 %v5486, 1.442695
    %v5488 = vpow.pop %v5487
    %v5489 = vadd.f32 %v5488, 1.0
    %v5490 = vrcp.pop %v5489
    %v5491 = vmul.f32 %v5489, %v5490
    %v5492 = vsub.f32 1.0, %v5491
    %v5493 = vmul.f32 %v5490, %v5492
    %v5494 = vadd.f32 %v5490, %v5493
    %vm5495 = vweird.f32 %v5489
    %vm5496 = vweird.f32 %v5490
    %vm5497 = vmor %vm5495, %vm5496
    %v5498 = vsel %vm5497, %v5490, %v5494
    %v5499 = vand.u32 2147483647, %v5489
    %vm5500 = vcmp.eq.f32.partialorder %v5499, 8.507059e+37
    %v5501 = vand.u32 %v5489, 2147483648
    %v5502 = vor.u32 1.1754944e-38, %v5501
    %v5503 = vsel %vm5500, %v5502, %v5498
    %v5504 = vmul.f32 1.0, %v5503
    %v5505 = vmul.f32 %v5504, 2.0
    %v5506 = vsub.f32 %v5505, 1.0
    %v5507 = vmul.f32 %v5504, %v5240
    %5509 = vrot.lane.b32.xlu0 %v5506, 64
    %v5510 = vpop.permute.xlu0 %5509
    %v5512 = vmul.f32 %v5504, %v5510
    %5514 = vrot.lane.b32.xlu0 %v5512, 32
    %v5515 = vpop.permute.xlu0 %5514
    %v5517 = vadd.f32 %v5507, %v5515
    %v5518 = vtanh.pop %v5517
    %5520 = vrot.lane.b32.xlu0 %v5518, 64
    %v5521 = vpop.permute.xlu0 %5520
    %v5523 = vmul.f32 %v5504, %v5521
    %5525 = vrot.lane.b32.xlu0 %v5454, 32
    %v5526 = vpop.permute.xlu0 %5525
    %5529 = vrot.lane.b32.xlu0 %v5385, 64
    %v5530 = vpop.permute.xlu0 %5529
    %v5532 = vsel %vm73, %v5526, %v5530
    %v5534 = vsel %vm184, %v5532, 0
    %5536 = vmatpush.msra.mxu0 0.0
    %5537 = vmatpush.msra.mxu0 0.0
    %5538 = vmatpush.msra.mxu0 0.0
    %5539 = vmatpush.msra.mxu0 0.0
    %5540 = vmatpush.msra.mxu0 0.0
    %5541 = vmatpush.msra.mxu0 0.0
    %5542 = vmatpush.msra.mxu0 0.0
    %5543 = vmatpush.msra.mxu0 0.0
    %5544 = vmatpush.msra.mxu0 %v3244
    %5545 = vmatpush.msra.mxu0 %v3243
    %5546 = vmatpush.msra.mxu0 %v3242
    %5547 = vmatpush.msra.mxu0 %v3241
    %5548 = vmatpush.msra.mxu0 %v3240
    %5549 = vmatpush.msra.mxu0 %v3239
    %5550 = vmatpush.msra.mxu0 %v3238
    %5551 = vmatpush.msra.mxu0 %v3237
    %5552 = vmatmul.f32.gmra.mxu0 %v5534
    %v5553 = vpop.f32.mrf.mxu0
    %v5554 = vadd.f32 %v3248, %v5553
    %5555 = vdwg.mxu0
    %v5556 = vxor.u32 %v5554, 2147483648
    %v5557 = vmul.f32 %v5556, 1.442695
    %v5558 = vpow.pop %v5557
    %v5559 = vadd.f32 %v5558, 1.0
    %v5560 = vrcp.pop %v5559
    %v5561 = vmul.f32 %v5559, %v5560
    %v5562 = vsub.f32 1.0, %v5561
    %v5563 = vmul.f32 %v5560, %v5562
    %v5564 = vadd.f32 %v5560, %v5563
    %vm5565 = vweird.f32 %v5559
    %vm5566 = vweird.f32 %v5560
    %vm5567 = vmor %vm5565, %vm5566
    %v5568 = vsel %vm5567, %v5560, %v5564
    %v5569 = vand.u32 2147483647, %v5559
    %vm5570 = vcmp.eq.f32.partialorder %v5569, 8.507059e+37
    %v5571 = vand.u32 %v5559, 2147483648
    %v5572 = vor.u32 1.1754944e-38, %v5571
    %v5573 = vsel %vm5570, %v5572, %v5568
    %v5574 = vmul.f32 1.0, %v5573
    %v5575 = vmul.f32 %v5574, 2.0
    %v5576 = vsub.f32 %v5575, 1.0
    %v5577 = vmul.f32 %v5574, %v5379
    %5579 = vrot.lane.b32.xlu0 %v5576, 64
    %v5580 = vpop.permute.xlu0 %5579
    %v5582 = vmul.f32 %v5574, %v5580
    %5584 = vrot.lane.b32.xlu0 %v5582, 32
    %v5585 = vpop.permute.xlu0 %5584
    %v5587 = vadd.f32 %v5577, %v5585
    %v5588 = vtanh.pop %v5587
    %5590 = vrot.lane.b32.xlu0 %v5588, 64
    %v5591 = vpop.permute.xlu0 %5590
    %v5593 = vmul.f32 %v5574, %v5591
    %5595 = vrot.lane.b32.xlu0 %v5523, 32
    %v5596 = vpop.permute.xlu0 %5595
    %5598 = vrot.lane.b32.xlu0 %v5454, 64
    %v5599 = vpop.permute.xlu0 %5598
    %v5601 = vsel %vm73, %v5596, %v5599
    %v5603 = vsel %vm184, %v5601, 0
    %5605 = vmatpush.msra.mxu0 0.0
    %5606 = vmatpush.msra.mxu0 0.0
    %5607 = vmatpush.msra.mxu0 0.0
    %5608 = vmatpush.msra.mxu0 0.0
    %5609 = vmatpush.msra.mxu0 0.0
    %5610 = vmatpush.msra.mxu0 0.0
    %5611 = vmatpush.msra.mxu0 0.0
    %5612 = vmatpush.msra.mxu0 0.0
    %5613 = vmatpush.msra.mxu0 %v2679
    %5614 = vmatpush.msra.mxu0 %v2678
    %5615 = vmatpush.msra.mxu0 %v2677
    %5616 = vmatpush.msra.mxu0 %v2676
    %5617 = vmatpush.msra.mxu0 %v2675
    %5618 = vmatpush.msra.mxu0 %v2674
    %5619 = vmatpush.msra.mxu0 %v2673
    %5620 = vmatpush.msra.mxu0 %v2672
    %5621 = vmatmul.f32.gmra.mxu0 %v5603
    %v5622 = vpop.f32.mrf.mxu0
    %v5623 = vadd.f32 %v2683, %v5622
    %5624 = vdwg.mxu0
    %v5625 = vxor.u32 %v5623, 2147483648
    %v5626 = vmul.f32 %v5625, 1.442695
    %v5627 = vpow.pop %v5626
    %v5628 = vadd.f32 %v5627, 1.0
    %v5629 = vrcp.pop %v5628
    %v5630 = vmul.f32 %v5628, %v5629
    %v5631 = vsub.f32 1.0, %v5630
    %v5632 = vmul.f32 %v5629, %v5631
    %v5633 = vadd.f32 %v5629, %v5632
    %vm5634 = vweird.f32 %v5628
    %vm5635 = vweird.f32 %v5629
    %vm5636 = vmor %vm5634, %vm5635
    %v5637 = vsel %vm5636, %v5629, %v5633
    %v5638 = vand.u32 2147483647, %v5628
    %vm5639 = vcmp.eq.f32.partialorder %v5638, 8.507059e+37
    %v5640 = vand.u32 %v5628, 2147483648
    %v5641 = vor.u32 1.1754944e-38, %v5640
    %v5642 = vsel %vm5639, %v5641, %v5637
    %v5643 = vmul.f32 1.0, %v5642
    %v5644 = vmul.f32 %v5643, 2.0
    %v5645 = vsub.f32 %v5644, 1.0
    %v5646 = vmul.f32 %v5643, %v5448
    %5648 = vrot.lane.b32.xlu0 %v5645, 64
    %v5649 = vpop.permute.xlu0 %5648
    %v5651 = vmul.f32 %v5643, %v5649
    %5653 = vrot.lane.b32.xlu0 %v5651, 32
    %v5654 = vpop.permute.xlu0 %5653
    %v5656 = vadd.f32 %v5646, %v5654
    %v5657 = vtanh.pop %v5656
    %5659 = vrot.lane.b32.xlu0 %v5657, 64
    %v5660 = vpop.permute.xlu0 %5659
    %v5662 = vmul.f32 %v5643, %v5660
    %5664 = vrot.lane.b32.xlu0 %v5662, 32
    %v5665 = vpop.permute.xlu0 %5664
    %5668 = vrot.lane.b32.xlu0 %v5593, 64
    %v5669 = vpop.permute.xlu0 %5668
    %v5671 = vsel %vm73, %v5665, %v5669
    %v5673 = vsel %vm184, %v5671, 0
    %5675 = vmatpush.msra.mxu0 0.0
    %5676 = vmatpush.msra.mxu0 0.0
    %5677 = vmatpush.msra.mxu0 0.0
    %5678 = vmatpush.msra.mxu0 0.0
    %5679 = vmatpush.msra.mxu0 0.0
    %5680 = vmatpush.msra.mxu0 0.0
    %5681 = vmatpush.msra.mxu0 0.0
    %5682 = vmatpush.msra.mxu0 0.0
    %5683 = vmatpush.msra.mxu0 %v3244
    %5684 = vmatpush.msra.mxu0 %v3243
    %5685 = vmatpush.msra.mxu0 %v3242
    %5686 = vmatpush.msra.mxu0 %v3241
    %5687 = vmatpush.msra.mxu0 %v3240
    %5688 = vmatpush.msra.mxu0 %v3239
    %5689 = vmatpush.msra.mxu0 %v3238
    %5690 = vmatpush.msra.mxu0 %v3237
    %5691 = vmatmul.f32.gmra.mxu0 %v5673
    %v5692 = vpop.f32.mrf.mxu0
    %v5693 = vadd.f32 %v3248, %v5692
    %5694 = vdwg.mxu0
    %v5695 = vxor.u32 %v5693, 2147483648
    %v5696 = vmul.f32 %v5695, 1.442695
    %v5697 = vpow.pop %v5696
    %v5698 = vadd.f32 %v5697, 1.0
    %v5699 = vrcp.pop %v5698
    %v5700 = vmul.f32 %v5698, %v5699
    %v5701 = vsub.f32 1.0, %v5700
    %v5702 = vmul.f32 %v5699, %v5701
    %v5703 = vadd.f32 %v5699, %v5702
    %vm5704 = vweird.f32 %v5698
    %vm5705 = vweird.f32 %v5699
    %vm5706 = vmor %vm5704, %vm5705
    %v5707 = vsel %vm5706, %v5699, %v5703
    %v5708 = vand.u32 2147483647, %v5698
    %vm5709 = vcmp.eq.f32.partialorder %v5708, 8.507059e+37
    %v5710 = vand.u32 %v5698, 2147483648
    %v5711 = vor.u32 1.1754944e-38, %v5710
    %v5712 = vsel %vm5709, %v5711, %v5707
    %v5713 = vmul.f32 1.0, %v5712
    %v5714 = vmul.f32 %v5713, 2.0
    %v5715 = vsub.f32 %v5714, 1.0
    %v5716 = vmul.f32 %v5713, %v5587
    %5718 = vrot.lane.b32.xlu0 %v5715, 64
    %v5719 = vpop.permute.xlu0 %5718
    %v5721 = vmul.f32 %v5713, %v5719
    %5723 = vrot.lane.b32.xlu0 %v5721, 32
    %v5724 = vpop.permute.xlu0 %5723
    %v5726 = vadd.f32 %v5716, %v5724
    %v5727 = vtanh.pop %v5726
    %5729 = vrot.lane.b32.xlu0 %v5727, 64
    %v5730 = vpop.permute.xlu0 %5729
    %v5732 = vmul.f32 %v5713, %v5730
    %5733 = vrot.lane.b32.xlu0 %v3310, 32
    %v5734 = vpop.permute.xlu0 %5733
    %5736 = vrot.lane.b32.xlu0 %v4347, 96
    %v5737 = vpop.permute.xlu0 %5736
    %5739 = vrot.lane.b32.xlu0 %v5108, 32
    %v5740 = vpop.permute.xlu0 %5739
    %5742 = vrot.lane.b32.xlu0 %v5593, 96
    %v5743 = vpop.permute.xlu0 %5742
    %v5745 = vsel %vm73, %v5734, %v4284
    %v5746 = vsel %vm184, %v5745, %v5737
    %vm5747 = vcmask 785408
    %v5748 = vsel %vm5747, %v5746, %v4762
    %v5749 = vsel %vm73, %v5740, %v5530
    %v5750 = vsel %vm184, %v5749, %v5743
    %v5751 = vsel %vm5747, %v5750, %v5732
    %v5752 = vld [vmem:[#allocation5] sm:$0xff]
    %v5753 = vld [vmem:[#allocation5 + $0x8] sm:$0xff]
    %v5754 = vld [vmem:[#allocation5 + $0x10] sm:$0xff]
    %v5755 = vld [vmem:[#allocation5 + $0x18] sm:$0xff]
    %v5756 = vld [vmem:[#allocation5 + $0x20] sm:$0xff]
    %v5757 = vld [vmem:[#allocation5 + $0x28] sm:$0xff]
    %v5758 = vld [vmem:[#allocation5 + $0x30] sm:$0xff]
    %v5759 = vld [vmem:[#allocation5 + $0x38] sm:$0xff]
    %v5760 = vld [vmem:[#allocation5 + $0x40] sm:$0xff]
    %v5761 = vld [vmem:[#allocation5 + $0x48] sm:$0xff]
    %v5762 = vld [vmem:[#allocation5 + $0x50] sm:$0xff]
    %v5763 = vld [vmem:[#allocation5 + $0x58] sm:$0xff]
    %v5764 = vld [vmem:[#allocation5 + $0x60] sm:$0xff]
    %v5765 = vld [vmem:[#allocation5 + $0x68] sm:$0xff]
    %v5766 = vld [vmem:[#allocation5 + $0x70] sm:$0xff]
    %v5767 = vld [vmem:[#allocation5 + $0x78] sm:$0xff]
    %v5768 = vld [vmem:[#allocation5 + $0x80] sm:$0xff]
    %v5769 = vld [vmem:[#allocation5 + $0x88] sm:$0xff]
    %v5770 = vld [vmem:[#allocation5 + $0x90] sm:$0xff]
    %v5771 = vld [vmem:[#allocation5 + $0x98] sm:$0xff]
    %v5772 = vld [vmem:[#allocation5 + $0xa0] sm:$0xff]
    %v5773 = vld [vmem:[#allocation5 + $0xa8] sm:$0xff]
    %v5774 = vld [vmem:[#allocation5 + $0xb0] sm:$0xff]
    %v5775 = vld [vmem:[#allocation5 + $0xb8] sm:$0xff]
    %v5776 = vld [vmem:[#allocation5 + $0xc0] sm:$0xff]
    %v5777 = vld [vmem:[#allocation5 + $0xc8] sm:$0xff]
    %v5778 = vld [vmem:[#allocation5 + $0xd0] sm:$0xff]
    %v5779 = vld [vmem:[#allocation5 + $0xd8] sm:$0xff]
    %v5780 = vld [vmem:[#allocation5 + $0xe0] sm:$0xff]
    %v5781 = vld [vmem:[#allocation5 + $0xe8] sm:$0xff]
    %v5782 = vld [vmem:[#allocation5 + $0xf0] sm:$0xff]
    %v5783 = vld [vmem:[#allocation5 + $0xf8] sm:$0xff]
    %v5784 = vld [vmem:[#allocation5 + $0x100] sm:$0xff]
    %v5785 = vld [vmem:[#allocation5 + $0x108] sm:$0xff]
    %v5786 = vld [vmem:[#allocation5 + $0x110] sm:$0xff]
    %v5787 = vld [vmem:[#allocation5 + $0x118] sm:$0xff]
    %v5788 = vld [vmem:[#allocation5 + $0x120] sm:$0xff]
    %v5789 = vld [vmem:[#allocation5 + $0x128] sm:$0xff]
    %v5790 = vld [vmem:[#allocation5 + $0x130] sm:$0xff]
    %v5791 = vld [vmem:[#allocation5 + $0x138] sm:$0xff]
    %v5792 = vld [vmem:[#allocation5 + $0x140] sm:$0xff]
    %v5793 = vld [vmem:[#allocation5 + $0x148] sm:$0xff]
    %v5794 = vld [vmem:[#allocation5 + $0x150] sm:$0xff]
    %v5795 = vld [vmem:[#allocation5 + $0x158] sm:$0xff]
    %v5796 = vld [vmem:[#allocation5 + $0x160] sm:$0xff]
    %v5797 = vld [vmem:[#allocation5 + $0x168] sm:$0xff]
    %v5798 = vld [vmem:[#allocation5 + $0x170] sm:$0xff]
    %v5799 = vld [vmem:[#allocation5 + $0x178] sm:$0xff]
    %v5800 = vld [vmem:[#allocation5 + $0x180] sm:$0xff]
    %v5801 = vld [vmem:[#allocation5 + $0x188] sm:$0xff]
    %v5802 = vld [vmem:[#allocation5 + $0x190] sm:$0xff]
    %v5803 = vld [vmem:[#allocation5 + $0x198] sm:$0xff]
    %v5804 = vld [vmem:[#allocation5 + $0x1a0] sm:$0xff]
    %v5805 = vld [vmem:[#allocation5 + $0x1a8] sm:$0xff]
    %v5806 = vld [vmem:[#allocation5 + $0x1b0] sm:$0xff]
    %v5807 = vld [vmem:[#allocation5 + $0x1b8] sm:$0xff]
    %v5808 = vld [vmem:[#allocation5 + $0x1c0] sm:$0xff]
    %v5809 = vld [vmem:[#allocation5 + $0x1c8] sm:$0xff]
    %v5810 = vld [vmem:[#allocation5 + $0x1d0] sm:$0xff]
    %v5811 = vld [vmem:[#allocation5 + $0x1d8] sm:$0xff]
    %v5812 = vld [vmem:[#allocation5 + $0x1e0] sm:$0xff]
    %v5813 = vld [vmem:[#allocation5 + $0x1e8] sm:$0xff]
    %v5814 = vld [vmem:[#allocation5 + $0x1f0] sm:$0xff]
    %v5815 = vld [vmem:[#allocation5 + $0x1f8] sm:$0xff]
    %v5816 = vld [vmem:[%s4] sm:$0x3]
    %v5818 = vperm.slane %v5816, 0
    %v5819 = vperm.slane %v5816, 1
    %5822 = vmatpush.msra.mxu0 %v5782
    %5823 = vmatpush.msra.mxu0 %v5780
    %5824 = vmatpush.msra.mxu0 %v5778
    %5825 = vmatpush.msra.mxu0 %v5776
    %5826 = vmatpush.msra.mxu0 %v5774
    %5827 = vmatpush.msra.mxu0 %v5772
    %5828 = vmatpush.msra.mxu0 %v5770
    %5829 = vmatpush.msra.mxu0 %v5768
    %5830 = vmatpush.msra.mxu0 %v5766
    %5831 = vmatpush.msra.mxu0 %v5764
    %5832 = vmatpush.msra.mxu0 %v5762
    %5833 = vmatpush.msra.mxu0 %v5760
    %5834 = vmatpush.msra.mxu0 %v5758
    %5835 = vmatpush.msra.mxu0 %v5756
    %5836 = vmatpush.msra.mxu0 %v5754
    %5837 = vmatpush.msra.mxu0 %v5752
    %5838 = vmatmul.f32.gmra.mxu0 %v5748
    %v5839 = vpop.f32.mrf.mxu0
    %v5840 = vadd.f32 %v5818, %v5839
    %5841 = vdwg.mxu0
    %5842 = vmatpush.msra.mxu0 %v5814
    %5843 = vmatpush.msra.mxu0 %v5812
    %5844 = vmatpush.msra.mxu0 %v5810
    %5845 = vmatpush.msra.mxu0 %v5808
    %5846 = vmatpush.msra.mxu0 %v5806
    %5847 = vmatpush.msra.mxu0 %v5804
    %5848 = vmatpush.msra.mxu0 %v5802
    %5849 = vmatpush.msra.mxu0 %v5800
    %5850 = vmatpush.msra.mxu0 %v5798
    %5851 = vmatpush.msra.mxu0 %v5796
    %5852 = vmatpush.msra.mxu0 %v5794
    %5853 = vmatpush.msra.mxu0 %v5792
    %5854 = vmatpush.msra.mxu0 %v5790
    %5855 = vmatpush.msra.mxu0 %v5788
    %5856 = vmatpush.msra.mxu0 %v5786
    %5857 = vmatpush.msra.mxu0 %v5784
    %5858 = vmatmul.f32.gmra.mxu0 %v5751
    %v5859 = vpop.f32.mrf.mxu0
    %v5860 = vadd.f32 %v5840, %v5859
    %5861 = vdwg.mxu0
    %5862 = vmatpush.msra.mxu0 %v5783
    %5863 = vmatpush.msra.mxu0 %v5781
    %5864 = vmatpush.msra.mxu0 %v5779
    %5865 = vmatpush.msra.mxu0 %v5777
    %5866 = vmatpush.msra.mxu0 %v5775
    %5867 = vmatpush.msra.mxu0 %v5773
    %5868 = vmatpush.msra.mxu0 %v5771
    %5869 = vmatpush.msra.mxu0 %v5769
    %5870 = vmatpush.msra.mxu0 %v5767
    %5871 = vmatpush.msra.mxu0 %v5765
    %5872 = vmatpush.msra.mxu0 %v5763
    %5873 = vmatpush.msra.mxu0 %v5761
    %5874 = vmatpush.msra.mxu0 %v5759
    %5875 = vmatpush.msra.mxu0 %v5757
    %5876 = vmatpush.msra.mxu0 %v5755
    %5877 = vmatpush.msra.mxu0 %v5753
    %5878 = vmatmul.f32.gmra.mxu0 %v5748
    %v5879 = vpop.f32.mrf.mxu0
    %v5880 = vadd.f32 %v5819, %v5879
    %5881 = vdwg.mxu0
    %5882 = vmatpush.msra.mxu0 %v5815
    %5883 = vmatpush.msra.mxu0 %v5813
    %5884 = vmatpush.msra.mxu0 %v5811
    %5885 = vmatpush.msra.mxu0 %v5809
    %5886 = vmatpush.msra.mxu0 %v5807
    %5887 = vmatpush.msra.mxu0 %v5805
    %5888 = vmatpush.msra.mxu0 %v5803
    %5889 = vmatpush.msra.mxu0 %v5801
    %5890 = vmatpush.msra.mxu0 %v5799
    %5891 = vmatpush.msra.mxu0 %v5797
    %5892 = vmatpush.msra.mxu0 %v5795
    %5893 = vmatpush.msra.mxu0 %v5793
    %5894 = vmatpush.msra.mxu0 %v5791
    %5895 = vmatpush.msra.mxu0 %v5789
    %5896 = vmatpush.msra.mxu0 %v5787
    %5897 = vmatpush.msra.mxu0 %v5785
    %5898 = vmatmul.f32.gmra.mxu0 %v5751
    %v5899 = vpop.f32.mrf.mxu0
    %v5900 = vadd.f32 %v5880, %v5899
    %5901 = vdwg.mxu0
    %v5902 = vmax.f32 %v5860, 0.0
    %v5903 = vmax.f32 %v5900, 0.0
    %v5904 = vld [vmem:[%s5] sm:$0xff]
    %v5905 = vld [vmem:[%s5 + $0x8] sm:$0xff]
    %v5906 = vld [vmem:[%s5 + $0x10] sm:$0xff]
    %v5907 = vld [vmem:[%s5 + $0x18] sm:$0xff]
    %v5908 = vld [vmem:[%s5 + $0x20] sm:$0xff]
    %v5909 = vld [vmem:[%s5 + $0x28] sm:$0xff]
    %v5910 = vld [vmem:[%s5 + $0x30] sm:$0xff]
    %v5911 = vld [vmem:[%s5 + $0x38] sm:$0xff]
    %v5912 = vld [vmem:[%s5 + $0x40] sm:$0xff]
    %v5913 = vld [vmem:[%s5 + $0x48] sm:$0xff]
    %v5914 = vld [vmem:[%s5 + $0x50] sm:$0xff]
    %v5915 = vld [vmem:[%s5 + $0x58] sm:$0xff]
    %v5916 = vld [vmem:[%s5 + $0x60] sm:$0xff]
    %v5917 = vld [vmem:[%s5 + $0x68] sm:$0xff]
    %v5918 = vld [vmem:[%s5 + $0x70] sm:$0xff]
    %v5919 = vld [vmem:[%s5 + $0x78] sm:$0xff]
    %v5920 = vld [vmem:[%s5 + $0x80] sm:$0xff]
    %v5921 = vld [vmem:[%s5 + $0x88] sm:$0xff]
    %v5922 = vld [vmem:[%s5 + $0x90] sm:$0xff]
    %v5923 = vld [vmem:[%s5 + $0x98] sm:$0xff]
    %v5924 = vld [vmem:[%s5 + $0xa0] sm:$0xff]
    %v5925 = vld [vmem:[%s5 + $0xa8] sm:$0xff]
    %v5926 = vld [vmem:[%s5 + $0xb0] sm:$0xff]
    %v5927 = vld [vmem:[%s5 + $0xb8] sm:$0xff]
    %v5928 = vld [vmem:[%s5 + $0xc0] sm:$0xff]
    %v5929 = vld [vmem:[%s5 + $0xc8] sm:$0xff]
    %v5930 = vld [vmem:[%s5 + $0xd0] sm:$0xff]
    %v5931 = vld [vmem:[%s5 + $0xd8] sm:$0xff]
    %v5932 = vld [vmem:[%s5 + $0xe0] sm:$0xff]
    %v5933 = vld [vmem:[%s5 + $0xe8] sm:$0xff]
    %v5934 = vld [vmem:[%s5 + $0xf0] sm:$0xff]
    %v5935 = vld [vmem:[%s5 + $0xf8] sm:$0xff]
    %v5936 = vld [vmem:[%s6] sm:$0x1]
    %v5938 = vperm.slane %v5936, 0
    %5940 = vmatpush.msra.mxu0 %v5919
    %5941 = vmatpush.msra.mxu0 %v5918
    %5942 = vmatpush.msra.mxu0 %v5917
    %5943 = vmatpush.msra.mxu0 %v5916
    %5944 = vmatpush.msra.mxu0 %v5915
    %5945 = vmatpush.msra.mxu0 %v5914
    %5946 = vmatpush.msra.mxu0 %v5913
    %5947 = vmatpush.msra.mxu0 %v5912
    %5948 = vmatpush.msra.mxu0 %v5911
    %5949 = vmatpush.msra.mxu0 %v5910
    %5950 = vmatpush.msra.mxu0 %v5909
    %5951 = vmatpush.msra.mxu0 %v5908
    %5952 = vmatpush.msra.mxu0 %v5907
    %5953 = vmatpush.msra.mxu0 %v5906
    %5954 = vmatpush.msra.mxu0 %v5905
    %5955 = vmatpush.msra.mxu0 %v5904
    %5956 = vmatmul.f32.gmra.mxu0 %v5902
    %v5957 = vpop.f32.mrf.mxu0
    %v5958 = vadd.f32 %v5938, %v5957
    %5959 = vdwg.mxu0
    %5960 = vmatpush.msra.mxu0 %v5935
    %5961 = vmatpush.msra.mxu0 %v5934
    %5962 = vmatpush.msra.mxu0 %v5933
    %5963 = vmatpush.msra.mxu0 %v5932
    %5964 = vmatpush.msra.mxu0 %v5931
    %5965 = vmatpush.msra.mxu0 %v5930
    %5966 = vmatpush.msra.mxu0 %v5929
    %5967 = vmatpush.msra.mxu0 %v5928
    %5968 = vmatpush.msra.mxu0 %v5927
    %5969 = vmatpush.msra.mxu0 %v5926
    %5970 = vmatpush.msra.mxu0 %v5925
    %5971 = vmatpush.msra.mxu0 %v5924
    %5972 = vmatpush.msra.mxu0 %v5923
    %5973 = vmatpush.msra.mxu0 %v5922
    %5974 = vmatpush.msra.mxu0 %v5921
    %5975 = vmatpush.msra.mxu0 %v5920
    %5976 = vmatmul.f32.gmra.mxu0 %v5903
    %v5977 = vpop.f32.mrf.mxu0
    %v5978 = vadd.f32 %v5958, %v5977
    %5979 = vdwg.mxu0
    %vm5980 = vcmask 517120
    %5981 = vst.msk [vmem:[#allocation7] sm:$0x3] %vm5980, %v5978
    // Predicated region
    $region38: #{forward.1} parent=1 // pred_check
      _
    $region39: #{forward.1} parent=1 // pred_check_branch
      %5983 = sbr.rel (0) target = $region41
    $region40: #{forward.1} parent=1 // pred_region
      %5985 = vsyncadd [#allocation4], 0
      %s5987 = sshll.u32 [#allocation7], 4
      %s5988 = int_to_ptr.vmem [resolvable:$true] %s5987
      %s5989 = sshll.u32 %s7, 4
      %s5990 = int_to_ptr.hbm [resolvable:$true] %s5989
      %5992 = dma.vmem_to_hbm [thread:$0]  %s5988, 32, %s5990, [#allocation4]
    $region41: #{forward.1} parent=1 // pred_fallthru
      _
    // Predicated region
    $region42: #{forward.1} parent=1 // pred_check
      _
    $region43: #{forward.1} parent=1 // pred_check_branch
      %5994 = sbr.rel (0) target = $region45
    $region44: #{forward.1} parent=1 // pred_region
      %5996 = dma.done [#allocation4], 32
    $region45: #{forward.1} parent=1 // pred_fallthru
      _
    %5997 = vsyncpa [#allocation3], 1
    %5998 = vsyncpa [#allocation6], 1
    %5999 = vsyncpa [#allocation4], 1

</llo_original>
